<compile_context>
chip_gen: v5e
topology: v5e:2x2
jax: 0.10.0
libtpu: 0.0.40
codegen_flags: <defaults>
</compile_context>

<pallas_src>
import functools

import jax
import jax.numpy as jnp
from jax import lax
from jax.experimental import pallas as pl
from jax.experimental.pallas import tpu as pltpu

EPS = 1e-5


def _vpn_resblocks_kernel(x_ref, mask_ref, g1_ref, b1_ref, w1_ref, c1_ref,
                          g2_ref, b2_ref, w2_ref, c2_ref,
                          o_ref, patches_ref, *, dims):
    """All residual blocks, fused, for one batch element.

    x_ref      : (1, C, S)   f32, S = D*H*W   (lane-dense activation)
    mask_ref   : (27, 1, S)  f32 tap-validity masks (1.0 inside volume, 0.0 = SAME pad)
    g*/b*/c*   : (B, C, 1)   f32  GroupNorm affine / conv bias, per residual block
    w*_ref     : (B, C, Kp)  bf16 im2col weights, K zero-padded 27*C -> Kp = 28*C
    o_ref      : (1, C, S)   f32
    patches_ref: (Kp, S)     bf16 VMEM scratch (im2col patch matrix, reused per conv)
    """
    D, H, W = dims
    _, C, S = x_ref.shape
    Kp = patches_ref.shape[0]
    num_blocks = g1_ref.shape[0]
    n_taps = 27
    n_pairs = Kp // (2 * C)

    def gn_relu(v, gamma, beta):
        # GroupNorm(num_groups=1) + ReLU.  Single fused sum / sum-of-squares pass,
        # then the normalize + affine is folded into per-channel scale/shift so the
        # per-element work is just v * scale + shift (2 VPU ops) + max.
        inv_n = 1.0 / (C * S)
        s1 = jnp.sum(v)
        s2 = jnp.sum(v * v)
        mean = s1 * inv_n
        var = s2 * inv_n - mean * mean
        inv_std = lax.rsqrt(var + EPS)            # scalar -> EUP
        scale = gamma * inv_std                    # (C, 1)
        shift = beta - mean * scale                # (C, 1)
        return jnp.maximum(v * scale + shift, 0.0)

    def tap(a, k):
        # tap(a, k)[:, s] == a_zero_padded[:, s + delta_k] (zero outside the
        # D x H x W volume == SAME conv padding).  Lane roll (XLU) + mask (VPU).
        kd, kh, kw = k // 9, (k // 3) % 3, k % 3
        dd, dh, dw = kd - 1, kh - 1, kw - 1
        if (dd, dh, dw) == (0, 0, 0):
            return a
        delta = dd * H * W + dh * W + dw
        rolled = pltpu.roll(a, shift=(-delta) % S, axis=1)
        return rolled * mask_ref[k]                # (1, S) mask broadcasts over C

    def conv3x3x3(a, w_t, bias):
        # im2col: patches[k*C + ci, s] = a[ci, spatial(s) shifted by tap k].
        # Two taps per store -> every store is a full, aligned (2*C, S) bf16 slab;
        # the last slab carries the zero rows matching the zero-padded weight
        # columns, so no separate memset of the scratch is needed.
        zero_tap = jnp.zeros((C, S), jnp.float32)
        for j in range(n_pairs):
            k0, k1 = 2 * j, 2 * j + 1
            t0 = tap(a, k0) if k0 < n_taps else zero_tap
            t1 = tap(a, k1) if k1 < n_taps else zero_tap
            pair = jnp.concatenate([t0, t1], axis=0).astype(jnp.bfloat16)
            patches_ref[2 * C * j:2 * C * (j + 1), :] = pair
        out = jnp.dot(w_t, patches_ref[...],
                      preferred_element_type=jnp.float32)       # (C, S) f32 on MXU
        return out + bias

    y = x_ref[0]                                                 # (C, S) f32
    for blk in range(num_blocks):                                # static unroll (tiny)
        a = gn_relu(y, g1_ref[blk], b1_ref[blk])
        a = conv3x3x3(a, w1_ref[blk], c1_ref[blk])
        a = gn_relu(a, g2_ref[blk], b2_ref[blk])
        a = conv3x3x3(a, w2_ref[blk], c2_ref[blk])
        y = y + a
    o_ref[0] = y


def _make_tap_masks(D, H, W):
    """(27, 1, S) f32: 1.0 where the shifted spatial position is inside the volume."""
    S = D * H * W
    s = jnp.arange(S)
    d = s // (H * W)
    h = (s // W) % H
    w = s % W
    masks = []
    for kd in range(3):
        for kh in range(3):
            for kw in range(3):
                dd, dh, dw = kd - 1, kh - 1, kw - 1
                valid = ((d + dd >= 0) & (d + dd < D) &
                         (h + dh >= 0) & (h + dh < H) &
                         (w + dw >= 0) & (w + dw < W))
                masks.append(valid)
    return jnp.stack(masks).astype(jnp.float32).reshape(27, 1, S)


def _prep_block(p, C):
    """Per-block params -> kernel layout: (C,1) f32 columns, (Cout, Kp) bf16 weights."""
    Kp = 28 * C

    def col(v):
        return v.reshape(C, 1).astype(jnp.float32)

    def wt(w):                                  # (3,3,3,Cin,Cout) -> (Cout, Kp) bf16
        w_t = jnp.transpose(w.reshape(27 * C, C))          # (Cout, 27*Cin)
        w_t = jnp.pad(w_t, ((0, 0), (0, Kp - 27 * C)))     # zero-pad K to 28*C
        return w_t.astype(jnp.bfloat16)

    return (col(p["g1"]), col(p["b1"]), wt(p["w1"]), col(p["c1b"]),
            col(p["g2"]), col(p["b2"]), wt(p["w2"]), col(p["c2b"]))


def vpn_resblocks_forward(x_ncdhw, blocks_params):
    """VPN_ResBlocks.forward: PyTorch NCDHW in / NCDHW out (all blocks in one call)."""
    N, C, D, H, W = x_ncdhw.shape
    S = D * H * W
    assert S % 128 == 0 and C % 8 == 0, "lane-dense layout needs S%128==0 and C%8==0"
    Kp = 28 * C

    # Channels -> sublanes, flattened spatial -> lanes.  Pure reshape, no transpose.
    x = x_ncdhw.reshape(N, C, S).astype(jnp.float32)
    masks = _make_tap_masks(D, H, W)
    stacked = [jnp.stack(g, axis=0)
               for g in zip(*[_prep_block(p, C) for p in blocks_params])]

    def full_spec(a):
        # Whole array resident in VMEM, same block for every grid step (no re-DMA).
        return pl.BlockSpec(a.shape, lambda n, _nd=a.ndim: (0,) * _nd)

    y = pl.pallas_call(
        functools.partial(_vpn_resblocks_kernel, dims=(D, H, W)),
        out_shape=jax.ShapeDtypeStruct((N, C, S), jnp.float32),
        grid_spec=pltpu.PrefetchScalarGridSpec(
            num_scalar_prefetch=0,
            grid=(N,),
            in_specs=[pl.BlockSpec((1, C, S), lambda n: (n, 0, 0)),
                      full_spec(masks)]
                     + [full_spec(a) for a in stacked],
            out_specs=pl.BlockSpec((1, C, S), lambda n: (n, 0, 0)),
            scratch_shapes=[pltpu.VMEM((Kp, S), jnp.bfloat16)],
        ),
        compiler_params=pltpu.CompilerParams(
            dimension_semantics=("parallel",)),   # batch items are independent
    )(x, masks, *stacked)

    return y.reshape(N, C, D, H, W)


def init_params(key, num_blocks, channels):
    blocks = []
    for _ in range(num_blocks):
        key, k0, k1, k2, k3, k4, k5, k6, k7 = jax.random.split(key, 9)
        blocks.append(dict(
            g1=1.0 + 0.1 * jax.random.normal(k0, (channels,), jnp.float32),
            b1=0.1 * jax.random.normal(k1, (channels,), jnp.float32),
            w1=0.05 * jax.random.normal(k2, (3, 3, 3, channels, channels), jnp.float32),
            c1b=0.01 * jax.random.normal(k3, (channels,), jnp.float32),
            g2=1.0 + 0.1 * jax.random.normal(k4, (channels,), jnp.float32),
            b2=0.1 * jax.random.normal(k5, (channels,), jnp.float32),
            w2=0.05 * jax.random.normal(k6, (3, 3, 3, channels, channels), jnp.float32),
            c2b=0.01 * jax.random.normal(k7, (channels,), jnp.float32),
        ))
    return blocks


def ref_forward(x_ncdhw, blocks_params):
    """Pure-JAX f32 reference (same semantics, lax.conv) for validation."""
    x = jnp.transpose(x_ncdhw, (0, 2, 3, 4, 1))   # NDHWC

    def gn(v, g, b):
        mean = jnp.mean(v, axis=(1, 2, 3, 4), keepdims=True)
        var = jnp.mean((v - mean) ** 2, axis=(1, 2, 3, 4), keepdims=True)
        return (v - mean) * lax.rsqrt(var + EPS) * g + b

    def conv(v, w, b):
        return lax.conv_general_dilated(
            v, w, (1, 1, 1), "SAME",
            dimension_numbers=("NDHWC", "DHWIO", "NDHWC"),
            precision=lax.Precision.HIGHEST) + b

    for p in blocks_params:
        out = jnp.maximum(gn(x, p["g1"], p["b1"]), 0.0)
        out = conv(out, p["w1"], p["c1b"])
        out = jnp.maximum(gn(out, p["g2"], p["b2"]), 0.0)
        out = conv(out, p["w2"], p["c2b"])
        x = x + out
    return jnp.transpose(x, (0, 4, 1, 2, 3))


if __name__ == "__main__":
    N, C, D, H, W = 2, 8, 8, 8, 8   # small NCDHW input
    NUM_BLOCKS = 2

    key = jax.random.PRNGKey(0)
    kx, kp = jax.random.split(key)
    x = jax.random.normal(kx, (N, C, D, H, W), jnp.float32)
    blocks_params = init_params(kp, NUM_BLOCKS, C)

    y = jax.block_until_ready(vpn_resblocks_forward(x, blocks_params))
    y_ref = jax.block_until_ready(ref_forward(x, blocks_params))

    assert y.shape == (N, C, D, H, W)
    # The kernel feeds bf16 operands to the MXU (f32 accumulation); vs. the pure-f32
    # reference this gives ~1e-2 max deviation at these magnitudes.  3e-2 keeps ~10
    # sigma of margin while still catching any real indexing / masking / weight-layout
    # bug (those produce O(0.1+) errors).
    assert jnp.allclose(y, y_ref, atol=3e-2, rtol=3e-2), \
        f"max err {jnp.max(jnp.abs(y - y_ref))}"

    print("KERNEL_OK")
</pallas_src>

<mosaic_0001>
module attributes {stable_mosaic.version = 11 : i64} {
  func.func @_vpn_resblocks_kernel(%arg0: i32, %arg1: memref<1x8x512xf32, #tpu.memory_space<vmem>>, %arg2: memref<27x1x512xf32, #tpu.memory_space<vmem>>, %arg3: memref<2x8x1xf32, #tpu.memory_space<vmem>>, %arg4: memref<2x8x1xf32, #tpu.memory_space<vmem>>, %arg5: memref<2x8x224xbf16, #tpu.memory_space<vmem>>, %arg6: memref<2x8x1xf32, #tpu.memory_space<vmem>>, %arg7: memref<2x8x1xf32, #tpu.memory_space<vmem>>, %arg8: memref<2x8x1xf32, #tpu.memory_space<vmem>>, %arg9: memref<2x8x224xbf16, #tpu.memory_space<vmem>>, %arg10: memref<2x8x1xf32, #tpu.memory_space<vmem>>, %arg11: memref<1x8x512xf32, #tpu.memory_space<vmem>>, %arg12: memref<224x512xbf16, #tpu.memory_space<vmem>>) attributes {dimension_semantics = [#tpu.dimension_semantics<parallel>], iteration_bounds = array<i64: 2>, scalar_prefetch = 0 : i64, scratch_operands = 1 : i64, tpu.core_type = #tpu.core_type<tc>, window_params = [{transform_indices = @transform_0, window_bounds = array<i64: 1, 8, 512>}, {pipeline_mode = #tpu.pipeline_mode<synchronous>, transform_indices = @transform_1, window_bounds = array<i64: 27, 1, 512>}, {pipeline_mode = #tpu.pipeline_mode<synchronous>, transform_indices = @transform_2, window_bounds = array<i64: 2, 8, 1>}, {pipeline_mode = #tpu.pipeline_mode<synchronous>, transform_indices = @transform_3, window_bounds = array<i64: 2, 8, 1>}, {pipeline_mode = #tpu.pipeline_mode<synchronous>, transform_indices = @transform_4, window_bounds = array<i64: 2, 8, 224>}, {pipeline_mode = #tpu.pipeline_mode<synchronous>, transform_indices = @transform_5, window_bounds = array<i64: 2, 8, 1>}, {pipeline_mode = #tpu.pipeline_mode<synchronous>, transform_indices = @transform_6, window_bounds = array<i64: 2, 8, 1>}, {pipeline_mode = #tpu.pipeline_mode<synchronous>, transform_indices = @transform_7, window_bounds = array<i64: 2, 8, 1>}, {pipeline_mode = #tpu.pipeline_mode<synchronous>, transform_indices = @transform_8, window_bounds = array<i64: 2, 8, 224>}, {pipeline_mode = #tpu.pipeline_mode<synchronous>, transform_indices = @transform_9, window_bounds = array<i64: 2, 8, 1>}, {transform_indices = @transform_10, window_bounds = array<i64: 1, 8, 512>}]} {
    %c0 = arith.constant 0 : index
    %c0_0 = arith.constant 0 : index
    %c0_1 = arith.constant 0 : index
    %0 = vector.load %arg1[%c0, %c0_0, %c0_1] : memref<1x8x512xf32, #tpu.memory_space<vmem>>, vector<1x8x512xf32>
    %1 = vector.shape_cast %0 : vector<1x8x512xf32> to vector<8x512xf32>
    %c0_2 = arith.constant 0 : index
    %c0_3 = arith.constant 0 : index
    %c0_4 = arith.constant 0 : index
    %2 = vector.load %arg3[%c0_2, %c0_3, %c0_4] : memref<2x8x1xf32, #tpu.memory_space<vmem>>, vector<1x8x1xf32>
    %3 = vector.shape_cast %2 : vector<1x8x1xf32> to vector<8x1xf32>
    %c0_5 = arith.constant 0 : index
    %c0_6 = arith.constant 0 : index
    %c0_7 = arith.constant 0 : index
    %4 = vector.load %arg4[%c0_5, %c0_6, %c0_7] : memref<2x8x1xf32, #tpu.memory_space<vmem>>, vector<1x8x1xf32>
    %5 = vector.shape_cast %4 : vector<1x8x1xf32> to vector<8x1xf32>
    %6 = vector.shape_cast %1 : vector<8x512xf32> to vector<1x8x512xf32>
    %cst = arith.constant dense<0.000000e+00> : vector<1xf32>
    %7 = vector.multi_reduction <add>, %6, %cst [1, 2] : vector<1x8x512xf32> to vector<1xf32>
    %8 = vector.shape_cast %7 : vector<1xf32> to vector<1x1x1xf32>
    %9 = vector.extract %8[0, 0, 0] : f32 from vector<1x1x1xf32>
    %10 = arith.mulf %1, %1 : vector<8x512xf32>
    %11 = vector.shape_cast %10 : vector<8x512xf32> to vector<1x8x512xf32>
    %cst_8 = arith.constant dense<0.000000e+00> : vector<1xf32>
    %12 = vector.multi_reduction <add>, %11, %cst_8 [1, 2] : vector<1x8x512xf32> to vector<1xf32>
    %13 = vector.shape_cast %12 : vector<1xf32> to vector<1x1x1xf32>
    %14 = vector.extract %13[0, 0, 0] : f32 from vector<1x1x1xf32>
    %cst_9 = arith.constant 2.44140625E-4 : f32
    %15 = arith.mulf %9, %cst_9 : f32
    %cst_10 = arith.constant 2.44140625E-4 : f32
    %16 = arith.mulf %14, %cst_10 : f32
    %17 = arith.mulf %15, %15 : f32
    %18 = arith.subf %16, %17 : f32
    %cst_11 = arith.constant 9.99999974E-6 : f32
    %19 = arith.addf %18, %cst_11 : f32
    %20 = math.rsqrt %19 : f32
    %21 = vector.broadcast %20 : f32 to vector<8x1xf32>
    %22 = arith.mulf %3, %21 : vector<8x1xf32>
    %23 = vector.broadcast %15 : f32 to vector<8x1xf32>
    %24 = arith.mulf %23, %22 : vector<8x1xf32>
    %25 = arith.subf %5, %24 : vector<8x1xf32>
    %26 = vector.broadcast %22 : vector<8x1xf32> to vector<8x512xf32>
    %27 = arith.mulf %1, %26 : vector<8x512xf32>
    %28 = vector.broadcast %25 : vector<8x1xf32> to vector<8x512xf32>
    %29 = arith.addf %27, %28 : vector<8x512xf32>
    %cst_12 = arith.constant 0.000000e+00 : f32
    %30 = vector.broadcast %cst_12 : f32 to vector<8x512xf32>
    %31 = arith.maximumf %29, %30 : vector<8x512xf32>
    %c0_13 = arith.constant 0 : index
    %c0_14 = arith.constant 0 : index
    %c0_15 = arith.constant 0 : index
    %32 = vector.load %arg5[%c0_13, %c0_14, %c0_15] : memref<2x8x224xbf16, #tpu.memory_space<vmem>>, vector<1x8x224xbf16>
    %33 = vector.shape_cast %32 : vector<1x8x224xbf16> to vector<8x224xbf16>
    %c0_16 = arith.constant 0 : index
    %c0_17 = arith.constant 0 : index
    %c0_18 = arith.constant 0 : index
    %34 = vector.load %arg6[%c0_16, %c0_17, %c0_18] : memref<2x8x1xf32, #tpu.memory_space<vmem>>, vector<1x8x1xf32>
    %35 = vector.shape_cast %34 : vector<1x8x1xf32> to vector<8x1xf32>
    %cst_19 = arith.constant 0.000000e+00 : f32
    %36 = vector.broadcast %cst_19 : f32 to vector<8x512xf32>
    %c73_i32 = arith.constant 73 : i32
    %37 = tpu.dynamic_rotate %31 by %c73_i32 dim 1 : vector<8x512xf32>, i32 -> vector<8x512xf32>
    %c0_20 = arith.constant 0 : index
    %c0_21 = arith.constant 0 : index
    %c0_22 = arith.constant 0 : index
    %38 = vector.load %arg2[%c0_20, %c0_21, %c0_22] : memref<27x1x512xf32, #tpu.memory_space<vmem>>, vector<1x1x512xf32>
    %39 = vector.shape_cast %38 : vector<1x1x512xf32> to vector<1x512xf32>
    %40 = vector.broadcast %39 : vector<1x512xf32> to vector<8x512xf32>
    %41 = arith.mulf %37, %40 : vector<8x512xf32>
    %c72_i32 = arith.constant 72 : i32
    %42 = tpu.dynamic_rotate %31 by %c72_i32 dim 1 : vector<8x512xf32>, i32 -> vector<8x512xf32>
    %c1 = arith.constant 1 : index
    %c0_23 = arith.constant 0 : index
    %c0_24 = arith.constant 0 : index
    %43 = vector.load %arg2[%c1, %c0_23, %c0_24] : memref<27x1x512xf32, #tpu.memory_space<vmem>>, vector<1x1x512xf32>
    %44 = vector.shape_cast %43 : vector<1x1x512xf32> to vector<1x512xf32>
    %45 = vector.broadcast %44 : vector<1x512xf32> to vector<8x512xf32>
    %46 = arith.mulf %42, %45 : vector<8x512xf32>
    %47 = tpu.concatenate %41, %46 in 0 : vector<8x512xf32>, vector<8x512xf32> -> vector<16x512xf32>
    %48 = arith.truncf %47 : vector<16x512xf32> to vector<16x512xbf16>
    %c0_25 = arith.constant 0 : index
    %c0_26 = arith.constant 0 : index
    %49 = vector.load %arg12[%c0_25, %c0_26] : memref<224x512xbf16, #tpu.memory_space<vmem>>, vector<16x512xbf16>
    tpu.vector_store %arg12[%c0_25, %c0_26], %48 {strides = array<i32>} : memref<224x512xbf16, #tpu.memory_space<vmem>>, vector<16x512xbf16>,
    %c71_i32 = arith.constant 71 : i32
    %50 = tpu.dynamic_rotate %31 by %c71_i32 dim 1 : vector<8x512xf32>, i32 -> vector<8x512xf32>
    %c2 = arith.constant 2 : index
    %c0_27 = arith.constant 0 : index
    %c0_28 = arith.constant 0 : index
    %51 = vector.load %arg2[%c2, %c0_27, %c0_28] : memref<27x1x512xf32, #tpu.memory_space<vmem>>, vector<1x1x512xf32>
    %52 = vector.shape_cast %51 : vector<1x1x512xf32> to vector<1x512xf32>
    %53 = vector.broadcast %52 : vector<1x512xf32> to vector<8x512xf32>
    %54 = arith.mulf %50, %53 : vector<8x512xf32>
    %c65_i32 = arith.constant 65 : i32
    %55 = tpu.dynamic_rotate %31 by %c65_i32 dim 1 : vector<8x512xf32>, i32 -> vector<8x512xf32>
    %c3 = arith.constant 3 : index
    %c0_29 = arith.constant 0 : index
    %c0_30 = arith.constant 0 : index
    %56 = vector.load %arg2[%c3, %c0_29, %c0_30] : memref<27x1x512xf32, #tpu.memory_space<vmem>>, vector<1x1x512xf32>
    %57 = vector.shape_cast %56 : vector<1x1x512xf32> to vector<1x512xf32>
    %58 = vector.broadcast %57 : vector<1x512xf32> to vector<8x512xf32>
    %59 = arith.mulf %55, %58 : vector<8x512xf32>
    %60 = tpu.concatenate %54, %59 in 0 : vector<8x512xf32>, vector<8x512xf32> -> vector<16x512xf32>
    %61 = arith.truncf %60 : vector<16x512xf32> to vector<16x512xbf16>
    %c16 = arith.constant 16 : index
    %c0_31 = arith.constant 0 : index
    %62 = vector.load %arg12[%c16, %c0_31] : memref<224x512xbf16, #tpu.memory_space<vmem>>, vector<16x512xbf16>
    tpu.vector_store %arg12[%c16, %c0_31], %61 {strides = array<i32>} : memref<224x512xbf16, #tpu.memory_space<vmem>>, vector<16x512xbf16>,
    %c64_i32 = arith.constant 64 : i32
    %63 = tpu.dynamic_rotate %31 by %c64_i32 dim 1 : vector<8x512xf32>, i32 -> vector<8x512xf32>
    %c4 = arith.constant 4 : index
    %c0_32 = arith.constant 0 : index
    %c0_33 = arith.constant 0 : index
    %64 = vector.load %arg2[%c4, %c0_32, %c0_33] : memref<27x1x512xf32, #tpu.memory_space<vmem>>, vector<1x1x512xf32>
    %65 = vector.shape_cast %64 : vector<1x1x512xf32> to vector<1x512xf32>
    %66 = vector.broadcast %65 : vector<1x512xf32> to vector<8x512xf32>
    %67 = arith.mulf %63, %66 : vector<8x512xf32>
    %c63_i32 = arith.constant 63 : i32
    %68 = tpu.dynamic_rotate %31 by %c63_i32 dim 1 : vector<8x512xf32>, i32 -> vector<8x512xf32>
    %c5 = arith.constant 5 : index
    %c0_34 = arith.constant 0 : index
    %c0_35 = arith.constant 0 : index
    %69 = vector.load %arg2[%c5, %c0_34, %c0_35] : memref<27x1x512xf32, #tpu.memory_space<vmem>>, vector<1x1x512xf32>
    %70 = vector.shape_cast %69 : vector<1x1x512xf32> to vector<1x512xf32>
    %71 = vector.broadcast %70 : vector<1x512xf32> to vector<8x512xf32>
    %72 = arith.mulf %68, %71 : vector<8x512xf32>
    %73 = tpu.concatenate %67, %72 in 0 : vector<8x512xf32>, vector<8x512xf32> -> vector<16x512xf32>
    %74 = arith.truncf %73 : vector<16x512xf32> to vector<16x512xbf16>
    %c32 = arith.constant 32 : index
    %c0_36 = arith.constant 0 : index
    %75 = vector.load %arg12[%c32, %c0_36] : memref<224x512xbf16, #tpu.memory_space<vmem>>, vector<16x512xbf16>
    tpu.vector_store %arg12[%c32, %c0_36], %74 {strides = array<i32>} : memref<224x512xbf16, #tpu.memory_space<vmem>>, vector<16x512xbf16>,
    %c57_i32 = arith.constant 57 : i32
    %76 = tpu.dynamic_rotate %31 by %c57_i32 dim 1 : vector<8x512xf32>, i32 -> vector<8x512xf32>
    %c6 = arith.constant 6 : index
    %c0_37 = arith.constant 0 : index
    %c0_38 = arith.constant 0 : index
    %77 = vector.load %arg2[%c6, %c0_37, %c0_38] : memref<27x1x512xf32, #tpu.memory_space<vmem>>, vector<1x1x512xf32>
    %78 = vector.shape_cast %77 : vector<1x1x512xf32> to vector<1x512xf32>
    %79 = vector.broadcast %78 : vector<1x512xf32> to vector<8x512xf32>
    %80 = arith.mulf %76, %79 : vector<8x512xf32>
    %c56_i32 = arith.constant 56 : i32
    %81 = tpu.dynamic_rotate %31 by %c56_i32 dim 1 : vector<8x512xf32>, i32 -> vector<8x512xf32>
    %c7 = arith.constant 7 : index
    %c0_39 = arith.constant 0 : index
    %c0_40 = arith.constant 0 : index
    %82 = vector.load %arg2[%c7, %c0_39, %c0_40] : memref<27x1x512xf32, #tpu.memory_space<vmem>>, vector<1x1x512xf32>
    %83 = vector.shape_cast %82 : vector<1x1x512xf32> to vector<1x512xf32>
    %84 = vector.broadcast %83 : vector<1x512xf32> to vector<8x512xf32>
    %85 = arith.mulf %81, %84 : vector<8x512xf32>
    %86 = tpu.concatenate %80, %85 in 0 : vector<8x512xf32>, vector<8x512xf32> -> vector<16x512xf32>
    %87 = arith.truncf %86 : vector<16x512xf32> to vector<16x512xbf16>
    %c48 = arith.constant 48 : index
    %c0_41 = arith.constant 0 : index
    %88 = vector.load %arg12[%c48, %c0_41] : memref<224x512xbf16, #tpu.memory_space<vmem>>, vector<16x512xbf16>
    tpu.vector_store %arg12[%c48, %c0_41], %87 {strides = array<i32>} : memref<224x512xbf16, #tpu.memory_space<vmem>>, vector<16x512xbf16>,
    %c55_i32 = arith.constant 55 : i32
    %89 = tpu.dynamic_rotate %31 by %c55_i32 dim 1 : vector<8x512xf32>, i32 -> vector<8x512xf32>
    %c8 = arith.constant 8 : index
    %c0_42 = arith.constant 0 : index
    %c0_43 = arith.constant 0 : index
    %90 = vector.load %arg2[%c8, %c0_42, %c0_43] : memref<27x1x512xf32, #tpu.memory_space<vmem>>, vector<1x1x512xf32>
    %91 = vector.shape_cast %90 : vector<1x1x512xf32> to vector<1x512xf32>
    %92 = vector.broadcast %91 : vector<1x512xf32> to vector<8x512xf32>
    %93 = arith.mulf %89, %92 : vector<8x512xf32>
    %c9_i32 = arith.constant 9 : i32
    %94 = tpu.dynamic_rotate %31 by %c9_i32 dim 1 : vector<8x512xf32>, i32 -> vector<8x512xf32>
    %c9 = arith.constant 9 : index
    %c0_44 = arith.constant 0 : index
    %c0_45 = arith.constant 0 : index
    %95 = vector.load %arg2[%c9, %c0_44, %c0_45] : memref<27x1x512xf32, #tpu.memory_space<vmem>>, vector<1x1x512xf32>
    %96 = vector.shape_cast %95 : vector<1x1x512xf32> to vector<1x512xf32>
    %97 = vector.broadcast %96 : vector<1x512xf32> to vector<8x512xf32>
    %98 = arith.mulf %94, %97 : vector<8x512xf32>
    %99 = tpu.concatenate %93, %98 in 0 : vector<8x512xf32>, vector<8x512xf32> -> vector<16x512xf32>
    %100 = arith.truncf %99 : vector<16x512xf32> to vector<16x512xbf16>
    %c64 = arith.constant 64 : index
    %c0_46 = arith.constant 0 : index
    %101 = vector.load %arg12[%c64, %c0_46] : memref<224x512xbf16, #tpu.memory_space<vmem>>, vector<16x512xbf16>
    tpu.vector_store %arg12[%c64, %c0_46], %100 {strides = array<i32>} : memref<224x512xbf16, #tpu.memory_space<vmem>>, vector<16x512xbf16>,
    %c8_i32 = arith.constant 8 : i32
    %102 = tpu.dynamic_rotate %31 by %c8_i32 dim 1 : vector<8x512xf32>, i32 -> vector<8x512xf32>
    %c10 = arith.constant 10 : index
    %c0_47 = arith.constant 0 : index
    %c0_48 = arith.constant 0 : index
    %103 = vector.load %arg2[%c10, %c0_47, %c0_48] : memref<27x1x512xf32, #tpu.memory_space<vmem>>, vector<1x1x512xf32>
    %104 = vector.shape_cast %103 : vector<1x1x512xf32> to vector<1x512xf32>
    %105 = vector.broadcast %104 : vector<1x512xf32> to vector<8x512xf32>
    %106 = arith.mulf %102, %105 : vector<8x512xf32>
    %c7_i32 = arith.constant 7 : i32
    %107 = tpu.dynamic_rotate %31 by %c7_i32 dim 1 : vector<8x512xf32>, i32 -> vector<8x512xf32>
    %c11 = arith.constant 11 : index
    %c0_49 = arith.constant 0 : index
    %c0_50 = arith.constant 0 : index
    %108 = vector.load %arg2[%c11, %c0_49, %c0_50] : memref<27x1x512xf32, #tpu.memory_space<vmem>>, vector<1x1x512xf32>
    %109 = vector.shape_cast %108 : vector<1x1x512xf32> to vector<1x512xf32>
    %110 = vector.broadcast %109 : vector<1x512xf32> to vector<8x512xf32>
    %111 = arith.mulf %107, %110 : vector<8x512xf32>
    %112 = tpu.concatenate %106, %111 in 0 : vector<8x512xf32>, vector<8x512xf32> -> vector<16x512xf32>
    %113 = arith.truncf %112 : vector<16x512xf32> to vector<16x512xbf16>
    %c80 = arith.constant 80 : index
    %c0_51 = arith.constant 0 : index
    %114 = vector.load %arg12[%c80, %c0_51] : memref<224x512xbf16, #tpu.memory_space<vmem>>, vector<16x512xbf16>
    tpu.vector_store %arg12[%c80, %c0_51], %113 {strides = array<i32>} : memref<224x512xbf16, #tpu.memory_space<vmem>>, vector<16x512xbf16>,
    %c1_i32 = arith.constant 1 : i32
    %115 = tpu.dynamic_rotate %31 by %c1_i32 dim 1 : vector<8x512xf32>, i32 -> vector<8x512xf32>
    %c12 = arith.constant 12 : index
    %c0_52 = arith.constant 0 : index
    %c0_53 = arith.constant 0 : index
    %116 = vector.load %arg2[%c12, %c0_52, %c0_53] : memref<27x1x512xf32, #tpu.memory_space<vmem>>, vector<1x1x512xf32>
    %117 = vector.shape_cast %116 : vector<1x1x512xf32> to vector<1x512xf32>
    %118 = vector.broadcast %117 : vector<1x512xf32> to vector<8x512xf32>
    %119 = arith.mulf %115, %118 : vector<8x512xf32>
    %120 = tpu.concatenate %119, %31 in 0 : vector<8x512xf32>, vector<8x512xf32> -> vector<16x512xf32>
    %121 = arith.truncf %120 : vector<16x512xf32> to vector<16x512xbf16>
    %c96 = arith.constant 96 : index
    %c0_54 = arith.constant 0 : index
    %122 = vector.load %arg12[%c96, %c0_54] : memref<224x512xbf16, #tpu.memory_space<vmem>>, vector<16x512xbf16>
    tpu.vector_store %arg12[%c96, %c0_54], %121 {strides = array<i32>} : memref<224x512xbf16, #tpu.memory_space<vmem>>, vector<16x512xbf16>,
    %c511_i32 = arith.constant 511 : i32
    %123 = tpu.dynamic_rotate %31 by %c511_i32 dim 1 : vector<8x512xf32>, i32 -> vector<8x512xf32>
    %c14 = arith.constant 14 : index
    %c0_55 = arith.constant 0 : index
    %c0_56 = arith.constant 0 : index
    %124 = vector.load %arg2[%c14, %c0_55, %c0_56] : memref<27x1x512xf32, #tpu.memory_space<vmem>>, vector<1x1x512xf32>
    %125 = vector.shape_cast %124 : vector<1x1x512xf32> to vector<1x512xf32>
    %126 = vector.broadcast %125 : vector<1x512xf32> to vector<8x512xf32>
    %127 = arith.mulf %123, %126 : vector<8x512xf32>
    %c505_i32 = arith.constant 505 : i32
    %128 = tpu.dynamic_rotate %31 by %c505_i32 dim 1 : vector<8x512xf32>, i32 -> vector<8x512xf32>
    %c15 = arith.constant 15 : index
    %c0_57 = arith.constant 0 : index
    %c0_58 = arith.constant 0 : index
    %129 = vector.load %arg2[%c15, %c0_57, %c0_58] : memref<27x1x512xf32, #tpu.memory_space<vmem>>, vector<1x1x512xf32>
    %130 = vector.shape_cast %129 : vector<1x1x512xf32> to vector<1x512xf32>
    %131 = vector.broadcast %130 : vector<1x512xf32> to vector<8x512xf32>
    %132 = arith.mulf %128, %131 : vector<8x512xf32>
    %133 = tpu.concatenate %127, %132 in 0 : vector<8x512xf32>, vector<8x512xf32> -> vector<16x512xf32>
    %134 = arith.truncf %133 : vector<16x512xf32> to vector<16x512xbf16>
    %c112 = arith.constant 112 : index
    %c0_59 = arith.constant 0 : index
    %135 = vector.load %arg12[%c112, %c0_59] : memref<224x512xbf16, #tpu.memory_space<vmem>>, vector<16x512xbf16>
    tpu.vector_store %arg12[%c112, %c0_59], %134 {strides = array<i32>} : memref<224x512xbf16, #tpu.memory_space<vmem>>, vector<16x512xbf16>,
    %c504_i32 = arith.constant 504 : i32
    %136 = tpu.dynamic_rotate %31 by %c504_i32 dim 1 : vector<8x512xf32>, i32 -> vector<8x512xf32>
    %c16_60 = arith.constant 16 : index
    %c0_61 = arith.constant 0 : index
    %c0_62 = arith.constant 0 : index
    %137 = vector.load %arg2[%c16_60, %c0_61, %c0_62] : memref<27x1x512xf32, #tpu.memory_space<vmem>>, vector<1x1x512xf32>
    %138 = vector.shape_cast %137 : vector<1x1x512xf32> to vector<1x512xf32>
    %139 = vector.broadcast %138 : vector<1x512xf32> to vector<8x512xf32>
    %140 = arith.mulf %136, %139 : vector<8x512xf32>
    %c503_i32 = arith.constant 503 : i32
    %141 = tpu.dynamic_rotate %31 by %c503_i32 dim 1 : vector<8x512xf32>, i32 -> vector<8x512xf32>
    %c17 = arith.constant 17 : index
    %c0_63 = arith.constant 0 : index
    %c0_64 = arith.constant 0 : index
    %142 = vector.load %arg2[%c17, %c0_63, %c0_64] : memref<27x1x512xf32, #tpu.memory_space<vmem>>, vector<1x1x512xf32>
    %143 = vector.shape_cast %142 : vector<1x1x512xf32> to vector<1x512xf32>
    %144 = vector.broadcast %143 : vector<1x512xf32> to vector<8x512xf32>
    %145 = arith.mulf %141, %144 : vector<8x512xf32>
    %146 = tpu.concatenate %140, %145 in 0 : vector<8x512xf32>, vector<8x512xf32> -> vector<16x512xf32>
    %147 = arith.truncf %146 : vector<16x512xf32> to vector<16x512xbf16>
    %c128 = arith.constant 128 : index
    %c0_65 = arith.constant 0 : index
    %148 = vector.load %arg12[%c128, %c0_65] : memref<224x512xbf16, #tpu.memory_space<vmem>>, vector<16x512xbf16>
    tpu.vector_store %arg12[%c128, %c0_65], %147 {strides = array<i32>} : memref<224x512xbf16, #tpu.memory_space<vmem>>, vector<16x512xbf16>,
    %c457_i32 = arith.constant 457 : i32
    %149 = tpu.dynamic_rotate %31 by %c457_i32 dim 1 : vector<8x512xf32>, i32 -> vector<8x512xf32>
    %c18 = arith.constant 18 : index
    %c0_66 = arith.constant 0 : index
    %c0_67 = arith.constant 0 : index
    %150 = vector.load %arg2[%c18, %c0_66, %c0_67] : memref<27x1x512xf32, #tpu.memory_space<vmem>>, vector<1x1x512xf32>
    %151 = vector.shape_cast %150 : vector<1x1x512xf32> to vector<1x512xf32>
    %152 = vector.broadcast %151 : vector<1x512xf32> to vector<8x512xf32>
    %153 = arith.mulf %149, %152 : vector<8x512xf32>
    %c456_i32 = arith.constant 456 : i32
    %154 = tpu.dynamic_rotate %31 by %c456_i32 dim 1 : vector<8x512xf32>, i32 -> vector<8x512xf32>
    %c19 = arith.constant 19 : index
    %c0_68 = arith.constant 0 : index
    %c0_69 = arith.constant 0 : index
    %155 = vector.load %arg2[%c19, %c0_68, %c0_69] : memref<27x1x512xf32, #tpu.memory_space<vmem>>, vector<1x1x512xf32>
    %156 = vector.shape_cast %155 : vector<1x1x512xf32> to vector<1x512xf32>
    %157 = vector.broadcast %156 : vector<1x512xf32> to vector<8x512xf32>
    %158 = arith.mulf %154, %157 : vector<8x512xf32>
    %159 = tpu.concatenate %153, %158 in 0 : vector<8x512xf32>, vector<8x512xf32> -> vector<16x512xf32>
    %160 = arith.truncf %159 : vector<16x512xf32> to vector<16x512xbf16>
    %c144 = arith.constant 144 : index
    %c0_70 = arith.constant 0 : index
    %161 = vector.load %arg12[%c144, %c0_70] : memref<224x512xbf16, #tpu.memory_space<vmem>>, vector<16x512xbf16>
    tpu.vector_store %arg12[%c144, %c0_70], %160 {strides = array<i32>} : memref<224x512xbf16, #tpu.memory_space<vmem>>, vector<16x512xbf16>,
    %c455_i32 = arith.constant 455 : i32
    %162 = tpu.dynamic_rotate %31 by %c455_i32 dim 1 : vector<8x512xf32>, i32 -> vector<8x512xf32>
    %c20 = arith.constant 20 : index
    %c0_71 = arith.constant 0 : index
    %c0_72 = arith.constant 0 : index
    %163 = vector.load %arg2[%c20, %c0_71, %c0_72] : memref<27x1x512xf32, #tpu.memory_space<vmem>>, vector<1x1x512xf32>
    %164 = vector.shape_cast %163 : vector<1x1x512xf32> to vector<1x512xf32>
    %165 = vector.broadcast %164 : vector<1x512xf32> to vector<8x512xf32>
    %166 = arith.mulf %162, %165 : vector<8x512xf32>
    %c449_i32 = arith.constant 449 : i32
    %167 = tpu.dynamic_rotate %31 by %c449_i32 dim 1 : vector<8x512xf32>, i32 -> vector<8x512xf32>
    %c21 = arith.constant 21 : index
    %c0_73 = arith.constant 0 : index
    %c0_74 = arith.constant 0 : index
    %168 = vector.load %arg2[%c21, %c0_73, %c0_74] : memref<27x1x512xf32, #tpu.memory_space<vmem>>, vector<1x1x512xf32>
    %169 = vector.shape_cast %168 : vector<1x1x512xf32> to vector<1x512xf32>
    %170 = vector.broadcast %169 : vector<1x512xf32> to vector<8x512xf32>
    %171 = arith.mulf %167, %170 : vector<8x512xf32>
    %172 = tpu.concatenate %166, %171 in 0 : vector<8x512xf32>, vector<8x512xf32> -> vector<16x512xf32>
    %173 = arith.truncf %172 : vector<16x512xf32> to vector<16x512xbf16>
    %c160 = arith.constant 160 : index
    %c0_75 = arith.constant 0 : index
    %174 = vector.load %arg12[%c160, %c0_75] : memref<224x512xbf16, #tpu.memory_space<vmem>>, vector<16x512xbf16>
    tpu.vector_store %arg12[%c160, %c0_75], %173 {strides = array<i32>} : memref<224x512xbf16, #tpu.memory_space<vmem>>, vector<16x512xbf16>,
    %c448_i32 = arith.constant 448 : i32
    %175 = tpu.dynamic_rotate %31 by %c448_i32 dim 1 : vector<8x512xf32>, i32 -> vector<8x512xf32>
    %c22 = arith.constant 22 : index
    %c0_76 = arith.constant 0 : index
    %c0_77 = arith.constant 0 : index
    %176 = vector.load %arg2[%c22, %c0_76, %c0_77] : memref<27x1x512xf32, #tpu.memory_space<vmem>>, vector<1x1x512xf32>
    %177 = vector.shape_cast %176 : vector<1x1x512xf32> to vector<1x512xf32>
    %178 = vector.broadcast %177 : vector<1x512xf32> to vector<8x512xf32>
    %179 = arith.mulf %175, %178 : vector<8x512xf32>
    %c447_i32 = arith.constant 447 : i32
    %180 = tpu.dynamic_rotate %31 by %c447_i32 dim 1 : vector<8x512xf32>, i32 -> vector<8x512xf32>
    %c23 = arith.constant 23 : index
    %c0_78 = arith.constant 0 : index
    %c0_79 = arith.constant 0 : index
    %181 = vector.load %arg2[%c23, %c0_78, %c0_79] : memref<27x1x512xf32, #tpu.memory_space<vmem>>, vector<1x1x512xf32>
    %182 = vector.shape_cast %181 : vector<1x1x512xf32> to vector<1x512xf32>
    %183 = vector.broadcast %182 : vector<1x512xf32> to vector<8x512xf32>
    %184 = arith.mulf %180, %183 : vector<8x512xf32>
    %185 = tpu.concatenate %179, %184 in 0 : vector<8x512xf32>, vector<8x512xf32> -> vector<16x512xf32>
    %186 = arith.truncf %185 : vector<16x512xf32> to vector<16x512xbf16>
    %c176 = arith.constant 176 : index
    %c0_80 = arith.constant 0 : index
    %187 = vector.load %arg12[%c176, %c0_80] : memref<224x512xbf16, #tpu.memory_space<vmem>>, vector<16x512xbf16>
    tpu.vector_store %arg12[%c176, %c0_80], %186 {strides = array<i32>} : memref<224x512xbf16, #tpu.memory_space<vmem>>, vector<16x512xbf16>,
    %c441_i32 = arith.constant 441 : i32
    %188 = tpu.dynamic_rotate %31 by %c441_i32 dim 1 : vector<8x512xf32>, i32 -> vector<8x512xf32>
    %c24 = arith.constant 24 : index
    %c0_81 = arith.constant 0 : index
    %c0_82 = arith.constant 0 : index
    %189 = vector.load %arg2[%c24, %c0_81, %c0_82] : memref<27x1x512xf32, #tpu.memory_space<vmem>>, vector<1x1x512xf32>
    %190 = vector.shape_cast %189 : vector<1x1x512xf32> to vector<1x512xf32>
    %191 = vector.broadcast %190 : vector<1x512xf32> to vector<8x512xf32>
    %192 = arith.mulf %188, %191 : vector<8x512xf32>
    %c440_i32 = arith.constant 440 : i32
    %193 = tpu.dynamic_rotate %31 by %c440_i32 dim 1 : vector<8x512xf32>, i32 -> vector<8x512xf32>
    %c25 = arith.constant 25 : index
    %c0_83 = arith.constant 0 : index
    %c0_84 = arith.constant 0 : index
    %194 = vector.load %arg2[%c25, %c0_83, %c0_84] : memref<27x1x512xf32, #tpu.memory_space<vmem>>, vector<1x1x512xf32>
    %195 = vector.shape_cast %194 : vector<1x1x512xf32> to vector<1x512xf32>
    %196 = vector.broadcast %195 : vector<1x512xf32> to vector<8x512xf32>
    %197 = arith.mulf %193, %196 : vector<8x512xf32>
    %198 = tpu.concatenate %192, %197 in 0 : vector<8x512xf32>, vector<8x512xf32> -> vector<16x512xf32>
    %199 = arith.truncf %198 : vector<16x512xf32> to vector<16x512xbf16>
    %c192 = arith.constant 192 : index
    %c0_85 = arith.constant 0 : index
    %200 = vector.load %arg12[%c192, %c0_85] : memref<224x512xbf16, #tpu.memory_space<vmem>>, vector<16x512xbf16>
    tpu.vector_store %arg12[%c192, %c0_85], %199 {strides = array<i32>} : memref<224x512xbf16, #tpu.memory_space<vmem>>, vector<16x512xbf16>,
    %c439_i32 = arith.constant 439 : i32
    %201 = tpu.dynamic_rotate %31 by %c439_i32 dim 1 : vector<8x512xf32>, i32 -> vector<8x512xf32>
    %c26 = arith.constant 26 : index
    %c0_86 = arith.constant 0 : index
    %c0_87 = arith.constant 0 : index
    %202 = vector.load %arg2[%c26, %c0_86, %c0_87] : memref<27x1x512xf32, #tpu.memory_space<vmem>>, vector<1x1x512xf32>
    %203 = vector.shape_cast %202 : vector<1x1x512xf32> to vector<1x512xf32>
    %204 = vector.broadcast %203 : vector<1x512xf32> to vector<8x512xf32>
    %205 = arith.mulf %201, %204 : vector<8x512xf32>
    %206 = tpu.concatenate %205, %36 in 0 : vector<8x512xf32>, vector<8x512xf32> -> vector<16x512xf32>
    %207 = arith.truncf %206 : vector<16x512xf32> to vector<16x512xbf16>
    %c208 = arith.constant 208 : index
    %c0_88 = arith.constant 0 : index
    %208 = vector.load %arg12[%c208, %c0_88] : memref<224x512xbf16, #tpu.memory_space<vmem>>, vector<16x512xbf16>
    tpu.vector_store %arg12[%c208, %c0_88], %207 {strides = array<i32>} : memref<224x512xbf16, #tpu.memory_space<vmem>>, vector<16x512xbf16>,
    %c0_89 = arith.constant 0 : index
    %c0_90 = arith.constant 0 : index
    %209 = vector.load %arg12[%c0_89, %c0_90] : memref<224x512xbf16, #tpu.memory_space<vmem>>, vector<224x512xbf16>
    %cst_91 = arith.constant dense<0.000000e+00> : vector<8x512xf32>
    %210 = tpu.matmul %33, %209, %cst_91 {dimension_numbers = #tpu.dot_dimension_numbers<[1], [0], [0], [1], [0, 0, 1, 1], [], []>} : vector<8x224xbf16>, vector<224x512xbf16>, vector<8x512xf32> -> vector<8x512xf32>
    %211 = vector.broadcast %35 : vector<8x1xf32> to vector<8x512xf32>
    %212 = arith.addf %210, %211 : vector<8x512xf32>
    %c0_92 = arith.constant 0 : index
    %c0_93 = arith.constant 0 : index
    %c0_94 = arith.constant 0 : index
    %213 = vector.load %arg7[%c0_92, %c0_93, %c0_94] : memref<2x8x1xf32, #tpu.memory_space<vmem>>, vector<1x8x1xf32>
    %214 = vector.shape_cast %213 : vector<1x8x1xf32> to vector<8x1xf32>
    %c0_95 = arith.constant 0 : index
    %c0_96 = arith.constant 0 : index
    %c0_97 = arith.constant 0 : index
    %215 = vector.load %arg8[%c0_95, %c0_96, %c0_97] : memref<2x8x1xf32, #tpu.memory_space<vmem>>, vector<1x8x1xf32>
    %216 = vector.shape_cast %215 : vector<1x8x1xf32> to vector<8x1xf32>
    %217 = vector.shape_cast %212 : vector<8x512xf32> to vector<1x8x512xf32>
    %cst_98 = arith.constant dense<0.000000e+00> : vector<1xf32>
    %218 = vector.multi_reduction <add>, %217, %cst_98 [1, 2] : vector<1x8x512xf32> to vector<1xf32>
    %219 = vector.shape_cast %218 : vector<1xf32> to vector<1x1x1xf32>
    %220 = vector.extract %219[0, 0, 0] : f32 from vector<1x1x1xf32>
    %221 = arith.mulf %212, %212 : vector<8x512xf32>
    %222 = vector.shape_cast %221 : vector<8x512xf32> to vector<1x8x512xf32>
    %cst_99 = arith.constant dense<0.000000e+00> : vector<1xf32>
    %223 = vector.multi_reduction <add>, %222, %cst_99 [1, 2] : vector<1x8x512xf32> to vector<1xf32>
    %224 = vector.shape_cast %223 : vector<1xf32> to vector<1x1x1xf32>
    %225 = vector.extract %224[0, 0, 0] : f32 from vector<1x1x1xf32>
    %cst_100 = arith.constant 2.44140625E-4 : f32
    %226 = arith.mulf %220, %cst_100 : f32
    %cst_101 = arith.constant 2.44140625E-4 : f32
    %227 = arith.mulf %225, %cst_101 : f32
    %228 = arith.mulf %226, %226 : f32
    %229 = arith.subf %227, %228 : f32
    %cst_102 = arith.constant 9.99999974E-6 : f32
    %230 = arith.addf %229, %cst_102 : f32
    %231 = math.rsqrt %230 : f32
    %232 = vector.broadcast %231 : f32 to vector<8x1xf32>
    %233 = arith.mulf %214, %232 : vector<8x1xf32>
    %234 = vector.broadcast %226 : f32 to vector<8x1xf32>
    %235 = arith.mulf %234, %233 : vector<8x1xf32>
    %236 = arith.subf %216, %235 : vector<8x1xf32>
    %237 = vector.broadcast %233 : vector<8x1xf32> to vector<8x512xf32>
    %238 = arith.mulf %212, %237 : vector<8x512xf32>
    %239 = vector.broadcast %236 : vector<8x1xf32> to vector<8x512xf32>
    %240 = arith.addf %238, %239 : vector<8x512xf32>
    %cst_103 = arith.constant 0.000000e+00 : f32
    %241 = vector.broadcast %cst_103 : f32 to vector<8x512xf32>
    %242 = arith.maximumf %240, %241 : vector<8x512xf32>
    %c0_104 = arith.constant 0 : index
    %c0_105 = arith.constant 0 : index
    %c0_106 = arith.constant 0 : index
    %243 = vector.load %arg9[%c0_104, %c0_105, %c0_106] : memref<2x8x224xbf16, #tpu.memory_space<vmem>>, vector<1x8x224xbf16>
    %244 = vector.shape_cast %243 : vector<1x8x224xbf16> to vector<8x224xbf16>
    %c0_107 = arith.constant 0 : index
    %c0_108 = arith.constant 0 : index
    %c0_109 = arith.constant 0 : index
    %245 = vector.load %arg10[%c0_107, %c0_108, %c0_109] : memref<2x8x1xf32, #tpu.memory_space<vmem>>, vector<1x8x1xf32>
    %246 = vector.shape_cast %245 : vector<1x8x1xf32> to vector<8x1xf32>
    %cst_110 = arith.constant 0.000000e+00 : f32
    %247 = vector.broadcast %cst_110 : f32 to vector<8x512xf32>
    %c73_i32_111 = arith.constant 73 : i32
    %248 = tpu.dynamic_rotate %242 by %c73_i32_111 dim 1 : vector<8x512xf32>, i32 -> vector<8x512xf32>
    %c0_112 = arith.constant 0 : index
    %c0_113 = arith.constant 0 : index
    %c0_114 = arith.constant 0 : index
    %249 = vector.load %arg2[%c0_112, %c0_113, %c0_114] : memref<27x1x512xf32, #tpu.memory_space<vmem>>, vector<1x1x512xf32>
    %250 = vector.shape_cast %249 : vector<1x1x512xf32> to vector<1x512xf32>
    %251 = vector.broadcast %250 : vector<1x512xf32> to vector<8x512xf32>
    %252 = arith.mulf %248, %251 : vector<8x512xf32>
    %c72_i32_115 = arith.constant 72 : i32
    %253 = tpu.dynamic_rotate %242 by %c72_i32_115 dim 1 : vector<8x512xf32>, i32 -> vector<8x512xf32>
    %c1_116 = arith.constant 1 : index
    %c0_117 = arith.constant 0 : index
    %c0_118 = arith.constant 0 : index
    %254 = vector.load %arg2[%c1_116, %c0_117, %c0_118] : memref<27x1x512xf32, #tpu.memory_space<vmem>>, vector<1x1x512xf32>
    %255 = vector.shape_cast %254 : vector<1x1x512xf32> to vector<1x512xf32>
    %256 = vector.broadcast %255 : vector<1x512xf32> to vector<8x512xf32>
    %257 = arith.mulf %253, %256 : vector<8x512xf32>
    %258 = tpu.concatenate %252, %257 in 0 : vector<8x512xf32>, vector<8x512xf32> -> vector<16x512xf32>
    %259 = arith.truncf %258 : vector<16x512xf32> to vector<16x512xbf16>
    %c0_119 = arith.constant 0 : index
    %c0_120 = arith.constant 0 : index
    %260 = vector.load %arg12[%c0_119, %c0_120] : memref<224x512xbf16, #tpu.memory_space<vmem>>, vector<16x512xbf16>
    tpu.vector_store %arg12[%c0_119, %c0_120], %259 {strides = array<i32>} : memref<224x512xbf16, #tpu.memory_space<vmem>>, vector<16x512xbf16>,
    %c71_i32_121 = arith.constant 71 : i32
    %261 = tpu.dynamic_rotate %242 by %c71_i32_121 dim 1 : vector<8x512xf32>, i32 -> vector<8x512xf32>
    %c2_122 = arith.constant 2 : index
    %c0_123 = arith.constant 0 : index
    %c0_124 = arith.constant 0 : index
    %262 = vector.load %arg2[%c2_122, %c0_123, %c0_124] : memref<27x1x512xf32, #tpu.memory_space<vmem>>, vector<1x1x512xf32>
    %263 = vector.shape_cast %262 : vector<1x1x512xf32> to vector<1x512xf32>
    %264 = vector.broadcast %263 : vector<1x512xf32> to vector<8x512xf32>
    %265 = arith.mulf %261, %264 : vector<8x512xf32>
    %c65_i32_125 = arith.constant 65 : i32
    %266 = tpu.dynamic_rotate %242 by %c65_i32_125 dim 1 : vector<8x512xf32>, i32 -> vector<8x512xf32>
    %c3_126 = arith.constant 3 : index
    %c0_127 = arith.constant 0 : index
    %c0_128 = arith.constant 0 : index
    %267 = vector.load %arg2[%c3_126, %c0_127, %c0_128] : memref<27x1x512xf32, #tpu.memory_space<vmem>>, vector<1x1x512xf32>
    %268 = vector.shape_cast %267 : vector<1x1x512xf32> to vector<1x512xf32>
    %269 = vector.broadcast %268 : vector<1x512xf32> to vector<8x512xf32>
    %270 = arith.mulf %266, %269 : vector<8x512xf32>
    %271 = tpu.concatenate %265, %270 in 0 : vector<8x512xf32>, vector<8x512xf32> -> vector<16x512xf32>
    %272 = arith.truncf %271 : vector<16x512xf32> to vector<16x512xbf16>
    %c16_129 = arith.constant 16 : index
    %c0_130 = arith.constant 0 : index
    %273 = vector.load %arg12[%c16_129, %c0_130] : memref<224x512xbf16, #tpu.memory_space<vmem>>, vector<16x512xbf16>
    tpu.vector_store %arg12[%c16_129, %c0_130], %272 {strides = array<i32>} : memref<224x512xbf16, #tpu.memory_space<vmem>>, vector<16x512xbf16>,
    %c64_i32_131 = arith.constant 64 : i32
    %274 = tpu.dynamic_rotate %242 by %c64_i32_131 dim 1 : vector<8x512xf32>, i32 -> vector<8x512xf32>
    %c4_132 = arith.constant 4 : index
    %c0_133 = arith.constant 0 : index
    %c0_134 = arith.constant 0 : index
    %275 = vector.load %arg2[%c4_132, %c0_133, %c0_134] : memref<27x1x512xf32, #tpu.memory_space<vmem>>, vector<1x1x512xf32>
    %276 = vector.shape_cast %275 : vector<1x1x512xf32> to vector<1x512xf32>
    %277 = vector.broadcast %276 : vector<1x512xf32> to vector<8x512xf32>
    %278 = arith.mulf %274, %277 : vector<8x512xf32>
    %c63_i32_135 = arith.constant 63 : i32
    %279 = tpu.dynamic_rotate %242 by %c63_i32_135 dim 1 : vector<8x512xf32>, i32 -> vector<8x512xf32>
    %c5_136 = arith.constant 5 : index
    %c0_137 = arith.constant 0 : index
    %c0_138 = arith.constant 0 : index
    %280 = vector.load %arg2[%c5_136, %c0_137, %c0_138] : memref<27x1x512xf32, #tpu.memory_space<vmem>>, vector<1x1x512xf32>
    %281 = vector.shape_cast %280 : vector<1x1x512xf32> to vector<1x512xf32>
    %282 = vector.broadcast %281 : vector<1x512xf32> to vector<8x512xf32>
    %283 = arith.mulf %279, %282 : vector<8x512xf32>
    %284 = tpu.concatenate %278, %283 in 0 : vector<8x512xf32>, vector<8x512xf32> -> vector<16x512xf32>
    %285 = arith.truncf %284 : vector<16x512xf32> to vector<16x512xbf16>
    %c32_139 = arith.constant 32 : index
    %c0_140 = arith.constant 0 : index
    %286 = vector.load %arg12[%c32_139, %c0_140] : memref<224x512xbf16, #tpu.memory_space<vmem>>, vector<16x512xbf16>
    tpu.vector_store %arg12[%c32_139, %c0_140], %285 {strides = array<i32>} : memref<224x512xbf16, #tpu.memory_space<vmem>>, vector<16x512xbf16>,
    %c57_i32_141 = arith.constant 57 : i32
    %287 = tpu.dynamic_rotate %242 by %c57_i32_141 dim 1 : vector<8x512xf32>, i32 -> vector<8x512xf32>
    %c6_142 = arith.constant 6 : index
    %c0_143 = arith.constant 0 : index
    %c0_144 = arith.constant 0 : index
    %288 = vector.load %arg2[%c6_142, %c0_143, %c0_144] : memref<27x1x512xf32, #tpu.memory_space<vmem>>, vector<1x1x512xf32>
    %289 = vector.shape_cast %288 : vector<1x1x512xf32> to vector<1x512xf32>
    %290 = vector.broadcast %289 : vector<1x512xf32> to vector<8x512xf32>
    %291 = arith.mulf %287, %290 : vector<8x512xf32>
    %c56_i32_145 = arith.constant 56 : i32
    %292 = tpu.dynamic_rotate %242 by %c56_i32_145 dim 1 : vector<8x512xf32>, i32 -> vector<8x512xf32>
    %c7_146 = arith.constant 7 : index
    %c0_147 = arith.constant 0 : index
    %c0_148 = arith.constant 0 : index
    %293 = vector.load %arg2[%c7_146, %c0_147, %c0_148] : memref<27x1x512xf32, #tpu.memory_space<vmem>>, vector<1x1x512xf32>
    %294 = vector.shape_cast %293 : vector<1x1x512xf32> to vector<1x512xf32>
    %295 = vector.broadcast %294 : vector<1x512xf32> to vector<8x512xf32>
    %296 = arith.mulf %292, %295 : vector<8x512xf32>
    %297 = tpu.concatenate %291, %296 in 0 : vector<8x512xf32>, vector<8x512xf32> -> vector<16x512xf32>
    %298 = arith.truncf %297 : vector<16x512xf32> to vector<16x512xbf16>
    %c48_149 = arith.constant 48 : index
    %c0_150 = arith.constant 0 : index
    %299 = vector.load %arg12[%c48_149, %c0_150] : memref<224x512xbf16, #tpu.memory_space<vmem>>, vector<16x512xbf16>
    tpu.vector_store %arg12[%c48_149, %c0_150], %298 {strides = array<i32>} : memref<224x512xbf16, #tpu.memory_space<vmem>>, vector<16x512xbf16>,
    %c55_i32_151 = arith.constant 55 : i32
    %300 = tpu.dynamic_rotate %242 by %c55_i32_151 dim 1 : vector<8x512xf32>, i32 -> vector<8x512xf32>
    %c8_152 = arith.constant 8 : index
    %c0_153 = arith.constant 0 : index
    %c0_154 = arith.constant 0 : index
    %301 = vector.load %arg2[%c8_152, %c0_153, %c0_154] : memref<27x1x512xf32, #tpu.memory_space<vmem>>, vector<1x1x512xf32>
    %302 = vector.shape_cast %301 : vector<1x1x512xf32> to vector<1x512xf32>
    %303 = vector.broadcast %302 : vector<1x512xf32> to vector<8x512xf32>
    %304 = arith.mulf %300, %303 : vector<8x512xf32>
    %c9_i32_155 = arith.constant 9 : i32
    %305 = tpu.dynamic_rotate %242 by %c9_i32_155 dim 1 : vector<8x512xf32>, i32 -> vector<8x512xf32>
    %c9_156 = arith.constant 9 : index
    %c0_157 = arith.constant 0 : index
    %c0_158 = arith.constant 0 : index
    %306 = vector.load %arg2[%c9_156, %c0_157, %c0_158] : memref<27x1x512xf32, #tpu.memory_space<vmem>>, vector<1x1x512xf32>
    %307 = vector.shape_cast %306 : vector<1x1x512xf32> to vector<1x512xf32>
    %308 = vector.broadcast %307 : vector<1x512xf32> to vector<8x512xf32>
    %309 = arith.mulf %305, %308 : vector<8x512xf32>
    %310 = tpu.concatenate %304, %309 in 0 : vector<8x512xf32>, vector<8x512xf32> -> vector<16x512xf32>
    %311 = arith.truncf %310 : vector<16x512xf32> to vector<16x512xbf16>
    %c64_159 = arith.constant 64 : index
    %c0_160 = arith.constant 0 : index
    %312 = vector.load %arg12[%c64_159, %c0_160] : memref<224x512xbf16, #tpu.memory_space<vmem>>, vector<16x512xbf16>
    tpu.vector_store %arg12[%c64_159, %c0_160], %311 {strides = array<i32>} : memref<224x512xbf16, #tpu.memory_space<vmem>>, vector<16x512xbf16>,
    %c8_i32_161 = arith.constant 8 : i32
    %313 = tpu.dynamic_rotate %242 by %c8_i32_161 dim 1 : vector<8x512xf32>, i32 -> vector<8x512xf32>
    %c10_162 = arith.constant 10 : index
    %c0_163 = arith.constant 0 : index
    %c0_164 = arith.constant 0 : index
    %314 = vector.load %arg2[%c10_162, %c0_163, %c0_164] : memref<27x1x512xf32, #tpu.memory_space<vmem>>, vector<1x1x512xf32>
    %315 = vector.shape_cast %314 : vector<1x1x512xf32> to vector<1x512xf32>
    %316 = vector.broadcast %315 : vector<1x512xf32> to vector<8x512xf32>
    %317 = arith.mulf %313, %316 : vector<8x512xf32>
    %c7_i32_165 = arith.constant 7 : i32
    %318 = tpu.dynamic_rotate %242 by %c7_i32_165 dim 1 : vector<8x512xf32>, i32 -> vector<8x512xf32>
    %c11_166 = arith.constant 11 : index
    %c0_167 = arith.constant 0 : index
    %c0_168 = arith.constant 0 : index
    %319 = vector.load %arg2[%c11_166, %c0_167, %c0_168] : memref<27x1x512xf32, #tpu.memory_space<vmem>>, vector<1x1x512xf32>
    %320 = vector.shape_cast %319 : vector<1x1x512xf32> to vector<1x512xf32>
    %321 = vector.broadcast %320 : vector<1x512xf32> to vector<8x512xf32>
    %322 = arith.mulf %318, %321 : vector<8x512xf32>
    %323 = tpu.concatenate %317, %322 in 0 : vector<8x512xf32>, vector<8x512xf32> -> vector<16x512xf32>
    %324 = arith.truncf %323 : vector<16x512xf32> to vector<16x512xbf16>
    %c80_169 = arith.constant 80 : index
    %c0_170 = arith.constant 0 : index
    %325 = vector.load %arg12[%c80_169, %c0_170] : memref<224x512xbf16, #tpu.memory_space<vmem>>, vector<16x512xbf16>
    tpu.vector_store %arg12[%c80_169, %c0_170], %324 {strides = array<i32>} : memref<224x512xbf16, #tpu.memory_space<vmem>>, vector<16x512xbf16>,
    %c1_i32_171 = arith.constant 1 : i32
    %326 = tpu.dynamic_rotate %242 by %c1_i32_171 dim 1 : vector<8x512xf32>, i32 -> vector<8x512xf32>
    %c12_172 = arith.constant 12 : index
    %c0_173 = arith.constant 0 : index
    %c0_174 = arith.constant 0 : index
    %327 = vector.load %arg2[%c12_172, %c0_173, %c0_174] : memref<27x1x512xf32, #tpu.memory_space<vmem>>, vector<1x1x512xf32>
    %328 = vector.shape_cast %327 : vector<1x1x512xf32> to vector<1x512xf32>
    %329 = vector.broadcast %328 : vector<1x512xf32> to vector<8x512xf32>
    %330 = arith.mulf %326, %329 : vector<8x512xf32>
    %331 = tpu.concatenate %330, %242 in 0 : vector<8x512xf32>, vector<8x512xf32> -> vector<16x512xf32>
    %332 = arith.truncf %331 : vector<16x512xf32> to vector<16x512xbf16>
    %c96_175 = arith.constant 96 : index
    %c0_176 = arith.constant 0 : index
    %333 = vector.load %arg12[%c96_175, %c0_176] : memref<224x512xbf16, #tpu.memory_space<vmem>>, vector<16x512xbf16>
    tpu.vector_store %arg12[%c96_175, %c0_176], %332 {strides = array<i32>} : memref<224x512xbf16, #tpu.memory_space<vmem>>, vector<16x512xbf16>,
    %c511_i32_177 = arith.constant 511 : i32
    %334 = tpu.dynamic_rotate %242 by %c511_i32_177 dim 1 : vector<8x512xf32>, i32 -> vector<8x512xf32>
    %c14_178 = arith.constant 14 : index
    %c0_179 = arith.constant 0 : index
    %c0_180 = arith.constant 0 : index
    %335 = vector.load %arg2[%c14_178, %c0_179, %c0_180] : memref<27x1x512xf32, #tpu.memory_space<vmem>>, vector<1x1x512xf32>
    %336 = vector.shape_cast %335 : vector<1x1x512xf32> to vector<1x512xf32>
    %337 = vector.broadcast %336 : vector<1x512xf32> to vector<8x512xf32>
    %338 = arith.mulf %334, %337 : vector<8x512xf32>
    %c505_i32_181 = arith.constant 505 : i32
    %339 = tpu.dynamic_rotate %242 by %c505_i32_181 dim 1 : vector<8x512xf32>, i32 -> vector<8x512xf32>
    %c15_182 = arith.constant 15 : index
    %c0_183 = arith.constant 0 : index
    %c0_184 = arith.constant 0 : index
    %340 = vector.load %arg2[%c15_182, %c0_183, %c0_184] : memref<27x1x512xf32, #tpu.memory_space<vmem>>, vector<1x1x512xf32>
    %341 = vector.shape_cast %340 : vector<1x1x512xf32> to vector<1x512xf32>
    %342 = vector.broadcast %341 : vector<1x512xf32> to vector<8x512xf32>
    %343 = arith.mulf %339, %342 : vector<8x512xf32>
    %344 = tpu.concatenate %338, %343 in 0 : vector<8x512xf32>, vector<8x512xf32> -> vector<16x512xf32>
    %345 = arith.truncf %344 : vector<16x512xf32> to vector<16x512xbf16>
    %c112_185 = arith.constant 112 : index
    %c0_186 = arith.constant 0 : index
    %346 = vector.load %arg12[%c112_185, %c0_186] : memref<224x512xbf16, #tpu.memory_space<vmem>>, vector<16x512xbf16>
    tpu.vector_store %arg12[%c112_185, %c0_186], %345 {strides = array<i32>} : memref<224x512xbf16, #tpu.memory_space<vmem>>, vector<16x512xbf16>,
    %c504_i32_187 = arith.constant 504 : i32
    %347 = tpu.dynamic_rotate %242 by %c504_i32_187 dim 1 : vector<8x512xf32>, i32 -> vector<8x512xf32>
    %c16_188 = arith.constant 16 : index
    %c0_189 = arith.constant 0 : index
    %c0_190 = arith.constant 0 : index
    %348 = vector.load %arg2[%c16_188, %c0_189, %c0_190] : memref<27x1x512xf32, #tpu.memory_space<vmem>>, vector<1x1x512xf32>
    %349 = vector.shape_cast %348 : vector<1x1x512xf32> to vector<1x512xf32>
    %350 = vector.broadcast %349 : vector<1x512xf32> to vector<8x512xf32>
    %351 = arith.mulf %347, %350 : vector<8x512xf32>
    %c503_i32_191 = arith.constant 503 : i32
    %352 = tpu.dynamic_rotate %242 by %c503_i32_191 dim 1 : vector<8x512xf32>, i32 -> vector<8x512xf32>
    %c17_192 = arith.constant 17 : index
    %c0_193 = arith.constant 0 : index
    %c0_194 = arith.constant 0 : index
    %353 = vector.load %arg2[%c17_192, %c0_193, %c0_194] : memref<27x1x512xf32, #tpu.memory_space<vmem>>, vector<1x1x512xf32>
    %354 = vector.shape_cast %353 : vector<1x1x512xf32> to vector<1x512xf32>
    %355 = vector.broadcast %354 : vector<1x512xf32> to vector<8x512xf32>
    %356 = arith.mulf %352, %355 : vector<8x512xf32>
    %357 = tpu.concatenate %351, %356 in 0 : vector<8x512xf32>, vector<8x512xf32> -> vector<16x512xf32>
    %358 = arith.truncf %357 : vector<16x512xf32> to vector<16x512xbf16>
    %c128_195 = arith.constant 128 : index
    %c0_196 = arith.constant 0 : index
    %359 = vector.load %arg12[%c128_195, %c0_196] : memref<224x512xbf16, #tpu.memory_space<vmem>>, vector<16x512xbf16>
    tpu.vector_store %arg12[%c128_195, %c0_196], %358 {strides = array<i32>} : memref<224x512xbf16, #tpu.memory_space<vmem>>, vector<16x512xbf16>,
    %c457_i32_197 = arith.constant 457 : i32
    %360 = tpu.dynamic_rotate %242 by %c457_i32_197 dim 1 : vector<8x512xf32>, i32 -> vector<8x512xf32>
    %c18_198 = arith.constant 18 : index
    %c0_199 = arith.constant 0 : index
    %c0_200 = arith.constant 0 : index
    %361 = vector.load %arg2[%c18_198, %c0_199, %c0_200] : memref<27x1x512xf32, #tpu.memory_space<vmem>>, vector<1x1x512xf32>
    %362 = vector.shape_cast %361 : vector<1x1x512xf32> to vector<1x512xf32>
    %363 = vector.broadcast %362 : vector<1x512xf32> to vector<8x512xf32>
    %364 = arith.mulf %360, %363 : vector<8x512xf32>
    %c456_i32_201 = arith.constant 456 : i32
    %365 = tpu.dynamic_rotate %242 by %c456_i32_201 dim 1 : vector<8x512xf32>, i32 -> vector<8x512xf32>
    %c19_202 = arith.constant 19 : index
    %c0_203 = arith.constant 0 : index
    %c0_204 = arith.constant 0 : index
    %366 = vector.load %arg2[%c19_202, %c0_203, %c0_204] : memref<27x1x512xf32, #tpu.memory_space<vmem>>, vector<1x1x512xf32>
    %367 = vector.shape_cast %366 : vector<1x1x512xf32> to vector<1x512xf32>
    %368 = vector.broadcast %367 : vector<1x512xf32> to vector<8x512xf32>
    %369 = arith.mulf %365, %368 : vector<8x512xf32>
    %370 = tpu.concatenate %364, %369 in 0 : vector<8x512xf32>, vector<8x512xf32> -> vector<16x512xf32>
    %371 = arith.truncf %370 : vector<16x512xf32> to vector<16x512xbf16>
    %c144_205 = arith.constant 144 : index
    %c0_206 = arith.constant 0 : index
    %372 = vector.load %arg12[%c144_205, %c0_206] : memref<224x512xbf16, #tpu.memory_space<vmem>>, vector<16x512xbf16>
    tpu.vector_store %arg12[%c144_205, %c0_206], %371 {strides = array<i32>} : memref<224x512xbf16, #tpu.memory_space<vmem>>, vector<16x512xbf16>,
    %c455_i32_207 = arith.constant 455 : i32
    %373 = tpu.dynamic_rotate %242 by %c455_i32_207 dim 1 : vector<8x512xf32>, i32 -> vector<8x512xf32>
    %c20_208 = arith.constant 20 : index
    %c0_209 = arith.constant 0 : index
    %c0_210 = arith.constant 0 : index
    %374 = vector.load %arg2[%c20_208, %c0_209, %c0_210] : memref<27x1x512xf32, #tpu.memory_space<vmem>>, vector<1x1x512xf32>
    %375 = vector.shape_cast %374 : vector<1x1x512xf32> to vector<1x512xf32>
    %376 = vector.broadcast %375 : vector<1x512xf32> to vector<8x512xf32>
    %377 = arith.mulf %373, %376 : vector<8x512xf32>
    %c449_i32_211 = arith.constant 449 : i32
    %378 = tpu.dynamic_rotate %242 by %c449_i32_211 dim 1 : vector<8x512xf32>, i32 -> vector<8x512xf32>
    %c21_212 = arith.constant 21 : index
    %c0_213 = arith.constant 0 : index
    %c0_214 = arith.constant 0 : index
    %379 = vector.load %arg2[%c21_212, %c0_213, %c0_214] : memref<27x1x512xf32, #tpu.memory_space<vmem>>, vector<1x1x512xf32>
    %380 = vector.shape_cast %379 : vector<1x1x512xf32> to vector<1x512xf32>
    %381 = vector.broadcast %380 : vector<1x512xf32> to vector<8x512xf32>
    %382 = arith.mulf %378, %381 : vector<8x512xf32>
    %383 = tpu.concatenate %377, %382 in 0 : vector<8x512xf32>, vector<8x512xf32> -> vector<16x512xf32>
    %384 = arith.truncf %383 : vector<16x512xf32> to vector<16x512xbf16>
    %c160_215 = arith.constant 160 : index
    %c0_216 = arith.constant 0 : index
    %385 = vector.load %arg12[%c160_215, %c0_216] : memref<224x512xbf16, #tpu.memory_space<vmem>>, vector<16x512xbf16>
    tpu.vector_store %arg12[%c160_215, %c0_216], %384 {strides = array<i32>} : memref<224x512xbf16, #tpu.memory_space<vmem>>, vector<16x512xbf16>,
    %c448_i32_217 = arith.constant 448 : i32
    %386 = tpu.dynamic_rotate %242 by %c448_i32_217 dim 1 : vector<8x512xf32>, i32 -> vector<8x512xf32>
    %c22_218 = arith.constant 22 : index
    %c0_219 = arith.constant 0 : index
    %c0_220 = arith.constant 0 : index
    %387 = vector.load %arg2[%c22_218, %c0_219, %c0_220] : memref<27x1x512xf32, #tpu.memory_space<vmem>>, vector<1x1x512xf32>
    %388 = vector.shape_cast %387 : vector<1x1x512xf32> to vector<1x512xf32>
    %389 = vector.broadcast %388 : vector<1x512xf32> to vector<8x512xf32>
    %390 = arith.mulf %386, %389 : vector<8x512xf32>
    %c447_i32_221 = arith.constant 447 : i32
    %391 = tpu.dynamic_rotate %242 by %c447_i32_221 dim 1 : vector<8x512xf32>, i32 -> vector<8x512xf32>
    %c23_222 = arith.constant 23 : index
    %c0_223 = arith.constant 0 : index
    %c0_224 = arith.constant 0 : index
    %392 = vector.load %arg2[%c23_222, %c0_223, %c0_224] : memref<27x1x512xf32, #tpu.memory_space<vmem>>, vector<1x1x512xf32>
    %393 = vector.shape_cast %392 : vector<1x1x512xf32> to vector<1x512xf32>
    %394 = vector.broadcast %393 : vector<1x512xf32> to vector<8x512xf32>
    %395 = arith.mulf %391, %394 : vector<8x512xf32>
    %396 = tpu.concatenate %390, %395 in 0 : vector<8x512xf32>, vector<8x512xf32> -> vector<16x512xf32>
    %397 = arith.truncf %396 : vector<16x512xf32> to vector<16x512xbf16>
    %c176_225 = arith.constant 176 : index
    %c0_226 = arith.constant 0 : index
    %398 = vector.load %arg12[%c176_225, %c0_226] : memref<224x512xbf16, #tpu.memory_space<vmem>>, vector<16x512xbf16>
    tpu.vector_store %arg12[%c176_225, %c0_226], %397 {strides = array<i32>} : memref<224x512xbf16, #tpu.memory_space<vmem>>, vector<16x512xbf16>,
    %c441_i32_227 = arith.constant 441 : i32
    %399 = tpu.dynamic_rotate %242 by %c441_i32_227 dim 1 : vector<8x512xf32>, i32 -> vector<8x512xf32>
    %c24_228 = arith.constant 24 : index
    %c0_229 = arith.constant 0 : index
    %c0_230 = arith.constant 0 : index
    %400 = vector.load %arg2[%c24_228, %c0_229, %c0_230] : memref<27x1x512xf32, #tpu.memory_space<vmem>>, vector<1x1x512xf32>
    %401 = vector.shape_cast %400 : vector<1x1x512xf32> to vector<1x512xf32>
    %402 = vector.broadcast %401 : vector<1x512xf32> to vector<8x512xf32>
    %403 = arith.mulf %399, %402 : vector<8x512xf32>
    %c440_i32_231 = arith.constant 440 : i32
    %404 = tpu.dynamic_rotate %242 by %c440_i32_231 dim 1 : vector<8x512xf32>, i32 -> vector<8x512xf32>
    %c25_232 = arith.constant 25 : index
    %c0_233 = arith.constant 0 : index
    %c0_234 = arith.constant 0 : index
    %405 = vector.load %arg2[%c25_232, %c0_233, %c0_234] : memref<27x1x512xf32, #tpu.memory_space<vmem>>, vector<1x1x512xf32>
    %406 = vector.shape_cast %405 : vector<1x1x512xf32> to vector<1x512xf32>
    %407 = vector.broadcast %406 : vector<1x512xf32> to vector<8x512xf32>
    %408 = arith.mulf %404, %407 : vector<8x512xf32>
    %409 = tpu.concatenate %403, %408 in 0 : vector<8x512xf32>, vector<8x512xf32> -> vector<16x512xf32>
    %410 = arith.truncf %409 : vector<16x512xf32> to vector<16x512xbf16>
    %c192_235 = arith.constant 192 : index
    %c0_236 = arith.constant 0 : index
    %411 = vector.load %arg12[%c192_235, %c0_236] : memref<224x512xbf16, #tpu.memory_space<vmem>>, vector<16x512xbf16>
    tpu.vector_store %arg12[%c192_235, %c0_236], %410 {strides = array<i32>} : memref<224x512xbf16, #tpu.memory_space<vmem>>, vector<16x512xbf16>,
    %c439_i32_237 = arith.constant 439 : i32
    %412 = tpu.dynamic_rotate %242 by %c439_i32_237 dim 1 : vector<8x512xf32>, i32 -> vector<8x512xf32>
    %c26_238 = arith.constant 26 : index
    %c0_239 = arith.constant 0 : index
    %c0_240 = arith.constant 0 : index
    %413 = vector.load %arg2[%c26_238, %c0_239, %c0_240] : memref<27x1x512xf32, #tpu.memory_space<vmem>>, vector<1x1x512xf32>
    %414 = vector.shape_cast %413 : vector<1x1x512xf32> to vector<1x512xf32>
    %415 = vector.broadcast %414 : vector<1x512xf32> to vector<8x512xf32>
    %416 = arith.mulf %412, %415 : vector<8x512xf32>
    %417 = tpu.concatenate %416, %247 in 0 : vector<8x512xf32>, vector<8x512xf32> -> vector<16x512xf32>
    %418 = arith.truncf %417 : vector<16x512xf32> to vector<16x512xbf16>
    %c208_241 = arith.constant 208 : index
    %c0_242 = arith.constant 0 : index
    %419 = vector.load %arg12[%c208_241, %c0_242] : memref<224x512xbf16, #tpu.memory_space<vmem>>, vector<16x512xbf16>
    tpu.vector_store %arg12[%c208_241, %c0_242], %418 {strides = array<i32>} : memref<224x512xbf16, #tpu.memory_space<vmem>>, vector<16x512xbf16>,
    %c0_243 = arith.constant 0 : index
    %c0_244 = arith.constant 0 : index
    %420 = vector.load %arg12[%c0_243, %c0_244] : memref<224x512xbf16, #tpu.memory_space<vmem>>, vector<224x512xbf16>
    %cst_245 = arith.constant dense<0.000000e+00> : vector<8x512xf32>
    %421 = tpu.matmul %244, %420, %cst_245 {dimension_numbers = #tpu.dot_dimension_numbers<[1], [0], [0], [1], [0, 0, 1, 1], [], []>} : vector<8x224xbf16>, vector<224x512xbf16>, vector<8x512xf32> -> vector<8x512xf32>
    %422 = vector.broadcast %246 : vector<8x1xf32> to vector<8x512xf32>
    %423 = arith.addf %421, %422 : vector<8x512xf32>
    %424 = arith.addf %1, %423 : vector<8x512xf32>
    %c1_246 = arith.constant 1 : index
    %c0_247 = arith.constant 0 : index
    %c0_248 = arith.constant 0 : index
    %425 = vector.load %arg3[%c1_246, %c0_247, %c0_248] : memref<2x8x1xf32, #tpu.memory_space<vmem>>, vector<1x8x1xf32>
    %426 = vector.shape_cast %425 : vector<1x8x1xf32> to vector<8x1xf32>
    %c1_249 = arith.constant 1 : index
    %c0_250 = arith.constant 0 : index
    %c0_251 = arith.constant 0 : index
    %427 = vector.load %arg4[%c1_249, %c0_250, %c0_251] : memref<2x8x1xf32, #tpu.memory_space<vmem>>, vector<1x8x1xf32>
    %428 = vector.shape_cast %427 : vector<1x8x1xf32> to vector<8x1xf32>
    %429 = vector.shape_cast %424 : vector<8x512xf32> to vector<1x8x512xf32>
    %cst_252 = arith.constant dense<0.000000e+00> : vector<1xf32>
    %430 = vector.multi_reduction <add>, %429, %cst_252 [1, 2] : vector<1x8x512xf32> to vector<1xf32>
    %431 = vector.shape_cast %430 : vector<1xf32> to vector<1x1x1xf32>
    %432 = vector.extract %431[0, 0, 0] : f32 from vector<1x1x1xf32>
    %433 = arith.mulf %424, %424 : vector<8x512xf32>
    %434 = vector.shape_cast %433 : vector<8x512xf32> to vector<1x8x512xf32>
    %cst_253 = arith.constant dense<0.000000e+00> : vector<1xf32>
    %435 = vector.multi_reduction <add>, %434, %cst_253 [1, 2] : vector<1x8x512xf32> to vector<1xf32>
    %436 = vector.shape_cast %435 : vector<1xf32> to vector<1x1x1xf32>
    %437 = vector.extract %436[0, 0, 0] : f32 from vector<1x1x1xf32>
    %cst_254 = arith.constant 2.44140625E-4 : f32
    %438 = arith.mulf %432, %cst_254 : f32
    %cst_255 = arith.constant 2.44140625E-4 : f32
    %439 = arith.mulf %437, %cst_255 : f32
    %440 = arith.mulf %438, %438 : f32
    %441 = arith.subf %439, %440 : f32
    %cst_256 = arith.constant 9.99999974E-6 : f32
    %442 = arith.addf %441, %cst_256 : f32
    %443 = math.rsqrt %442 : f32
    %444 = vector.broadcast %443 : f32 to vector<8x1xf32>
    %445 = arith.mulf %426, %444 : vector<8x1xf32>
    %446 = vector.broadcast %438 : f32 to vector<8x1xf32>
    %447 = arith.mulf %446, %445 : vector<8x1xf32>
    %448 = arith.subf %428, %447 : vector<8x1xf32>
    %449 = vector.broadcast %445 : vector<8x1xf32> to vector<8x512xf32>
    %450 = arith.mulf %424, %449 : vector<8x512xf32>
    %451 = vector.broadcast %448 : vector<8x1xf32> to vector<8x512xf32>
    %452 = arith.addf %450, %451 : vector<8x512xf32>
    %cst_257 = arith.constant 0.000000e+00 : f32
    %453 = vector.broadcast %cst_257 : f32 to vector<8x512xf32>
    %454 = arith.maximumf %452, %453 : vector<8x512xf32>
    %c1_258 = arith.constant 1 : index
    %c0_259 = arith.constant 0 : index
    %c0_260 = arith.constant 0 : index
    %455 = vector.load %arg5[%c1_258, %c0_259, %c0_260] : memref<2x8x224xbf16, #tpu.memory_space<vmem>>, vector<1x8x224xbf16>
    %456 = vector.shape_cast %455 : vector<1x8x224xbf16> to vector<8x224xbf16>
    %c1_261 = arith.constant 1 : index
    %c0_262 = arith.constant 0 : index
    %c0_263 = arith.constant 0 : index
    %457 = vector.load %arg6[%c1_261, %c0_262, %c0_263] : memref<2x8x1xf32, #tpu.memory_space<vmem>>, vector<1x8x1xf32>
    %458 = vector.shape_cast %457 : vector<1x8x1xf32> to vector<8x1xf32>
    %cst_264 = arith.constant 0.000000e+00 : f32
    %459 = vector.broadcast %cst_264 : f32 to vector<8x512xf32>
    %c73_i32_265 = arith.constant 73 : i32
    %460 = tpu.dynamic_rotate %454 by %c73_i32_265 dim 1 : vector<8x512xf32>, i32 -> vector<8x512xf32>
    %c0_266 = arith.constant 0 : index
    %c0_267 = arith.constant 0 : index
    %c0_268 = arith.constant 0 : index
    %461 = vector.load %arg2[%c0_266, %c0_267, %c0_268] : memref<27x1x512xf32, #tpu.memory_space<vmem>>, vector<1x1x512xf32>
    %462 = vector.shape_cast %461 : vector<1x1x512xf32> to vector<1x512xf32>
    %463 = vector.broadcast %462 : vector<1x512xf32> to vector<8x512xf32>
    %464 = arith.mulf %460, %463 : vector<8x512xf32>
    %c72_i32_269 = arith.constant 72 : i32
    %465 = tpu.dynamic_rotate %454 by %c72_i32_269 dim 1 : vector<8x512xf32>, i32 -> vector<8x512xf32>
    %c1_270 = arith.constant 1 : index
    %c0_271 = arith.constant 0 : index
    %c0_272 = arith.constant 0 : index
    %466 = vector.load %arg2[%c1_270, %c0_271, %c0_272] : memref<27x1x512xf32, #tpu.memory_space<vmem>>, vector<1x1x512xf32>
    %467 = vector.shape_cast %466 : vector<1x1x512xf32> to vector<1x512xf32>
    %468 = vector.broadcast %467 : vector<1x512xf32> to vector<8x512xf32>
    %469 = arith.mulf %465, %468 : vector<8x512xf32>
    %470 = tpu.concatenate %464, %469 in 0 : vector<8x512xf32>, vector<8x512xf32> -> vector<16x512xf32>
    %471 = arith.truncf %470 : vector<16x512xf32> to vector<16x512xbf16>
    %c0_273 = arith.constant 0 : index
    %c0_274 = arith.constant 0 : index
    %472 = vector.load %arg12[%c0_273, %c0_274] : memref<224x512xbf16, #tpu.memory_space<vmem>>, vector<16x512xbf16>
    tpu.vector_store %arg12[%c0_273, %c0_274], %471 {strides = array<i32>} : memref<224x512xbf16, #tpu.memory_space<vmem>>, vector<16x512xbf16>,
    %c71_i32_275 = arith.constant 71 : i32
    %473 = tpu.dynamic_rotate %454 by %c71_i32_275 dim 1 : vector<8x512xf32>, i32 -> vector<8x512xf32>
    %c2_276 = arith.constant 2 : index
    %c0_277 = arith.constant 0 : index
    %c0_278 = arith.constant 0 : index
    %474 = vector.load %arg2[%c2_276, %c0_277, %c0_278] : memref<27x1x512xf32, #tpu.memory_space<vmem>>, vector<1x1x512xf32>
    %475 = vector.shape_cast %474 : vector<1x1x512xf32> to vector<1x512xf32>
    %476 = vector.broadcast %475 : vector<1x512xf32> to vector<8x512xf32>
    %477 = arith.mulf %473, %476 : vector<8x512xf32>
    %c65_i32_279 = arith.constant 65 : i32
    %478 = tpu.dynamic_rotate %454 by %c65_i32_279 dim 1 : vector<8x512xf32>, i32 -> vector<8x512xf32>
    %c3_280 = arith.constant 3 : index
    %c0_281 = arith.constant 0 : index
    %c0_282 = arith.constant 0 : index
    %479 = vector.load %arg2[%c3_280, %c0_281, %c0_282] : memref<27x1x512xf32, #tpu.memory_space<vmem>>, vector<1x1x512xf32>
    %480 = vector.shape_cast %479 : vector<1x1x512xf32> to vector<1x512xf32>
    %481 = vector.broadcast %480 : vector<1x512xf32> to vector<8x512xf32>
    %482 = arith.mulf %478, %481 : vector<8x512xf32>
    %483 = tpu.concatenate %477, %482 in 0 : vector<8x512xf32>, vector<8x512xf32> -> vector<16x512xf32>
    %484 = arith.truncf %483 : vector<16x512xf32> to vector<16x512xbf16>
    %c16_283 = arith.constant 16 : index
    %c0_284 = arith.constant 0 : index
    %485 = vector.load %arg12[%c16_283, %c0_284] : memref<224x512xbf16, #tpu.memory_space<vmem>>, vector<16x512xbf16>
    tpu.vector_store %arg12[%c16_283, %c0_284], %484 {strides = array<i32>} : memref<224x512xbf16, #tpu.memory_space<vmem>>, vector<16x512xbf16>,
    %c64_i32_285 = arith.constant 64 : i32
    %486 = tpu.dynamic_rotate %454 by %c64_i32_285 dim 1 : vector<8x512xf32>, i32 -> vector<8x512xf32>
    %c4_286 = arith.constant 4 : index
    %c0_287 = arith.constant 0 : index
    %c0_288 = arith.constant 0 : index
    %487 = vector.load %arg2[%c4_286, %c0_287, %c0_288] : memref<27x1x512xf32, #tpu.memory_space<vmem>>, vector<1x1x512xf32>
    %488 = vector.shape_cast %487 : vector<1x1x512xf32> to vector<1x512xf32>
    %489 = vector.broadcast %488 : vector<1x512xf32> to vector<8x512xf32>
    %490 = arith.mulf %486, %489 : vector<8x512xf32>
    %c63_i32_289 = arith.constant 63 : i32
    %491 = tpu.dynamic_rotate %454 by %c63_i32_289 dim 1 : vector<8x512xf32>, i32 -> vector<8x512xf32>
    %c5_290 = arith.constant 5 : index
    %c0_291 = arith.constant 0 : index
    %c0_292 = arith.constant 0 : index
    %492 = vector.load %arg2[%c5_290, %c0_291, %c0_292] : memref<27x1x512xf32, #tpu.memory_space<vmem>>, vector<1x1x512xf32>
    %493 = vector.shape_cast %492 : vector<1x1x512xf32> to vector<1x512xf32>
    %494 = vector.broadcast %493 : vector<1x512xf32> to vector<8x512xf32>
    %495 = arith.mulf %491, %494 : vector<8x512xf32>
    %496 = tpu.concatenate %490, %495 in 0 : vector<8x512xf32>, vector<8x512xf32> -> vector<16x512xf32>
    %497 = arith.truncf %496 : vector<16x512xf32> to vector<16x512xbf16>
    %c32_293 = arith.constant 32 : index
    %c0_294 = arith.constant 0 : index
    %498 = vector.load %arg12[%c32_293, %c0_294] : memref<224x512xbf16, #tpu.memory_space<vmem>>, vector<16x512xbf16>
    tpu.vector_store %arg12[%c32_293, %c0_294], %497 {strides = array<i32>} : memref<224x512xbf16, #tpu.memory_space<vmem>>, vector<16x512xbf16>,
    %c57_i32_295 = arith.constant 57 : i32
    %499 = tpu.dynamic_rotate %454 by %c57_i32_295 dim 1 : vector<8x512xf32>, i32 -> vector<8x512xf32>
    %c6_296 = arith.constant 6 : index
    %c0_297 = arith.constant 0 : index
    %c0_298 = arith.constant 0 : index
    %500 = vector.load %arg2[%c6_296, %c0_297, %c0_298] : memref<27x1x512xf32, #tpu.memory_space<vmem>>, vector<1x1x512xf32>
    %501 = vector.shape_cast %500 : vector<1x1x512xf32> to vector<1x512xf32>
    %502 = vector.broadcast %501 : vector<1x512xf32> to vector<8x512xf32>
    %503 = arith.mulf %499, %502 : vector<8x512xf32>
    %c56_i32_299 = arith.constant 56 : i32
    %504 = tpu.dynamic_rotate %454 by %c56_i32_299 dim 1 : vector<8x512xf32>, i32 -> vector<8x512xf32>
    %c7_300 = arith.constant 7 : index
    %c0_301 = arith.constant 0 : index
    %c0_302 = arith.constant 0 : index
    %505 = vector.load %arg2[%c7_300, %c0_301, %c0_302] : memref<27x1x512xf32, #tpu.memory_space<vmem>>, vector<1x1x512xf32>
    %506 = vector.shape_cast %505 : vector<1x1x512xf32> to vector<1x512xf32>
    %507 = vector.broadcast %506 : vector<1x512xf32> to vector<8x512xf32>
    %508 = arith.mulf %504, %507 : vector<8x512xf32>
    %509 = tpu.concatenate %503, %508 in 0 : vector<8x512xf32>, vector<8x512xf32> -> vector<16x512xf32>
    %510 = arith.truncf %509 : vector<16x512xf32> to vector<16x512xbf16>
    %c48_303 = arith.constant 48 : index
    %c0_304 = arith.constant 0 : index
    %511 = vector.load %arg12[%c48_303, %c0_304] : memref<224x512xbf16, #tpu.memory_space<vmem>>, vector<16x512xbf16>
    tpu.vector_store %arg12[%c48_303, %c0_304], %510 {strides = array<i32>} : memref<224x512xbf16, #tpu.memory_space<vmem>>, vector<16x512xbf16>,
    %c55_i32_305 = arith.constant 55 : i32
    %512 = tpu.dynamic_rotate %454 by %c55_i32_305 dim 1 : vector<8x512xf32>, i32 -> vector<8x512xf32>
    %c8_306 = arith.constant 8 : index
    %c0_307 = arith.constant 0 : index
    %c0_308 = arith.constant 0 : index
    %513 = vector.load %arg2[%c8_306, %c0_307, %c0_308] : memref<27x1x512xf32, #tpu.memory_space<vmem>>, vector<1x1x512xf32>
    %514 = vector.shape_cast %513 : vector<1x1x512xf32> to vector<1x512xf32>
    %515 = vector.broadcast %514 : vector<1x512xf32> to vector<8x512xf32>
    %516 = arith.mulf %512, %515 : vector<8x512xf32>
    %c9_i32_309 = arith.constant 9 : i32
    %517 = tpu.dynamic_rotate %454 by %c9_i32_309 dim 1 : vector<8x512xf32>, i32 -> vector<8x512xf32>
    %c9_310 = arith.constant 9 : index
    %c0_311 = arith.constant 0 : index
    %c0_312 = arith.constant 0 : index
    %518 = vector.load %arg2[%c9_310, %c0_311, %c0_312] : memref<27x1x512xf32, #tpu.memory_space<vmem>>, vector<1x1x512xf32>
    %519 = vector.shape_cast %518 : vector<1x1x512xf32> to vector<1x512xf32>
    %520 = vector.broadcast %519 : vector<1x512xf32> to vector<8x512xf32>
    %521 = arith.mulf %517, %520 : vector<8x512xf32>
    %522 = tpu.concatenate %516, %521 in 0 : vector<8x512xf32>, vector<8x512xf32> -> vector<16x512xf32>
    %523 = arith.truncf %522 : vector<16x512xf32> to vector<16x512xbf16>
    %c64_313 = arith.constant 64 : index
    %c0_314 = arith.constant 0 : index
    %524 = vector.load %arg12[%c64_313, %c0_314] : memref<224x512xbf16, #tpu.memory_space<vmem>>, vector<16x512xbf16>
    tpu.vector_store %arg12[%c64_313, %c0_314], %523 {strides = array<i32>} : memref<224x512xbf16, #tpu.memory_space<vmem>>, vector<16x512xbf16>,
    %c8_i32_315 = arith.constant 8 : i32
    %525 = tpu.dynamic_rotate %454 by %c8_i32_315 dim 1 : vector<8x512xf32>, i32 -> vector<8x512xf32>
    %c10_316 = arith.constant 10 : index
    %c0_317 = arith.constant 0 : index
    %c0_318 = arith.constant 0 : index
    %526 = vector.load %arg2[%c10_316, %c0_317, %c0_318] : memref<27x1x512xf32, #tpu.memory_space<vmem>>, vector<1x1x512xf32>
    %527 = vector.shape_cast %526 : vector<1x1x512xf32> to vector<1x512xf32>
    %528 = vector.broadcast %527 : vector<1x512xf32> to vector<8x512xf32>
    %529 = arith.mulf %525, %528 : vector<8x512xf32>
    %c7_i32_319 = arith.constant 7 : i32
    %530 = tpu.dynamic_rotate %454 by %c7_i32_319 dim 1 : vector<8x512xf32>, i32 -> vector<8x512xf32>
    %c11_320 = arith.constant 11 : index
    %c0_321 = arith.constant 0 : index
    %c0_322 = arith.constant 0 : index
    %531 = vector.load %arg2[%c11_320, %c0_321, %c0_322] : memref<27x1x512xf32, #tpu.memory_space<vmem>>, vector<1x1x512xf32>
    %532 = vector.shape_cast %531 : vector<1x1x512xf32> to vector<1x512xf32>
    %533 = vector.broadcast %532 : vector<1x512xf32> to vector<8x512xf32>
    %534 = arith.mulf %530, %533 : vector<8x512xf32>
    %535 = tpu.concatenate %529, %534 in 0 : vector<8x512xf32>, vector<8x512xf32> -> vector<16x512xf32>
    %536 = arith.truncf %535 : vector<16x512xf32> to vector<16x512xbf16>
    %c80_323 = arith.constant 80 : index
    %c0_324 = arith.constant 0 : index
    %537 = vector.load %arg12[%c80_323, %c0_324] : memref<224x512xbf16, #tpu.memory_space<vmem>>, vector<16x512xbf16>
    tpu.vector_store %arg12[%c80_323, %c0_324], %536 {strides = array<i32>} : memref<224x512xbf16, #tpu.memory_space<vmem>>, vector<16x512xbf16>,
    %c1_i32_325 = arith.constant 1 : i32
    %538 = tpu.dynamic_rotate %454 by %c1_i32_325 dim 1 : vector<8x512xf32>, i32 -> vector<8x512xf32>
    %c12_326 = arith.constant 12 : index
    %c0_327 = arith.constant 0 : index
    %c0_328 = arith.constant 0 : index
    %539 = vector.load %arg2[%c12_326, %c0_327, %c0_328] : memref<27x1x512xf32, #tpu.memory_space<vmem>>, vector<1x1x512xf32>
    %540 = vector.shape_cast %539 : vector<1x1x512xf32> to vector<1x512xf32>
    %541 = vector.broadcast %540 : vector<1x512xf32> to vector<8x512xf32>
    %542 = arith.mulf %538, %541 : vector<8x512xf32>
    %543 = tpu.concatenate %542, %454 in 0 : vector<8x512xf32>, vector<8x512xf32> -> vector<16x512xf32>
    %544 = arith.truncf %543 : vector<16x512xf32> to vector<16x512xbf16>
    %c96_329 = arith.constant 96 : index
    %c0_330 = arith.constant 0 : index
    %545 = vector.load %arg12[%c96_329, %c0_330] : memref<224x512xbf16, #tpu.memory_space<vmem>>, vector<16x512xbf16>
    tpu.vector_store %arg12[%c96_329, %c0_330], %544 {strides = array<i32>} : memref<224x512xbf16, #tpu.memory_space<vmem>>, vector<16x512xbf16>,
    %c511_i32_331 = arith.constant 511 : i32
    %546 = tpu.dynamic_rotate %454 by %c511_i32_331 dim 1 : vector<8x512xf32>, i32 -> vector<8x512xf32>
    %c14_332 = arith.constant 14 : index
    %c0_333 = arith.constant 0 : index
    %c0_334 = arith.constant 0 : index
    %547 = vector.load %arg2[%c14_332, %c0_333, %c0_334] : memref<27x1x512xf32, #tpu.memory_space<vmem>>, vector<1x1x512xf32>
    %548 = vector.shape_cast %547 : vector<1x1x512xf32> to vector<1x512xf32>
    %549 = vector.broadcast %548 : vector<1x512xf32> to vector<8x512xf32>
    %550 = arith.mulf %546, %549 : vector<8x512xf32>
    %c505_i32_335 = arith.constant 505 : i32
    %551 = tpu.dynamic_rotate %454 by %c505_i32_335 dim 1 : vector<8x512xf32>, i32 -> vector<8x512xf32>
    %c15_336 = arith.constant 15 : index
    %c0_337 = arith.constant 0 : index
    %c0_338 = arith.constant 0 : index
    %552 = vector.load %arg2[%c15_336, %c0_337, %c0_338] : memref<27x1x512xf32, #tpu.memory_space<vmem>>, vector<1x1x512xf32>
    %553 = vector.shape_cast %552 : vector<1x1x512xf32> to vector<1x512xf32>
    %554 = vector.broadcast %553 : vector<1x512xf32> to vector<8x512xf32>
    %555 = arith.mulf %551, %554 : vector<8x512xf32>
    %556 = tpu.concatenate %550, %555 in 0 : vector<8x512xf32>, vector<8x512xf32> -> vector<16x512xf32>
    %557 = arith.truncf %556 : vector<16x512xf32> to vector<16x512xbf16>
    %c112_339 = arith.constant 112 : index
    %c0_340 = arith.constant 0 : index
    %558 = vector.load %arg12[%c112_339, %c0_340] : memref<224x512xbf16, #tpu.memory_space<vmem>>, vector<16x512xbf16>
    tpu.vector_store %arg12[%c112_339, %c0_340], %557 {strides = array<i32>} : memref<224x512xbf16, #tpu.memory_space<vmem>>, vector<16x512xbf16>,
    %c504_i32_341 = arith.constant 504 : i32
    %559 = tpu.dynamic_rotate %454 by %c504_i32_341 dim 1 : vector<8x512xf32>, i32 -> vector<8x512xf32>
    %c16_342 = arith.constant 16 : index
    %c0_343 = arith.constant 0 : index
    %c0_344 = arith.constant 0 : index
    %560 = vector.load %arg2[%c16_342, %c0_343, %c0_344] : memref<27x1x512xf32, #tpu.memory_space<vmem>>, vector<1x1x512xf32>
    %561 = vector.shape_cast %560 : vector<1x1x512xf32> to vector<1x512xf32>
    %562 = vector.broadcast %561 : vector<1x512xf32> to vector<8x512xf32>
    %563 = arith.mulf %559, %562 : vector<8x512xf32>
    %c503_i32_345 = arith.constant 503 : i32
    %564 = tpu.dynamic_rotate %454 by %c503_i32_345 dim 1 : vector<8x512xf32>, i32 -> vector<8x512xf32>
    %c17_346 = arith.constant 17 : index
    %c0_347 = arith.constant 0 : index
    %c0_348 = arith.constant 0 : index
    %565 = vector.load %arg2[%c17_346, %c0_347, %c0_348] : memref<27x1x512xf32, #tpu.memory_space<vmem>>, vector<1x1x512xf32>
    %566 = vector.shape_cast %565 : vector<1x1x512xf32> to vector<1x512xf32>
    %567 = vector.broadcast %566 : vector<1x512xf32> to vector<8x512xf32>
    %568 = arith.mulf %564, %567 : vector<8x512xf32>
    %569 = tpu.concatenate %563, %568 in 0 : vector<8x512xf32>, vector<8x512xf32> -> vector<16x512xf32>
    %570 = arith.truncf %569 : vector<16x512xf32> to vector<16x512xbf16>
    %c128_349 = arith.constant 128 : index
    %c0_350 = arith.constant 0 : index
    %571 = vector.load %arg12[%c128_349, %c0_350] : memref<224x512xbf16, #tpu.memory_space<vmem>>, vector<16x512xbf16>
    tpu.vector_store %arg12[%c128_349, %c0_350], %570 {strides = array<i32>} : memref<224x512xbf16, #tpu.memory_space<vmem>>, vector<16x512xbf16>,
    %c457_i32_351 = arith.constant 457 : i32
    %572 = tpu.dynamic_rotate %454 by %c457_i32_351 dim 1 : vector<8x512xf32>, i32 -> vector<8x512xf32>
    %c18_352 = arith.constant 18 : index
    %c0_353 = arith.constant 0 : index
    %c0_354 = arith.constant 0 : index
    %573 = vector.load %arg2[%c18_352, %c0_353, %c0_354] : memref<27x1x512xf32, #tpu.memory_space<vmem>>, vector<1x1x512xf32>
    %574 = vector.shape_cast %573 : vector<1x1x512xf32> to vector<1x512xf32>
    %575 = vector.broadcast %574 : vector<1x512xf32> to vector<8x512xf32>
    %576 = arith.mulf %572, %575 : vector<8x512xf32>
    %c456_i32_355 = arith.constant 456 : i32
    %577 = tpu.dynamic_rotate %454 by %c456_i32_355 dim 1 : vector<8x512xf32>, i32 -> vector<8x512xf32>
    %c19_356 = arith.constant 19 : index
    %c0_357 = arith.constant 0 : index
    %c0_358 = arith.constant 0 : index
    %578 = vector.load %arg2[%c19_356, %c0_357, %c0_358] : memref<27x1x512xf32, #tpu.memory_space<vmem>>, vector<1x1x512xf32>
    %579 = vector.shape_cast %578 : vector<1x1x512xf32> to vector<1x512xf32>
    %580 = vector.broadcast %579 : vector<1x512xf32> to vector<8x512xf32>
    %581 = arith.mulf %577, %580 : vector<8x512xf32>
    %582 = tpu.concatenate %576, %581 in 0 : vector<8x512xf32>, vector<8x512xf32> -> vector<16x512xf32>
    %583 = arith.truncf %582 : vector<16x512xf32> to vector<16x512xbf16>
    %c144_359 = arith.constant 144 : index
    %c0_360 = arith.constant 0 : index
    %584 = vector.load %arg12[%c144_359, %c0_360] : memref<224x512xbf16, #tpu.memory_space<vmem>>, vector<16x512xbf16>
    tpu.vector_store %arg12[%c144_359, %c0_360], %583 {strides = array<i32>} : memref<224x512xbf16, #tpu.memory_space<vmem>>, vector<16x512xbf16>,
    %c455_i32_361 = arith.constant 455 : i32
    %585 = tpu.dynamic_rotate %454 by %c455_i32_361 dim 1 : vector<8x512xf32>, i32 -> vector<8x512xf32>
    %c20_362 = arith.constant 20 : index
    %c0_363 = arith.constant 0 : index
    %c0_364 = arith.constant 0 : index
    %586 = vector.load %arg2[%c20_362, %c0_363, %c0_364] : memref<27x1x512xf32, #tpu.memory_space<vmem>>, vector<1x1x512xf32>
    %587 = vector.shape_cast %586 : vector<1x1x512xf32> to vector<1x512xf32>
    %588 = vector.broadcast %587 : vector<1x512xf32> to vector<8x512xf32>
    %589 = arith.mulf %585, %588 : vector<8x512xf32>
    %c449_i32_365 = arith.constant 449 : i32
    %590 = tpu.dynamic_rotate %454 by %c449_i32_365 dim 1 : vector<8x512xf32>, i32 -> vector<8x512xf32>
    %c21_366 = arith.constant 21 : index
    %c0_367 = arith.constant 0 : index
    %c0_368 = arith.constant 0 : index
    %591 = vector.load %arg2[%c21_366, %c0_367, %c0_368] : memref<27x1x512xf32, #tpu.memory_space<vmem>>, vector<1x1x512xf32>
    %592 = vector.shape_cast %591 : vector<1x1x512xf32> to vector<1x512xf32>
    %593 = vector.broadcast %592 : vector<1x512xf32> to vector<8x512xf32>
    %594 = arith.mulf %590, %593 : vector<8x512xf32>
    %595 = tpu.concatenate %589, %594 in 0 : vector<8x512xf32>, vector<8x512xf32> -> vector<16x512xf32>
    %596 = arith.truncf %595 : vector<16x512xf32> to vector<16x512xbf16>
    %c160_369 = arith.constant 160 : index
    %c0_370 = arith.constant 0 : index
    %597 = vector.load %arg12[%c160_369, %c0_370] : memref<224x512xbf16, #tpu.memory_space<vmem>>, vector<16x512xbf16>
    tpu.vector_store %arg12[%c160_369, %c0_370], %596 {strides = array<i32>} : memref<224x512xbf16, #tpu.memory_space<vmem>>, vector<16x512xbf16>,
    %c448_i32_371 = arith.constant 448 : i32
    %598 = tpu.dynamic_rotate %454 by %c448_i32_371 dim 1 : vector<8x512xf32>, i32 -> vector<8x512xf32>
    %c22_372 = arith.constant 22 : index
    %c0_373 = arith.constant 0 : index
    %c0_374 = arith.constant 0 : index
    %599 = vector.load %arg2[%c22_372, %c0_373, %c0_374] : memref<27x1x512xf32, #tpu.memory_space<vmem>>, vector<1x1x512xf32>
    %600 = vector.shape_cast %599 : vector<1x1x512xf32> to vector<1x512xf32>
    %601 = vector.broadcast %600 : vector<1x512xf32> to vector<8x512xf32>
    %602 = arith.mulf %598, %601 : vector<8x512xf32>
    %c447_i32_375 = arith.constant 447 : i32
    %603 = tpu.dynamic_rotate %454 by %c447_i32_375 dim 1 : vector<8x512xf32>, i32 -> vector<8x512xf32>
    %c23_376 = arith.constant 23 : index
    %c0_377 = arith.constant 0 : index
    %c0_378 = arith.constant 0 : index
    %604 = vector.load %arg2[%c23_376, %c0_377, %c0_378] : memref<27x1x512xf32, #tpu.memory_space<vmem>>, vector<1x1x512xf32>
    %605 = vector.shape_cast %604 : vector<1x1x512xf32> to vector<1x512xf32>
    %606 = vector.broadcast %605 : vector<1x512xf32> to vector<8x512xf32>
    %607 = arith.mulf %603, %606 : vector<8x512xf32>
    %608 = tpu.concatenate %602, %607 in 0 : vector<8x512xf32>, vector<8x512xf32> -> vector<16x512xf32>
    %609 = arith.truncf %608 : vector<16x512xf32> to vector<16x512xbf16>
    %c176_379 = arith.constant 176 : index
    %c0_380 = arith.constant 0 : index
    %610 = vector.load %arg12[%c176_379, %c0_380] : memref<224x512xbf16, #tpu.memory_space<vmem>>, vector<16x512xbf16>
    tpu.vector_store %arg12[%c176_379, %c0_380], %609 {strides = array<i32>} : memref<224x512xbf16, #tpu.memory_space<vmem>>, vector<16x512xbf16>,
    %c441_i32_381 = arith.constant 441 : i32
    %611 = tpu.dynamic_rotate %454 by %c441_i32_381 dim 1 : vector<8x512xf32>, i32 -> vector<8x512xf32>
    %c24_382 = arith.constant 24 : index
    %c0_383 = arith.constant 0 : index
    %c0_384 = arith.constant 0 : index
    %612 = vector.load %arg2[%c24_382, %c0_383, %c0_384] : memref<27x1x512xf32, #tpu.memory_space<vmem>>, vector<1x1x512xf32>
    %613 = vector.shape_cast %612 : vector<1x1x512xf32> to vector<1x512xf32>
    %614 = vector.broadcast %613 : vector<1x512xf32> to vector<8x512xf32>
    %615 = arith.mulf %611, %614 : vector<8x512xf32>
    %c440_i32_385 = arith.constant 440 : i32
    %616 = tpu.dynamic_rotate %454 by %c440_i32_385 dim 1 : vector<8x512xf32>, i32 -> vector<8x512xf32>
    %c25_386 = arith.constant 25 : index
    %c0_387 = arith.constant 0 : index
    %c0_388 = arith.constant 0 : index
    %617 = vector.load %arg2[%c25_386, %c0_387, %c0_388] : memref<27x1x512xf32, #tpu.memory_space<vmem>>, vector<1x1x512xf32>
    %618 = vector.shape_cast %617 : vector<1x1x512xf32> to vector<1x512xf32>
    %619 = vector.broadcast %618 : vector<1x512xf32> to vector<8x512xf32>
    %620 = arith.mulf %616, %619 : vector<8x512xf32>
    %621 = tpu.concatenate %615, %620 in 0 : vector<8x512xf32>, vector<8x512xf32> -> vector<16x512xf32>
    %622 = arith.truncf %621 : vector<16x512xf32> to vector<16x512xbf16>
    %c192_389 = arith.constant 192 : index
    %c0_390 = arith.constant 0 : index
    %623 = vector.load %arg12[%c192_389, %c0_390] : memref<224x512xbf16, #tpu.memory_space<vmem>>, vector<16x512xbf16>
    tpu.vector_store %arg12[%c192_389, %c0_390], %622 {strides = array<i32>} : memref<224x512xbf16, #tpu.memory_space<vmem>>, vector<16x512xbf16>,
    %c439_i32_391 = arith.constant 439 : i32
    %624 = tpu.dynamic_rotate %454 by %c439_i32_391 dim 1 : vector<8x512xf32>, i32 -> vector<8x512xf32>
    %c26_392 = arith.constant 26 : index
    %c0_393 = arith.constant 0 : index
    %c0_394 = arith.constant 0 : index
    %625 = vector.load %arg2[%c26_392, %c0_393, %c0_394] : memref<27x1x512xf32, #tpu.memory_space<vmem>>, vector<1x1x512xf32>
    %626 = vector.shape_cast %625 : vector<1x1x512xf32> to vector<1x512xf32>
    %627 = vector.broadcast %626 : vector<1x512xf32> to vector<8x512xf32>
    %628 = arith.mulf %624, %627 : vector<8x512xf32>
    %629 = tpu.concatenate %628, %459 in 0 : vector<8x512xf32>, vector<8x512xf32> -> vector<16x512xf32>
    %630 = arith.truncf %629 : vector<16x512xf32> to vector<16x512xbf16>
    %c208_395 = arith.constant 208 : index
    %c0_396 = arith.constant 0 : index
    %631 = vector.load %arg12[%c208_395, %c0_396] : memref<224x512xbf16, #tpu.memory_space<vmem>>, vector<16x512xbf16>
    tpu.vector_store %arg12[%c208_395, %c0_396], %630 {strides = array<i32>} : memref<224x512xbf16, #tpu.memory_space<vmem>>, vector<16x512xbf16>,
    %c0_397 = arith.constant 0 : index
    %c0_398 = arith.constant 0 : index
    %632 = vector.load %arg12[%c0_397, %c0_398] : memref<224x512xbf16, #tpu.memory_space<vmem>>, vector<224x512xbf16>
    %cst_399 = arith.constant dense<0.000000e+00> : vector<8x512xf32>
    %633 = tpu.matmul %456, %632, %cst_399 {dimension_numbers = #tpu.dot_dimension_numbers<[1], [0], [0], [1], [0, 0, 1, 1], [], []>} : vector<8x224xbf16>, vector<224x512xbf16>, vector<8x512xf32> -> vector<8x512xf32>
    %634 = vector.broadcast %458 : vector<8x1xf32> to vector<8x512xf32>
    %635 = arith.addf %633, %634 : vector<8x512xf32>
    %c1_400 = arith.constant 1 : index
    %c0_401 = arith.constant 0 : index
    %c0_402 = arith.constant 0 : index
    %636 = vector.load %arg7[%c1_400, %c0_401, %c0_402] : memref<2x8x1xf32, #tpu.memory_space<vmem>>, vector<1x8x1xf32>
    %637 = vector.shape_cast %636 : vector<1x8x1xf32> to vector<8x1xf32>
    %c1_403 = arith.constant 1 : index
    %c0_404 = arith.constant 0 : index
    %c0_405 = arith.constant 0 : index
    %638 = vector.load %arg8[%c1_403, %c0_404, %c0_405] : memref<2x8x1xf32, #tpu.memory_space<vmem>>, vector<1x8x1xf32>
    %639 = vector.shape_cast %638 : vector<1x8x1xf32> to vector<8x1xf32>
    %640 = vector.shape_cast %635 : vector<8x512xf32> to vector<1x8x512xf32>
    %cst_406 = arith.constant dense<0.000000e+00> : vector<1xf32>
    %641 = vector.multi_reduction <add>, %640, %cst_406 [1, 2] : vector<1x8x512xf32> to vector<1xf32>
    %642 = vector.shape_cast %641 : vector<1xf32> to vector<1x1x1xf32>
    %643 = vector.extract %642[0, 0, 0] : f32 from vector<1x1x1xf32>
    %644 = arith.mulf %635, %635 : vector<8x512xf32>
    %645 = vector.shape_cast %644 : vector<8x512xf32> to vector<1x8x512xf32>
    %cst_407 = arith.constant dense<0.000000e+00> : vector<1xf32>
    %646 = vector.multi_reduction <add>, %645, %cst_407 [1, 2] : vector<1x8x512xf32> to vector<1xf32>
    %647 = vector.shape_cast %646 : vector<1xf32> to vector<1x1x1xf32>
    %648 = vector.extract %647[0, 0, 0] : f32 from vector<1x1x1xf32>
    %cst_408 = arith.constant 2.44140625E-4 : f32
    %649 = arith.mulf %643, %cst_408 : f32
    %cst_409 = arith.constant 2.44140625E-4 : f32
    %650 = arith.mulf %648, %cst_409 : f32
    %651 = arith.mulf %649, %649 : f32
    %652 = arith.subf %650, %651 : f32
    %cst_410 = arith.constant 9.99999974E-6 : f32
    %653 = arith.addf %652, %cst_410 : f32
    %654 = math.rsqrt %653 : f32
    %655 = vector.broadcast %654 : f32 to vector<8x1xf32>
    %656 = arith.mulf %637, %655 : vector<8x1xf32>
    %657 = vector.broadcast %649 : f32 to vector<8x1xf32>
    %658 = arith.mulf %657, %656 : vector<8x1xf32>
    %659 = arith.subf %639, %658 : vector<8x1xf32>
    %660 = vector.broadcast %656 : vector<8x1xf32> to vector<8x512xf32>
    %661 = arith.mulf %635, %660 : vector<8x512xf32>
    %662 = vector.broadcast %659 : vector<8x1xf32> to vector<8x512xf32>
    %663 = arith.addf %661, %662 : vector<8x512xf32>
    %cst_411 = arith.constant 0.000000e+00 : f32
    %664 = vector.broadcast %cst_411 : f32 to vector<8x512xf32>
    %665 = arith.maximumf %663, %664 : vector<8x512xf32>
    %c1_412 = arith.constant 1 : index
    %c0_413 = arith.constant 0 : index
    %c0_414 = arith.constant 0 : index
    %666 = vector.load %arg9[%c1_412, %c0_413, %c0_414] : memref<2x8x224xbf16, #tpu.memory_space<vmem>>, vector<1x8x224xbf16>
    %667 = vector.shape_cast %666 : vector<1x8x224xbf16> to vector<8x224xbf16>
    %c1_415 = arith.constant 1 : index
    %c0_416 = arith.constant 0 : index
    %c0_417 = arith.constant 0 : index
    %668 = vector.load %arg10[%c1_415, %c0_416, %c0_417] : memref<2x8x1xf32, #tpu.memory_space<vmem>>, vector<1x8x1xf32>
    %669 = vector.shape_cast %668 : vector<1x8x1xf32> to vector<8x1xf32>
    %cst_418 = arith.constant 0.000000e+00 : f32
    %670 = vector.broadcast %cst_418 : f32 to vector<8x512xf32>
    %c73_i32_419 = arith.constant 73 : i32
    %671 = tpu.dynamic_rotate %665 by %c73_i32_419 dim 1 : vector<8x512xf32>, i32 -> vector<8x512xf32>
    %c0_420 = arith.constant 0 : index
    %c0_421 = arith.constant 0 : index
    %c0_422 = arith.constant 0 : index
    %672 = vector.load %arg2[%c0_420, %c0_421, %c0_422] : memref<27x1x512xf32, #tpu.memory_space<vmem>>, vector<1x1x512xf32>
    %673 = vector.shape_cast %672 : vector<1x1x512xf32> to vector<1x512xf32>
    %674 = vector.broadcast %673 : vector<1x512xf32> to vector<8x512xf32>
    %675 = arith.mulf %671, %674 : vector<8x512xf32>
    %c72_i32_423 = arith.constant 72 : i32
    %676 = tpu.dynamic_rotate %665 by %c72_i32_423 dim 1 : vector<8x512xf32>, i32 -> vector<8x512xf32>
    %c1_424 = arith.constant 1 : index
    %c0_425 = arith.constant 0 : index
    %c0_426 = arith.constant 0 : index
    %677 = vector.load %arg2[%c1_424, %c0_425, %c0_426] : memref<27x1x512xf32, #tpu.memory_space<vmem>>, vector<1x1x512xf32>
    %678 = vector.shape_cast %677 : vector<1x1x512xf32> to vector<1x512xf32>
    %679 = vector.broadcast %678 : vector<1x512xf32> to vector<8x512xf32>
    %680 = arith.mulf %676, %679 : vector<8x512xf32>
    %681 = tpu.concatenate %675, %680 in 0 : vector<8x512xf32>, vector<8x512xf32> -> vector<16x512xf32>
    %682 = arith.truncf %681 : vector<16x512xf32> to vector<16x512xbf16>
    %c0_427 = arith.constant 0 : index
    %c0_428 = arith.constant 0 : index
    %683 = vector.load %arg12[%c0_427, %c0_428] : memref<224x512xbf16, #tpu.memory_space<vmem>>, vector<16x512xbf16>
    tpu.vector_store %arg12[%c0_427, %c0_428], %682 {strides = array<i32>} : memref<224x512xbf16, #tpu.memory_space<vmem>>, vector<16x512xbf16>,
    %c71_i32_429 = arith.constant 71 : i32
    %684 = tpu.dynamic_rotate %665 by %c71_i32_429 dim 1 : vector<8x512xf32>, i32 -> vector<8x512xf32>
    %c2_430 = arith.constant 2 : index
    %c0_431 = arith.constant 0 : index
    %c0_432 = arith.constant 0 : index
    %685 = vector.load %arg2[%c2_430, %c0_431, %c0_432] : memref<27x1x512xf32, #tpu.memory_space<vmem>>, vector<1x1x512xf32>
    %686 = vector.shape_cast %685 : vector<1x1x512xf32> to vector<1x512xf32>
    %687 = vector.broadcast %686 : vector<1x512xf32> to vector<8x512xf32>
    %688 = arith.mulf %684, %687 : vector<8x512xf32>
    %c65_i32_433 = arith.constant 65 : i32
    %689 = tpu.dynamic_rotate %665 by %c65_i32_433 dim 1 : vector<8x512xf32>, i32 -> vector<8x512xf32>
    %c3_434 = arith.constant 3 : index
    %c0_435 = arith.constant 0 : index
    %c0_436 = arith.constant 0 : index
    %690 = vector.load %arg2[%c3_434, %c0_435, %c0_436] : memref<27x1x512xf32, #tpu.memory_space<vmem>>, vector<1x1x512xf32>
    %691 = vector.shape_cast %690 : vector<1x1x512xf32> to vector<1x512xf32>
    %692 = vector.broadcast %691 : vector<1x512xf32> to vector<8x512xf32>
    %693 = arith.mulf %689, %692 : vector<8x512xf32>
    %694 = tpu.concatenate %688, %693 in 0 : vector<8x512xf32>, vector<8x512xf32> -> vector<16x512xf32>
    %695 = arith.truncf %694 : vector<16x512xf32> to vector<16x512xbf16>
    %c16_437 = arith.constant 16 : index
    %c0_438 = arith.constant 0 : index
    %696 = vector.load %arg12[%c16_437, %c0_438] : memref<224x512xbf16, #tpu.memory_space<vmem>>, vector<16x512xbf16>
    tpu.vector_store %arg12[%c16_437, %c0_438], %695 {strides = array<i32>} : memref<224x512xbf16, #tpu.memory_space<vmem>>, vector<16x512xbf16>,
    %c64_i32_439 = arith.constant 64 : i32
    %697 = tpu.dynamic_rotate %665 by %c64_i32_439 dim 1 : vector<8x512xf32>, i32 -> vector<8x512xf32>
    %c4_440 = arith.constant 4 : index
    %c0_441 = arith.constant 0 : index
    %c0_442 = arith.constant 0 : index
    %698 = vector.load %arg2[%c4_440, %c0_441, %c0_442] : memref<27x1x512xf32, #tpu.memory_space<vmem>>, vector<1x1x512xf32>
    %699 = vector.shape_cast %698 : vector<1x1x512xf32> to vector<1x512xf32>
    %700 = vector.broadcast %699 : vector<1x512xf32> to vector<8x512xf32>
    %701 = arith.mulf %697, %700 : vector<8x512xf32>
    %c63_i32_443 = arith.constant 63 : i32
    %702 = tpu.dynamic_rotate %665 by %c63_i32_443 dim 1 : vector<8x512xf32>, i32 -> vector<8x512xf32>
    %c5_444 = arith.constant 5 : index
    %c0_445 = arith.constant 0 : index
    %c0_446 = arith.constant 0 : index
    %703 = vector.load %arg2[%c5_444, %c0_445, %c0_446] : memref<27x1x512xf32, #tpu.memory_space<vmem>>, vector<1x1x512xf32>
    %704 = vector.shape_cast %703 : vector<1x1x512xf32> to vector<1x512xf32>
    %705 = vector.broadcast %704 : vector<1x512xf32> to vector<8x512xf32>
    %706 = arith.mulf %702, %705 : vector<8x512xf32>
    %707 = tpu.concatenate %701, %706 in 0 : vector<8x512xf32>, vector<8x512xf32> -> vector<16x512xf32>
    %708 = arith.truncf %707 : vector<16x512xf32> to vector<16x512xbf16>
    %c32_447 = arith.constant 32 : index
    %c0_448 = arith.constant 0 : index
    %709 = vector.load %arg12[%c32_447, %c0_448] : memref<224x512xbf16, #tpu.memory_space<vmem>>, vector<16x512xbf16>
    tpu.vector_store %arg12[%c32_447, %c0_448], %708 {strides = array<i32>} : memref<224x512xbf16, #tpu.memory_space<vmem>>, vector<16x512xbf16>,
    %c57_i32_449 = arith.constant 57 : i32
    %710 = tpu.dynamic_rotate %665 by %c57_i32_449 dim 1 : vector<8x512xf32>, i32 -> vector<8x512xf32>
    %c6_450 = arith.constant 6 : index
    %c0_451 = arith.constant 0 : index
    %c0_452 = arith.constant 0 : index
    %711 = vector.load %arg2[%c6_450, %c0_451, %c0_452] : memref<27x1x512xf32, #tpu.memory_space<vmem>>, vector<1x1x512xf32>
    %712 = vector.shape_cast %711 : vector<1x1x512xf32> to vector<1x512xf32>
    %713 = vector.broadcast %712 : vector<1x512xf32> to vector<8x512xf32>
    %714 = arith.mulf %710, %713 : vector<8x512xf32>
    %c56_i32_453 = arith.constant 56 : i32
    %715 = tpu.dynamic_rotate %665 by %c56_i32_453 dim 1 : vector<8x512xf32>, i32 -> vector<8x512xf32>
    %c7_454 = arith.constant 7 : index
    %c0_455 = arith.constant 0 : index
    %c0_456 = arith.constant 0 : index
    %716 = vector.load %arg2[%c7_454, %c0_455, %c0_456] : memref<27x1x512xf32, #tpu.memory_space<vmem>>, vector<1x1x512xf32>
    %717 = vector.shape_cast %716 : vector<1x1x512xf32> to vector<1x512xf32>
    %718 = vector.broadcast %717 : vector<1x512xf32> to vector<8x512xf32>
    %719 = arith.mulf %715, %718 : vector<8x512xf32>
    %720 = tpu.concatenate %714, %719 in 0 : vector<8x512xf32>, vector<8x512xf32> -> vector<16x512xf32>
    %721 = arith.truncf %720 : vector<16x512xf32> to vector<16x512xbf16>
    %c48_457 = arith.constant 48 : index
    %c0_458 = arith.constant 0 : index
    %722 = vector.load %arg12[%c48_457, %c0_458] : memref<224x512xbf16, #tpu.memory_space<vmem>>, vector<16x512xbf16>
    tpu.vector_store %arg12[%c48_457, %c0_458], %721 {strides = array<i32>} : memref<224x512xbf16, #tpu.memory_space<vmem>>, vector<16x512xbf16>,
    %c55_i32_459 = arith.constant 55 : i32
    %723 = tpu.dynamic_rotate %665 by %c55_i32_459 dim 1 : vector<8x512xf32>, i32 -> vector<8x512xf32>
    %c8_460 = arith.constant 8 : index
    %c0_461 = arith.constant 0 : index
    %c0_462 = arith.constant 0 : index
    %724 = vector.load %arg2[%c8_460, %c0_461, %c0_462] : memref<27x1x512xf32, #tpu.memory_space<vmem>>, vector<1x1x512xf32>
    %725 = vector.shape_cast %724 : vector<1x1x512xf32> to vector<1x512xf32>
    %726 = vector.broadcast %725 : vector<1x512xf32> to vector<8x512xf32>
    %727 = arith.mulf %723, %726 : vector<8x512xf32>
    %c9_i32_463 = arith.constant 9 : i32
    %728 = tpu.dynamic_rotate %665 by %c9_i32_463 dim 1 : vector<8x512xf32>, i32 -> vector<8x512xf32>
    %c9_464 = arith.constant 9 : index
    %c0_465 = arith.constant 0 : index
    %c0_466 = arith.constant 0 : index
    %729 = vector.load %arg2[%c9_464, %c0_465, %c0_466] : memref<27x1x512xf32, #tpu.memory_space<vmem>>, vector<1x1x512xf32>
    %730 = vector.shape_cast %729 : vector<1x1x512xf32> to vector<1x512xf32>
    %731 = vector.broadcast %730 : vector<1x512xf32> to vector<8x512xf32>
    %732 = arith.mulf %728, %731 : vector<8x512xf32>
    %733 = tpu.concatenate %727, %732 in 0 : vector<8x512xf32>, vector<8x512xf32> -> vector<16x512xf32>
    %734 = arith.truncf %733 : vector<16x512xf32> to vector<16x512xbf16>
    %c64_467 = arith.constant 64 : index
    %c0_468 = arith.constant 0 : index
    %735 = vector.load %arg12[%c64_467, %c0_468] : memref<224x512xbf16, #tpu.memory_space<vmem>>, vector<16x512xbf16>
    tpu.vector_store %arg12[%c64_467, %c0_468], %734 {strides = array<i32>} : memref<224x512xbf16, #tpu.memory_space<vmem>>, vector<16x512xbf16>,
    %c8_i32_469 = arith.constant 8 : i32
    %736 = tpu.dynamic_rotate %665 by %c8_i32_469 dim 1 : vector<8x512xf32>, i32 -> vector<8x512xf32>
    %c10_470 = arith.constant 10 : index
    %c0_471 = arith.constant 0 : index
    %c0_472 = arith.constant 0 : index
    %737 = vector.load %arg2[%c10_470, %c0_471, %c0_472] : memref<27x1x512xf32, #tpu.memory_space<vmem>>, vector<1x1x512xf32>
    %738 = vector.shape_cast %737 : vector<1x1x512xf32> to vector<1x512xf32>
    %739 = vector.broadcast %738 : vector<1x512xf32> to vector<8x512xf32>
    %740 = arith.mulf %736, %739 : vector<8x512xf32>
    %c7_i32_473 = arith.constant 7 : i32
    %741 = tpu.dynamic_rotate %665 by %c7_i32_473 dim 1 : vector<8x512xf32>, i32 -> vector<8x512xf32>
    %c11_474 = arith.constant 11 : index
    %c0_475 = arith.constant 0 : index
    %c0_476 = arith.constant 0 : index
    %742 = vector.load %arg2[%c11_474, %c0_475, %c0_476] : memref<27x1x512xf32, #tpu.memory_space<vmem>>, vector<1x1x512xf32>
    %743 = vector.shape_cast %742 : vector<1x1x512xf32> to vector<1x512xf32>
    %744 = vector.broadcast %743 : vector<1x512xf32> to vector<8x512xf32>
    %745 = arith.mulf %741, %744 : vector<8x512xf32>
    %746 = tpu.concatenate %740, %745 in 0 : vector<8x512xf32>, vector<8x512xf32> -> vector<16x512xf32>
    %747 = arith.truncf %746 : vector<16x512xf32> to vector<16x512xbf16>
    %c80_477 = arith.constant 80 : index
    %c0_478 = arith.constant 0 : index
    %748 = vector.load %arg12[%c80_477, %c0_478] : memref<224x512xbf16, #tpu.memory_space<vmem>>, vector<16x512xbf16>
    tpu.vector_store %arg12[%c80_477, %c0_478], %747 {strides = array<i32>} : memref<224x512xbf16, #tpu.memory_space<vmem>>, vector<16x512xbf16>,
    %c1_i32_479 = arith.constant 1 : i32
    %749 = tpu.dynamic_rotate %665 by %c1_i32_479 dim 1 : vector<8x512xf32>, i32 -> vector<8x512xf32>
    %c12_480 = arith.constant 12 : index
    %c0_481 = arith.constant 0 : index
    %c0_482 = arith.constant 0 : index
    %750 = vector.load %arg2[%c12_480, %c0_481, %c0_482] : memref<27x1x512xf32, #tpu.memory_space<vmem>>, vector<1x1x512xf32>
    %751 = vector.shape_cast %750 : vector<1x1x512xf32> to vector<1x512xf32>
    %752 = vector.broadcast %751 : vector<1x512xf32> to vector<8x512xf32>
    %753 = arith.mulf %749, %752 : vector<8x512xf32>
    %754 = tpu.concatenate %753, %665 in 0 : vector<8x512xf32>, vector<8x512xf32> -> vector<16x512xf32>
    %755 = arith.truncf %754 : vector<16x512xf32> to vector<16x512xbf16>
    %c96_483 = arith.constant 96 : index
    %c0_484 = arith.constant 0 : index
    %756 = vector.load %arg12[%c96_483, %c0_484] : memref<224x512xbf16, #tpu.memory_space<vmem>>, vector<16x512xbf16>
    tpu.vector_store %arg12[%c96_483, %c0_484], %755 {strides = array<i32>} : memref<224x512xbf16, #tpu.memory_space<vmem>>, vector<16x512xbf16>,
    %c511_i32_485 = arith.constant 511 : i32
    %757 = tpu.dynamic_rotate %665 by %c511_i32_485 dim 1 : vector<8x512xf32>, i32 -> vector<8x512xf32>
    %c14_486 = arith.constant 14 : index
    %c0_487 = arith.constant 0 : index
    %c0_488 = arith.constant 0 : index
    %758 = vector.load %arg2[%c14_486, %c0_487, %c0_488] : memref<27x1x512xf32, #tpu.memory_space<vmem>>, vector<1x1x512xf32>
    %759 = vector.shape_cast %758 : vector<1x1x512xf32> to vector<1x512xf32>
    %760 = vector.broadcast %759 : vector<1x512xf32> to vector<8x512xf32>
    %761 = arith.mulf %757, %760 : vector<8x512xf32>
    %c505_i32_489 = arith.constant 505 : i32
    %762 = tpu.dynamic_rotate %665 by %c505_i32_489 dim 1 : vector<8x512xf32>, i32 -> vector<8x512xf32>
    %c15_490 = arith.constant 15 : index
    %c0_491 = arith.constant 0 : index
    %c0_492 = arith.constant 0 : index
    %763 = vector.load %arg2[%c15_490, %c0_491, %c0_492] : memref<27x1x512xf32, #tpu.memory_space<vmem>>, vector<1x1x512xf32>
    %764 = vector.shape_cast %763 : vector<1x1x512xf32> to vector<1x512xf32>
    %765 = vector.broadcast %764 : vector<1x512xf32> to vector<8x512xf32>
    %766 = arith.mulf %762, %765 : vector<8x512xf32>
    %767 = tpu.concatenate %761, %766 in 0 : vector<8x512xf32>, vector<8x512xf32> -> vector<16x512xf32>
    %768 = arith.truncf %767 : vector<16x512xf32> to vector<16x512xbf16>
    %c112_493 = arith.constant 112 : index
    %c0_494 = arith.constant 0 : index
    %769 = vector.load %arg12[%c112_493, %c0_494] : memref<224x512xbf16, #tpu.memory_space<vmem>>, vector<16x512xbf16>
    tpu.vector_store %arg12[%c112_493, %c0_494], %768 {strides = array<i32>} : memref<224x512xbf16, #tpu.memory_space<vmem>>, vector<16x512xbf16>,
    %c504_i32_495 = arith.constant 504 : i32
    %770 = tpu.dynamic_rotate %665 by %c504_i32_495 dim 1 : vector<8x512xf32>, i32 -> vector<8x512xf32>
    %c16_496 = arith.constant 16 : index
    %c0_497 = arith.constant 0 : index
    %c0_498 = arith.constant 0 : index
    %771 = vector.load %arg2[%c16_496, %c0_497, %c0_498] : memref<27x1x512xf32, #tpu.memory_space<vmem>>, vector<1x1x512xf32>
    %772 = vector.shape_cast %771 : vector<1x1x512xf32> to vector<1x512xf32>
    %773 = vector.broadcast %772 : vector<1x512xf32> to vector<8x512xf32>
    %774 = arith.mulf %770, %773 : vector<8x512xf32>
    %c503_i32_499 = arith.constant 503 : i32
    %775 = tpu.dynamic_rotate %665 by %c503_i32_499 dim 1 : vector<8x512xf32>, i32 -> vector<8x512xf32>
    %c17_500 = arith.constant 17 : index
    %c0_501 = arith.constant 0 : index
    %c0_502 = arith.constant 0 : index
    %776 = vector.load %arg2[%c17_500, %c0_501, %c0_502] : memref<27x1x512xf32, #tpu.memory_space<vmem>>, vector<1x1x512xf32>
    %777 = vector.shape_cast %776 : vector<1x1x512xf32> to vector<1x512xf32>
    %778 = vector.broadcast %777 : vector<1x512xf32> to vector<8x512xf32>
    %779 = arith.mulf %775, %778 : vector<8x512xf32>
    %780 = tpu.concatenate %774, %779 in 0 : vector<8x512xf32>, vector<8x512xf32> -> vector<16x512xf32>
    %781 = arith.truncf %780 : vector<16x512xf32> to vector<16x512xbf16>
    %c128_503 = arith.constant 128 : index
    %c0_504 = arith.constant 0 : index
    %782 = vector.load %arg12[%c128_503, %c0_504] : memref<224x512xbf16, #tpu.memory_space<vmem>>, vector<16x512xbf16>
    tpu.vector_store %arg12[%c128_503, %c0_504], %781 {strides = array<i32>} : memref<224x512xbf16, #tpu.memory_space<vmem>>, vector<16x512xbf16>,
    %c457_i32_505 = arith.constant 457 : i32
    %783 = tpu.dynamic_rotate %665 by %c457_i32_505 dim 1 : vector<8x512xf32>, i32 -> vector<8x512xf32>
    %c18_506 = arith.constant 18 : index
    %c0_507 = arith.constant 0 : index
    %c0_508 = arith.constant 0 : index
    %784 = vector.load %arg2[%c18_506, %c0_507, %c0_508] : memref<27x1x512xf32, #tpu.memory_space<vmem>>, vector<1x1x512xf32>
    %785 = vector.shape_cast %784 : vector<1x1x512xf32> to vector<1x512xf32>
    %786 = vector.broadcast %785 : vector<1x512xf32> to vector<8x512xf32>
    %787 = arith.mulf %783, %786 : vector<8x512xf32>
    %c456_i32_509 = arith.constant 456 : i32
    %788 = tpu.dynamic_rotate %665 by %c456_i32_509 dim 1 : vector<8x512xf32>, i32 -> vector<8x512xf32>
    %c19_510 = arith.constant 19 : index
    %c0_511 = arith.constant 0 : index
    %c0_512 = arith.constant 0 : index
    %789 = vector.load %arg2[%c19_510, %c0_511, %c0_512] : memref<27x1x512xf32, #tpu.memory_space<vmem>>, vector<1x1x512xf32>
    %790 = vector.shape_cast %789 : vector<1x1x512xf32> to vector<1x512xf32>
    %791 = vector.broadcast %790 : vector<1x512xf32> to vector<8x512xf32>
    %792 = arith.mulf %788, %791 : vector<8x512xf32>
    %793 = tpu.concatenate %787, %792 in 0 : vector<8x512xf32>, vector<8x512xf32> -> vector<16x512xf32>
    %794 = arith.truncf %793 : vector<16x512xf32> to vector<16x512xbf16>
    %c144_513 = arith.constant 144 : index
    %c0_514 = arith.constant 0 : index
    %795 = vector.load %arg12[%c144_513, %c0_514] : memref<224x512xbf16, #tpu.memory_space<vmem>>, vector<16x512xbf16>
    tpu.vector_store %arg12[%c144_513, %c0_514], %794 {strides = array<i32>} : memref<224x512xbf16, #tpu.memory_space<vmem>>, vector<16x512xbf16>,
    %c455_i32_515 = arith.constant 455 : i32
    %796 = tpu.dynamic_rotate %665 by %c455_i32_515 dim 1 : vector<8x512xf32>, i32 -> vector<8x512xf32>
    %c20_516 = arith.constant 20 : index
    %c0_517 = arith.constant 0 : index
    %c0_518 = arith.constant 0 : index
    %797 = vector.load %arg2[%c20_516, %c0_517, %c0_518] : memref<27x1x512xf32, #tpu.memory_space<vmem>>, vector<1x1x512xf32>
    %798 = vector.shape_cast %797 : vector<1x1x512xf32> to vector<1x512xf32>
    %799 = vector.broadcast %798 : vector<1x512xf32> to vector<8x512xf32>
    %800 = arith.mulf %796, %799 : vector<8x512xf32>
    %c449_i32_519 = arith.constant 449 : i32
    %801 = tpu.dynamic_rotate %665 by %c449_i32_519 dim 1 : vector<8x512xf32>, i32 -> vector<8x512xf32>
    %c21_520 = arith.constant 21 : index
    %c0_521 = arith.constant 0 : index
    %c0_522 = arith.constant 0 : index
    %802 = vector.load %arg2[%c21_520, %c0_521, %c0_522] : memref<27x1x512xf32, #tpu.memory_space<vmem>>, vector<1x1x512xf32>
    %803 = vector.shape_cast %802 : vector<1x1x512xf32> to vector<1x512xf32>
    %804 = vector.broadcast %803 : vector<1x512xf32> to vector<8x512xf32>
    %805 = arith.mulf %801, %804 : vector<8x512xf32>
    %806 = tpu.concatenate %800, %805 in 0 : vector<8x512xf32>, vector<8x512xf32> -> vector<16x512xf32>
    %807 = arith.truncf %806 : vector<16x512xf32> to vector<16x512xbf16>
    %c160_523 = arith.constant 160 : index
    %c0_524 = arith.constant 0 : index
    %808 = vector.load %arg12[%c160_523, %c0_524] : memref<224x512xbf16, #tpu.memory_space<vmem>>, vector<16x512xbf16>
    tpu.vector_store %arg12[%c160_523, %c0_524], %807 {strides = array<i32>} : memref<224x512xbf16, #tpu.memory_space<vmem>>, vector<16x512xbf16>,
    %c448_i32_525 = arith.constant 448 : i32
    %809 = tpu.dynamic_rotate %665 by %c448_i32_525 dim 1 : vector<8x512xf32>, i32 -> vector<8x512xf32>
    %c22_526 = arith.constant 22 : index
    %c0_527 = arith.constant 0 : index
    %c0_528 = arith.constant 0 : index
    %810 = vector.load %arg2[%c22_526, %c0_527, %c0_528] : memref<27x1x512xf32, #tpu.memory_space<vmem>>, vector<1x1x512xf32>
    %811 = vector.shape_cast %810 : vector<1x1x512xf32> to vector<1x512xf32>
    %812 = vector.broadcast %811 : vector<1x512xf32> to vector<8x512xf32>
    %813 = arith.mulf %809, %812 : vector<8x512xf32>
    %c447_i32_529 = arith.constant 447 : i32
    %814 = tpu.dynamic_rotate %665 by %c447_i32_529 dim 1 : vector<8x512xf32>, i32 -> vector<8x512xf32>
    %c23_530 = arith.constant 23 : index
    %c0_531 = arith.constant 0 : index
    %c0_532 = arith.constant 0 : index
    %815 = vector.load %arg2[%c23_530, %c0_531, %c0_532] : memref<27x1x512xf32, #tpu.memory_space<vmem>>, vector<1x1x512xf32>
    %816 = vector.shape_cast %815 : vector<1x1x512xf32> to vector<1x512xf32>
    %817 = vector.broadcast %816 : vector<1x512xf32> to vector<8x512xf32>
    %818 = arith.mulf %814, %817 : vector<8x512xf32>
    %819 = tpu.concatenate %813, %818 in 0 : vector<8x512xf32>, vector<8x512xf32> -> vector<16x512xf32>
    %820 = arith.truncf %819 : vector<16x512xf32> to vector<16x512xbf16>
    %c176_533 = arith.constant 176 : index
    %c0_534 = arith.constant 0 : index
    %821 = vector.load %arg12[%c176_533, %c0_534] : memref<224x512xbf16, #tpu.memory_space<vmem>>, vector<16x512xbf16>
    tpu.vector_store %arg12[%c176_533, %c0_534], %820 {strides = array<i32>} : memref<224x512xbf16, #tpu.memory_space<vmem>>, vector<16x512xbf16>,
    %c441_i32_535 = arith.constant 441 : i32
    %822 = tpu.dynamic_rotate %665 by %c441_i32_535 dim 1 : vector<8x512xf32>, i32 -> vector<8x512xf32>
    %c24_536 = arith.constant 24 : index
    %c0_537 = arith.constant 0 : index
    %c0_538 = arith.constant 0 : index
    %823 = vector.load %arg2[%c24_536, %c0_537, %c0_538] : memref<27x1x512xf32, #tpu.memory_space<vmem>>, vector<1x1x512xf32>
    %824 = vector.shape_cast %823 : vector<1x1x512xf32> to vector<1x512xf32>
    %825 = vector.broadcast %824 : vector<1x512xf32> to vector<8x512xf32>
    %826 = arith.mulf %822, %825 : vector<8x512xf32>
    %c440_i32_539 = arith.constant 440 : i32
    %827 = tpu.dynamic_rotate %665 by %c440_i32_539 dim 1 : vector<8x512xf32>, i32 -> vector<8x512xf32>
    %c25_540 = arith.constant 25 : index
    %c0_541 = arith.constant 0 : index
    %c0_542 = arith.constant 0 : index
    %828 = vector.load %arg2[%c25_540, %c0_541, %c0_542] : memref<27x1x512xf32, #tpu.memory_space<vmem>>, vector<1x1x512xf32>
    %829 = vector.shape_cast %828 : vector<1x1x512xf32> to vector<1x512xf32>
    %830 = vector.broadcast %829 : vector<1x512xf32> to vector<8x512xf32>
    %831 = arith.mulf %827, %830 : vector<8x512xf32>
    %832 = tpu.concatenate %826, %831 in 0 : vector<8x512xf32>, vector<8x512xf32> -> vector<16x512xf32>
    %833 = arith.truncf %832 : vector<16x512xf32> to vector<16x512xbf16>
    %c192_543 = arith.constant 192 : index
    %c0_544 = arith.constant 0 : index
    %834 = vector.load %arg12[%c192_543, %c0_544] : memref<224x512xbf16, #tpu.memory_space<vmem>>, vector<16x512xbf16>
    tpu.vector_store %arg12[%c192_543, %c0_544], %833 {strides = array<i32>} : memref<224x512xbf16, #tpu.memory_space<vmem>>, vector<16x512xbf16>,
    %c439_i32_545 = arith.constant 439 : i32
    %835 = tpu.dynamic_rotate %665 by %c439_i32_545 dim 1 : vector<8x512xf32>, i32 -> vector<8x512xf32>
    %c26_546 = arith.constant 26 : index
    %c0_547 = arith.constant 0 : index
    %c0_548 = arith.constant 0 : index
    %836 = vector.load %arg2[%c26_546, %c0_547, %c0_548] : memref<27x1x512xf32, #tpu.memory_space<vmem>>, vector<1x1x512xf32>
    %837 = vector.shape_cast %836 : vector<1x1x512xf32> to vector<1x512xf32>
    %838 = vector.broadcast %837 : vector<1x512xf32> to vector<8x512xf32>
    %839 = arith.mulf %835, %838 : vector<8x512xf32>
    %840 = tpu.concatenate %839, %670 in 0 : vector<8x512xf32>, vector<8x512xf32> -> vector<16x512xf32>
    %841 = arith.truncf %840 : vector<16x512xf32> to vector<16x512xbf16>
    %c208_549 = arith.constant 208 : index
    %c0_550 = arith.constant 0 : index
    %842 = vector.load %arg12[%c208_549, %c0_550] : memref<224x512xbf16, #tpu.memory_space<vmem>>, vector<16x512xbf16>
    tpu.vector_store %arg12[%c208_549, %c0_550], %841 {strides = array<i32>} : memref<224x512xbf16, #tpu.memory_space<vmem>>, vector<16x512xbf16>,
    %c0_551 = arith.constant 0 : index
    %c0_552 = arith.constant 0 : index
    %843 = vector.load %arg12[%c0_551, %c0_552] : memref<224x512xbf16, #tpu.memory_space<vmem>>, vector<224x512xbf16>
    %cst_553 = arith.constant dense<0.000000e+00> : vector<8x512xf32>
    %844 = tpu.matmul %667, %843, %cst_553 {dimension_numbers = #tpu.dot_dimension_numbers<[1], [0], [0], [1], [0, 0, 1, 1], [], []>} : vector<8x224xbf16>, vector<224x512xbf16>, vector<8x512xf32> -> vector<8x512xf32>
    %845 = vector.broadcast %669 : vector<8x1xf32> to vector<8x512xf32>
    %846 = arith.addf %844, %845 : vector<8x512xf32>
    %847 = arith.addf %424, %846 : vector<8x512xf32>
    %c0_554 = arith.constant 0 : index
    %c0_555 = arith.constant 0 : index
    %c0_556 = arith.constant 0 : index
    %848 = vector.load %arg11[%c0_554, %c0_555, %c0_556] : memref<1x8x512xf32, #tpu.memory_space<vmem>>, vector<1x8x512xf32>
    %849 = vector.shape_cast %848 : vector<1x8x512xf32> to vector<8x512xf32>
    %850 = vector.shape_cast %847 : vector<8x512xf32> to vector<1x8x512xf32>
    tpu.vector_store %arg11[%c0_554, %c0_555, %c0_556], %850 {strides = array<i32>} : memref<1x8x512xf32, #tpu.memory_space<vmem>>, vector<1x8x512xf32>,
    return
  }
  func.func @transform_0(%arg0: i32) -> (i32, i32, i32) {
    %c0_i32 = arith.constant 0 : i32
    %c0_i32_0 = arith.constant 0 : i32
    %c0_i32_1 = arith.constant 0 : i32
    return %arg0, %c0_i32, %c0_i32_0 : i32, i32, i32
  }
  func.func @transform_1(%arg0: i32) -> (i32, i32, i32) {
    %c0_i32 = arith.constant 0 : i32
    %c0_i32_0 = arith.constant 0 : i32
    %c0_i32_1 = arith.constant 0 : i32
    %c0_i32_2 = arith.constant 0 : i32
    return %c0_i32, %c0_i32_0, %c0_i32_1 : i32, i32, i32
  }
  func.func @transform_2(%arg0: i32) -> (i32, i32, i32) {
    %c0_i32 = arith.constant 0 : i32
    %c0_i32_0 = arith.constant 0 : i32
    %c0_i32_1 = arith.constant 0 : i32
    %c0_i32_2 = arith.constant 0 : i32
    return %c0_i32, %c0_i32_0, %c0_i32_1 : i32, i32, i32
  }
  func.func @transform_3(%arg0: i32) -> (i32, i32, i32) {
    %c0_i32 = arith.constant 0 : i32
    %c0_i32_0 = arith.constant 0 : i32
    %c0_i32_1 = arith.constant 0 : i32
    %c0_i32_2 = arith.constant 0 : i32
    return %c0_i32, %c0_i32_0, %c0_i32_1 : i32, i32, i32
  }
  func.func @transform_4(%arg0: i32) -> (i32, i32, i32) {
    %c0_i32 = arith.constant 0 : i32
    %c0_i32_0 = arith.constant 0 : i32
    %c0_i32_1 = arith.constant 0 : i32
    %c0_i32_2 = arith.constant 0 : i32
    return %c0_i32, %c0_i32_0, %c0_i32_1 : i32, i32, i32
  }
  func.func @transform_5(%arg0: i32) -> (i32, i32, i32) {
    %c0_i32 = arith.constant 0 : i32
    %c0_i32_0 = arith.constant 0 : i32
    %c0_i32_1 = arith.constant 0 : i32
    %c0_i32_2 = arith.constant 0 : i32
    return %c0_i32, %c0_i32_0, %c0_i32_1 : i32, i32, i32
  }
  func.func @transform_6(%arg0: i32) -> (i32, i32, i32) {
    %c0_i32 = arith.constant 0 : i32
    %c0_i32_0 = arith.constant 0 : i32
    %c0_i32_1 = arith.constant 0 : i32
    %c0_i32_2 = arith.constant 0 : i32
    return %c0_i32, %c0_i32_0, %c0_i32_1 : i32, i32, i32
  }
  func.func @transform_7(%arg0: i32) -> (i32, i32, i32) {
    %c0_i32 = arith.constant 0 : i32
    %c0_i32_0 = arith.constant 0 : i32
    %c0_i32_1 = arith.constant 0 : i32
    %c0_i32_2 = arith.constant 0 : i32
    return %c0_i32, %c0_i32_0, %c0_i32_1 : i32, i32, i32
  }
  func.func @transform_8(%arg0: i32) -> (i32, i32, i32) {
    %c0_i32 = arith.constant 0 : i32
    %c0_i32_0 = arith.constant 0 : i32
    %c0_i32_1 = arith.constant 0 : i32
    %c0_i32_2 = arith.constant 0 : i32
    return %c0_i32, %c0_i32_0, %c0_i32_1 : i32, i32, i32
  }
  func.func @transform_9(%arg0: i32) -> (i32, i32, i32) {
    %c0_i32 = arith.constant 0 : i32
    %c0_i32_0 = arith.constant 0 : i32
    %c0_i32_1 = arith.constant 0 : i32
    %c0_i32_2 = arith.constant 0 : i32
    return %c0_i32, %c0_i32_0, %c0_i32_1 : i32, i32, i32
  }
  func.func @transform_10(%arg0: i32) -> (i32, i32, i32) {
    %c0_i32 = arith.constant 0 : i32
    %c0_i32_0 = arith.constant 0 : i32
    %c0_i32_1 = arith.constant 0 : i32
    return %arg0, %c0_i32, %c0_i32_0 : i32, i32, i32
  }
}

</mosaic_0001>

<llo_original>
// kernel: tpu_custom_call.1
$region0: #{tpu_custom_call.1}
  #allocation0 [shape = 'u32[]', space=smem, size = 0x4, offset = 0x4, fixed_abs, tag = 'smem constant byte address 0x4 - core index']
  #allocation1 [shape = 'u32[72,128]{1,0:T(1,128)}', space=vmem, size = 0x9000, scoped, tag = 'internal scratch']
  #allocation2 [shape = 'bf16[224,512]{1,0:T(8,128)(2,1)}', space=vmem, size = 0x38000, scoped, tag = 'scratch operand']
  %s0 = inlined_call_operand.hbm [shape: f32[2,8,512], index: 0, kind: input, shape index: {}]
  %s1 = inlined_call_operand.hbm [shape: f32[27,1,512], index: 1, kind: input, shape index: {}]
  %s2 = inlined_call_operand.vmem [shape: f32[2,8,1], index: 2, kind: input, shape index: {}]
  %s3 = inlined_call_operand.vmem [shape: f32[2,8,1], index: 3, kind: input, shape index: {}]
  %s4 = inlined_call_operand.vmem [shape: bf16[2,8,224], index: 4, kind: input, shape index: {}]
  %s5 = inlined_call_operand.vmem [shape: f32[2,8,1], index: 5, kind: input, shape index: {}]
  %s6 = inlined_call_operand.vmem [shape: f32[2,8,1], index: 6, kind: input, shape index: {}]
  %s7 = inlined_call_operand.vmem [shape: f32[2,8,1], index: 7, kind: input, shape index: {}]
  %s8 = inlined_call_operand.vmem [shape: bf16[2,8,224], index: 8, kind: input, shape index: {}]
  %s9 = inlined_call_operand.vmem [shape: f32[2,8,1], index: 9, kind: input, shape index: {}]
  %s10 = inlined_call_operand.hbm [shape: f32[2,8,512], index: 10, kind: output, shape index: {}]
  %s11 = sld [smem:[#allocation0]]
  $region81: #{tpu_custom_call.1} parent=0
    _
  %s13 = ssub.s32 1, %s11
  %s14 = scalar_select 0, %s13, %s11
  $region1: #{tpu_custom_call.1} parent=0
    #allocation3 [shape = 'u8[32768]{0}', space=vmem, size = 0x8000, scoped, tag = 'input window, operand 0']
    #allocation4 [shape = 's32[2]{0}', space=sflag, size = 0x8, scoped, tag = 'scoped memory for tpu_custom_call.1']
    #allocation5 [shape = 's32[2]{0}', space=sflag, size = 0x8, scoped, tag = 'scoped memory for tpu_custom_call.1']
    #allocation6 [shape = 'u8[55296]{0}', space=vmem, size = 0xd800, scoped, tag = 'input window, operand 1, single buffered']
    #allocation7 [shape = 's32[1]{0}', space=sflag, size = 0x4, scoped, tag = 'scoped memory for tpu_custom_call.1']
    #allocation8 [shape = 'u8[32768]{0}', space=vmem, size = 0x8000, scoped, tag = 'output window, operand 0']
    %15 = vsyncpa [#allocation4], 0
    %s16 = scalar_lea.sflag [#allocation4], 1
    %17 = vsyncpa %s16, 0
    %18 = vsyncpa [#allocation7], 0
    %19 = vsyncpa [#allocation5], 0
    %s20 = scalar_lea.sflag [#allocation5], 1
    %21 = vsyncpa %s20, 0
    loop: start=0, step=1, limit=4
    $region2: #{tpu_custom_call.1} parent=1 // loop_pre_header
      _
    $region3: #{tpu_custom_call.1} parent=1 // loop_header
      %s23 = sphi 0, %s27
      %p24 = scmp.ge.s32.totalorder %s23, 4
      %s33 = sphi 0, %s35
      %s36 = sphi 0, %s33
      %s37 = sphi 0, %s36
      %s53 = sphi 0, %s37
      %s57 = sphi 0, %s57
      %s59 = sphi 0, %s57
      %s60 = sphi 0, %s59
      %s74 = sphi 0, %s60
      %s78 = sphi 0, %s78
      %s80 = sphi 0, %s78
      %s81 = sphi 0, %s80
      %s95 = sphi 0, %s81
      %s99 = sphi 0, %s99
      %s101 = sphi 0, %s99
      %s102 = sphi 0, %s101
      %s116 = sphi 0, %s102
      %s120 = sphi 0, %s120
      %s122 = sphi 0, %s120
      %s123 = sphi 0, %s122
      %s137 = sphi 0, %s123
      %s141 = sphi 0, %s141
      %s143 = sphi 0, %s141
      %s144 = sphi 0, %s143
      %s158 = sphi 0, %s144
      %s162 = sphi 0, %s162
      %s164 = sphi 0, %s162
      %s165 = sphi 0, %s164
      %s179 = sphi 0, %s165
      %s183 = sphi 0, %s183
      %s185 = sphi 0, %s183
      %s186 = sphi 0, %s185
      %s200 = sphi 0, %s186
      %s204 = sphi 0, %s204
      %s206 = sphi 0, %s204
      %s207 = sphi 0, %s206
      %s221 = sphi 0, %s207
      %s225 = sphi 0, %s225
      %s227 = sphi 0, %s225
      %s228 = sphi 0, %s227
      %s242 = sphi 0, %s228
      %s248 = sphi 0, %s250
      %s251 = sphi 0, %s248
      %s252 = sphi 0, %s251
      %s268 = sphi 0, %s252
    $region4: #{tpu_custom_call.1} parent=1 // loop_header_branch
      %26 = sbr.rel (%p24) target = $region8
    $region5: #{tpu_custom_call.1} parent=1 // loop_body
      %s28 = ssub.s32 %s23, 1
      %s29 = ssub.s32 %s23, 2
      %s30 = sadd.s32 %s23, 1
      %s31 = ssub.s32 %s23, %s30
      %p32 = scmp.eq.s32.totalorder %s31, 0
      %s34 = sadd.s32 %s33, 1
      %s35 = scalar_select %p32, %s33, %s34
      %p38 = pneg %p32
      %p39 = scmp.eq.s32.totalorder %s23, 1
      %p40 = por %p38, %p39
      %p41 = scmp.ne.s32.totalorder %s33, %s36
      %p42 = scmp.eq.s32.totalorder %s23, 0
      %p43 = por %p41, %p42
      %p44 = scmp.ne.s32.totalorder %s33, %s36
      %p45 = scmp.eq.s32.totalorder %s28, 1
      %p46 = por %p44, %p45
      %p47 = scmp.ne.s32.totalorder %s36, %s37
      %p48 = scmp.eq.s32.totalorder %s28, 0
      %p49 = por %p47, %p48
      %p50 = scmp.ne.s32.totalorder %s36, %s37
      %p51 = scmp.eq.s32.totalorder %s29, 1
      %p52 = por %p50, %p51
      %p54 = scmp.ne.s32.totalorder %s37, %s53
      %p55 = scmp.eq.s32.totalorder %s29, 0
      %p56 = por %p54, %p55
      %s58 = sadd.s32 %s57, 1
      %p61 = scmp.eq.s32.totalorder %s23, 1
      %p62 = scmp.ne.s32.totalorder %s57, %s59
      %p63 = scmp.eq.s32.totalorder %s23, 0
      %p64 = por %p62, %p63
      %p65 = scmp.ne.s32.totalorder %s57, %s59
      %p66 = scmp.eq.s32.totalorder %s28, 1
      %p67 = por %p65, %p66
      %p68 = scmp.ne.s32.totalorder %s59, %s60
      %p69 = scmp.eq.s32.totalorder %s28, 0
      %p70 = por %p68, %p69
      %p71 = scmp.ne.s32.totalorder %s59, %s60
      %p72 = scmp.eq.s32.totalorder %s29, 1
      %p73 = por %p71, %p72
      %p75 = scmp.ne.s32.totalorder %s60, %s74
      %p76 = scmp.eq.s32.totalorder %s29, 0
      %p77 = por %p75, %p76
      %s79 = sadd.s32 %s78, 1
      %p82 = scmp.eq.s32.totalorder %s23, 1
      %p83 = scmp.ne.s32.totalorder %s78, %s80
      %p84 = scmp.eq.s32.totalorder %s23, 0
      %p85 = por %p83, %p84
      %p86 = scmp.ne.s32.totalorder %s78, %s80
      %p87 = scmp.eq.s32.totalorder %s28, 1
      %p88 = por %p86, %p87
      %p89 = scmp.ne.s32.totalorder %s80, %s81
      %p90 = scmp.eq.s32.totalorder %s28, 0
      %p91 = por %p89, %p90
      %p92 = scmp.ne.s32.totalorder %s80, %s81
      %p93 = scmp.eq.s32.totalorder %s29, 1
      %p94 = por %p92, %p93
      %p96 = scmp.ne.s32.totalorder %s81, %s95
      %p97 = scmp.eq.s32.totalorder %s29, 0
      %p98 = por %p96, %p97
      %s100 = sadd.s32 %s99, 1
      %p103 = scmp.eq.s32.totalorder %s23, 1
      %p104 = scmp.ne.s32.totalorder %s99, %s101
      %p105 = scmp.eq.s32.totalorder %s23, 0
      %p106 = por %p104, %p105
      %p107 = scmp.ne.s32.totalorder %s99, %s101
      %p108 = scmp.eq.s32.totalorder %s28, 1
      %p109 = por %p107, %p108
      %p110 = scmp.ne.s32.totalorder %s101, %s102
      %p111 = scmp.eq.s32.totalorder %s28, 0
      %p112 = por %p110, %p111
      %p113 = scmp.ne.s32.totalorder %s101, %s102
      %p114 = scmp.eq.s32.totalorder %s29, 1
      %p115 = por %p113, %p114
      %p117 = scmp.ne.s32.totalorder %s102, %s116
      %p118 = scmp.eq.s32.totalorder %s29, 0
      %p119 = por %p117, %p118
      %s121 = sadd.s32 %s120, 1
      %p124 = scmp.eq.s32.totalorder %s23, 1
      %p125 = scmp.ne.s32.totalorder %s120, %s122
      %p126 = scmp.eq.s32.totalorder %s23, 0
      %p127 = por %p125, %p126
      %p128 = scmp.ne.s32.totalorder %s120, %s122
      %p129 = scmp.eq.s32.totalorder %s28, 1
      %p130 = por %p128, %p129
      %p131 = scmp.ne.s32.totalorder %s122, %s123
      %p132 = scmp.eq.s32.totalorder %s28, 0
      %p133 = por %p131, %p132
      %p134 = scmp.ne.s32.totalorder %s122, %s123
      %p135 = scmp.eq.s32.totalorder %s29, 1
      %p136 = por %p134, %p135
      %p138 = scmp.ne.s32.totalorder %s123, %s137
      %p139 = scmp.eq.s32.totalorder %s29, 0
      %p140 = por %p138, %p139
      %s142 = sadd.s32 %s141, 1
      %p145 = scmp.eq.s32.totalorder %s23, 1
      %p146 = scmp.ne.s32.totalorder %s141, %s143
      %p147 = scmp.eq.s32.totalorder %s23, 0
      %p148 = por %p146, %p147
      %p149 = scmp.ne.s32.totalorder %s141, %s143
      %p150 = scmp.eq.s32.totalorder %s28, 1
      %p151 = por %p149, %p150
      %p152 = scmp.ne.s32.totalorder %s143, %s144
      %p153 = scmp.eq.s32.totalorder %s28, 0
      %p154 = por %p152, %p153
      %p155 = scmp.ne.s32.totalorder %s143, %s144
      %p156 = scmp.eq.s32.totalorder %s29, 1
      %p157 = por %p155, %p156
      %p159 = scmp.ne.s32.totalorder %s144, %s158
      %p160 = scmp.eq.s32.totalorder %s29, 0
      %p161 = por %p159, %p160
      %s163 = sadd.s32 %s162, 1
      %p166 = scmp.eq.s32.totalorder %s23, 1
      %p167 = scmp.ne.s32.totalorder %s162, %s164
      %p168 = scmp.eq.s32.totalorder %s23, 0
      %p169 = por %p167, %p168
      %p170 = scmp.ne.s32.totalorder %s162, %s164
      %p171 = scmp.eq.s32.totalorder %s28, 1
      %p172 = por %p170, %p171
      %p173 = scmp.ne.s32.totalorder %s164, %s165
      %p174 = scmp.eq.s32.totalorder %s28, 0
      %p175 = por %p173, %p174
      %p176 = scmp.ne.s32.totalorder %s164, %s165
      %p177 = scmp.eq.s32.totalorder %s29, 1
      %p178 = por %p176, %p177
      %p180 = scmp.ne.s32.totalorder %s165, %s179
      %p181 = scmp.eq.s32.totalorder %s29, 0
      %p182 = por %p180, %p181
      %s184 = sadd.s32 %s183, 1
      %p187 = scmp.eq.s32.totalorder %s23, 1
      %p188 = scmp.ne.s32.totalorder %s183, %s185
      %p189 = scmp.eq.s32.totalorder %s23, 0
      %p190 = por %p188, %p189
      %p191 = scmp.ne.s32.totalorder %s183, %s185
      %p192 = scmp.eq.s32.totalorder %s28, 1
      %p193 = por %p191, %p192
      %p194 = scmp.ne.s32.totalorder %s185, %s186
      %p195 = scmp.eq.s32.totalorder %s28, 0
      %p196 = por %p194, %p195
      %p197 = scmp.ne.s32.totalorder %s185, %s186
      %p198 = scmp.eq.s32.totalorder %s29, 1
      %p199 = por %p197, %p198
      %p201 = scmp.ne.s32.totalorder %s186, %s200
      %p202 = scmp.eq.s32.totalorder %s29, 0
      %p203 = por %p201, %p202
      %s205 = sadd.s32 %s204, 1
      %p208 = scmp.eq.s32.totalorder %s23, 1
      %p209 = scmp.ne.s32.totalorder %s204, %s206
      %p210 = scmp.eq.s32.totalorder %s23, 0
      %p211 = por %p209, %p210
      %p212 = scmp.ne.s32.totalorder %s204, %s206
      %p213 = scmp.eq.s32.totalorder %s28, 1
      %p214 = por %p212, %p213
      %p215 = scmp.ne.s32.totalorder %s206, %s207
      %p216 = scmp.eq.s32.totalorder %s28, 0
      %p217 = por %p215, %p216
      %p218 = scmp.ne.s32.totalorder %s206, %s207
      %p219 = scmp.eq.s32.totalorder %s29, 1
      %p220 = por %p218, %p219
      %p222 = scmp.ne.s32.totalorder %s207, %s221
      %p223 = scmp.eq.s32.totalorder %s29, 0
      %p224 = por %p222, %p223
      %s226 = sadd.s32 %s225, 1
      %p229 = scmp.eq.s32.totalorder %s23, 1
      %p230 = scmp.ne.s32.totalorder %s225, %s227
      %p231 = scmp.eq.s32.totalorder %s23, 0
      %p232 = por %p230, %p231
      %p233 = scmp.ne.s32.totalorder %s225, %s227
      %p234 = scmp.eq.s32.totalorder %s28, 1
      %p235 = por %p233, %p234
      %p236 = scmp.ne.s32.totalorder %s227, %s228
      %p237 = scmp.eq.s32.totalorder %s28, 0
      %p238 = por %p236, %p237
      %p239 = scmp.ne.s32.totalorder %s227, %s228
      %p240 = scmp.eq.s32.totalorder %s29, 1
      %p241 = por %p239, %p240
      %p243 = scmp.ne.s32.totalorder %s228, %s242
      %p244 = scmp.eq.s32.totalorder %s29, 0
      %p245 = por %p243, %p244
      %s246 = ssub.s32 %s23, %s30
      %p247 = scmp.eq.s32.totalorder %s246, 0
      %s249 = sadd.s32 %s248, 1
      %s250 = scalar_select %p247, %s248, %s249
      %p253 = pneg %p247
      %p254 = scmp.eq.s32.totalorder %s23, 1
      %p255 = por %p253, %p254
      %p256 = scmp.ne.s32.totalorder %s248, %s251
      %p257 = scmp.eq.s32.totalorder %s23, 0
      %p258 = por %p256, %p257
      %p259 = scmp.ne.s32.totalorder %s248, %s251
      %p260 = scmp.eq.s32.totalorder %s28, 1
      %p261 = por %p259, %p260
      %p262 = scmp.ne.s32.totalorder %s251, %s252
      %p263 = scmp.eq.s32.totalorder %s28, 0
      %p264 = por %p262, %p263
      %p265 = scmp.ne.s32.totalorder %s251, %s252
      %p266 = scmp.eq.s32.totalorder %s29, 1
      %p267 = por %p265, %p266
      %p269 = scmp.ne.s32.totalorder %s252, %s268
      %p270 = scmp.eq.s32.totalorder %s29, 0
      %p271 = por %p269, %p270
      %p272 = scmp.le.s32.totalorder 1, %s23
      %p273 = scmp.lt.s32.totalorder %s23, 3
      %p274 = pnand %p272, %p273
      %p275 = pneg %p274
      // Predicated region
      $region9: #{tpu_custom_call.1} parent=5 // pred_check
        _
      $region10: #{tpu_custom_call.1} parent=5 // pred_check_branch
        %277 = sbr.rel (%p274) target = $region12
      $region11: #{tpu_custom_call.1} parent=5 // pred_region
        %s278 = ssub.s32 %s23, 1
        // Predicated region
        $region13: #{tpu_custom_call.1} parent=11 // pred_check
          %p279 = pneg %p70
        $region14: #{tpu_custom_call.1} parent=11 // pred_check_branch
          %281 = sbr.rel (%p279) target = $region16
        $region15: #{tpu_custom_call.1} parent=11 // pred_region
          %283 = vsyncadd [#allocation7], 0
          %s284 = sshll.u32 %s1, 4
          %s285 = int_to_ptr.hbm [resolvable:$true] %s284
          %s286 = sshll.u32 [#allocation6], 4
          %s287 = int_to_ptr.vmem [resolvable:$true] %s286
          %292 = dma.hbm_to_vmem [thread:$0]  %s285, 1728, %s287, [#allocation7], 64, 64, 4
        $region16: #{tpu_custom_call.1} parent=11 // pred_fallthru
          _
        // Predicated region
        $region17: #{tpu_custom_call.1} parent=11 // pred_check
          %p293 = pneg %p91
        $region18: #{tpu_custom_call.1} parent=11 // pred_check_branch
          %295 = sbr.rel (%p293) target = $region20
        $region19: #{tpu_custom_call.1} parent=11 // pred_region
          _
        $region20: #{tpu_custom_call.1} parent=11 // pred_fallthru
          _
        // Predicated region
        $region21: #{tpu_custom_call.1} parent=11 // pred_check
          %p296 = pneg %p112
        $region22: #{tpu_custom_call.1} parent=11 // pred_check_branch
          %298 = sbr.rel (%p296) target = $region24
        $region23: #{tpu_custom_call.1} parent=11 // pred_region
          _
        $region24: #{tpu_custom_call.1} parent=11 // pred_fallthru
          _
        // Predicated region
        $region25: #{tpu_custom_call.1} parent=11 // pred_check
          %p299 = pneg %p133
        $region26: #{tpu_custom_call.1} parent=11 // pred_check_branch
          %301 = sbr.rel (%p299) target = $region28
        $region27: #{tpu_custom_call.1} parent=11 // pred_region
          _
        $region28: #{tpu_custom_call.1} parent=11 // pred_fallthru
          _
        // Predicated region
        $region29: #{tpu_custom_call.1} parent=11 // pred_check
          %p302 = pneg %p154
        $region30: #{tpu_custom_call.1} parent=11 // pred_check_branch
          %304 = sbr.rel (%p302) target = $region32
        $region31: #{tpu_custom_call.1} parent=11 // pred_region
          _
        $region32: #{tpu_custom_call.1} parent=11 // pred_fallthru
          _
        // Predicated region
        $region33: #{tpu_custom_call.1} parent=11 // pred_check
          %p305 = pneg %p175
        $region34: #{tpu_custom_call.1} parent=11 // pred_check_branch
          %307 = sbr.rel (%p305) target = $region36
        $region35: #{tpu_custom_call.1} parent=11 // pred_region
          _
        $region36: #{tpu_custom_call.1} parent=11 // pred_fallthru
          _
        // Predicated region
        $region37: #{tpu_custom_call.1} parent=11 // pred_check
          %p308 = pneg %p196
        $region38: #{tpu_custom_call.1} parent=11 // pred_check_branch
          %310 = sbr.rel (%p308) target = $region40
        $region39: #{tpu_custom_call.1} parent=11 // pred_region
          _
        $region40: #{tpu_custom_call.1} parent=11 // pred_fallthru
          _
        // Predicated region
        $region41: #{tpu_custom_call.1} parent=11 // pred_check
          %p311 = pneg %p217
        $region42: #{tpu_custom_call.1} parent=11 // pred_check_branch
          %313 = sbr.rel (%p311) target = $region44
        $region43: #{tpu_custom_call.1} parent=11 // pred_region
          _
        $region44: #{tpu_custom_call.1} parent=11 // pred_fallthru
          _
        // Predicated region
        $region45: #{tpu_custom_call.1} parent=11 // pred_check
          %p314 = pneg %p238
        $region46: #{tpu_custom_call.1} parent=11 // pred_check_branch
          %316 = sbr.rel (%p314) target = $region48
        $region47: #{tpu_custom_call.1} parent=11 // pred_region
          _
        $region48: #{tpu_custom_call.1} parent=11 // pred_fallthru
          _
      $region12: #{tpu_custom_call.1} parent=5 // pred_fallthru
        _
      %p317 = scmp.lt.s32.totalorder %s23, 2
      // Predicated region
      $region49: #{tpu_custom_call.1} parent=5 // pred_check
        %p318 = pneg %p317
      $region50: #{tpu_custom_call.1} parent=5 // pred_check_branch
        %320 = sbr.rel (%p318) target = $region52
      $region51: #{tpu_custom_call.1} parent=5 // pred_region
        // Predicated region
        $region53: #{tpu_custom_call.1} parent=51 // pred_check
          %p321 = pneg %p43
        $region54: #{tpu_custom_call.1} parent=51 // pred_check_branch
          %323 = sbr.rel (%p321) target = $region56
        $region55: #{tpu_custom_call.1} parent=51 // pred_region
          %s324 = sand.u32 %s33, 1
          %s325 = scalar_lea.sflag [#allocation4], %s324
          %s326 = sand.u32 %s33, 1
          %s327 = smul.addr %s326, 32
          %s328 = scalar_lea.vmem [#allocation3], %s327
          %330 = vsyncadd %s325, 0
          %s331 = smul.addr %s23, 4
          %s332 = smul.addr %s331, 8
          %s333 = scalar_lea.hbm %s0, %s332
          %s335 = sshll.u32 %s333, 4
          %s336 = int_to_ptr.hbm [resolvable:$true] %s335
          %s337 = sshll.u32 %s328, 4
          %s338 = int_to_ptr.vmem [resolvable:$true] %s337
          %340 = dma.hbm_to_vmem [thread:$0]  %s336, 512, %s338, %s325
        $region56: #{tpu_custom_call.1} parent=51 // pred_fallthru
          _
      $region52: #{tpu_custom_call.1} parent=5 // pred_fallthru
        _
      %p341 = scmp.le.s32.totalorder 1, %s23
      %p342 = scmp.lt.s32.totalorder %s23, 3
      %p343 = pnand %p341, %p342
      %p344 = pneg %p343
      // Predicated region
      $region57: #{tpu_custom_call.1} parent=5 // pred_check
        _
      $region58: #{tpu_custom_call.1} parent=5 // pred_check_branch
        %346 = sbr.rel (%p343) target = $region60
      $region59: #{tpu_custom_call.1} parent=5 // pred_region
        %s347 = ssub.s32 %s23, 1
        %s348 = sand.u32 %s36, 1
        %s349 = scalar_lea.sflag [#allocation4], %s348
        %s350 = sand.u32 %s36, 1
        %s351 = smul.addr %s350, 32
        %s352 = scalar_lea.vmem [#allocation3], %s351
        // Predicated region
        $region61: #{tpu_custom_call.1} parent=59 // pred_check
          %p353 = pneg %p49
        $region62: #{tpu_custom_call.1} parent=59 // pred_check_branch
          %355 = sbr.rel (%p353) target = $region64
        $region63: #{tpu_custom_call.1} parent=59 // pred_region
          %357 = dma.done %s349, 512
        $region64: #{tpu_custom_call.1} parent=59 // pred_fallthru
          _
        // Predicated region
        $region65: #{tpu_custom_call.1} parent=59 // pred_check
          %p358 = pneg %p70
        $region66: #{tpu_custom_call.1} parent=59 // pred_check_branch
          %360 = sbr.rel (%p358) target = $region68
        $region67: #{tpu_custom_call.1} parent=59 // pred_region
          %362 = dma.done [#allocation7], 1728
        $region68: #{tpu_custom_call.1} parent=59 // pred_fallthru
          _
        %s363 = sand.u32 %s36, 1
        %s364 = scalar_lea.sflag [#allocation4], %s363
        %s365 = sand.u32 %s36, 1
        %s366 = smul.addr %s365, 32
        %s367 = scalar_lea.vmem [#allocation3], %s366
        %p368 = pneg %p49
        %p369 = pneg %p46
        %p370 = pneg %p70
        %p371 = pneg %p67
        %p372 = pneg %p91
        %p373 = pneg %p88
        %p374 = pneg %p112
        %p375 = pneg %p109
        %p376 = pneg %p133
        %p377 = pneg %p130
        %p378 = pneg %p154
        %p379 = pneg %p151
        %p380 = pneg %p175
        %p381 = pneg %p172
        %p382 = pneg %p196
        %p383 = pneg %p193
        %p384 = pneg %p217
        %p385 = pneg %p214
        %p386 = pneg %p238
        %p387 = pneg %p235
        %p388 = pneg %p264
        %p389 = pneg %p261
        %s390 = sand.u32 %s251, 1
        %s391 = scalar_lea.sflag [#allocation5], %s390
        %s392 = sand.u32 %s251, 1
        %s393 = smul.addr %s392, 32
        %s394 = scalar_lea.vmem [#allocation8], %s393
        %v396 = vld [vmem:[%s352] sm:$0xff]
        %v397 = vld [vmem:[%s352 + $0x8] sm:$0xff]
        %v398 = vld [vmem:[%s352 + $0x10] sm:$0xff]
        %v399 = vld [vmem:[%s352 + $0x18] sm:$0xff]
        %v400 = vld [vmem:[%s2] sm:$0xff]
        %v401 = vld [vmem:[%s3] sm:$0xff]
        %v402 = vadd.f32 %v396, %v397
        %v403 = vadd.f32 %v402, %v398
        %v404 = vadd.f32 %v403, %v399
        %405 = vadd.xlane.f32.xlu0 %v404
        %v406 = vpop.xlane.xlu0 %405
        %v407 = vrot.slane %v406, 4
        %v408 = vadd.f32 %v406, %v407
        %v409 = vrot.slane %v408, 2
        %v410 = vadd.f32 %v408, %v409
        %v411 = vrot.slane %v410, 1
        %v412 = vadd.f32 %v410, %v411
        %s413 = vtos %v412
        %v414 = vmul.f32 %v396, %v396
        %v415 = vmul.f32 %v397, %v397
        %v416 = vmul.f32 %v398, %v398
        %v417 = vmul.f32 %v399, %v399
        %v418 = vadd.f32 %v414, %v415
        %v419 = vadd.f32 %v418, %v416
        %v420 = vadd.f32 %v419, %v417
        %421 = vadd.xlane.f32.xlu0 %v420
        %v422 = vpop.xlane.xlu0 %421
        %v423 = vrot.slane %v422, 4
        %v424 = vadd.f32 %v422, %v423
        %v425 = vrot.slane %v424, 2
        %v426 = vadd.f32 %v424, %v425
        %v427 = vrot.slane %v426, 1
        %v428 = vadd.f32 %v426, %v427
        %s429 = vtos %v428
        %s430 = smul.f32 %s413, 0.00024414063
        %s431 = smul.f32 %s429, 0.00024414063
        %s432 = smul.f32 %s430, %s430
        %s433 = ssub.f32 %s431, %s432
        %s434 = sadd.f32 %s433, 1e-05
        %v435 = vstv %s434
        %v436 = vrsqrt.pop %v435
        %v437 = vmul.f32 %v436, %v435
        %v438 = vmul.f32 %v437, %v436
        %v439 = vmul.f32 0.5, %v438
        %v440 = vsub.f32 1.5, %v439
        %v441 = vmul.f32 %v436, %v440
        %vm442 = vweird.f32 %v435
        %vm443 = vweird.f32 %v436
        %vm444 = vmor %vm442, %vm443
        %v445 = vsel %vm444, %v436, %v441
        %s446 = vtos %v445
        %v447 = vstv %s446
        %v448 = vmul.f32 %v400, %v447
        %v449 = vstv %s430
        %v450 = vmul.f32 %v449, %v448
        %v451 = vsub.f32 %v401, %v450
        %453 = vset.pattern.permute.xlu0 0
        %454 = vperm.xlu0 %453, %v448
        %v455 = vpop.permute.xlu0 %454
        %v457 = vmul.f32 %v396, %v455
        %v458 = vmul.f32 %v397, %v455
        %v459 = vmul.f32 %v398, %v455
        %v460 = vmul.f32 %v399, %v455
        %462 = vset.pattern.permute.xlu0 0
        %463 = vperm.xlu0 %462, %v451
        %v464 = vpop.permute.xlu0 %463
        %v466 = vadd.f32 %v457, %v464
        %v467 = vadd.f32 %v458, %v464
        %v468 = vadd.f32 %v459, %v464
        %v469 = vadd.f32 %v460, %v464
        %v470 = vmax.f32 %v466, 0.0
        %v471 = vmax.f32 %v467, 0.0
        %v472 = vmax.f32 %v468, 0.0
        %v473 = vmax.f32 %v469, 0.0
        %v474 = vld [vmem:[%s4] sm:$0xff]
        %v475 = vld [vmem:[%s5] sm:$0xff]
        %476 = vrot.lane.b32.xlu0 %v470, 73
        %v477 = vpop.permute.xlu0 %476
        %478 = vrot.lane.b32.xlu0 %v471, 73
        %v479 = vpop.permute.xlu0 %478
        %480 = vrot.lane.b32.xlu0 %v472, 73
        %v481 = vpop.permute.xlu0 %480
        %482 = vrot.lane.b32.xlu0 %v473, 73
        %v483 = vpop.permute.xlu0 %482
        %v484 = vlaneseq
        %v485 = vand.u32 %v484, 127
        %vm486 = vcmp.lt.s32.totalorder %v485, 73
        %v487 = vsel %vm486, %v481, %v483
        %v488 = vsel %vm486, %v479, %v481
        %v489 = vsel %vm486, %v477, %v479
        %v490 = vsel %vm486, %v483, %v477
        %v491 = vld [vmem:[#allocation6] sm:$0xf]
        %v493 = vperm.slane %v491, 0
        %v494 = vperm.slane %v491, 1
        %v495 = vperm.slane %v491, 2
        %v496 = vperm.slane %v491, 3
        %v501 = vmul.f32 %v490, %v493
        %v502 = vmul.f32 %v489, %v494
        %v503 = vmul.f32 %v488, %v495
        %v504 = vmul.f32 %v487, %v496
        %505 = vrot.lane.b32.xlu0 %v470, 72
        %v506 = vpop.permute.xlu0 %505
        %507 = vrot.lane.b32.xlu0 %v471, 72
        %v508 = vpop.permute.xlu0 %507
        %509 = vrot.lane.b32.xlu0 %v472, 72
        %v510 = vpop.permute.xlu0 %509
        %511 = vrot.lane.b32.xlu0 %v473, 72
        %v512 = vpop.permute.xlu0 %511
        %vm513 = vcmp.lt.s32.totalorder %v485, 72
        %v514 = vsel %vm513, %v510, %v512
        %v515 = vsel %vm513, %v508, %v510
        %v516 = vsel %vm513, %v506, %v508
        %v517 = vsel %vm513, %v512, %v506
        %s518 = scalar_lea.vmem [#allocation6], 4
        %v519 = vld [vmem:[%s518] sm:$0xf]
        %v521 = vperm.slane %v519, 0
        %v522 = vperm.slane %v519, 1
        %v523 = vperm.slane %v519, 2
        %v524 = vperm.slane %v519, 3
        %v529 = vmul.f32 %v517, %v521
        %v530 = vmul.f32 %v516, %v522
        %v531 = vmul.f32 %v515, %v523
        %v532 = vmul.f32 %v514, %v524
        %v533 = vpack.c.bf16 %v502, %v501
        %v534 = vpack.c.bf16 %v504, %v503
        %v535 = vpack.c.bf16 %v530, %v529
        %v536 = vpack.c.bf16 %v532, %v531
        %537 = vst [vmem:[#allocation2] sm:$0xff] %v533
        %538 = vst [vmem:[#allocation2 + $0x8] sm:$0xff] %v534
        %539 = vst [vmem:[#allocation2 + $0x10] sm:$0xff] %v535
        %540 = vst [vmem:[#allocation2 + $0x18] sm:$0xff] %v536
        %541 = vrot.lane.b32.xlu0 %v470, 71
        %v542 = vpop.permute.xlu0 %541
        %543 = vrot.lane.b32.xlu0 %v471, 71
        %v544 = vpop.permute.xlu0 %543
        %545 = vrot.lane.b32.xlu0 %v472, 71
        %v546 = vpop.permute.xlu0 %545
        %547 = vrot.lane.b32.xlu0 %v473, 71
        %v548 = vpop.permute.xlu0 %547
        %vm549 = vcmp.lt.s32.totalorder %v485, 71
        %v550 = vsel %vm549, %v546, %v548
        %v551 = vsel %vm549, %v544, %v546
        %v552 = vsel %vm549, %v542, %v544
        %v553 = vsel %vm549, %v548, %v542
        %s554 = scalar_lea.vmem [#allocation6], 8
        %v555 = vld [vmem:[%s554] sm:$0xf]
        %v557 = vperm.slane %v555, 0
        %v558 = vperm.slane %v555, 1
        %v559 = vperm.slane %v555, 2
        %v560 = vperm.slane %v555, 3
        %v565 = vmul.f32 %v553, %v557
        %v566 = vmul.f32 %v552, %v558
        %v567 = vmul.f32 %v551, %v559
        %v568 = vmul.f32 %v550, %v560
        %569 = vrot.lane.b32.xlu0 %v470, 65
        %v570 = vpop.permute.xlu0 %569
        %571 = vrot.lane.b32.xlu0 %v471, 65
        %v572 = vpop.permute.xlu0 %571
        %573 = vrot.lane.b32.xlu0 %v472, 65
        %v574 = vpop.permute.xlu0 %573
        %575 = vrot.lane.b32.xlu0 %v473, 65
        %v576 = vpop.permute.xlu0 %575
        %vm577 = vcmp.lt.s32.totalorder %v485, 65
        %v578 = vsel %vm577, %v574, %v576
        %v579 = vsel %vm577, %v572, %v574
        %v580 = vsel %vm577, %v570, %v572
        %v581 = vsel %vm577, %v576, %v570
        %s582 = scalar_lea.vmem [#allocation6], 12
        %v583 = vld [vmem:[%s582] sm:$0xf]
        %v585 = vperm.slane %v583, 0
        %v586 = vperm.slane %v583, 1
        %v587 = vperm.slane %v583, 2
        %v588 = vperm.slane %v583, 3
        %v593 = vmul.f32 %v581, %v585
        %v594 = vmul.f32 %v580, %v586
        %v595 = vmul.f32 %v579, %v587
        %v596 = vmul.f32 %v578, %v588
        %v597 = vpack.c.bf16 %v566, %v565
        %v598 = vpack.c.bf16 %v568, %v567
        %v599 = vpack.c.bf16 %v594, %v593
        %v600 = vpack.c.bf16 %v596, %v595
        %601 = vst [vmem:[#allocation2 + $0x20] sm:$0xff] %v597
        %602 = vst [vmem:[#allocation2 + $0x28] sm:$0xff] %v598
        %603 = vst [vmem:[#allocation2 + $0x30] sm:$0xff] %v599
        %604 = vst [vmem:[#allocation2 + $0x38] sm:$0xff] %v600
        %605 = vrot.lane.b32.xlu0 %v470, 64
        %v606 = vpop.permute.xlu0 %605
        %607 = vrot.lane.b32.xlu0 %v471, 64
        %v608 = vpop.permute.xlu0 %607
        %609 = vrot.lane.b32.xlu0 %v472, 64
        %v610 = vpop.permute.xlu0 %609
        %611 = vrot.lane.b32.xlu0 %v473, 64
        %v612 = vpop.permute.xlu0 %611
        %vm613 = vcmp.lt.s32.totalorder %v485, 64
        %v614 = vsel %vm613, %v610, %v612
        %v615 = vsel %vm613, %v608, %v610
        %v616 = vsel %vm613, %v606, %v608
        %v617 = vsel %vm613, %v612, %v606
        %s618 = scalar_lea.vmem [#allocation6], 16
        %v619 = vld [vmem:[%s618] sm:$0xf]
        %v621 = vperm.slane %v619, 0
        %v622 = vperm.slane %v619, 1
        %v623 = vperm.slane %v619, 2
        %v624 = vperm.slane %v619, 3
        %v629 = vmul.f32 %v617, %v621
        %v630 = vmul.f32 %v616, %v622
        %v631 = vmul.f32 %v615, %v623
        %v632 = vmul.f32 %v614, %v624
        %633 = vrot.lane.b32.xlu0 %v470, 63
        %v634 = vpop.permute.xlu0 %633
        %635 = vrot.lane.b32.xlu0 %v471, 63
        %v636 = vpop.permute.xlu0 %635
        %637 = vrot.lane.b32.xlu0 %v472, 63
        %v638 = vpop.permute.xlu0 %637
        %639 = vrot.lane.b32.xlu0 %v473, 63
        %v640 = vpop.permute.xlu0 %639
        %vm641 = vcmp.lt.s32.totalorder %v485, 63
        %v642 = vsel %vm641, %v638, %v640
        %v643 = vsel %vm641, %v636, %v638
        %v644 = vsel %vm641, %v634, %v636
        %v645 = vsel %vm641, %v640, %v634
        %s646 = scalar_lea.vmem [#allocation6], 20
        %v647 = vld [vmem:[%s646] sm:$0xf]
        %v649 = vperm.slane %v647, 0
        %v650 = vperm.slane %v647, 1
        %v651 = vperm.slane %v647, 2
        %v652 = vperm.slane %v647, 3
        %v657 = vmul.f32 %v645, %v649
        %v658 = vmul.f32 %v644, %v650
        %v659 = vmul.f32 %v643, %v651
        %v660 = vmul.f32 %v642, %v652
        %v661 = vpack.c.bf16 %v630, %v629
        %v662 = vpack.c.bf16 %v632, %v631
        %v663 = vpack.c.bf16 %v658, %v657
        %v664 = vpack.c.bf16 %v660, %v659
        %665 = vst [vmem:[#allocation2 + $0x40] sm:$0xff] %v661
        %666 = vst [vmem:[#allocation2 + $0x48] sm:$0xff] %v662
        %667 = vst [vmem:[#allocation2 + $0x50] sm:$0xff] %v663
        %668 = vst [vmem:[#allocation2 + $0x58] sm:$0xff] %v664
        %669 = vrot.lane.b32.xlu0 %v470, 57
        %v670 = vpop.permute.xlu0 %669
        %671 = vrot.lane.b32.xlu0 %v471, 57
        %v672 = vpop.permute.xlu0 %671
        %673 = vrot.lane.b32.xlu0 %v472, 57
        %v674 = vpop.permute.xlu0 %673
        %675 = vrot.lane.b32.xlu0 %v473, 57
        %v676 = vpop.permute.xlu0 %675
        %vm677 = vcmp.lt.s32.totalorder %v485, 57
        %v678 = vsel %vm677, %v674, %v676
        %v679 = vsel %vm677, %v672, %v674
        %v680 = vsel %vm677, %v670, %v672
        %v681 = vsel %vm677, %v676, %v670
        %s682 = scalar_lea.vmem [#allocation6], 24
        %v683 = vld [vmem:[%s682] sm:$0xf]
        %v685 = vperm.slane %v683, 0
        %v686 = vperm.slane %v683, 1
        %v687 = vperm.slane %v683, 2
        %v688 = vperm.slane %v683, 3
        %v693 = vmul.f32 %v681, %v685
        %v694 = vmul.f32 %v680, %v686
        %v695 = vmul.f32 %v679, %v687
        %v696 = vmul.f32 %v678, %v688
        %697 = vrot.lane.b32.xlu0 %v470, 56
        %v698 = vpop.permute.xlu0 %697
        %699 = vrot.lane.b32.xlu0 %v471, 56
        %v700 = vpop.permute.xlu0 %699
        %701 = vrot.lane.b32.xlu0 %v472, 56
        %v702 = vpop.permute.xlu0 %701
        %703 = vrot.lane.b32.xlu0 %v473, 56
        %v704 = vpop.permute.xlu0 %703
        %vm705 = vcmp.lt.s32.totalorder %v485, 56
        %v706 = vsel %vm705, %v702, %v704
        %v707 = vsel %vm705, %v700, %v702
        %v708 = vsel %vm705, %v698, %v700
        %v709 = vsel %vm705, %v704, %v698
        %s710 = scalar_lea.vmem [#allocation6], 28
        %v711 = vld [vmem:[%s710] sm:$0xf]
        %v713 = vperm.slane %v711, 0
        %v714 = vperm.slane %v711, 1
        %v715 = vperm.slane %v711, 2
        %v716 = vperm.slane %v711, 3
        %v721 = vmul.f32 %v709, %v713
        %v722 = vmul.f32 %v708, %v714
        %v723 = vmul.f32 %v707, %v715
        %v724 = vmul.f32 %v706, %v716
        %v725 = vpack.c.bf16 %v694, %v693
        %v726 = vpack.c.bf16 %v696, %v695
        %v727 = vpack.c.bf16 %v722, %v721
        %v728 = vpack.c.bf16 %v724, %v723
        %729 = vst [vmem:[#allocation2 + $0x60] sm:$0xff] %v725
        %730 = vst [vmem:[#allocation2 + $0x68] sm:$0xff] %v726
        %731 = vst [vmem:[#allocation2 + $0x70] sm:$0xff] %v727
        %732 = vst [vmem:[#allocation2 + $0x78] sm:$0xff] %v728
        %733 = vrot.lane.b32.xlu0 %v470, 55
        %v734 = vpop.permute.xlu0 %733
        %735 = vrot.lane.b32.xlu0 %v471, 55
        %v736 = vpop.permute.xlu0 %735
        %737 = vrot.lane.b32.xlu0 %v472, 55
        %v738 = vpop.permute.xlu0 %737
        %739 = vrot.lane.b32.xlu0 %v473, 55
        %v740 = vpop.permute.xlu0 %739
        %vm741 = vcmp.lt.s32.totalorder %v485, 55
        %v742 = vsel %vm741, %v738, %v740
        %v743 = vsel %vm741, %v736, %v738
        %v744 = vsel %vm741, %v734, %v736
        %v745 = vsel %vm741, %v740, %v734
        %s746 = scalar_lea.vmem [#allocation6], 32
        %v747 = vld [vmem:[%s746] sm:$0xf]
        %v749 = vperm.slane %v747, 0
        %v750 = vperm.slane %v747, 1
        %v751 = vperm.slane %v747, 2
        %v752 = vperm.slane %v747, 3
        %v757 = vmul.f32 %v745, %v749
        %v758 = vmul.f32 %v744, %v750
        %v759 = vmul.f32 %v743, %v751
        %v760 = vmul.f32 %v742, %v752
        %761 = vrot.lane.b32.xlu0 %v470, 9
        %v762 = vpop.permute.xlu0 %761
        %763 = vrot.lane.b32.xlu0 %v471, 9
        %v764 = vpop.permute.xlu0 %763
        %765 = vrot.lane.b32.xlu0 %v472, 9
        %v766 = vpop.permute.xlu0 %765
        %767 = vrot.lane.b32.xlu0 %v473, 9
        %v768 = vpop.permute.xlu0 %767
        %vm769 = vcmp.lt.s32.totalorder %v485, 9
        %v770 = vsel %vm769, %v766, %v768
        %v771 = vsel %vm769, %v764, %v766
        %v772 = vsel %vm769, %v762, %v764
        %v773 = vsel %vm769, %v768, %v762
        %s774 = scalar_lea.vmem [#allocation6], 36
        %v775 = vld [vmem:[%s774] sm:$0xf]
        %v777 = vperm.slane %v775, 0
        %v778 = vperm.slane %v775, 1
        %v779 = vperm.slane %v775, 2
        %v780 = vperm.slane %v775, 3
        %v785 = vmul.f32 %v773, %v777
        %v786 = vmul.f32 %v772, %v778
        %v787 = vmul.f32 %v771, %v779
        %v788 = vmul.f32 %v770, %v780
        %v789 = vpack.c.bf16 %v758, %v757
        %v790 = vpack.c.bf16 %v760, %v759
        %v791 = vpack.c.bf16 %v786, %v785
        %v792 = vpack.c.bf16 %v788, %v787
        %793 = vst [vmem:[#allocation2 + $0x80] sm:$0xff] %v789
        %794 = vst [vmem:[#allocation2 + $0x88] sm:$0xff] %v790
        %795 = vst [vmem:[#allocation2 + $0x90] sm:$0xff] %v791
        %796 = vst [vmem:[#allocation2 + $0x98] sm:$0xff] %v792
        %797 = vrot.lane.b32.xlu0 %v470, 8
        %v798 = vpop.permute.xlu0 %797
        %799 = vrot.lane.b32.xlu0 %v471, 8
        %v800 = vpop.permute.xlu0 %799
        %801 = vrot.lane.b32.xlu0 %v472, 8
        %v802 = vpop.permute.xlu0 %801
        %803 = vrot.lane.b32.xlu0 %v473, 8
        %v804 = vpop.permute.xlu0 %803
        %vm805 = vcmp.lt.s32.totalorder %v485, 8
        %v806 = vsel %vm805, %v802, %v804
        %v807 = vsel %vm805, %v800, %v802
        %v808 = vsel %vm805, %v798, %v800
        %v809 = vsel %vm805, %v804, %v798
        %s810 = scalar_lea.vmem [#allocation6], 40
        %v811 = vld [vmem:[%s810] sm:$0xf]
        %v813 = vperm.slane %v811, 0
        %v814 = vperm.slane %v811, 1
        %v815 = vperm.slane %v811, 2
        %v816 = vperm.slane %v811, 3
        %v821 = vmul.f32 %v809, %v813
        %v822 = vmul.f32 %v808, %v814
        %v823 = vmul.f32 %v807, %v815
        %v824 = vmul.f32 %v806, %v816
        %825 = vrot.lane.b32.xlu0 %v470, 7
        %v826 = vpop.permute.xlu0 %825
        %827 = vrot.lane.b32.xlu0 %v471, 7
        %v828 = vpop.permute.xlu0 %827
        %829 = vrot.lane.b32.xlu0 %v472, 7
        %v830 = vpop.permute.xlu0 %829
        %831 = vrot.lane.b32.xlu0 %v473, 7
        %v832 = vpop.permute.xlu0 %831
        %vm833 = vcmp.lt.s32.totalorder %v485, 7
        %v834 = vsel %vm833, %v830, %v832
        %v835 = vsel %vm833, %v828, %v830
        %v836 = vsel %vm833, %v826, %v828
        %v837 = vsel %vm833, %v832, %v826
        %s838 = scalar_lea.vmem [#allocation6], 44
        %v839 = vld [vmem:[%s838] sm:$0xf]
        %v841 = vperm.slane %v839, 0
        %v842 = vperm.slane %v839, 1
        %v843 = vperm.slane %v839, 2
        %v844 = vperm.slane %v839, 3
        %v849 = vmul.f32 %v837, %v841
        %v850 = vmul.f32 %v836, %v842
        %v851 = vmul.f32 %v835, %v843
        %v852 = vmul.f32 %v834, %v844
        %v853 = vpack.c.bf16 %v822, %v821
        %v854 = vpack.c.bf16 %v824, %v823
        %v855 = vpack.c.bf16 %v850, %v849
        %v856 = vpack.c.bf16 %v852, %v851
        %857 = vst [vmem:[#allocation2 + $0xa0] sm:$0xff] %v853
        %858 = vst [vmem:[#allocation2 + $0xa8] sm:$0xff] %v854
        %859 = vst [vmem:[#allocation2 + $0xb0] sm:$0xff] %v855
        %860 = vst [vmem:[#allocation2 + $0xb8] sm:$0xff] %v856
        %861 = vrot.lane.b32.xlu0 %v470, 1
        %v862 = vpop.permute.xlu0 %861
        %863 = vrot.lane.b32.xlu0 %v471, 1
        %v864 = vpop.permute.xlu0 %863
        %865 = vrot.lane.b32.xlu0 %v472, 1
        %v866 = vpop.permute.xlu0 %865
        %867 = vrot.lane.b32.xlu0 %v473, 1
        %v868 = vpop.permute.xlu0 %867
        %vm869 = vcmp.lt.s32.totalorder %v485, 1
        %v870 = vsel %vm869, %v866, %v868
        %v871 = vsel %vm869, %v864, %v866
        %v872 = vsel %vm869, %v862, %v864
        %v873 = vsel %vm869, %v868, %v862
        %s874 = scalar_lea.vmem [#allocation6], 48
        %v875 = vld [vmem:[%s874] sm:$0xf]
        %v877 = vperm.slane %v875, 0
        %v878 = vperm.slane %v875, 1
        %v879 = vperm.slane %v875, 2
        %v880 = vperm.slane %v875, 3
        %v885 = vmul.f32 %v873, %v877
        %v886 = vmul.f32 %v872, %v878
        %v887 = vmul.f32 %v871, %v879
        %v888 = vmul.f32 %v870, %v880
        %v889 = vpack.c.bf16 %v886, %v885
        %v890 = vpack.c.bf16 %v888, %v887
        %v891 = vpack.c.bf16 %v471, %v470
        %v892 = vpack.c.bf16 %v473, %v472
        %893 = vst [vmem:[#allocation2 + $0xc0] sm:$0xff] %v889
        %894 = vst [vmem:[#allocation2 + $0xc8] sm:$0xff] %v890
        %895 = vst [vmem:[#allocation2 + $0xd0] sm:$0xff] %v891
        %896 = vst [vmem:[#allocation2 + $0xd8] sm:$0xff] %v892
        %897 = vrot.lane.b32.xlu0 %v470, 127
        %v898 = vpop.permute.xlu0 %897
        %899 = vrot.lane.b32.xlu0 %v471, 127
        %v900 = vpop.permute.xlu0 %899
        %901 = vrot.lane.b32.xlu0 %v472, 127
        %v902 = vpop.permute.xlu0 %901
        %903 = vrot.lane.b32.xlu0 %v473, 127
        %v904 = vpop.permute.xlu0 %903
        %vm905 = vcmp.lt.s32.totalorder %v485, 127
        %v906 = vsel %vm905, %v902, %v904
        %v907 = vsel %vm905, %v900, %v902
        %v908 = vsel %vm905, %v898, %v900
        %v909 = vsel %vm905, %v904, %v898
        %s910 = scalar_lea.vmem [#allocation6], 56
        %v911 = vld [vmem:[%s910] sm:$0xf]
        %v913 = vperm.slane %v911, 0
        %v914 = vperm.slane %v911, 1
        %v915 = vperm.slane %v911, 2
        %v916 = vperm.slane %v911, 3
        %v921 = vmul.f32 %v908, %v913
        %v922 = vmul.f32 %v907, %v914
        %v923 = vmul.f32 %v906, %v915
        %v924 = vmul.f32 %v909, %v916
        %925 = vrot.lane.b32.xlu0 %v470, 121
        %v926 = vpop.permute.xlu0 %925
        %927 = vrot.lane.b32.xlu0 %v471, 121
        %v928 = vpop.permute.xlu0 %927
        %929 = vrot.lane.b32.xlu0 %v472, 121
        %v930 = vpop.permute.xlu0 %929
        %931 = vrot.lane.b32.xlu0 %v473, 121
        %v932 = vpop.permute.xlu0 %931
        %vm933 = vcmp.lt.s32.totalorder %v485, 121
        %v934 = vsel %vm933, %v930, %v932
        %v935 = vsel %vm933, %v928, %v930
        %v936 = vsel %vm933, %v926, %v928
        %v937 = vsel %vm933, %v932, %v926
        %s938 = scalar_lea.vmem [#allocation6], 60
        %v939 = vld [vmem:[%s938] sm:$0xf]
        %v941 = vperm.slane %v939, 0
        %v942 = vperm.slane %v939, 1
        %v943 = vperm.slane %v939, 2
        %v944 = vperm.slane %v939, 3
        %v949 = vmul.f32 %v936, %v941
        %v950 = vmul.f32 %v935, %v942
        %v951 = vmul.f32 %v934, %v943
        %v952 = vmul.f32 %v937, %v944
        %v953 = vpack.c.bf16 %v922, %v921
        %v954 = vpack.c.bf16 %v924, %v923
        %v955 = vpack.c.bf16 %v950, %v949
        %v956 = vpack.c.bf16 %v952, %v951
        %957 = vst [vmem:[#allocation2 + $0xe0] sm:$0xff] %v953
        %958 = vst [vmem:[#allocation2 + $0xe8] sm:$0xff] %v954
        %959 = vst [vmem:[#allocation2 + $0xf0] sm:$0xff] %v955
        %960 = vst [vmem:[#allocation2 + $0xf8] sm:$0xff] %v956
        %961 = vrot.lane.b32.xlu0 %v470, 120
        %v962 = vpop.permute.xlu0 %961
        %963 = vrot.lane.b32.xlu0 %v471, 120
        %v964 = vpop.permute.xlu0 %963
        %965 = vrot.lane.b32.xlu0 %v472, 120
        %v966 = vpop.permute.xlu0 %965
        %967 = vrot.lane.b32.xlu0 %v473, 120
        %v968 = vpop.permute.xlu0 %967
        %vm969 = vcmp.lt.s32.totalorder %v485, 120
        %v970 = vsel %vm969, %v966, %v968
        %v971 = vsel %vm969, %v964, %v966
        %v972 = vsel %vm969, %v962, %v964
        %v973 = vsel %vm969, %v968, %v962
        %s974 = scalar_lea.vmem [#allocation6], 64
        %v975 = vld [vmem:[%s974] sm:$0xf]
        %v977 = vperm.slane %v975, 0
        %v978 = vperm.slane %v975, 1
        %v979 = vperm.slane %v975, 2
        %v980 = vperm.slane %v975, 3
        %v985 = vmul.f32 %v972, %v977
        %v986 = vmul.f32 %v971, %v978
        %v987 = vmul.f32 %v970, %v979
        %v988 = vmul.f32 %v973, %v980
        %989 = vrot.lane.b32.xlu0 %v470, 119
        %v990 = vpop.permute.xlu0 %989
        %991 = vrot.lane.b32.xlu0 %v471, 119
        %v992 = vpop.permute.xlu0 %991
        %993 = vrot.lane.b32.xlu0 %v472, 119
        %v994 = vpop.permute.xlu0 %993
        %995 = vrot.lane.b32.xlu0 %v473, 119
        %v996 = vpop.permute.xlu0 %995
        %vm997 = vcmp.lt.s32.totalorder %v485, 119
        %v998 = vsel %vm997, %v994, %v996
        %v999 = vsel %vm997, %v992, %v994
        %v1000 = vsel %vm997, %v990, %v992
        %v1001 = vsel %vm997, %v996, %v990
        %s1002 = scalar_lea.vmem [#allocation6], 68
        %v1003 = vld [vmem:[%s1002] sm:$0xf]
        %v1005 = vperm.slane %v1003, 0
        %v1006 = vperm.slane %v1003, 1
        %v1007 = vperm.slane %v1003, 2
        %v1008 = vperm.slane %v1003, 3
        %v1013 = vmul.f32 %v1000, %v1005
        %v1014 = vmul.f32 %v999, %v1006
        %v1015 = vmul.f32 %v998, %v1007
        %v1016 = vmul.f32 %v1001, %v1008
        %v1017 = vpack.c.bf16 %v986, %v985
        %v1018 = vpack.c.bf16 %v988, %v987
        %v1019 = vpack.c.bf16 %v1014, %v1013
        %v1020 = vpack.c.bf16 %v1016, %v1015
        %1021 = vst [vmem:[#allocation2 + $0x100] sm:$0xff] %v1017
        %1022 = vst [vmem:[#allocation2 + $0x108] sm:$0xff] %v1018
        %1023 = vst [vmem:[#allocation2 + $0x110] sm:$0xff] %v1019
        %1024 = vst [vmem:[#allocation2 + $0x118] sm:$0xff] %v1020
        %s1025 = scalar_lea.vmem [#allocation6], 72
        %v1026 = vld [vmem:[%s1025] sm:$0xf]
        %v1028 = vperm.slane %v1026, 0
        %v1029 = vperm.slane %v1026, 1
        %v1030 = vperm.slane %v1026, 2
        %v1031 = vperm.slane %v1026, 3
        %v1036 = vmul.f32 %v489, %v1028
        %v1037 = vmul.f32 %v488, %v1029
        %v1038 = vmul.f32 %v487, %v1030
        %v1039 = vmul.f32 %v490, %v1031
        %s1040 = scalar_lea.vmem [#allocation6], 76
        %v1041 = vld [vmem:[%s1040] sm:$0xf]
        %v1043 = vperm.slane %v1041, 0
        %v1044 = vperm.slane %v1041, 1
        %v1045 = vperm.slane %v1041, 2
        %v1046 = vperm.slane %v1041, 3
        %v1051 = vmul.f32 %v516, %v1043
        %v1052 = vmul.f32 %v515, %v1044
        %v1053 = vmul.f32 %v514, %v1045
        %v1054 = vmul.f32 %v517, %v1046
        %v1055 = vpack.c.bf16 %v1037, %v1036
        %v1056 = vpack.c.bf16 %v1039, %v1038
        %v1057 = vpack.c.bf16 %v1052, %v1051
        %v1058 = vpack.c.bf16 %v1054, %v1053
        %1059 = vst [vmem:[#allocation2 + $0x120] sm:$0xff] %v1055
        %1060 = vst [vmem:[#allocation2 + $0x128] sm:$0xff] %v1056
        %1061 = vst [vmem:[#allocation2 + $0x130] sm:$0xff] %v1057
        %1062 = vst [vmem:[#allocation2 + $0x138] sm:$0xff] %v1058
        %s1063 = scalar_lea.vmem [#allocation6], 80
        %v1064 = vld [vmem:[%s1063] sm:$0xf]
        %v1066 = vperm.slane %v1064, 0
        %v1067 = vperm.slane %v1064, 1
        %v1068 = vperm.slane %v1064, 2
        %v1069 = vperm.slane %v1064, 3
        %v1074 = vmul.f32 %v552, %v1066
        %v1075 = vmul.f32 %v551, %v1067
        %v1076 = vmul.f32 %v550, %v1068
        %v1077 = vmul.f32 %v553, %v1069
        %s1078 = scalar_lea.vmem [#allocation6], 84
        %v1079 = vld [vmem:[%s1078] sm:$0xf]
        %v1081 = vperm.slane %v1079, 0
        %v1082 = vperm.slane %v1079, 1
        %v1083 = vperm.slane %v1079, 2
        %v1084 = vperm.slane %v1079, 3
        %v1089 = vmul.f32 %v580, %v1081
        %v1090 = vmul.f32 %v579, %v1082
        %v1091 = vmul.f32 %v578, %v1083
        %v1092 = vmul.f32 %v581, %v1084
        %v1093 = vpack.c.bf16 %v1075, %v1074
        %v1094 = vpack.c.bf16 %v1077, %v1076
        %v1095 = vpack.c.bf16 %v1090, %v1089
        %v1096 = vpack.c.bf16 %v1092, %v1091
        %1097 = vst [vmem:[#allocation2 + $0x140] sm:$0xff] %v1093
        %1098 = vst [vmem:[#allocation2 + $0x148] sm:$0xff] %v1094
        %1099 = vst [vmem:[#allocation2 + $0x150] sm:$0xff] %v1095
        %1100 = vst [vmem:[#allocation2 + $0x158] sm:$0xff] %v1096
        %s1101 = scalar_lea.vmem [#allocation6], 88
        %v1102 = vld [vmem:[%s1101] sm:$0xf]
        %v1104 = vperm.slane %v1102, 0
        %v1105 = vperm.slane %v1102, 1
        %v1106 = vperm.slane %v1102, 2
        %v1107 = vperm.slane %v1102, 3
        %v1112 = vmul.f32 %v616, %v1104
        %v1113 = vmul.f32 %v615, %v1105
        %v1114 = vmul.f32 %v614, %v1106
        %v1115 = vmul.f32 %v617, %v1107
        %s1116 = scalar_lea.vmem [#allocation6], 92
        %v1117 = vld [vmem:[%s1116] sm:$0xf]
        %v1119 = vperm.slane %v1117, 0
        %v1120 = vperm.slane %v1117, 1
        %v1121 = vperm.slane %v1117, 2
        %v1122 = vperm.slane %v1117, 3
        %v1127 = vmul.f32 %v644, %v1119
        %v1128 = vmul.f32 %v643, %v1120
        %v1129 = vmul.f32 %v642, %v1121
        %v1130 = vmul.f32 %v645, %v1122
        %v1131 = vpack.c.bf16 %v1113, %v1112
        %v1132 = vpack.c.bf16 %v1115, %v1114
        %v1133 = vpack.c.bf16 %v1128, %v1127
        %v1134 = vpack.c.bf16 %v1130, %v1129
        %1135 = vst [vmem:[#allocation2 + $0x160] sm:$0xff] %v1131
        %1136 = vst [vmem:[#allocation2 + $0x168] sm:$0xff] %v1132
        %1137 = vst [vmem:[#allocation2 + $0x170] sm:$0xff] %v1133
        %1138 = vst [vmem:[#allocation2 + $0x178] sm:$0xff] %v1134
        %s1139 = scalar_lea.vmem [#allocation6], 96
        %v1140 = vld [vmem:[%s1139] sm:$0xf]
        %v1142 = vperm.slane %v1140, 0
        %v1143 = vperm.slane %v1140, 1
        %v1144 = vperm.slane %v1140, 2
        %v1145 = vperm.slane %v1140, 3
        %v1150 = vmul.f32 %v680, %v1142
        %v1151 = vmul.f32 %v679, %v1143
        %v1152 = vmul.f32 %v678, %v1144
        %v1153 = vmul.f32 %v681, %v1145
        %s1154 = scalar_lea.vmem [#allocation6], 100
        %v1155 = vld [vmem:[%s1154] sm:$0xf]
        %v1157 = vperm.slane %v1155, 0
        %v1158 = vperm.slane %v1155, 1
        %v1159 = vperm.slane %v1155, 2
        %v1160 = vperm.slane %v1155, 3
        %v1165 = vmul.f32 %v708, %v1157
        %v1166 = vmul.f32 %v707, %v1158
        %v1167 = vmul.f32 %v706, %v1159
        %v1168 = vmul.f32 %v709, %v1160
        %v1169 = vpack.c.bf16 %v1151, %v1150
        %v1170 = vpack.c.bf16 %v1153, %v1152
        %v1171 = vpack.c.bf16 %v1166, %v1165
        %v1172 = vpack.c.bf16 %v1168, %v1167
        %1173 = vst [vmem:[#allocation2 + $0x180] sm:$0xff] %v1169
        %1174 = vst [vmem:[#allocation2 + $0x188] sm:$0xff] %v1170
        %1175 = vst [vmem:[#allocation2 + $0x190] sm:$0xff] %v1171
        %1176 = vst [vmem:[#allocation2 + $0x198] sm:$0xff] %v1172
        %s1177 = scalar_lea.vmem [#allocation6], 104
        %v1178 = vld [vmem:[%s1177] sm:$0xf]
        %v1180 = vperm.slane %v1178, 0
        %v1181 = vperm.slane %v1178, 1
        %v1182 = vperm.slane %v1178, 2
        %v1183 = vperm.slane %v1178, 3
        %v1188 = vmul.f32 %v744, %v1180
        %v1189 = vmul.f32 %v743, %v1181
        %v1190 = vmul.f32 %v742, %v1182
        %v1191 = vmul.f32 %v745, %v1183
        %v1192 = vpack.c.bf16 %v1189, %v1188
        %v1193 = vpack.c.bf16 %v1191, %v1190
        %v1194 = vpack.c.bf16 0.0, 0.0
        %1195 = vst [vmem:[#allocation2 + $0x1a0] sm:$0xff] %v1192
        %1196 = vst [vmem:[#allocation2 + $0x1a8] sm:$0xff] %v1193
        %1197 = vst [vmem:[#allocation2 + $0x1b0] sm:$0xff] %v1194
        %1198 = vst [vmem:[#allocation2 + $0x1b8] sm:$0xff] %v1194
        %v1199 = vld [vmem:[#allocation2] sm:$0xff]
        %v1200 = vld [vmem:[#allocation2 + $0x8] sm:$0xff]
        %v1201 = vld [vmem:[#allocation2 + $0x10] sm:$0xff]
        %v1202 = vld [vmem:[#allocation2 + $0x18] sm:$0xff]
        %v1203 = vld [vmem:[#allocation2 + $0x20] sm:$0xff]
        %v1204 = vld [vmem:[#allocation2 + $0x28] sm:$0xff]
        %v1205 = vld [vmem:[#allocation2 + $0x30] sm:$0xff]
        %v1206 = vld [vmem:[#allocation2 + $0x38] sm:$0xff]
        %v1207 = vld [vmem:[#allocation2 + $0x40] sm:$0xff]
        %v1208 = vld [vmem:[#allocation2 + $0x48] sm:$0xff]
        %v1209 = vld [vmem:[#allocation2 + $0x50] sm:$0xff]
        %v1210 = vld [vmem:[#allocation2 + $0x58] sm:$0xff]
        %v1211 = vld [vmem:[#allocation2 + $0x60] sm:$0xff]
        %v1212 = vld [vmem:[#allocation2 + $0x68] sm:$0xff]
        %v1213 = vld [vmem:[#allocation2 + $0x70] sm:$0xff]
        %v1214 = vld [vmem:[#allocation2 + $0x78] sm:$0xff]
        %v1215 = vld [vmem:[#allocation2 + $0x80] sm:$0xff]
        %v1216 = vld [vmem:[#allocation2 + $0x88] sm:$0xff]
        %v1217 = vld [vmem:[#allocation2 + $0x90] sm:$0xff]
        %v1218 = vld [vmem:[#allocation2 + $0x98] sm:$0xff]
        %v1219 = vld [vmem:[#allocation2 + $0xa0] sm:$0xff]
        %v1220 = vld [vmem:[#allocation2 + $0xa8] sm:$0xff]
        %v1221 = vld [vmem:[#allocation2 + $0xb0] sm:$0xff]
        %v1222 = vld [vmem:[#allocation2 + $0xb8] sm:$0xff]
        %v1223 = vld [vmem:[#allocation2 + $0xc0] sm:$0xff]
        %v1224 = vld [vmem:[#allocation2 + $0xc8] sm:$0xff]
        %v1225 = vld [vmem:[#allocation2 + $0xd0] sm:$0xff]
        %v1226 = vld [vmem:[#allocation2 + $0xd8] sm:$0xff]
        %v1227 = vld [vmem:[#allocation2 + $0xe0] sm:$0xff]
        %v1228 = vld [vmem:[#allocation2 + $0xe8] sm:$0xff]
        %v1229 = vld [vmem:[#allocation2 + $0xf0] sm:$0xff]
        %v1230 = vld [vmem:[#allocation2 + $0xf8] sm:$0xff]
        %v1231 = vld [vmem:[#allocation2 + $0x100] sm:$0xff]
        %v1232 = vld [vmem:[#allocation2 + $0x108] sm:$0xff]
        %v1233 = vld [vmem:[#allocation2 + $0x110] sm:$0xff]
        %v1234 = vld [vmem:[#allocation2 + $0x118] sm:$0xff]
        %v1235 = vld [vmem:[#allocation2 + $0x120] sm:$0xff]
        %v1236 = vld [vmem:[#allocation2 + $0x128] sm:$0xff]
        %v1237 = vld [vmem:[#allocation2 + $0x130] sm:$0xff]
        %v1238 = vld [vmem:[#allocation2 + $0x138] sm:$0xff]
        %v1239 = vld [vmem:[#allocation2 + $0x140] sm:$0xff]
        %v1240 = vld [vmem:[#allocation2 + $0x148] sm:$0xff]
        %v1241 = vld [vmem:[#allocation2 + $0x150] sm:$0xff]
        %v1242 = vld [vmem:[#allocation2 + $0x158] sm:$0xff]
        %v1243 = vld [vmem:[#allocation2 + $0x160] sm:$0xff]
        %v1244 = vld [vmem:[#allocation2 + $0x168] sm:$0xff]
        %v1245 = vld [vmem:[#allocation2 + $0x170] sm:$0xff]
        %v1246 = vld [vmem:[#allocation2 + $0x178] sm:$0xff]
        %v1247 = vld [vmem:[#allocation2 + $0x180] sm:$0xff]
        %v1248 = vld [vmem:[#allocation2 + $0x188] sm:$0xff]
        %v1249 = vld [vmem:[#allocation2 + $0x190] sm:$0xff]
        %v1250 = vld [vmem:[#allocation2 + $0x198] sm:$0xff]
        %v1251 = vld [vmem:[#allocation2 + $0x1a0] sm:$0xff]
        %v1252 = vld [vmem:[#allocation2 + $0x1a8] sm:$0xff]
        %v1253 = vld [vmem:[#allocation2 + $0x1b0] sm:$0xff]
        %v1254 = vld [vmem:[#allocation2 + $0x1b8] sm:$0xff]
        %1256 = vset.pattern.permute.xlu0 0
        %1257 = vperm.xlu0 %1256, %v475
        %v1258 = vpop.permute.xlu0 %1257
        %v1261 = vunpack.c.l.b16 %v474
        %v1262 = vunpack.c.h.b16 %v474
        %v1263 = vpack.c.b16 %v1261, %v1261
        %v1264 = vpack.c.b16 %v1262, %v1262
        %v1322 = vunpack.c.l.b16 %v1199
        %v1323 = vunpack.c.h.b16 %v1199
        %v1324 = vunpack.c.l.b16 %v1200
        %v1325 = vunpack.c.h.b16 %v1200
        %v1326 = vunpack.c.l.b16 %v1201
        %v1327 = vunpack.c.h.b16 %v1201
        %v1328 = vunpack.c.l.b16 %v1202
        %v1329 = vunpack.c.h.b16 %v1202
        %v1330 = vunpack.c.l.b16 %v1203
        %v1331 = vunpack.c.h.b16 %v1203
        %v1332 = vunpack.c.l.b16 %v1204
        %v1333 = vunpack.c.h.b16 %v1204
        %v1334 = vunpack.c.l.b16 %v1205
        %v1335 = vunpack.c.h.b16 %v1205
        %v1336 = vunpack.c.l.b16 %v1206
        %v1337 = vunpack.c.h.b16 %v1206
        %v1338 = vunpack.c.l.b16 %v1207
        %v1339 = vunpack.c.h.b16 %v1207
        %v1340 = vunpack.c.l.b16 %v1208
        %v1341 = vunpack.c.h.b16 %v1208
        %v1342 = vunpack.c.l.b16 %v1209
        %v1343 = vunpack.c.h.b16 %v1209
        %v1344 = vunpack.c.l.b16 %v1210
        %v1345 = vunpack.c.h.b16 %v1210
        %v1346 = vunpack.c.l.b16 %v1211
        %v1347 = vunpack.c.h.b16 %v1211
        %v1348 = vunpack.c.l.b16 %v1212
        %v1349 = vunpack.c.h.b16 %v1212
        %v1350 = vunpack.c.l.b16 %v1213
        %v1351 = vunpack.c.h.b16 %v1213
        %v1352 = vunpack.c.l.b16 %v1214
        %v1353 = vunpack.c.h.b16 %v1214
        %v1354 = vunpack.c.l.b16 %v1215
        %v1355 = vunpack.c.h.b16 %v1215
        %v1356 = vunpack.c.l.b16 %v1216
        %v1357 = vunpack.c.h.b16 %v1216
        %v1358 = vunpack.c.l.b16 %v1217
        %v1359 = vunpack.c.h.b16 %v1217
        %v1360 = vunpack.c.l.b16 %v1218
        %v1361 = vunpack.c.h.b16 %v1218
        %v1362 = vunpack.c.l.b16 %v1219
        %v1363 = vunpack.c.h.b16 %v1219
        %v1364 = vunpack.c.l.b16 %v1220
        %v1365 = vunpack.c.h.b16 %v1220
        %v1366 = vunpack.c.l.b16 %v1221
        %v1367 = vunpack.c.h.b16 %v1221
        %v1368 = vunpack.c.l.b16 %v1222
        %v1369 = vunpack.c.h.b16 %v1222
        %v1370 = vunpack.c.l.b16 %v1223
        %v1371 = vunpack.c.h.b16 %v1223
        %v1372 = vunpack.c.l.b16 %v1224
        %v1373 = vunpack.c.h.b16 %v1224
        %v1374 = vunpack.c.l.b16 %v1225
        %v1375 = vunpack.c.h.b16 %v1225
        %v1376 = vunpack.c.l.b16 %v1226
        %v1377 = vunpack.c.h.b16 %v1226
        %v1378 = vunpack.c.l.b16 %v1227
        %v1379 = vunpack.c.h.b16 %v1227
        %v1380 = vunpack.c.l.b16 %v1228
        %v1381 = vunpack.c.h.b16 %v1228
        %v1382 = vunpack.c.l.b16 %v1229
        %v1383 = vunpack.c.h.b16 %v1229
        %v1384 = vunpack.c.l.b16 %v1230
        %v1385 = vunpack.c.h.b16 %v1230
        %v1386 = vunpack.c.l.b16 %v1231
        %v1387 = vunpack.c.h.b16 %v1231
        %v1388 = vunpack.c.l.b16 %v1232
        %v1389 = vunpack.c.h.b16 %v1232
        %v1390 = vunpack.c.l.b16 %v1233
        %v1391 = vunpack.c.h.b16 %v1233
        %v1392 = vunpack.c.l.b16 %v1234
        %v1393 = vunpack.c.h.b16 %v1234
        %v1394 = vunpack.c.l.b16 %v1235
        %v1395 = vunpack.c.h.b16 %v1235
        %v1396 = vunpack.c.l.b16 %v1236
        %v1397 = vunpack.c.h.b16 %v1236
        %v1398 = vunpack.c.l.b16 %v1237
        %v1399 = vunpack.c.h.b16 %v1237
        %v1400 = vunpack.c.l.b16 %v1238
        %v1401 = vunpack.c.h.b16 %v1238
        %v1402 = vunpack.c.l.b16 %v1239
        %v1403 = vunpack.c.h.b16 %v1239
        %v1404 = vunpack.c.l.b16 %v1240
        %v1405 = vunpack.c.h.b16 %v1240
        %v1406 = vunpack.c.l.b16 %v1241
        %v1407 = vunpack.c.h.b16 %v1241
        %v1408 = vunpack.c.l.b16 %v1242
        %v1409 = vunpack.c.h.b16 %v1242
        %v1410 = vunpack.c.l.b16 %v1243
        %v1411 = vunpack.c.h.b16 %v1243
        %v1412 = vunpack.c.l.b16 %v1244
        %v1413 = vunpack.c.h.b16 %v1244
        %v1414 = vunpack.c.l.b16 %v1245
        %v1415 = vunpack.c.h.b16 %v1245
        %v1416 = vunpack.c.l.b16 %v1246
        %v1417 = vunpack.c.h.b16 %v1246
        %v1418 = vunpack.c.l.b16 %v1247
        %v1419 = vunpack.c.h.b16 %v1247
        %v1420 = vunpack.c.l.b16 %v1248
        %v1421 = vunpack.c.h.b16 %v1248
        %v1422 = vunpack.c.l.b16 %v1249
        %v1423 = vunpack.c.h.b16 %v1249
        %v1424 = vunpack.c.l.b16 %v1250
        %v1425 = vunpack.c.h.b16 %v1250
        %v1426 = vunpack.c.l.b16 %v1251
        %v1427 = vunpack.c.h.b16 %v1251
        %v1428 = vunpack.c.l.b16 %v1252
        %v1429 = vunpack.c.h.b16 %v1252
        %v1430 = vunpack.c.l.b16 %v1253
        %v1431 = vunpack.c.h.b16 %v1253
        %v1432 = vunpack.c.l.b16 %v1254
        %v1433 = vunpack.c.h.b16 %v1254
        %v1434 = vpack.c.b16 %v1326, %v1322
        %v1435 = vpack.c.b16 %v1327, %v1323
        %v1436 = vpack.c.b16 %v1328, %v1324
        %v1437 = vpack.c.b16 %v1329, %v1325
        %v1438 = vpack.c.b16 %v1334, %v1330
        %v1439 = vpack.c.b16 %v1335, %v1331
        %v1440 = vpack.c.b16 %v1336, %v1332
        %v1441 = vpack.c.b16 %v1337, %v1333
        %v1442 = vpack.c.b16 %v1342, %v1338
        %v1443 = vpack.c.b16 %v1343, %v1339
        %v1444 = vpack.c.b16 %v1344, %v1340
        %v1445 = vpack.c.b16 %v1345, %v1341
        %v1446 = vpack.c.b16 %v1350, %v1346
        %v1447 = vpack.c.b16 %v1351, %v1347
        %v1448 = vpack.c.b16 %v1352, %v1348
        %v1449 = vpack.c.b16 %v1353, %v1349
        %v1450 = vpack.c.b16 %v1358, %v1354
        %v1451 = vpack.c.b16 %v1359, %v1355
        %v1452 = vpack.c.b16 %v1360, %v1356
        %v1453 = vpack.c.b16 %v1361, %v1357
        %v1454 = vpack.c.b16 %v1366, %v1362
        %v1455 = vpack.c.b16 %v1367, %v1363
        %v1456 = vpack.c.b16 %v1368, %v1364
        %v1457 = vpack.c.b16 %v1369, %v1365
        %v1458 = vpack.c.b16 %v1374, %v1370
        %v1459 = vpack.c.b16 %v1375, %v1371
        %v1460 = vpack.c.b16 %v1376, %v1372
        %v1461 = vpack.c.b16 %v1377, %v1373
        %v1462 = vpack.c.b16 %v1382, %v1378
        %v1463 = vpack.c.b16 %v1383, %v1379
        %v1464 = vpack.c.b16 %v1384, %v1380
        %v1465 = vpack.c.b16 %v1385, %v1381
        %v1466 = vpack.c.b16 %v1390, %v1386
        %v1467 = vpack.c.b16 %v1391, %v1387
        %v1468 = vpack.c.b16 %v1392, %v1388
        %v1469 = vpack.c.b16 %v1393, %v1389
        %v1470 = vpack.c.b16 %v1398, %v1394
        %v1471 = vpack.c.b16 %v1399, %v1395
        %v1472 = vpack.c.b16 %v1400, %v1396
        %v1473 = vpack.c.b16 %v1401, %v1397
        %v1474 = vpack.c.b16 %v1406, %v1402
        %v1475 = vpack.c.b16 %v1407, %v1403
        %v1476 = vpack.c.b16 %v1408, %v1404
        %v1477 = vpack.c.b16 %v1409, %v1405
        %v1478 = vpack.c.b16 %v1414, %v1410
        %v1479 = vpack.c.b16 %v1415, %v1411
        %v1480 = vpack.c.b16 %v1416, %v1412
        %v1481 = vpack.c.b16 %v1417, %v1413
        %v1482 = vpack.c.b16 %v1422, %v1418
        %v1483 = vpack.c.b16 %v1423, %v1419
        %v1484 = vpack.c.b16 %v1424, %v1420
        %v1485 = vpack.c.b16 %v1425, %v1421
        %v1486 = vpack.c.b16 %v1430, %v1426
        %v1487 = vpack.c.b16 %v1431, %v1427
        %v1488 = vpack.c.b16 %v1432, %v1428
        %v1489 = vpack.c.b16 %v1433, %v1429
        %vm1546 = vcmask 785408
        %v1548 = vsel %vm1546, %v1264, 0
        %1550 = vmatpush.bf16.msra.mxu0 %v1462
        %1551 = vmatpush.bf16.msra.mxu0 %v1458
        %1552 = vmatpush.bf16.msra.mxu0 %v1454
        %1553 = vmatpush.bf16.msra.mxu0 %v1450
        %1554 = vmatpush.bf16.msra.mxu0 %v1446
        %1555 = vmatpush.bf16.msra.mxu0 %v1442
        %1556 = vmatpush.bf16.msra.mxu0 %v1438
        %1557 = vmatpush.bf16.msra.mxu0 %v1434
        %1558 = vmatmul.bf16.gmra.mxu0 %v1263
        %v1559 = vpop.f32.mrf.mxu0
        %v1560 = vadd.f32 %v1258, %v1559
        %v1561 = vpop.f32.mrf.mxu0
        %1562 = vdwg.mxu0
        %1563 = vmatpush.bf16.msra.mxu0 0
        %1564 = vmatpush.bf16.msra.mxu0 0
        %1565 = vmatpush.bf16.msra.mxu0 %v1486
        %1566 = vmatpush.bf16.msra.mxu0 %v1482
        %1567 = vmatpush.bf16.msra.mxu0 %v1478
        %1568 = vmatpush.bf16.msra.mxu0 %v1474
        %1569 = vmatpush.bf16.msra.mxu0 %v1470
        %1570 = vmatpush.bf16.msra.mxu0 %v1466
        %1571 = vmatmul.bf16.gmra.mxu0 %v1548
        %v1572 = vpop.f32.mrf.mxu0
        %v1573 = vadd.f32 %v1560, %v1572
        %v1574 = vpop.f32.mrf.mxu0
        %1575 = vdwg.mxu0
        %1576 = vmatpush.bf16.msra.mxu0 %v1463
        %1577 = vmatpush.bf16.msra.mxu0 %v1459
        %1578 = vmatpush.bf16.msra.mxu0 %v1455
        %1579 = vmatpush.bf16.msra.mxu0 %v1451
        %1580 = vmatpush.bf16.msra.mxu0 %v1447
        %1581 = vmatpush.bf16.msra.mxu0 %v1443
        %1582 = vmatpush.bf16.msra.mxu0 %v1439
        %1583 = vmatpush.bf16.msra.mxu0 %v1435
        %1584 = vmatmul.bf16.gmra.mxu0 %v1263
        %v1585 = vpop.f32.mrf.mxu0
        %v1586 = vadd.f32 %v1258, %v1585
        %v1587 = vpop.f32.mrf.mxu0
        %1588 = vdwg.mxu0
        %1589 = vmatpush.bf16.msra.mxu0 0
        %1590 = vmatpush.bf16.msra.mxu0 0
        %1591 = vmatpush.bf16.msra.mxu0 %v1487
        %1592 = vmatpush.bf16.msra.mxu0 %v1483
        %1593 = vmatpush.bf16.msra.mxu0 %v1479
        %1594 = vmatpush.bf16.msra.mxu0 %v1475
        %1595 = vmatpush.bf16.msra.mxu0 %v1471
        %1596 = vmatpush.bf16.msra.mxu0 %v1467
        %1597 = vmatmul.bf16.gmra.mxu0 %v1548
        %v1598 = vpop.f32.mrf.mxu0
        %v1599 = vadd.f32 %v1586, %v1598
        %v1600 = vpop.f32.mrf.mxu0
        %1601 = vdwg.mxu0
        %1602 = vmatpush.bf16.msra.mxu0 %v1464
        %1603 = vmatpush.bf16.msra.mxu0 %v1460
        %1604 = vmatpush.bf16.msra.mxu0 %v1456
        %1605 = vmatpush.bf16.msra.mxu0 %v1452
        %1606 = vmatpush.bf16.msra.mxu0 %v1448
        %1607 = vmatpush.bf16.msra.mxu0 %v1444
        %1608 = vmatpush.bf16.msra.mxu0 %v1440
        %1609 = vmatpush.bf16.msra.mxu0 %v1436
        %1610 = vmatmul.bf16.gmra.mxu0 %v1263
        %v1611 = vpop.f32.mrf.mxu0
        %v1612 = vadd.f32 %v1258, %v1611
        %v1613 = vpop.f32.mrf.mxu0
        %1614 = vdwg.mxu0
        %1615 = vmatpush.bf16.msra.mxu0 0
        %1616 = vmatpush.bf16.msra.mxu0 0
        %1617 = vmatpush.bf16.msra.mxu0 %v1488
        %1618 = vmatpush.bf16.msra.mxu0 %v1484
        %1619 = vmatpush.bf16.msra.mxu0 %v1480
        %1620 = vmatpush.bf16.msra.mxu0 %v1476
        %1621 = vmatpush.bf16.msra.mxu0 %v1472
        %1622 = vmatpush.bf16.msra.mxu0 %v1468
        %1623 = vmatmul.bf16.gmra.mxu0 %v1548
        %v1624 = vpop.f32.mrf.mxu0
        %v1625 = vadd.f32 %v1612, %v1624
        %v1626 = vpop.f32.mrf.mxu0
        %1627 = vdwg.mxu0
        %1628 = vmatpush.bf16.msra.mxu0 %v1465
        %1629 = vmatpush.bf16.msra.mxu0 %v1461
        %1630 = vmatpush.bf16.msra.mxu0 %v1457
        %1631 = vmatpush.bf16.msra.mxu0 %v1453
        %1632 = vmatpush.bf16.msra.mxu0 %v1449
        %1633 = vmatpush.bf16.msra.mxu0 %v1445
        %1634 = vmatpush.bf16.msra.mxu0 %v1441
        %1635 = vmatpush.bf16.msra.mxu0 %v1437
        %1636 = vmatmul.bf16.gmra.mxu0 %v1263
        %v1637 = vpop.f32.mrf.mxu0
        %v1638 = vadd.f32 %v1258, %v1637
        %v1639 = vpop.f32.mrf.mxu0
        %1640 = vdwg.mxu0
        %1641 = vmatpush.bf16.msra.mxu0 0
        %1642 = vmatpush.bf16.msra.mxu0 0
        %1643 = vmatpush.bf16.msra.mxu0 %v1489
        %1644 = vmatpush.bf16.msra.mxu0 %v1485
        %1645 = vmatpush.bf16.msra.mxu0 %v1481
        %1646 = vmatpush.bf16.msra.mxu0 %v1477
        %1647 = vmatpush.bf16.msra.mxu0 %v1473
        %1648 = vmatpush.bf16.msra.mxu0 %v1469
        %1649 = vmatmul.bf16.gmra.mxu0 %v1548
        %v1650 = vpop.f32.mrf.mxu0
        %v1651 = vadd.f32 %v1638, %v1650
        %v1652 = vpop.f32.mrf.mxu0
        %1653 = vdwg.mxu0
        %v1654 = vld [vmem:[%s6] sm:$0xff]
        %v1655 = vld [vmem:[%s7] sm:$0xff]
        %v1656 = vadd.f32 %v1573, %v1599
        %v1657 = vadd.f32 %v1656, %v1625
        %v1658 = vadd.f32 %v1657, %v1651
        %1659 = vadd.xlane.f32.xlu0 %v1658
        %v1660 = vpop.xlane.xlu0 %1659
        %v1661 = vrot.slane %v1660, 4
        %v1662 = vadd.f32 %v1660, %v1661
        %v1663 = vrot.slane %v1662, 2
        %v1664 = vadd.f32 %v1662, %v1663
        %v1665 = vrot.slane %v1664, 1
        %v1666 = vadd.f32 %v1664, %v1665
        %s1667 = vtos %v1666
        %v1668 = vmul.f32 %v1573, %v1573
        %v1669 = vmul.f32 %v1599, %v1599
        %v1670 = vmul.f32 %v1625, %v1625
        %v1671 = vmul.f32 %v1651, %v1651
        %v1672 = vadd.f32 %v1668, %v1669
        %v1673 = vadd.f32 %v1672, %v1670
        %v1674 = vadd.f32 %v1673, %v1671
        %1675 = vadd.xlane.f32.xlu0 %v1674
        %v1676 = vpop.xlane.xlu0 %1675
        %v1677 = vrot.slane %v1676, 4
        %v1678 = vadd.f32 %v1676, %v1677
        %v1679 = vrot.slane %v1678, 2
        %v1680 = vadd.f32 %v1678, %v1679
        %v1681 = vrot.slane %v1680, 1
        %v1682 = vadd.f32 %v1680, %v1681
        %s1683 = vtos %v1682
        %s1684 = smul.f32 %s1667, 0.00024414063
        %s1685 = smul.f32 %s1683, 0.00024414063
        %s1686 = smul.f32 %s1684, %s1684
        %s1687 = ssub.f32 %s1685, %s1686
        %s1688 = sadd.f32 %s1687, 1e-05
        %v1689 = vstv %s1688
        %v1690 = vrsqrt.pop %v1689
        %v1691 = vmul.f32 %v1690, %v1689
        %v1692 = vmul.f32 %v1691, %v1690
        %v1693 = vmul.f32 0.5, %v1692
        %v1694 = vsub.f32 1.5, %v1693
        %v1695 = vmul.f32 %v1690, %v1694
        %vm1696 = vweird.f32 %v1689
        %vm1697 = vweird.f32 %v1690
        %vm1698 = vmor %vm1696, %vm1697
        %v1699 = vsel %vm1698, %v1690, %v1695
        %s1700 = vtos %v1699
        %v1701 = vstv %s1700
        %v1702 = vmul.f32 %v1654, %v1701
        %v1703 = vstv %s1684
        %v1704 = vmul.f32 %v1703, %v1702
        %v1705 = vsub.f32 %v1655, %v1704
        %1707 = vset.pattern.permute.xlu0 0
        %1708 = vperm.xlu0 %1707, %v1702
        %v1709 = vpop.permute.xlu0 %1708
        %v1711 = vmul.f32 %v1573, %v1709
        %v1712 = vmul.f32 %v1599, %v1709
        %v1713 = vmul.f32 %v1625, %v1709
        %v1714 = vmul.f32 %v1651, %v1709
        %1716 = vset.pattern.permute.xlu0 0
        %1717 = vperm.xlu0 %1716, %v1705
        %v1718 = vpop.permute.xlu0 %1717
        %v1720 = vadd.f32 %v1711, %v1718
        %v1721 = vadd.f32 %v1712, %v1718
        %v1722 = vadd.f32 %v1713, %v1718
        %v1723 = vadd.f32 %v1714, %v1718
        %v1724 = vmax.f32 %v1720, 0.0
        %v1725 = vmax.f32 %v1721, 0.0
        %v1726 = vmax.f32 %v1722, 0.0
        %v1727 = vmax.f32 %v1723, 0.0
        %v1728 = vld [vmem:[%s8] sm:$0xff]
        %v1729 = vld [vmem:[%s9] sm:$0xff]
        %1730 = vrot.lane.b32.xlu0 %v1724, 73
        %v1731 = vpop.permute.xlu0 %1730
        %1732 = vrot.lane.b32.xlu0 %v1725, 73
        %v1733 = vpop.permute.xlu0 %1732
        %1734 = vrot.lane.b32.xlu0 %v1726, 73
        %v1735 = vpop.permute.xlu0 %1734
        %1736 = vrot.lane.b32.xlu0 %v1727, 73
        %v1737 = vpop.permute.xlu0 %1736
        %v1738 = vsel %vm486, %v1735, %v1737
        %v1739 = vsel %vm486, %v1733, %v1735
        %v1740 = vsel %vm486, %v1731, %v1733
        %v1741 = vsel %vm486, %v1737, %v1731
        %v1742 = vld [vmem:[#allocation6] sm:$0xf]
        %v1744 = vperm.slane %v1742, 0
        %v1745 = vperm.slane %v1742, 1
        %v1746 = vperm.slane %v1742, 2
        %v1747 = vperm.slane %v1742, 3
        %v1752 = vmul.f32 %v1741, %v1744
        %v1753 = vmul.f32 %v1740, %v1745
        %v1754 = vmul.f32 %v1739, %v1746
        %v1755 = vmul.f32 %v1738, %v1747
        %1756 = vrot.lane.b32.xlu0 %v1724, 72
        %v1757 = vpop.permute.xlu0 %1756
        %1758 = vrot.lane.b32.xlu0 %v1725, 72
        %v1759 = vpop.permute.xlu0 %1758
        %1760 = vrot.lane.b32.xlu0 %v1726, 72
        %v1761 = vpop.permute.xlu0 %1760
        %1762 = vrot.lane.b32.xlu0 %v1727, 72
        %v1763 = vpop.permute.xlu0 %1762
        %v1764 = vsel %vm513, %v1761, %v1763
        %v1765 = vsel %vm513, %v1759, %v1761
        %v1766 = vsel %vm513, %v1757, %v1759
        %v1767 = vsel %vm513, %v1763, %v1757
        %v1768 = vld [vmem:[%s518] sm:$0xf]
        %v1770 = vperm.slane %v1768, 0
        %v1771 = vperm.slane %v1768, 1
        %v1772 = vperm.slane %v1768, 2
        %v1773 = vperm.slane %v1768, 3
        %v1778 = vmul.f32 %v1767, %v1770
        %v1779 = vmul.f32 %v1766, %v1771
        %v1780 = vmul.f32 %v1765, %v1772
        %v1781 = vmul.f32 %v1764, %v1773
        %v1782 = vpack.c.bf16 %v1753, %v1752
        %v1783 = vpack.c.bf16 %v1755, %v1754
        %v1784 = vpack.c.bf16 %v1779, %v1778
        %v1785 = vpack.c.bf16 %v1781, %v1780
        %1786 = vst [vmem:[#allocation2] sm:$0xff] %v1782
        %1787 = vst [vmem:[#allocation2 + $0x8] sm:$0xff] %v1783
        %1788 = vst [vmem:[#allocation2 + $0x10] sm:$0xff] %v1784
        %1789 = vst [vmem:[#allocation2 + $0x18] sm:$0xff] %v1785
        %1790 = vrot.lane.b32.xlu0 %v1724, 71
        %v1791 = vpop.permute.xlu0 %1790
        %1792 = vrot.lane.b32.xlu0 %v1725, 71
        %v1793 = vpop.permute.xlu0 %1792
        %1794 = vrot.lane.b32.xlu0 %v1726, 71
        %v1795 = vpop.permute.xlu0 %1794
        %1796 = vrot.lane.b32.xlu0 %v1727, 71
        %v1797 = vpop.permute.xlu0 %1796
        %v1798 = vsel %vm549, %v1795, %v1797
        %v1799 = vsel %vm549, %v1793, %v1795
        %v1800 = vsel %vm549, %v1791, %v1793
        %v1801 = vsel %vm549, %v1797, %v1791
        %v1802 = vld [vmem:[%s554] sm:$0xf]
        %v1804 = vperm.slane %v1802, 0
        %v1805 = vperm.slane %v1802, 1
        %v1806 = vperm.slane %v1802, 2
        %v1807 = vperm.slane %v1802, 3
        %v1812 = vmul.f32 %v1801, %v1804
        %v1813 = vmul.f32 %v1800, %v1805
        %v1814 = vmul.f32 %v1799, %v1806
        %v1815 = vmul.f32 %v1798, %v1807
        %1816 = vrot.lane.b32.xlu0 %v1724, 65
        %v1817 = vpop.permute.xlu0 %1816
        %1818 = vrot.lane.b32.xlu0 %v1725, 65
        %v1819 = vpop.permute.xlu0 %1818
        %1820 = vrot.lane.b32.xlu0 %v1726, 65
        %v1821 = vpop.permute.xlu0 %1820
        %1822 = vrot.lane.b32.xlu0 %v1727, 65
        %v1823 = vpop.permute.xlu0 %1822
        %v1824 = vsel %vm577, %v1821, %v1823
        %v1825 = vsel %vm577, %v1819, %v1821
        %v1826 = vsel %vm577, %v1817, %v1819
        %v1827 = vsel %vm577, %v1823, %v1817
        %v1828 = vld [vmem:[%s582] sm:$0xf]
        %v1830 = vperm.slane %v1828, 0
        %v1831 = vperm.slane %v1828, 1
        %v1832 = vperm.slane %v1828, 2
        %v1833 = vperm.slane %v1828, 3
        %v1838 = vmul.f32 %v1827, %v1830
        %v1839 = vmul.f32 %v1826, %v1831
        %v1840 = vmul.f32 %v1825, %v1832
        %v1841 = vmul.f32 %v1824, %v1833
        %v1842 = vpack.c.bf16 %v1813, %v1812
        %v1843 = vpack.c.bf16 %v1815, %v1814
        %v1844 = vpack.c.bf16 %v1839, %v1838
        %v1845 = vpack.c.bf16 %v1841, %v1840
        %1846 = vst [vmem:[#allocation2 + $0x20] sm:$0xff] %v1842
        %1847 = vst [vmem:[#allocation2 + $0x28] sm:$0xff] %v1843
        %1848 = vst [vmem:[#allocation2 + $0x30] sm:$0xff] %v1844
        %1849 = vst [vmem:[#allocation2 + $0x38] sm:$0xff] %v1845
        %1850 = vrot.lane.b32.xlu0 %v1724, 64
        %v1851 = vpop.permute.xlu0 %1850
        %1852 = vrot.lane.b32.xlu0 %v1725, 64
        %v1853 = vpop.permute.xlu0 %1852
        %1854 = vrot.lane.b32.xlu0 %v1726, 64
        %v1855 = vpop.permute.xlu0 %1854
        %1856 = vrot.lane.b32.xlu0 %v1727, 64
        %v1857 = vpop.permute.xlu0 %1856
        %v1858 = vsel %vm613, %v1855, %v1857
        %v1859 = vsel %vm613, %v1853, %v1855
        %v1860 = vsel %vm613, %v1851, %v1853
        %v1861 = vsel %vm613, %v1857, %v1851
        %v1862 = vld [vmem:[%s618] sm:$0xf]
        %v1864 = vperm.slane %v1862, 0
        %v1865 = vperm.slane %v1862, 1
        %v1866 = vperm.slane %v1862, 2
        %v1867 = vperm.slane %v1862, 3
        %v1872 = vmul.f32 %v1861, %v1864
        %v1873 = vmul.f32 %v1860, %v1865
        %v1874 = vmul.f32 %v1859, %v1866
        %v1875 = vmul.f32 %v1858, %v1867
        %1876 = vrot.lane.b32.xlu0 %v1724, 63
        %v1877 = vpop.permute.xlu0 %1876
        %1878 = vrot.lane.b32.xlu0 %v1725, 63
        %v1879 = vpop.permute.xlu0 %1878
        %1880 = vrot.lane.b32.xlu0 %v1726, 63
        %v1881 = vpop.permute.xlu0 %1880
        %1882 = vrot.lane.b32.xlu0 %v1727, 63
        %v1883 = vpop.permute.xlu0 %1882
        %v1884 = vsel %vm641, %v1881, %v1883
        %v1885 = vsel %vm641, %v1879, %v1881
        %v1886 = vsel %vm641, %v1877, %v1879
        %v1887 = vsel %vm641, %v1883, %v1877
        %v1888 = vld [vmem:[%s646] sm:$0xf]
        %v1890 = vperm.slane %v1888, 0
        %v1891 = vperm.slane %v1888, 1
        %v1892 = vperm.slane %v1888, 2
        %v1893 = vperm.slane %v1888, 3
        %v1898 = vmul.f32 %v1887, %v1890
        %v1899 = vmul.f32 %v1886, %v1891
        %v1900 = vmul.f32 %v1885, %v1892
        %v1901 = vmul.f32 %v1884, %v1893
        %v1902 = vpack.c.bf16 %v1873, %v1872
        %v1903 = vpack.c.bf16 %v1875, %v1874
        %v1904 = vpack.c.bf16 %v1899, %v1898
        %v1905 = vpack.c.bf16 %v1901, %v1900
        %1906 = vst [vmem:[#allocation2 + $0x40] sm:$0xff] %v1902
        %1907 = vst [vmem:[#allocation2 + $0x48] sm:$0xff] %v1903
        %1908 = vst [vmem:[#allocation2 + $0x50] sm:$0xff] %v1904
        %1909 = vst [vmem:[#allocation2 + $0x58] sm:$0xff] %v1905
        %1910 = vrot.lane.b32.xlu0 %v1724, 57
        %v1911 = vpop.permute.xlu0 %1910
        %1912 = vrot.lane.b32.xlu0 %v1725, 57
        %v1913 = vpop.permute.xlu0 %1912
        %1914 = vrot.lane.b32.xlu0 %v1726, 57
        %v1915 = vpop.permute.xlu0 %1914
        %1916 = vrot.lane.b32.xlu0 %v1727, 57
        %v1917 = vpop.permute.xlu0 %1916
        %v1918 = vsel %vm677, %v1915, %v1917
        %v1919 = vsel %vm677, %v1913, %v1915
        %v1920 = vsel %vm677, %v1911, %v1913
        %v1921 = vsel %vm677, %v1917, %v1911
        %v1922 = vld [vmem:[%s682] sm:$0xf]
        %v1924 = vperm.slane %v1922, 0
        %v1925 = vperm.slane %v1922, 1
        %v1926 = vperm.slane %v1922, 2
        %v1927 = vperm.slane %v1922, 3
        %v1932 = vmul.f32 %v1921, %v1924
        %v1933 = vmul.f32 %v1920, %v1925
        %v1934 = vmul.f32 %v1919, %v1926
        %v1935 = vmul.f32 %v1918, %v1927
        %1936 = vrot.lane.b32.xlu0 %v1724, 56
        %v1937 = vpop.permute.xlu0 %1936
        %1938 = vrot.lane.b32.xlu0 %v1725, 56
        %v1939 = vpop.permute.xlu0 %1938
        %1940 = vrot.lane.b32.xlu0 %v1726, 56
        %v1941 = vpop.permute.xlu0 %1940
        %1942 = vrot.lane.b32.xlu0 %v1727, 56
        %v1943 = vpop.permute.xlu0 %1942
        %v1944 = vsel %vm705, %v1941, %v1943
        %v1945 = vsel %vm705, %v1939, %v1941
        %v1946 = vsel %vm705, %v1937, %v1939
        %v1947 = vsel %vm705, %v1943, %v1937
        %v1948 = vld [vmem:[%s710] sm:$0xf]
        %v1950 = vperm.slane %v1948, 0
        %v1951 = vperm.slane %v1948, 1
        %v1952 = vperm.slane %v1948, 2
        %v1953 = vperm.slane %v1948, 3
        %v1958 = vmul.f32 %v1947, %v1950
        %v1959 = vmul.f32 %v1946, %v1951
        %v1960 = vmul.f32 %v1945, %v1952
        %v1961 = vmul.f32 %v1944, %v1953
        %v1962 = vpack.c.bf16 %v1933, %v1932
        %v1963 = vpack.c.bf16 %v1935, %v1934
        %v1964 = vpack.c.bf16 %v1959, %v1958
        %v1965 = vpack.c.bf16 %v1961, %v1960
        %1966 = vst [vmem:[#allocation2 + $0x60] sm:$0xff] %v1962
        %1967 = vst [vmem:[#allocation2 + $0x68] sm:$0xff] %v1963
        %1968 = vst [vmem:[#allocation2 + $0x70] sm:$0xff] %v1964
        %1969 = vst [vmem:[#allocation2 + $0x78] sm:$0xff] %v1965
        %1970 = vrot.lane.b32.xlu0 %v1724, 55
        %v1971 = vpop.permute.xlu0 %1970
        %1972 = vrot.lane.b32.xlu0 %v1725, 55
        %v1973 = vpop.permute.xlu0 %1972
        %1974 = vrot.lane.b32.xlu0 %v1726, 55
        %v1975 = vpop.permute.xlu0 %1974
        %1976 = vrot.lane.b32.xlu0 %v1727, 55
        %v1977 = vpop.permute.xlu0 %1976
        %v1978 = vsel %vm741, %v1975, %v1977
        %v1979 = vsel %vm741, %v1973, %v1975
        %v1980 = vsel %vm741, %v1971, %v1973
        %v1981 = vsel %vm741, %v1977, %v1971
        %v1982 = vld [vmem:[%s746] sm:$0xf]
        %v1984 = vperm.slane %v1982, 0
        %v1985 = vperm.slane %v1982, 1
        %v1986 = vperm.slane %v1982, 2
        %v1987 = vperm.slane %v1982, 3
        %v1992 = vmul.f32 %v1981, %v1984
        %v1993 = vmul.f32 %v1980, %v1985
        %v1994 = vmul.f32 %v1979, %v1986
        %v1995 = vmul.f32 %v1978, %v1987
        %1996 = vrot.lane.b32.xlu0 %v1724, 9
        %v1997 = vpop.permute.xlu0 %1996
        %1998 = vrot.lane.b32.xlu0 %v1725, 9
        %v1999 = vpop.permute.xlu0 %1998
        %2000 = vrot.lane.b32.xlu0 %v1726, 9
        %v2001 = vpop.permute.xlu0 %2000
        %2002 = vrot.lane.b32.xlu0 %v1727, 9
        %v2003 = vpop.permute.xlu0 %2002
        %v2004 = vsel %vm769, %v2001, %v2003
        %v2005 = vsel %vm769, %v1999, %v2001
        %v2006 = vsel %vm769, %v1997, %v1999
        %v2007 = vsel %vm769, %v2003, %v1997
        %v2008 = vld [vmem:[%s774] sm:$0xf]
        %v2010 = vperm.slane %v2008, 0
        %v2011 = vperm.slane %v2008, 1
        %v2012 = vperm.slane %v2008, 2
        %v2013 = vperm.slane %v2008, 3
        %v2018 = vmul.f32 %v2007, %v2010
        %v2019 = vmul.f32 %v2006, %v2011
        %v2020 = vmul.f32 %v2005, %v2012
        %v2021 = vmul.f32 %v2004, %v2013
        %v2022 = vpack.c.bf16 %v1993, %v1992
        %v2023 = vpack.c.bf16 %v1995, %v1994
        %v2024 = vpack.c.bf16 %v2019, %v2018
        %v2025 = vpack.c.bf16 %v2021, %v2020
        %2026 = vst [vmem:[#allocation2 + $0x80] sm:$0xff] %v2022
        %2027 = vst [vmem:[#allocation2 + $0x88] sm:$0xff] %v2023
        %2028 = vst [vmem:[#allocation2 + $0x90] sm:$0xff] %v2024
        %2029 = vst [vmem:[#allocation2 + $0x98] sm:$0xff] %v2025
        %2030 = vrot.lane.b32.xlu0 %v1724, 8
        %v2031 = vpop.permute.xlu0 %2030
        %2032 = vrot.lane.b32.xlu0 %v1725, 8
        %v2033 = vpop.permute.xlu0 %2032
        %2034 = vrot.lane.b32.xlu0 %v1726, 8
        %v2035 = vpop.permute.xlu0 %2034
        %2036 = vrot.lane.b32.xlu0 %v1727, 8
        %v2037 = vpop.permute.xlu0 %2036
        %v2038 = vsel %vm805, %v2035, %v2037
        %v2039 = vsel %vm805, %v2033, %v2035
        %v2040 = vsel %vm805, %v2031, %v2033
        %v2041 = vsel %vm805, %v2037, %v2031
        %v2042 = vld [vmem:[%s810] sm:$0xf]
        %v2044 = vperm.slane %v2042, 0
        %v2045 = vperm.slane %v2042, 1
        %v2046 = vperm.slane %v2042, 2
        %v2047 = vperm.slane %v2042, 3
        %v2052 = vmul.f32 %v2041, %v2044
        %v2053 = vmul.f32 %v2040, %v2045
        %v2054 = vmul.f32 %v2039, %v2046
        %v2055 = vmul.f32 %v2038, %v2047
        %2056 = vrot.lane.b32.xlu0 %v1724, 7
        %v2057 = vpop.permute.xlu0 %2056
        %2058 = vrot.lane.b32.xlu0 %v1725, 7
        %v2059 = vpop.permute.xlu0 %2058
        %2060 = vrot.lane.b32.xlu0 %v1726, 7
        %v2061 = vpop.permute.xlu0 %2060
        %2062 = vrot.lane.b32.xlu0 %v1727, 7
        %v2063 = vpop.permute.xlu0 %2062
        %v2064 = vsel %vm833, %v2061, %v2063
        %v2065 = vsel %vm833, %v2059, %v2061
        %v2066 = vsel %vm833, %v2057, %v2059
        %v2067 = vsel %vm833, %v2063, %v2057
        %v2068 = vld [vmem:[%s838] sm:$0xf]
        %v2070 = vperm.slane %v2068, 0
        %v2071 = vperm.slane %v2068, 1
        %v2072 = vperm.slane %v2068, 2
        %v2073 = vperm.slane %v2068, 3
        %v2078 = vmul.f32 %v2067, %v2070
        %v2079 = vmul.f32 %v2066, %v2071
        %v2080 = vmul.f32 %v2065, %v2072
        %v2081 = vmul.f32 %v2064, %v2073
        %v2082 = vpack.c.bf16 %v2053, %v2052
        %v2083 = vpack.c.bf16 %v2055, %v2054
        %v2084 = vpack.c.bf16 %v2079, %v2078
        %v2085 = vpack.c.bf16 %v2081, %v2080
        %2086 = vst [vmem:[#allocation2 + $0xa0] sm:$0xff] %v2082
        %2087 = vst [vmem:[#allocation2 + $0xa8] sm:$0xff] %v2083
        %2088 = vst [vmem:[#allocation2 + $0xb0] sm:$0xff] %v2084
        %2089 = vst [vmem:[#allocation2 + $0xb8] sm:$0xff] %v2085
        %2090 = vrot.lane.b32.xlu0 %v1724, 1
        %v2091 = vpop.permute.xlu0 %2090
        %2092 = vrot.lane.b32.xlu0 %v1725, 1
        %v2093 = vpop.permute.xlu0 %2092
        %2094 = vrot.lane.b32.xlu0 %v1726, 1
        %v2095 = vpop.permute.xlu0 %2094
        %2096 = vrot.lane.b32.xlu0 %v1727, 1
        %v2097 = vpop.permute.xlu0 %2096
        %v2098 = vsel %vm869, %v2095, %v2097
        %v2099 = vsel %vm869, %v2093, %v2095
        %v2100 = vsel %vm869, %v2091, %v2093
        %v2101 = vsel %vm869, %v2097, %v2091
        %v2102 = vld [vmem:[%s874] sm:$0xf]
        %v2104 = vperm.slane %v2102, 0
        %v2105 = vperm.slane %v2102, 1
        %v2106 = vperm.slane %v2102, 2
        %v2107 = vperm.slane %v2102, 3
        %v2112 = vmul.f32 %v2101, %v2104
        %v2113 = vmul.f32 %v2100, %v2105
        %v2114 = vmul.f32 %v2099, %v2106
        %v2115 = vmul.f32 %v2098, %v2107
        %v2116 = vpack.c.bf16 %v2113, %v2112
        %v2117 = vpack.c.bf16 %v2115, %v2114
        %v2118 = vpack.c.bf16 %v1725, %v1724
        %v2119 = vpack.c.bf16 %v1727, %v1726
        %2120 = vst [vmem:[#allocation2 + $0xc0] sm:$0xff] %v2116
        %2121 = vst [vmem:[#allocation2 + $0xc8] sm:$0xff] %v2117
        %2122 = vst [vmem:[#allocation2 + $0xd0] sm:$0xff] %v2118
        %2123 = vst [vmem:[#allocation2 + $0xd8] sm:$0xff] %v2119
        %2124 = vrot.lane.b32.xlu0 %v1724, 127
        %v2125 = vpop.permute.xlu0 %2124
        %2126 = vrot.lane.b32.xlu0 %v1725, 127
        %v2127 = vpop.permute.xlu0 %2126
        %2128 = vrot.lane.b32.xlu0 %v1726, 127
        %v2129 = vpop.permute.xlu0 %2128
        %2130 = vrot.lane.b32.xlu0 %v1727, 127
        %v2131 = vpop.permute.xlu0 %2130
        %v2132 = vsel %vm905, %v2129, %v2131
        %v2133 = vsel %vm905, %v2127, %v2129
        %v2134 = vsel %vm905, %v2125, %v2127
        %v2135 = vsel %vm905, %v2131, %v2125
        %v2136 = vld [vmem:[%s910] sm:$0xf]
        %v2138 = vperm.slane %v2136, 0
        %v2139 = vperm.slane %v2136, 1
        %v2140 = vperm.slane %v2136, 2
        %v2141 = vperm.slane %v2136, 3
        %v2146 = vmul.f32 %v2134, %v2138
        %v2147 = vmul.f32 %v2133, %v2139
        %v2148 = vmul.f32 %v2132, %v2140
        %v2149 = vmul.f32 %v2135, %v2141
        %2150 = vrot.lane.b32.xlu0 %v1724, 121
        %v2151 = vpop.permute.xlu0 %2150
        %2152 = vrot.lane.b32.xlu0 %v1725, 121
        %v2153 = vpop.permute.xlu0 %2152
        %2154 = vrot.lane.b32.xlu0 %v1726, 121
        %v2155 = vpop.permute.xlu0 %2154
        %2156 = vrot.lane.b32.xlu0 %v1727, 121
        %v2157 = vpop.permute.xlu0 %2156
        %v2158 = vsel %vm933, %v2155, %v2157
        %v2159 = vsel %vm933, %v2153, %v2155
        %v2160 = vsel %vm933, %v2151, %v2153
        %v2161 = vsel %vm933, %v2157, %v2151
        %v2162 = vld [vmem:[%s938] sm:$0xf]
        %v2164 = vperm.slane %v2162, 0
        %v2165 = vperm.slane %v2162, 1
        %v2166 = vperm.slane %v2162, 2
        %v2167 = vperm.slane %v2162, 3
        %v2172 = vmul.f32 %v2160, %v2164
        %v2173 = vmul.f32 %v2159, %v2165
        %v2174 = vmul.f32 %v2158, %v2166
        %v2175 = vmul.f32 %v2161, %v2167
        %v2176 = vpack.c.bf16 %v2147, %v2146
        %v2177 = vpack.c.bf16 %v2149, %v2148
        %v2178 = vpack.c.bf16 %v2173, %v2172
        %v2179 = vpack.c.bf16 %v2175, %v2174
        %2180 = vst [vmem:[#allocation2 + $0xe0] sm:$0xff] %v2176
        %2181 = vst [vmem:[#allocation2 + $0xe8] sm:$0xff] %v2177
        %2182 = vst [vmem:[#allocation2 + $0xf0] sm:$0xff] %v2178
        %2183 = vst [vmem:[#allocation2 + $0xf8] sm:$0xff] %v2179
        %2184 = vrot.lane.b32.xlu0 %v1724, 120
        %v2185 = vpop.permute.xlu0 %2184
        %2186 = vrot.lane.b32.xlu0 %v1725, 120
        %v2187 = vpop.permute.xlu0 %2186
        %2188 = vrot.lane.b32.xlu0 %v1726, 120
        %v2189 = vpop.permute.xlu0 %2188
        %2190 = vrot.lane.b32.xlu0 %v1727, 120
        %v2191 = vpop.permute.xlu0 %2190
        %v2192 = vsel %vm969, %v2189, %v2191
        %v2193 = vsel %vm969, %v2187, %v2189
        %v2194 = vsel %vm969, %v2185, %v2187
        %v2195 = vsel %vm969, %v2191, %v2185
        %v2196 = vld [vmem:[%s974] sm:$0xf]
        %v2198 = vperm.slane %v2196, 0
        %v2199 = vperm.slane %v2196, 1
        %v2200 = vperm.slane %v2196, 2
        %v2201 = vperm.slane %v2196, 3
        %v2206 = vmul.f32 %v2194, %v2198
        %v2207 = vmul.f32 %v2193, %v2199
        %v2208 = vmul.f32 %v2192, %v2200
        %v2209 = vmul.f32 %v2195, %v2201
        %2210 = vrot.lane.b32.xlu0 %v1724, 119
        %v2211 = vpop.permute.xlu0 %2210
        %2212 = vrot.lane.b32.xlu0 %v1725, 119
        %v2213 = vpop.permute.xlu0 %2212
        %2214 = vrot.lane.b32.xlu0 %v1726, 119
        %v2215 = vpop.permute.xlu0 %2214
        %2216 = vrot.lane.b32.xlu0 %v1727, 119
        %v2217 = vpop.permute.xlu0 %2216
        %v2218 = vsel %vm997, %v2215, %v2217
        %v2219 = vsel %vm997, %v2213, %v2215
        %v2220 = vsel %vm997, %v2211, %v2213
        %v2221 = vsel %vm997, %v2217, %v2211
        %v2222 = vld [vmem:[%s1002] sm:$0xf]
        %v2224 = vperm.slane %v2222, 0
        %v2225 = vperm.slane %v2222, 1
        %v2226 = vperm.slane %v2222, 2
        %v2227 = vperm.slane %v2222, 3
        %v2232 = vmul.f32 %v2220, %v2224
        %v2233 = vmul.f32 %v2219, %v2225
        %v2234 = vmul.f32 %v2218, %v2226
        %v2235 = vmul.f32 %v2221, %v2227
        %v2236 = vpack.c.bf16 %v2207, %v2206
        %v2237 = vpack.c.bf16 %v2209, %v2208
        %v2238 = vpack.c.bf16 %v2233, %v2232
        %v2239 = vpack.c.bf16 %v2235, %v2234
        %2240 = vst [vmem:[#allocation2 + $0x100] sm:$0xff] %v2236
        %2241 = vst [vmem:[#allocation2 + $0x108] sm:$0xff] %v2237
        %2242 = vst [vmem:[#allocation2 + $0x110] sm:$0xff] %v2238
        %2243 = vst [vmem:[#allocation2 + $0x118] sm:$0xff] %v2239
        %v2244 = vld [vmem:[%s1025] sm:$0xf]
        %v2246 = vperm.slane %v2244, 0
        %v2247 = vperm.slane %v2244, 1
        %v2248 = vperm.slane %v2244, 2
        %v2249 = vperm.slane %v2244, 3
        %v2254 = vmul.f32 %v1740, %v2246
        %v2255 = vmul.f32 %v1739, %v2247
        %v2256 = vmul.f32 %v1738, %v2248
        %v2257 = vmul.f32 %v1741, %v2249
        %v2258 = vld [vmem:[%s1040] sm:$0xf]
        %v2260 = vperm.slane %v2258, 0
        %v2261 = vperm.slane %v2258, 1
        %v2262 = vperm.slane %v2258, 2
        %v2263 = vperm.slane %v2258, 3
        %v2268 = vmul.f32 %v1766, %v2260
        %v2269 = vmul.f32 %v1765, %v2261
        %v2270 = vmul.f32 %v1764, %v2262
        %v2271 = vmul.f32 %v1767, %v2263
        %v2272 = vpack.c.bf16 %v2255, %v2254
        %v2273 = vpack.c.bf16 %v2257, %v2256
        %v2274 = vpack.c.bf16 %v2269, %v2268
        %v2275 = vpack.c.bf16 %v2271, %v2270
        %2276 = vst [vmem:[#allocation2 + $0x120] sm:$0xff] %v2272
        %2277 = vst [vmem:[#allocation2 + $0x128] sm:$0xff] %v2273
        %2278 = vst [vmem:[#allocation2 + $0x130] sm:$0xff] %v2274
        %2279 = vst [vmem:[#allocation2 + $0x138] sm:$0xff] %v2275
        %v2280 = vld [vmem:[%s1063] sm:$0xf]
        %v2282 = vperm.slane %v2280, 0
        %v2283 = vperm.slane %v2280, 1
        %v2284 = vperm.slane %v2280, 2
        %v2285 = vperm.slane %v2280, 3
        %v2290 = vmul.f32 %v1800, %v2282
        %v2291 = vmul.f32 %v1799, %v2283
        %v2292 = vmul.f32 %v1798, %v2284
        %v2293 = vmul.f32 %v1801, %v2285
        %v2294 = vld [vmem:[%s1078] sm:$0xf]
        %v2296 = vperm.slane %v2294, 0
        %v2297 = vperm.slane %v2294, 1
        %v2298 = vperm.slane %v2294, 2
        %v2299 = vperm.slane %v2294, 3
        %v2304 = vmul.f32 %v1826, %v2296
        %v2305 = vmul.f32 %v1825, %v2297
        %v2306 = vmul.f32 %v1824, %v2298
        %v2307 = vmul.f32 %v1827, %v2299
        %v2308 = vpack.c.bf16 %v2291, %v2290
        %v2309 = vpack.c.bf16 %v2293, %v2292
        %v2310 = vpack.c.bf16 %v2305, %v2304
        %v2311 = vpack.c.bf16 %v2307, %v2306
        %2312 = vst [vmem:[#allocation2 + $0x140] sm:$0xff] %v2308
        %2313 = vst [vmem:[#allocation2 + $0x148] sm:$0xff] %v2309
        %2314 = vst [vmem:[#allocation2 + $0x150] sm:$0xff] %v2310
        %2315 = vst [vmem:[#allocation2 + $0x158] sm:$0xff] %v2311
        %v2316 = vld [vmem:[%s1101] sm:$0xf]
        %v2318 = vperm.slane %v2316, 0
        %v2319 = vperm.slane %v2316, 1
        %v2320 = vperm.slane %v2316, 2
        %v2321 = vperm.slane %v2316, 3
        %v2326 = vmul.f32 %v1860, %v2318
        %v2327 = vmul.f32 %v1859, %v2319
        %v2328 = vmul.f32 %v1858, %v2320
        %v2329 = vmul.f32 %v1861, %v2321
        %v2330 = vld [vmem:[%s1116] sm:$0xf]
        %v2332 = vperm.slane %v2330, 0
        %v2333 = vperm.slane %v2330, 1
        %v2334 = vperm.slane %v2330, 2
        %v2335 = vperm.slane %v2330, 3
        %v2340 = vmul.f32 %v1886, %v2332
        %v2341 = vmul.f32 %v1885, %v2333
        %v2342 = vmul.f32 %v1884, %v2334
        %v2343 = vmul.f32 %v1887, %v2335
        %v2344 = vpack.c.bf16 %v2327, %v2326
        %v2345 = vpack.c.bf16 %v2329, %v2328
        %v2346 = vpack.c.bf16 %v2341, %v2340
        %v2347 = vpack.c.bf16 %v2343, %v2342
        %2348 = vst [vmem:[#allocation2 + $0x160] sm:$0xff] %v2344
        %2349 = vst [vmem:[#allocation2 + $0x168] sm:$0xff] %v2345
        %2350 = vst [vmem:[#allocation2 + $0x170] sm:$0xff] %v2346
        %2351 = vst [vmem:[#allocation2 + $0x178] sm:$0xff] %v2347
        %v2352 = vld [vmem:[%s1139] sm:$0xf]
        %v2354 = vperm.slane %v2352, 0
        %v2355 = vperm.slane %v2352, 1
        %v2356 = vperm.slane %v2352, 2
        %v2357 = vperm.slane %v2352, 3
        %v2362 = vmul.f32 %v1920, %v2354
        %v2363 = vmul.f32 %v1919, %v2355
        %v2364 = vmul.f32 %v1918, %v2356
        %v2365 = vmul.f32 %v1921, %v2357
        %v2366 = vld [vmem:[%s1154] sm:$0xf]
        %v2368 = vperm.slane %v2366, 0
        %v2369 = vperm.slane %v2366, 1
        %v2370 = vperm.slane %v2366, 2
        %v2371 = vperm.slane %v2366, 3
        %v2376 = vmul.f32 %v1946, %v2368
        %v2377 = vmul.f32 %v1945, %v2369
        %v2378 = vmul.f32 %v1944, %v2370
        %v2379 = vmul.f32 %v1947, %v2371
        %v2380 = vpack.c.bf16 %v2363, %v2362
        %v2381 = vpack.c.bf16 %v2365, %v2364
        %v2382 = vpack.c.bf16 %v2377, %v2376
        %v2383 = vpack.c.bf16 %v2379, %v2378
        %2384 = vst [vmem:[#allocation2 + $0x180] sm:$0xff] %v2380
        %2385 = vst [vmem:[#allocation2 + $0x188] sm:$0xff] %v2381
        %2386 = vst [vmem:[#allocation2 + $0x190] sm:$0xff] %v2382
        %2387 = vst [vmem:[#allocation2 + $0x198] sm:$0xff] %v2383
        %v2388 = vld [vmem:[%s1177] sm:$0xf]
        %v2390 = vperm.slane %v2388, 0
        %v2391 = vperm.slane %v2388, 1
        %v2392 = vperm.slane %v2388, 2
        %v2393 = vperm.slane %v2388, 3
        %v2398 = vmul.f32 %v1980, %v2390
        %v2399 = vmul.f32 %v1979, %v2391
        %v2400 = vmul.f32 %v1978, %v2392
        %v2401 = vmul.f32 %v1981, %v2393
        %v2402 = vpack.c.bf16 %v2399, %v2398
        %v2403 = vpack.c.bf16 %v2401, %v2400
        %2404 = vst [vmem:[#allocation2 + $0x1a0] sm:$0xff] %v2402
        %2405 = vst [vmem:[#allocation2 + $0x1a8] sm:$0xff] %v2403
        %2406 = vst [vmem:[#allocation2 + $0x1b0] sm:$0xff] %v1194
        %2407 = vst [vmem:[#allocation2 + $0x1b8] sm:$0xff] %v1194
        %v2408 = vld [vmem:[#allocation2] sm:$0xff]
        %v2409 = vld [vmem:[#allocation2 + $0x8] sm:$0xff]
        %v2410 = vld [vmem:[#allocation2 + $0x10] sm:$0xff]
        %v2411 = vld [vmem:[#allocation2 + $0x18] sm:$0xff]
        %v2412 = vld [vmem:[#allocation2 + $0x20] sm:$0xff]
        %v2413 = vld [vmem:[#allocation2 + $0x28] sm:$0xff]
        %v2414 = vld [vmem:[#allocation2 + $0x30] sm:$0xff]
        %v2415 = vld [vmem:[#allocation2 + $0x38] sm:$0xff]
        %v2416 = vld [vmem:[#allocation2 + $0x40] sm:$0xff]
        %v2417 = vld [vmem:[#allocation2 + $0x48] sm:$0xff]
        %v2418 = vld [vmem:[#allocation2 + $0x50] sm:$0xff]
        %v2419 = vld [vmem:[#allocation2 + $0x58] sm:$0xff]
        %v2420 = vld [vmem:[#allocation2 + $0x60] sm:$0xff]
        %v2421 = vld [vmem:[#allocation2 + $0x68] sm:$0xff]
        %v2422 = vld [vmem:[#allocation2 + $0x70] sm:$0xff]
        %v2423 = vld [vmem:[#allocation2 + $0x78] sm:$0xff]
        %v2424 = vld [vmem:[#allocation2 + $0x80] sm:$0xff]
        %v2425 = vld [vmem:[#allocation2 + $0x88] sm:$0xff]
        %v2426 = vld [vmem:[#allocation2 + $0x90] sm:$0xff]
        %v2427 = vld [vmem:[#allocation2 + $0x98] sm:$0xff]
        %v2428 = vld [vmem:[#allocation2 + $0xa0] sm:$0xff]
        %v2429 = vld [vmem:[#allocation2 + $0xa8] sm:$0xff]
        %v2430 = vld [vmem:[#allocation2 + $0xb0] sm:$0xff]
        %v2431 = vld [vmem:[#allocation2 + $0xb8] sm:$0xff]
        %v2432 = vld [vmem:[#allocation2 + $0xc0] sm:$0xff]
        %v2433 = vld [vmem:[#allocation2 + $0xc8] sm:$0xff]
        %v2434 = vld [vmem:[#allocation2 + $0xd0] sm:$0xff]
        %v2435 = vld [vmem:[#allocation2 + $0xd8] sm:$0xff]
        %v2436 = vld [vmem:[#allocation2 + $0xe0] sm:$0xff]
        %v2437 = vld [vmem:[#allocation2 + $0xe8] sm:$0xff]
        %v2438 = vld [vmem:[#allocation2 + $0xf0] sm:$0xff]
        %v2439 = vld [vmem:[#allocation2 + $0xf8] sm:$0xff]
        %v2440 = vld [vmem:[#allocation2 + $0x100] sm:$0xff]
        %v2441 = vld [vmem:[#allocation2 + $0x108] sm:$0xff]
        %v2442 = vld [vmem:[#allocation2 + $0x110] sm:$0xff]
        %v2443 = vld [vmem:[#allocation2 + $0x118] sm:$0xff]
        %v2444 = vld [vmem:[#allocation2 + $0x120] sm:$0xff]
        %v2445 = vld [vmem:[#allocation2 + $0x128] sm:$0xff]
        %v2446 = vld [vmem:[#allocation2 + $0x130] sm:$0xff]
        %v2447 = vld [vmem:[#allocation2 + $0x138] sm:$0xff]
        %v2448 = vld [vmem:[#allocation2 + $0x140] sm:$0xff]
        %v2449 = vld [vmem:[#allocation2 + $0x148] sm:$0xff]
        %v2450 = vld [vmem:[#allocation2 + $0x150] sm:$0xff]
        %v2451 = vld [vmem:[#allocation2 + $0x158] sm:$0xff]
        %v2452 = vld [vmem:[#allocation2 + $0x160] sm:$0xff]
        %v2453 = vld [vmem:[#allocation2 + $0x168] sm:$0xff]
        %v2454 = vld [vmem:[#allocation2 + $0x170] sm:$0xff]
        %v2455 = vld [vmem:[#allocation2 + $0x178] sm:$0xff]
        %v2456 = vld [vmem:[#allocation2 + $0x180] sm:$0xff]
        %v2457 = vld [vmem:[#allocation2 + $0x188] sm:$0xff]
        %v2458 = vld [vmem:[#allocation2 + $0x190] sm:$0xff]
        %v2459 = vld [vmem:[#allocation2 + $0x198] sm:$0xff]
        %v2460 = vld [vmem:[#allocation2 + $0x1a0] sm:$0xff]
        %v2461 = vld [vmem:[#allocation2 + $0x1a8] sm:$0xff]
        %v2462 = vld [vmem:[#allocation2 + $0x1b0] sm:$0xff]
        %v2463 = vld [vmem:[#allocation2 + $0x1b8] sm:$0xff]
        %2465 = vset.pattern.permute.xlu0 0
        %2466 = vperm.xlu0 %2465, %v1729
        %v2467 = vpop.permute.xlu0 %2466
        %v2470 = vunpack.c.l.b16 %v1728
        %v2471 = vunpack.c.h.b16 %v1728
        %v2472 = vpack.c.b16 %v2470, %v2470
        %v2473 = vpack.c.b16 %v2471, %v2471
        %v2531 = vunpack.c.l.b16 %v2408
        %v2532 = vunpack.c.h.b16 %v2408
        %v2533 = vunpack.c.l.b16 %v2409
        %v2534 = vunpack.c.h.b16 %v2409
        %v2535 = vunpack.c.l.b16 %v2410
        %v2536 = vunpack.c.h.b16 %v2410
        %v2537 = vunpack.c.l.b16 %v2411
        %v2538 = vunpack.c.h.b16 %v2411
        %v2539 = vunpack.c.l.b16 %v2412
        %v2540 = vunpack.c.h.b16 %v2412
        %v2541 = vunpack.c.l.b16 %v2413
        %v2542 = vunpack.c.h.b16 %v2413
        %v2543 = vunpack.c.l.b16 %v2414
        %v2544 = vunpack.c.h.b16 %v2414
        %v2545 = vunpack.c.l.b16 %v2415
        %v2546 = vunpack.c.h.b16 %v2415
        %v2547 = vunpack.c.l.b16 %v2416
        %v2548 = vunpack.c.h.b16 %v2416
        %v2549 = vunpack.c.l.b16 %v2417
        %v2550 = vunpack.c.h.b16 %v2417
        %v2551 = vunpack.c.l.b16 %v2418
        %v2552 = vunpack.c.h.b16 %v2418
        %v2553 = vunpack.c.l.b16 %v2419
        %v2554 = vunpack.c.h.b16 %v2419
        %v2555 = vunpack.c.l.b16 %v2420
        %v2556 = vunpack.c.h.b16 %v2420
        %v2557 = vunpack.c.l.b16 %v2421
        %v2558 = vunpack.c.h.b16 %v2421
        %v2559 = vunpack.c.l.b16 %v2422
        %v2560 = vunpack.c.h.b16 %v2422
        %v2561 = vunpack.c.l.b16 %v2423
        %v2562 = vunpack.c.h.b16 %v2423
        %v2563 = vunpack.c.l.b16 %v2424
        %v2564 = vunpack.c.h.b16 %v2424
        %v2565 = vunpack.c.l.b16 %v2425
        %v2566 = vunpack.c.h.b16 %v2425
        %v2567 = vunpack.c.l.b16 %v2426
        %v2568 = vunpack.c.h.b16 %v2426
        %v2569 = vunpack.c.l.b16 %v2427
        %v2570 = vunpack.c.h.b16 %v2427
        %v2571 = vunpack.c.l.b16 %v2428
        %v2572 = vunpack.c.h.b16 %v2428
        %v2573 = vunpack.c.l.b16 %v2429
        %v2574 = vunpack.c.h.b16 %v2429
        %v2575 = vunpack.c.l.b16 %v2430
        %v2576 = vunpack.c.h.b16 %v2430
        %v2577 = vunpack.c.l.b16 %v2431
        %v2578 = vunpack.c.h.b16 %v2431
        %v2579 = vunpack.c.l.b16 %v2432
        %v2580 = vunpack.c.h.b16 %v2432
        %v2581 = vunpack.c.l.b16 %v2433
        %v2582 = vunpack.c.h.b16 %v2433
        %v2583 = vunpack.c.l.b16 %v2434
        %v2584 = vunpack.c.h.b16 %v2434
        %v2585 = vunpack.c.l.b16 %v2435
        %v2586 = vunpack.c.h.b16 %v2435
        %v2587 = vunpack.c.l.b16 %v2436
        %v2588 = vunpack.c.h.b16 %v2436
        %v2589 = vunpack.c.l.b16 %v2437
        %v2590 = vunpack.c.h.b16 %v2437
        %v2591 = vunpack.c.l.b16 %v2438
        %v2592 = vunpack.c.h.b16 %v2438
        %v2593 = vunpack.c.l.b16 %v2439
        %v2594 = vunpack.c.h.b16 %v2439
        %v2595 = vunpack.c.l.b16 %v2440
        %v2596 = vunpack.c.h.b16 %v2440
        %v2597 = vunpack.c.l.b16 %v2441
        %v2598 = vunpack.c.h.b16 %v2441
        %v2599 = vunpack.c.l.b16 %v2442
        %v2600 = vunpack.c.h.b16 %v2442
        %v2601 = vunpack.c.l.b16 %v2443
        %v2602 = vunpack.c.h.b16 %v2443
        %v2603 = vunpack.c.l.b16 %v2444
        %v2604 = vunpack.c.h.b16 %v2444
        %v2605 = vunpack.c.l.b16 %v2445
        %v2606 = vunpack.c.h.b16 %v2445
        %v2607 = vunpack.c.l.b16 %v2446
        %v2608 = vunpack.c.h.b16 %v2446
        %v2609 = vunpack.c.l.b16 %v2447
        %v2610 = vunpack.c.h.b16 %v2447
        %v2611 = vunpack.c.l.b16 %v2448
        %v2612 = vunpack.c.h.b16 %v2448
        %v2613 = vunpack.c.l.b16 %v2449
        %v2614 = vunpack.c.h.b16 %v2449
        %v2615 = vunpack.c.l.b16 %v2450
        %v2616 = vunpack.c.h.b16 %v2450
        %v2617 = vunpack.c.l.b16 %v2451
        %v2618 = vunpack.c.h.b16 %v2451
        %v2619 = vunpack.c.l.b16 %v2452
        %v2620 = vunpack.c.h.b16 %v2452
        %v2621 = vunpack.c.l.b16 %v2453
        %v2622 = vunpack.c.h.b16 %v2453
        %v2623 = vunpack.c.l.b16 %v2454
        %v2624 = vunpack.c.h.b16 %v2454
        %v2625 = vunpack.c.l.b16 %v2455
        %v2626 = vunpack.c.h.b16 %v2455
        %v2627 = vunpack.c.l.b16 %v2456
        %v2628 = vunpack.c.h.b16 %v2456
        %v2629 = vunpack.c.l.b16 %v2457
        %v2630 = vunpack.c.h.b16 %v2457
        %v2631 = vunpack.c.l.b16 %v2458
        %v2632 = vunpack.c.h.b16 %v2458
        %v2633 = vunpack.c.l.b16 %v2459
        %v2634 = vunpack.c.h.b16 %v2459
        %v2635 = vunpack.c.l.b16 %v2460
        %v2636 = vunpack.c.h.b16 %v2460
        %v2637 = vunpack.c.l.b16 %v2461
        %v2638 = vunpack.c.h.b16 %v2461
        %v2639 = vunpack.c.l.b16 %v2462
        %v2640 = vunpack.c.h.b16 %v2462
        %v2641 = vunpack.c.l.b16 %v2463
        %v2642 = vunpack.c.h.b16 %v2463
        %v2643 = vpack.c.b16 %v2535, %v2531
        %v2644 = vpack.c.b16 %v2536, %v2532
        %v2645 = vpack.c.b16 %v2537, %v2533
        %v2646 = vpack.c.b16 %v2538, %v2534
        %v2647 = vpack.c.b16 %v2543, %v2539
        %v2648 = vpack.c.b16 %v2544, %v2540
        %v2649 = vpack.c.b16 %v2545, %v2541
        %v2650 = vpack.c.b16 %v2546, %v2542
        %v2651 = vpack.c.b16 %v2551, %v2547
        %v2652 = vpack.c.b16 %v2552, %v2548
        %v2653 = vpack.c.b16 %v2553, %v2549
        %v2654 = vpack.c.b16 %v2554, %v2550
        %v2655 = vpack.c.b16 %v2559, %v2555
        %v2656 = vpack.c.b16 %v2560, %v2556
        %v2657 = vpack.c.b16 %v2561, %v2557
        %v2658 = vpack.c.b16 %v2562, %v2558
        %v2659 = vpack.c.b16 %v2567, %v2563
        %v2660 = vpack.c.b16 %v2568, %v2564
        %v2661 = vpack.c.b16 %v2569, %v2565
        %v2662 = vpack.c.b16 %v2570, %v2566
        %v2663 = vpack.c.b16 %v2575, %v2571
        %v2664 = vpack.c.b16 %v2576, %v2572
        %v2665 = vpack.c.b16 %v2577, %v2573
        %v2666 = vpack.c.b16 %v2578, %v2574
        %v2667 = vpack.c.b16 %v2583, %v2579
        %v2668 = vpack.c.b16 %v2584, %v2580
        %v2669 = vpack.c.b16 %v2585, %v2581
        %v2670 = vpack.c.b16 %v2586, %v2582
        %v2671 = vpack.c.b16 %v2591, %v2587
        %v2672 = vpack.c.b16 %v2592, %v2588
        %v2673 = vpack.c.b16 %v2593, %v2589
        %v2674 = vpack.c.b16 %v2594, %v2590
        %v2675 = vpack.c.b16 %v2599, %v2595
        %v2676 = vpack.c.b16 %v2600, %v2596
        %v2677 = vpack.c.b16 %v2601, %v2597
        %v2678 = vpack.c.b16 %v2602, %v2598
        %v2679 = vpack.c.b16 %v2607, %v2603
        %v2680 = vpack.c.b16 %v2608, %v2604
        %v2681 = vpack.c.b16 %v2609, %v2605
        %v2682 = vpack.c.b16 %v2610, %v2606
        %v2683 = vpack.c.b16 %v2615, %v2611
        %v2684 = vpack.c.b16 %v2616, %v2612
        %v2685 = vpack.c.b16 %v2617, %v2613
        %v2686 = vpack.c.b16 %v2618, %v2614
        %v2687 = vpack.c.b16 %v2623, %v2619
        %v2688 = vpack.c.b16 %v2624, %v2620
        %v2689 = vpack.c.b16 %v2625, %v2621
        %v2690 = vpack.c.b16 %v2626, %v2622
        %v2691 = vpack.c.b16 %v2631, %v2627
        %v2692 = vpack.c.b16 %v2632, %v2628
        %v2693 = vpack.c.b16 %v2633, %v2629
        %v2694 = vpack.c.b16 %v2634, %v2630
        %v2695 = vpack.c.b16 %v2639, %v2635
        %v2696 = vpack.c.b16 %v2640, %v2636
        %v2697 = vpack.c.b16 %v2641, %v2637
        %v2698 = vpack.c.b16 %v2642, %v2638
        %v2756 = vsel %vm1546, %v2473, 0
        %2758 = vmatpush.bf16.msra.mxu0 %v2671
        %2759 = vmatpush.bf16.msra.mxu0 %v2667
        %2760 = vmatpush.bf16.msra.mxu0 %v2663
        %2761 = vmatpush.bf16.msra.mxu0 %v2659
        %2762 = vmatpush.bf16.msra.mxu0 %v2655
        %2763 = vmatpush.bf16.msra.mxu0 %v2651
        %2764 = vmatpush.bf16.msra.mxu0 %v2647
        %2765 = vmatpush.bf16.msra.mxu0 %v2643
        %2766 = vmatmul.bf16.gmra.mxu0 %v2472
        %v2767 = vpop.f32.mrf.mxu0
        %v2768 = vadd.f32 %v2467, %v2767
        %v2769 = vpop.f32.mrf.mxu0
        %2770 = vdwg.mxu0
        %2771 = vmatpush.bf16.msra.mxu0 0
        %2772 = vmatpush.bf16.msra.mxu0 0
        %2773 = vmatpush.bf16.msra.mxu0 %v2695
        %2774 = vmatpush.bf16.msra.mxu0 %v2691
        %2775 = vmatpush.bf16.msra.mxu0 %v2687
        %2776 = vmatpush.bf16.msra.mxu0 %v2683
        %2777 = vmatpush.bf16.msra.mxu0 %v2679
        %2778 = vmatpush.bf16.msra.mxu0 %v2675
        %2779 = vmatmul.bf16.gmra.mxu0 %v2756
        %v2780 = vpop.f32.mrf.mxu0
        %v2781 = vadd.f32 %v2768, %v2780
        %v2782 = vpop.f32.mrf.mxu0
        %2783 = vdwg.mxu0
        %2784 = vmatpush.bf16.msra.mxu0 %v2672
        %2785 = vmatpush.bf16.msra.mxu0 %v2668
        %2786 = vmatpush.bf16.msra.mxu0 %v2664
        %2787 = vmatpush.bf16.msra.mxu0 %v2660
        %2788 = vmatpush.bf16.msra.mxu0 %v2656
        %2789 = vmatpush.bf16.msra.mxu0 %v2652
        %2790 = vmatpush.bf16.msra.mxu0 %v2648
        %2791 = vmatpush.bf16.msra.mxu0 %v2644
        %2792 = vmatmul.bf16.gmra.mxu0 %v2472
        %v2793 = vpop.f32.mrf.mxu0
        %v2794 = vadd.f32 %v2467, %v2793
        %v2795 = vpop.f32.mrf.mxu0
        %2796 = vdwg.mxu0
        %2797 = vmatpush.bf16.msra.mxu0 0
        %2798 = vmatpush.bf16.msra.mxu0 0
        %2799 = vmatpush.bf16.msra.mxu0 %v2696
        %2800 = vmatpush.bf16.msra.mxu0 %v2692
        %2801 = vmatpush.bf16.msra.mxu0 %v2688
        %2802 = vmatpush.bf16.msra.mxu0 %v2684
        %2803 = vmatpush.bf16.msra.mxu0 %v2680
        %2804 = vmatpush.bf16.msra.mxu0 %v2676
        %2805 = vmatmul.bf16.gmra.mxu0 %v2756
        %v2806 = vpop.f32.mrf.mxu0
        %v2807 = vadd.f32 %v2794, %v2806
        %v2808 = vpop.f32.mrf.mxu0
        %2809 = vdwg.mxu0
        %2810 = vmatpush.bf16.msra.mxu0 %v2673
        %2811 = vmatpush.bf16.msra.mxu0 %v2669
        %2812 = vmatpush.bf16.msra.mxu0 %v2665
        %2813 = vmatpush.bf16.msra.mxu0 %v2661
        %2814 = vmatpush.bf16.msra.mxu0 %v2657
        %2815 = vmatpush.bf16.msra.mxu0 %v2653
        %2816 = vmatpush.bf16.msra.mxu0 %v2649
        %2817 = vmatpush.bf16.msra.mxu0 %v2645
        %2818 = vmatmul.bf16.gmra.mxu0 %v2472
        %v2819 = vpop.f32.mrf.mxu0
        %v2820 = vadd.f32 %v2467, %v2819
        %v2821 = vpop.f32.mrf.mxu0
        %2822 = vdwg.mxu0
        %2823 = vmatpush.bf16.msra.mxu0 0
        %2824 = vmatpush.bf16.msra.mxu0 0
        %2825 = vmatpush.bf16.msra.mxu0 %v2697
        %2826 = vmatpush.bf16.msra.mxu0 %v2693
        %2827 = vmatpush.bf16.msra.mxu0 %v2689
        %2828 = vmatpush.bf16.msra.mxu0 %v2685
        %2829 = vmatpush.bf16.msra.mxu0 %v2681
        %2830 = vmatpush.bf16.msra.mxu0 %v2677
        %2831 = vmatmul.bf16.gmra.mxu0 %v2756
        %v2832 = vpop.f32.mrf.mxu0
        %v2833 = vadd.f32 %v2820, %v2832
        %v2834 = vpop.f32.mrf.mxu0
        %2835 = vdwg.mxu0
        %2836 = vmatpush.bf16.msra.mxu0 %v2674
        %2837 = vmatpush.bf16.msra.mxu0 %v2670
        %2838 = vmatpush.bf16.msra.mxu0 %v2666
        %2839 = vmatpush.bf16.msra.mxu0 %v2662
        %2840 = vmatpush.bf16.msra.mxu0 %v2658
        %2841 = vmatpush.bf16.msra.mxu0 %v2654
        %2842 = vmatpush.bf16.msra.mxu0 %v2650
        %2843 = vmatpush.bf16.msra.mxu0 %v2646
        %2844 = vmatmul.bf16.gmra.mxu0 %v2472
        %v2845 = vpop.f32.mrf.mxu0
        %v2846 = vadd.f32 %v2467, %v2845
        %v2847 = vpop.f32.mrf.mxu0
        %2848 = vdwg.mxu0
        %2849 = vmatpush.bf16.msra.mxu0 0
        %2850 = vmatpush.bf16.msra.mxu0 0
        %2851 = vmatpush.bf16.msra.mxu0 %v2698
        %2852 = vmatpush.bf16.msra.mxu0 %v2694
        %2853 = vmatpush.bf16.msra.mxu0 %v2690
        %2854 = vmatpush.bf16.msra.mxu0 %v2686
        %2855 = vmatpush.bf16.msra.mxu0 %v2682
        %2856 = vmatpush.bf16.msra.mxu0 %v2678
        %2857 = vmatmul.bf16.gmra.mxu0 %v2756
        %v2858 = vpop.f32.mrf.mxu0
        %v2859 = vadd.f32 %v2846, %v2858
        %v2860 = vpop.f32.mrf.mxu0
        %2861 = vdwg.mxu0
        %v2862 = vadd.f32 %v396, %v2781
        %v2863 = vadd.f32 %v397, %v2807
        %v2864 = vadd.f32 %v398, %v2833
        %v2865 = vadd.f32 %v399, %v2859
        %s2866 = scalar_lea.vmem %s2, 8
        %v2867 = vld [vmem:[%s2866] sm:$0xff]
        %s2868 = scalar_lea.vmem %s3, 8
        %v2869 = vld [vmem:[%s2868] sm:$0xff]
        %v2870 = vadd.f32 %v2862, %v2863
        %v2871 = vadd.f32 %v2870, %v2864
        %v2872 = vadd.f32 %v2871, %v2865
        %2873 = vadd.xlane.f32.xlu0 %v2872
        %v2874 = vpop.xlane.xlu0 %2873
        %v2875 = vrot.slane %v2874, 4
        %v2876 = vadd.f32 %v2874, %v2875
        %v2877 = vrot.slane %v2876, 2
        %v2878 = vadd.f32 %v2876, %v2877
        %v2879 = vrot.slane %v2878, 1
        %v2880 = vadd.f32 %v2878, %v2879
        %s2881 = vtos %v2880
        %v2882 = vmul.f32 %v2862, %v2862
        %v2883 = vmul.f32 %v2863, %v2863
        %v2884 = vmul.f32 %v2864, %v2864
        %v2885 = vmul.f32 %v2865, %v2865
        %v2886 = vadd.f32 %v2882, %v2883
        %v2887 = vadd.f32 %v2886, %v2884
        %v2888 = vadd.f32 %v2887, %v2885
        %2889 = vadd.xlane.f32.xlu0 %v2888
        %v2890 = vpop.xlane.xlu0 %2889
        %v2891 = vrot.slane %v2890, 4
        %v2892 = vadd.f32 %v2890, %v2891
        %v2893 = vrot.slane %v2892, 2
        %v2894 = vadd.f32 %v2892, %v2893
        %v2895 = vrot.slane %v2894, 1
        %v2896 = vadd.f32 %v2894, %v2895
        %s2897 = vtos %v2896
        %s2898 = smul.f32 %s2881, 0.00024414063
        %s2899 = smul.f32 %s2897, 0.00024414063
        %s2900 = smul.f32 %s2898, %s2898
        %s2901 = ssub.f32 %s2899, %s2900
        %s2902 = sadd.f32 %s2901, 1e-05
        %v2903 = vstv %s2902
        %v2904 = vrsqrt.pop %v2903
        %v2905 = vmul.f32 %v2904, %v2903
        %v2906 = vmul.f32 %v2905, %v2904
        %v2907 = vmul.f32 0.5, %v2906
        %v2908 = vsub.f32 1.5, %v2907
        %v2909 = vmul.f32 %v2904, %v2908
        %vm2910 = vweird.f32 %v2903
        %vm2911 = vweird.f32 %v2904
        %vm2912 = vmor %vm2910, %vm2911
        %v2913 = vsel %vm2912, %v2904, %v2909
        %s2914 = vtos %v2913
        %v2915 = vstv %s2914
        %v2916 = vmul.f32 %v2867, %v2915
        %v2917 = vstv %s2898
        %v2918 = vmul.f32 %v2917, %v2916
        %v2919 = vsub.f32 %v2869, %v2918
        %2921 = vset.pattern.permute.xlu0 0
        %2922 = vperm.xlu0 %2921, %v2916
        %v2923 = vpop.permute.xlu0 %2922
        %v2925 = vmul.f32 %v2862, %v2923
        %v2926 = vmul.f32 %v2863, %v2923
        %v2927 = vmul.f32 %v2864, %v2923
        %v2928 = vmul.f32 %v2865, %v2923
        %2930 = vset.pattern.permute.xlu0 0
        %2931 = vperm.xlu0 %2930, %v2919
        %v2932 = vpop.permute.xlu0 %2931
        %v2934 = vadd.f32 %v2925, %v2932
        %v2935 = vadd.f32 %v2926, %v2932
        %v2936 = vadd.f32 %v2927, %v2932
        %v2937 = vadd.f32 %v2928, %v2932
        %v2938 = vmax.f32 %v2934, 0.0
        %v2939 = vmax.f32 %v2935, 0.0
        %v2940 = vmax.f32 %v2936, 0.0
        %v2941 = vmax.f32 %v2937, 0.0
        %s2942 = scalar_lea.vmem %s4, 8
        %v2943 = vld [vmem:[%s2942] sm:$0xff]
        %s2944 = scalar_lea.vmem %s5, 8
        %v2945 = vld [vmem:[%s2944] sm:$0xff]
        %2946 = vrot.lane.b32.xlu0 %v2938, 73
        %v2947 = vpop.permute.xlu0 %2946
        %2948 = vrot.lane.b32.xlu0 %v2939, 73
        %v2949 = vpop.permute.xlu0 %2948
        %2950 = vrot.lane.b32.xlu0 %v2940, 73
        %v2951 = vpop.permute.xlu0 %2950
        %2952 = vrot.lane.b32.xlu0 %v2941, 73
        %v2953 = vpop.permute.xlu0 %2952
        %v2954 = vsel %vm486, %v2951, %v2953
        %v2955 = vsel %vm486, %v2949, %v2951
        %v2956 = vsel %vm486, %v2947, %v2949
        %v2957 = vsel %vm486, %v2953, %v2947
        %v2958 = vld [vmem:[#allocation6] sm:$0xf]
        %v2960 = vperm.slane %v2958, 0
        %v2961 = vperm.slane %v2958, 1
        %v2962 = vperm.slane %v2958, 2
        %v2963 = vperm.slane %v2958, 3
        %v2968 = vmul.f32 %v2957, %v2960
        %v2969 = vmul.f32 %v2956, %v2961
        %v2970 = vmul.f32 %v2955, %v2962
        %v2971 = vmul.f32 %v2954, %v2963
        %2972 = vrot.lane.b32.xlu0 %v2938, 72
        %v2973 = vpop.permute.xlu0 %2972
        %2974 = vrot.lane.b32.xlu0 %v2939, 72
        %v2975 = vpop.permute.xlu0 %2974
        %2976 = vrot.lane.b32.xlu0 %v2940, 72
        %v2977 = vpop.permute.xlu0 %2976
        %2978 = vrot.lane.b32.xlu0 %v2941, 72
        %v2979 = vpop.permute.xlu0 %2978
        %v2980 = vsel %vm513, %v2977, %v2979
        %v2981 = vsel %vm513, %v2975, %v2977
        %v2982 = vsel %vm513, %v2973, %v2975
        %v2983 = vsel %vm513, %v2979, %v2973
        %v2984 = vld [vmem:[%s518] sm:$0xf]
        %v2986 = vperm.slane %v2984, 0
        %v2987 = vperm.slane %v2984, 1
        %v2988 = vperm.slane %v2984, 2
        %v2989 = vperm.slane %v2984, 3
        %v2994 = vmul.f32 %v2983, %v2986
        %v2995 = vmul.f32 %v2982, %v2987
        %v2996 = vmul.f32 %v2981, %v2988
        %v2997 = vmul.f32 %v2980, %v2989
        %v2998 = vpack.c.bf16 %v2969, %v2968
        %v2999 = vpack.c.bf16 %v2971, %v2970
        %v3000 = vpack.c.bf16 %v2995, %v2994
        %v3001 = vpack.c.bf16 %v2997, %v2996
        %3002 = vst [vmem:[#allocation2] sm:$0xff] %v2998
        %3003 = vst [vmem:[#allocation2 + $0x8] sm:$0xff] %v2999
        %3004 = vst [vmem:[#allocation2 + $0x10] sm:$0xff] %v3000
        %3005 = vst [vmem:[#allocation2 + $0x18] sm:$0xff] %v3001
        %3006 = vrot.lane.b32.xlu0 %v2938, 71
        %v3007 = vpop.permute.xlu0 %3006
        %3008 = vrot.lane.b32.xlu0 %v2939, 71
        %v3009 = vpop.permute.xlu0 %3008
        %3010 = vrot.lane.b32.xlu0 %v2940, 71
        %v3011 = vpop.permute.xlu0 %3010
        %3012 = vrot.lane.b32.xlu0 %v2941, 71
        %v3013 = vpop.permute.xlu0 %3012
        %v3014 = vsel %vm549, %v3011, %v3013
        %v3015 = vsel %vm549, %v3009, %v3011
        %v3016 = vsel %vm549, %v3007, %v3009
        %v3017 = vsel %vm549, %v3013, %v3007
        %v3018 = vld [vmem:[%s554] sm:$0xf]
        %v3020 = vperm.slane %v3018, 0
        %v3021 = vperm.slane %v3018, 1
        %v3022 = vperm.slane %v3018, 2
        %v3023 = vperm.slane %v3018, 3
        %v3028 = vmul.f32 %v3017, %v3020
        %v3029 = vmul.f32 %v3016, %v3021
        %v3030 = vmul.f32 %v3015, %v3022
        %v3031 = vmul.f32 %v3014, %v3023
        %3032 = vrot.lane.b32.xlu0 %v2938, 65
        %v3033 = vpop.permute.xlu0 %3032
        %3034 = vrot.lane.b32.xlu0 %v2939, 65
        %v3035 = vpop.permute.xlu0 %3034
        %3036 = vrot.lane.b32.xlu0 %v2940, 65
        %v3037 = vpop.permute.xlu0 %3036
        %3038 = vrot.lane.b32.xlu0 %v2941, 65
        %v3039 = vpop.permute.xlu0 %3038
        %v3040 = vsel %vm577, %v3037, %v3039
        %v3041 = vsel %vm577, %v3035, %v3037
        %v3042 = vsel %vm577, %v3033, %v3035
        %v3043 = vsel %vm577, %v3039, %v3033
        %v3044 = vld [vmem:[%s582] sm:$0xf]
        %v3046 = vperm.slane %v3044, 0
        %v3047 = vperm.slane %v3044, 1
        %v3048 = vperm.slane %v3044, 2
        %v3049 = vperm.slane %v3044, 3
        %v3054 = vmul.f32 %v3043, %v3046
        %v3055 = vmul.f32 %v3042, %v3047
        %v3056 = vmul.f32 %v3041, %v3048
        %v3057 = vmul.f32 %v3040, %v3049
        %v3058 = vpack.c.bf16 %v3029, %v3028
        %v3059 = vpack.c.bf16 %v3031, %v3030
        %v3060 = vpack.c.bf16 %v3055, %v3054
        %v3061 = vpack.c.bf16 %v3057, %v3056
        %3062 = vst [vmem:[#allocation2 + $0x20] sm:$0xff] %v3058
        %3063 = vst [vmem:[#allocation2 + $0x28] sm:$0xff] %v3059
        %3064 = vst [vmem:[#allocation2 + $0x30] sm:$0xff] %v3060
        %3065 = vst [vmem:[#allocation2 + $0x38] sm:$0xff] %v3061
        %3066 = vrot.lane.b32.xlu0 %v2938, 64
        %v3067 = vpop.permute.xlu0 %3066
        %3068 = vrot.lane.b32.xlu0 %v2939, 64
        %v3069 = vpop.permute.xlu0 %3068
        %3070 = vrot.lane.b32.xlu0 %v2940, 64
        %v3071 = vpop.permute.xlu0 %3070
        %3072 = vrot.lane.b32.xlu0 %v2941, 64
        %v3073 = vpop.permute.xlu0 %3072
        %v3074 = vsel %vm613, %v3071, %v3073
        %v3075 = vsel %vm613, %v3069, %v3071
        %v3076 = vsel %vm613, %v3067, %v3069
        %v3077 = vsel %vm613, %v3073, %v3067
        %v3078 = vld [vmem:[%s618] sm:$0xf]
        %v3080 = vperm.slane %v3078, 0
        %v3081 = vperm.slane %v3078, 1
        %v3082 = vperm.slane %v3078, 2
        %v3083 = vperm.slane %v3078, 3
        %v3088 = vmul.f32 %v3077, %v3080
        %v3089 = vmul.f32 %v3076, %v3081
        %v3090 = vmul.f32 %v3075, %v3082
        %v3091 = vmul.f32 %v3074, %v3083
        %3092 = vrot.lane.b32.xlu0 %v2938, 63
        %v3093 = vpop.permute.xlu0 %3092
        %3094 = vrot.lane.b32.xlu0 %v2939, 63
        %v3095 = vpop.permute.xlu0 %3094
        %3096 = vrot.lane.b32.xlu0 %v2940, 63
        %v3097 = vpop.permute.xlu0 %3096
        %3098 = vrot.lane.b32.xlu0 %v2941, 63
        %v3099 = vpop.permute.xlu0 %3098
        %v3100 = vsel %vm641, %v3097, %v3099
        %v3101 = vsel %vm641, %v3095, %v3097
        %v3102 = vsel %vm641, %v3093, %v3095
        %v3103 = vsel %vm641, %v3099, %v3093
        %v3104 = vld [vmem:[%s646] sm:$0xf]
        %v3106 = vperm.slane %v3104, 0
        %v3107 = vperm.slane %v3104, 1
        %v3108 = vperm.slane %v3104, 2
        %v3109 = vperm.slane %v3104, 3
        %v3114 = vmul.f32 %v3103, %v3106
        %v3115 = vmul.f32 %v3102, %v3107
        %v3116 = vmul.f32 %v3101, %v3108
        %v3117 = vmul.f32 %v3100, %v3109
        %v3118 = vpack.c.bf16 %v3089, %v3088
        %v3119 = vpack.c.bf16 %v3091, %v3090
        %v3120 = vpack.c.bf16 %v3115, %v3114
        %v3121 = vpack.c.bf16 %v3117, %v3116
        %3122 = vst [vmem:[#allocation2 + $0x40] sm:$0xff] %v3118
        %3123 = vst [vmem:[#allocation2 + $0x48] sm:$0xff] %v3119
        %3124 = vst [vmem:[#allocation2 + $0x50] sm:$0xff] %v3120
        %3125 = vst [vmem:[#allocation2 + $0x58] sm:$0xff] %v3121
        %3126 = vrot.lane.b32.xlu0 %v2938, 57
        %v3127 = vpop.permute.xlu0 %3126
        %3128 = vrot.lane.b32.xlu0 %v2939, 57
        %v3129 = vpop.permute.xlu0 %3128
        %3130 = vrot.lane.b32.xlu0 %v2940, 57
        %v3131 = vpop.permute.xlu0 %3130
        %3132 = vrot.lane.b32.xlu0 %v2941, 57
        %v3133 = vpop.permute.xlu0 %3132
        %v3134 = vsel %vm677, %v3131, %v3133
        %v3135 = vsel %vm677, %v3129, %v3131
        %v3136 = vsel %vm677, %v3127, %v3129
        %v3137 = vsel %vm677, %v3133, %v3127
        %v3138 = vld [vmem:[%s682] sm:$0xf]
        %v3140 = vperm.slane %v3138, 0
        %v3141 = vperm.slane %v3138, 1
        %v3142 = vperm.slane %v3138, 2
        %v3143 = vperm.slane %v3138, 3
        %v3148 = vmul.f32 %v3137, %v3140
        %v3149 = vmul.f32 %v3136, %v3141
        %v3150 = vmul.f32 %v3135, %v3142
        %v3151 = vmul.f32 %v3134, %v3143
        %3152 = vrot.lane.b32.xlu0 %v2938, 56
        %v3153 = vpop.permute.xlu0 %3152
        %3154 = vrot.lane.b32.xlu0 %v2939, 56
        %v3155 = vpop.permute.xlu0 %3154
        %3156 = vrot.lane.b32.xlu0 %v2940, 56
        %v3157 = vpop.permute.xlu0 %3156
        %3158 = vrot.lane.b32.xlu0 %v2941, 56
        %v3159 = vpop.permute.xlu0 %3158
        %v3160 = vsel %vm705, %v3157, %v3159
        %v3161 = vsel %vm705, %v3155, %v3157
        %v3162 = vsel %vm705, %v3153, %v3155
        %v3163 = vsel %vm705, %v3159, %v3153
        %v3164 = vld [vmem:[%s710] sm:$0xf]
        %v3166 = vperm.slane %v3164, 0
        %v3167 = vperm.slane %v3164, 1
        %v3168 = vperm.slane %v3164, 2
        %v3169 = vperm.slane %v3164, 3
        %v3174 = vmul.f32 %v3163, %v3166
        %v3175 = vmul.f32 %v3162, %v3167
        %v3176 = vmul.f32 %v3161, %v3168
        %v3177 = vmul.f32 %v3160, %v3169
        %v3178 = vpack.c.bf16 %v3149, %v3148
        %v3179 = vpack.c.bf16 %v3151, %v3150
        %v3180 = vpack.c.bf16 %v3175, %v3174
        %v3181 = vpack.c.bf16 %v3177, %v3176
        %3182 = vst [vmem:[#allocation2 + $0x60] sm:$0xff] %v3178
        %3183 = vst [vmem:[#allocation2 + $0x68] sm:$0xff] %v3179
        %3184 = vst [vmem:[#allocation2 + $0x70] sm:$0xff] %v3180
        %3185 = vst [vmem:[#allocation2 + $0x78] sm:$0xff] %v3181
        %3186 = vrot.lane.b32.xlu0 %v2938, 55
        %v3187 = vpop.permute.xlu0 %3186
        %3188 = vrot.lane.b32.xlu0 %v2939, 55
        %v3189 = vpop.permute.xlu0 %3188
        %3190 = vrot.lane.b32.xlu0 %v2940, 55
        %v3191 = vpop.permute.xlu0 %3190
        %3192 = vrot.lane.b32.xlu0 %v2941, 55
        %v3193 = vpop.permute.xlu0 %3192
        %v3194 = vsel %vm741, %v3191, %v3193
        %v3195 = vsel %vm741, %v3189, %v3191
        %v3196 = vsel %vm741, %v3187, %v3189
        %v3197 = vsel %vm741, %v3193, %v3187
        %v3198 = vld [vmem:[%s746] sm:$0xf]
        %v3200 = vperm.slane %v3198, 0
        %v3201 = vperm.slane %v3198, 1
        %v3202 = vperm.slane %v3198, 2
        %v3203 = vperm.slane %v3198, 3
        %v3208 = vmul.f32 %v3197, %v3200
        %v3209 = vmul.f32 %v3196, %v3201
        %v3210 = vmul.f32 %v3195, %v3202
        %v3211 = vmul.f32 %v3194, %v3203
        %3212 = vrot.lane.b32.xlu0 %v2938, 9
        %v3213 = vpop.permute.xlu0 %3212
        %3214 = vrot.lane.b32.xlu0 %v2939, 9
        %v3215 = vpop.permute.xlu0 %3214
        %3216 = vrot.lane.b32.xlu0 %v2940, 9
        %v3217 = vpop.permute.xlu0 %3216
        %3218 = vrot.lane.b32.xlu0 %v2941, 9
        %v3219 = vpop.permute.xlu0 %3218
        %v3220 = vsel %vm769, %v3217, %v3219
        %v3221 = vsel %vm769, %v3215, %v3217
        %v3222 = vsel %vm769, %v3213, %v3215
        %v3223 = vsel %vm769, %v3219, %v3213
        %v3224 = vld [vmem:[%s774] sm:$0xf]
        %v3226 = vperm.slane %v3224, 0
        %v3227 = vperm.slane %v3224, 1
        %v3228 = vperm.slane %v3224, 2
        %v3229 = vperm.slane %v3224, 3
        %v3234 = vmul.f32 %v3223, %v3226
        %v3235 = vmul.f32 %v3222, %v3227
        %v3236 = vmul.f32 %v3221, %v3228
        %v3237 = vmul.f32 %v3220, %v3229
        %v3238 = vpack.c.bf16 %v3209, %v3208
        %v3239 = vpack.c.bf16 %v3211, %v3210
        %v3240 = vpack.c.bf16 %v3235, %v3234
        %v3241 = vpack.c.bf16 %v3237, %v3236
        %3242 = vst [vmem:[#allocation2 + $0x80] sm:$0xff] %v3238
        %3243 = vst [vmem:[#allocation2 + $0x88] sm:$0xff] %v3239
        %3244 = vst [vmem:[#allocation2 + $0x90] sm:$0xff] %v3240
        %3245 = vst [vmem:[#allocation2 + $0x98] sm:$0xff] %v3241
        %3246 = vrot.lane.b32.xlu0 %v2938, 8
        %v3247 = vpop.permute.xlu0 %3246
        %3248 = vrot.lane.b32.xlu0 %v2939, 8
        %v3249 = vpop.permute.xlu0 %3248
        %3250 = vrot.lane.b32.xlu0 %v2940, 8
        %v3251 = vpop.permute.xlu0 %3250
        %3252 = vrot.lane.b32.xlu0 %v2941, 8
        %v3253 = vpop.permute.xlu0 %3252
        %v3254 = vsel %vm805, %v3251, %v3253
        %v3255 = vsel %vm805, %v3249, %v3251
        %v3256 = vsel %vm805, %v3247, %v3249
        %v3257 = vsel %vm805, %v3253, %v3247
        %v3258 = vld [vmem:[%s810] sm:$0xf]
        %v3260 = vperm.slane %v3258, 0
        %v3261 = vperm.slane %v3258, 1
        %v3262 = vperm.slane %v3258, 2
        %v3263 = vperm.slane %v3258, 3
        %v3268 = vmul.f32 %v3257, %v3260
        %v3269 = vmul.f32 %v3256, %v3261
        %v3270 = vmul.f32 %v3255, %v3262
        %v3271 = vmul.f32 %v3254, %v3263
        %3272 = vrot.lane.b32.xlu0 %v2938, 7
        %v3273 = vpop.permute.xlu0 %3272
        %3274 = vrot.lane.b32.xlu0 %v2939, 7
        %v3275 = vpop.permute.xlu0 %3274
        %3276 = vrot.lane.b32.xlu0 %v2940, 7
        %v3277 = vpop.permute.xlu0 %3276
        %3278 = vrot.lane.b32.xlu0 %v2941, 7
        %v3279 = vpop.permute.xlu0 %3278
        %v3280 = vsel %vm833, %v3277, %v3279
        %v3281 = vsel %vm833, %v3275, %v3277
        %v3282 = vsel %vm833, %v3273, %v3275
        %v3283 = vsel %vm833, %v3279, %v3273
        %v3284 = vld [vmem:[%s838] sm:$0xf]
        %v3286 = vperm.slane %v3284, 0
        %v3287 = vperm.slane %v3284, 1
        %v3288 = vperm.slane %v3284, 2
        %v3289 = vperm.slane %v3284, 3
        %v3294 = vmul.f32 %v3283, %v3286
        %v3295 = vmul.f32 %v3282, %v3287
        %v3296 = vmul.f32 %v3281, %v3288
        %v3297 = vmul.f32 %v3280, %v3289
        %v3298 = vpack.c.bf16 %v3269, %v3268
        %v3299 = vpack.c.bf16 %v3271, %v3270
        %v3300 = vpack.c.bf16 %v3295, %v3294
        %v3301 = vpack.c.bf16 %v3297, %v3296
        %3302 = vst [vmem:[#allocation2 + $0xa0] sm:$0xff] %v3298
        %3303 = vst [vmem:[#allocation2 + $0xa8] sm:$0xff] %v3299
        %3304 = vst [vmem:[#allocation2 + $0xb0] sm:$0xff] %v3300
        %3305 = vst [vmem:[#allocation2 + $0xb8] sm:$0xff] %v3301
        %3306 = vrot.lane.b32.xlu0 %v2938, 1
        %v3307 = vpop.permute.xlu0 %3306
        %3308 = vrot.lane.b32.xlu0 %v2939, 1
        %v3309 = vpop.permute.xlu0 %3308
        %3310 = vrot.lane.b32.xlu0 %v2940, 1
        %v3311 = vpop.permute.xlu0 %3310
        %3312 = vrot.lane.b32.xlu0 %v2941, 1
        %v3313 = vpop.permute.xlu0 %3312
        %v3314 = vsel %vm869, %v3311, %v3313
        %v3315 = vsel %vm869, %v3309, %v3311
        %v3316 = vsel %vm869, %v3307, %v3309
        %v3317 = vsel %vm869, %v3313, %v3307
        %v3318 = vld [vmem:[%s874] sm:$0xf]
        %v3320 = vperm.slane %v3318, 0
        %v3321 = vperm.slane %v3318, 1
        %v3322 = vperm.slane %v3318, 2
        %v3323 = vperm.slane %v3318, 3
        %v3328 = vmul.f32 %v3317, %v3320
        %v3329 = vmul.f32 %v3316, %v3321
        %v3330 = vmul.f32 %v3315, %v3322
        %v3331 = vmul.f32 %v3314, %v3323
        %v3332 = vpack.c.bf16 %v3329, %v3328
        %v3333 = vpack.c.bf16 %v3331, %v3330
        %v3334 = vpack.c.bf16 %v2939, %v2938
        %v3335 = vpack.c.bf16 %v2941, %v2940
        %3336 = vst [vmem:[#allocation2 + $0xc0] sm:$0xff] %v3332
        %3337 = vst [vmem:[#allocation2 + $0xc8] sm:$0xff] %v3333
        %3338 = vst [vmem:[#allocation2 + $0xd0] sm:$0xff] %v3334
        %3339 = vst [vmem:[#allocation2 + $0xd8] sm:$0xff] %v3335
        %3340 = vrot.lane.b32.xlu0 %v2938, 127
        %v3341 = vpop.permute.xlu0 %3340
        %3342 = vrot.lane.b32.xlu0 %v2939, 127
        %v3343 = vpop.permute.xlu0 %3342
        %3344 = vrot.lane.b32.xlu0 %v2940, 127
        %v3345 = vpop.permute.xlu0 %3344
        %3346 = vrot.lane.b32.xlu0 %v2941, 127
        %v3347 = vpop.permute.xlu0 %3346
        %v3348 = vsel %vm905, %v3345, %v3347
        %v3349 = vsel %vm905, %v3343, %v3345
        %v3350 = vsel %vm905, %v3341, %v3343
        %v3351 = vsel %vm905, %v3347, %v3341
        %v3352 = vld [vmem:[%s910] sm:$0xf]
        %v3354 = vperm.slane %v3352, 0
        %v3355 = vperm.slane %v3352, 1
        %v3356 = vperm.slane %v3352, 2
        %v3357 = vperm.slane %v3352, 3
        %v3362 = vmul.f32 %v3350, %v3354
        %v3363 = vmul.f32 %v3349, %v3355
        %v3364 = vmul.f32 %v3348, %v3356
        %v3365 = vmul.f32 %v3351, %v3357
        %3366 = vrot.lane.b32.xlu0 %v2938, 121
        %v3367 = vpop.permute.xlu0 %3366
        %3368 = vrot.lane.b32.xlu0 %v2939, 121
        %v3369 = vpop.permute.xlu0 %3368
        %3370 = vrot.lane.b32.xlu0 %v2940, 121
        %v3371 = vpop.permute.xlu0 %3370
        %3372 = vrot.lane.b32.xlu0 %v2941, 121
        %v3373 = vpop.permute.xlu0 %3372
        %v3374 = vsel %vm933, %v3371, %v3373
        %v3375 = vsel %vm933, %v3369, %v3371
        %v3376 = vsel %vm933, %v3367, %v3369
        %v3377 = vsel %vm933, %v3373, %v3367
        %v3378 = vld [vmem:[%s938] sm:$0xf]
        %v3380 = vperm.slane %v3378, 0
        %v3381 = vperm.slane %v3378, 1
        %v3382 = vperm.slane %v3378, 2
        %v3383 = vperm.slane %v3378, 3
        %v3388 = vmul.f32 %v3376, %v3380
        %v3389 = vmul.f32 %v3375, %v3381
        %v3390 = vmul.f32 %v3374, %v3382
        %v3391 = vmul.f32 %v3377, %v3383
        %v3392 = vpack.c.bf16 %v3363, %v3362
        %v3393 = vpack.c.bf16 %v3365, %v3364
        %v3394 = vpack.c.bf16 %v3389, %v3388
        %v3395 = vpack.c.bf16 %v3391, %v3390
        %3396 = vst [vmem:[#allocation2 + $0xe0] sm:$0xff] %v3392
        %3397 = vst [vmem:[#allocation2 + $0xe8] sm:$0xff] %v3393
        %3398 = vst [vmem:[#allocation2 + $0xf0] sm:$0xff] %v3394
        %3399 = vst [vmem:[#allocation2 + $0xf8] sm:$0xff] %v3395
        %3400 = vrot.lane.b32.xlu0 %v2938, 120
        %v3401 = vpop.permute.xlu0 %3400
        %3402 = vrot.lane.b32.xlu0 %v2939, 120
        %v3403 = vpop.permute.xlu0 %3402
        %3404 = vrot.lane.b32.xlu0 %v2940, 120
        %v3405 = vpop.permute.xlu0 %3404
        %3406 = vrot.lane.b32.xlu0 %v2941, 120
        %v3407 = vpop.permute.xlu0 %3406
        %v3408 = vsel %vm969, %v3405, %v3407
        %v3409 = vsel %vm969, %v3403, %v3405
        %v3410 = vsel %vm969, %v3401, %v3403
        %v3411 = vsel %vm969, %v3407, %v3401
        %v3412 = vld [vmem:[%s974] sm:$0xf]
        %v3414 = vperm.slane %v3412, 0
        %v3415 = vperm.slane %v3412, 1
        %v3416 = vperm.slane %v3412, 2
        %v3417 = vperm.slane %v3412, 3
        %v3422 = vmul.f32 %v3410, %v3414
        %v3423 = vmul.f32 %v3409, %v3415
        %v3424 = vmul.f32 %v3408, %v3416
        %v3425 = vmul.f32 %v3411, %v3417
        %3426 = vrot.lane.b32.xlu0 %v2938, 119
        %v3427 = vpop.permute.xlu0 %3426
        %3428 = vrot.lane.b32.xlu0 %v2939, 119
        %v3429 = vpop.permute.xlu0 %3428
        %3430 = vrot.lane.b32.xlu0 %v2940, 119
        %v3431 = vpop.permute.xlu0 %3430
        %3432 = vrot.lane.b32.xlu0 %v2941, 119
        %v3433 = vpop.permute.xlu0 %3432
        %v3434 = vsel %vm997, %v3431, %v3433
        %v3435 = vsel %vm997, %v3429, %v3431
        %v3436 = vsel %vm997, %v3427, %v3429
        %v3437 = vsel %vm997, %v3433, %v3427
        %v3438 = vld [vmem:[%s1002] sm:$0xf]
        %v3440 = vperm.slane %v3438, 0
        %v3441 = vperm.slane %v3438, 1
        %v3442 = vperm.slane %v3438, 2
        %v3443 = vperm.slane %v3438, 3
        %v3448 = vmul.f32 %v3436, %v3440
        %v3449 = vmul.f32 %v3435, %v3441
        %v3450 = vmul.f32 %v3434, %v3442
        %v3451 = vmul.f32 %v3437, %v3443
        %v3452 = vpack.c.bf16 %v3423, %v3422
        %v3453 = vpack.c.bf16 %v3425, %v3424
        %v3454 = vpack.c.bf16 %v3449, %v3448
        %v3455 = vpack.c.bf16 %v3451, %v3450
        %3456 = vst [vmem:[#allocation2 + $0x100] sm:$0xff] %v3452
        %3457 = vst [vmem:[#allocation2 + $0x108] sm:$0xff] %v3453
        %3458 = vst [vmem:[#allocation2 + $0x110] sm:$0xff] %v3454
        %3459 = vst [vmem:[#allocation2 + $0x118] sm:$0xff] %v3455
        %v3460 = vld [vmem:[%s1025] sm:$0xf]
        %v3462 = vperm.slane %v3460, 0
        %v3463 = vperm.slane %v3460, 1
        %v3464 = vperm.slane %v3460, 2
        %v3465 = vperm.slane %v3460, 3
        %v3470 = vmul.f32 %v2956, %v3462
        %v3471 = vmul.f32 %v2955, %v3463
        %v3472 = vmul.f32 %v2954, %v3464
        %v3473 = vmul.f32 %v2957, %v3465
        %v3474 = vld [vmem:[%s1040] sm:$0xf]
        %v3476 = vperm.slane %v3474, 0
        %v3477 = vperm.slane %v3474, 1
        %v3478 = vperm.slane %v3474, 2
        %v3479 = vperm.slane %v3474, 3
        %v3484 = vmul.f32 %v2982, %v3476
        %v3485 = vmul.f32 %v2981, %v3477
        %v3486 = vmul.f32 %v2980, %v3478
        %v3487 = vmul.f32 %v2983, %v3479
        %v3488 = vpack.c.bf16 %v3471, %v3470
        %v3489 = vpack.c.bf16 %v3473, %v3472
        %v3490 = vpack.c.bf16 %v3485, %v3484
        %v3491 = vpack.c.bf16 %v3487, %v3486
        %3492 = vst [vmem:[#allocation2 + $0x120] sm:$0xff] %v3488
        %3493 = vst [vmem:[#allocation2 + $0x128] sm:$0xff] %v3489
        %3494 = vst [vmem:[#allocation2 + $0x130] sm:$0xff] %v3490
        %3495 = vst [vmem:[#allocation2 + $0x138] sm:$0xff] %v3491
        %v3496 = vld [vmem:[%s1063] sm:$0xf]
        %v3498 = vperm.slane %v3496, 0
        %v3499 = vperm.slane %v3496, 1
        %v3500 = vperm.slane %v3496, 2
        %v3501 = vperm.slane %v3496, 3
        %v3506 = vmul.f32 %v3016, %v3498
        %v3507 = vmul.f32 %v3015, %v3499
        %v3508 = vmul.f32 %v3014, %v3500
        %v3509 = vmul.f32 %v3017, %v3501
        %v3510 = vld [vmem:[%s1078] sm:$0xf]
        %v3512 = vperm.slane %v3510, 0
        %v3513 = vperm.slane %v3510, 1
        %v3514 = vperm.slane %v3510, 2
        %v3515 = vperm.slane %v3510, 3
        %v3520 = vmul.f32 %v3042, %v3512
        %v3521 = vmul.f32 %v3041, %v3513
        %v3522 = vmul.f32 %v3040, %v3514
        %v3523 = vmul.f32 %v3043, %v3515
        %v3524 = vpack.c.bf16 %v3507, %v3506
        %v3525 = vpack.c.bf16 %v3509, %v3508
        %v3526 = vpack.c.bf16 %v3521, %v3520
        %v3527 = vpack.c.bf16 %v3523, %v3522
        %3528 = vst [vmem:[#allocation2 + $0x140] sm:$0xff] %v3524
        %3529 = vst [vmem:[#allocation2 + $0x148] sm:$0xff] %v3525
        %3530 = vst [vmem:[#allocation2 + $0x150] sm:$0xff] %v3526
        %3531 = vst [vmem:[#allocation2 + $0x158] sm:$0xff] %v3527
        %v3532 = vld [vmem:[%s1101] sm:$0xf]
        %v3534 = vperm.slane %v3532, 0
        %v3535 = vperm.slane %v3532, 1
        %v3536 = vperm.slane %v3532, 2
        %v3537 = vperm.slane %v3532, 3
        %v3542 = vmul.f32 %v3076, %v3534
        %v3543 = vmul.f32 %v3075, %v3535
        %v3544 = vmul.f32 %v3074, %v3536
        %v3545 = vmul.f32 %v3077, %v3537
        %v3546 = vld [vmem:[%s1116] sm:$0xf]
        %v3548 = vperm.slane %v3546, 0
        %v3549 = vperm.slane %v3546, 1
        %v3550 = vperm.slane %v3546, 2
        %v3551 = vperm.slane %v3546, 3
        %v3556 = vmul.f32 %v3102, %v3548
        %v3557 = vmul.f32 %v3101, %v3549
        %v3558 = vmul.f32 %v3100, %v3550
        %v3559 = vmul.f32 %v3103, %v3551
        %v3560 = vpack.c.bf16 %v3543, %v3542
        %v3561 = vpack.c.bf16 %v3545, %v3544
        %v3562 = vpack.c.bf16 %v3557, %v3556
        %v3563 = vpack.c.bf16 %v3559, %v3558
        %3564 = vst [vmem:[#allocation2 + $0x160] sm:$0xff] %v3560
        %3565 = vst [vmem:[#allocation2 + $0x168] sm:$0xff] %v3561
        %3566 = vst [vmem:[#allocation2 + $0x170] sm:$0xff] %v3562
        %3567 = vst [vmem:[#allocation2 + $0x178] sm:$0xff] %v3563
        %v3568 = vld [vmem:[%s1139] sm:$0xf]
        %v3570 = vperm.slane %v3568, 0
        %v3571 = vperm.slane %v3568, 1
        %v3572 = vperm.slane %v3568, 2
        %v3573 = vperm.slane %v3568, 3
        %v3578 = vmul.f32 %v3136, %v3570
        %v3579 = vmul.f32 %v3135, %v3571
        %v3580 = vmul.f32 %v3134, %v3572
        %v3581 = vmul.f32 %v3137, %v3573
        %v3582 = vld [vmem:[%s1154] sm:$0xf]
        %v3584 = vperm.slane %v3582, 0
        %v3585 = vperm.slane %v3582, 1
        %v3586 = vperm.slane %v3582, 2
        %v3587 = vperm.slane %v3582, 3
        %v3592 = vmul.f32 %v3162, %v3584
        %v3593 = vmul.f32 %v3161, %v3585
        %v3594 = vmul.f32 %v3160, %v3586
        %v3595 = vmul.f32 %v3163, %v3587
        %v3596 = vpack.c.bf16 %v3579, %v3578
        %v3597 = vpack.c.bf16 %v3581, %v3580
        %v3598 = vpack.c.bf16 %v3593, %v3592
        %v3599 = vpack.c.bf16 %v3595, %v3594
        %3600 = vst [vmem:[#allocation2 + $0x180] sm:$0xff] %v3596
        %3601 = vst [vmem:[#allocation2 + $0x188] sm:$0xff] %v3597
        %3602 = vst [vmem:[#allocation2 + $0x190] sm:$0xff] %v3598
        %3603 = vst [vmem:[#allocation2 + $0x198] sm:$0xff] %v3599
        %v3604 = vld [vmem:[%s1177] sm:$0xf]
        %v3606 = vperm.slane %v3604, 0
        %v3607 = vperm.slane %v3604, 1
        %v3608 = vperm.slane %v3604, 2
        %v3609 = vperm.slane %v3604, 3
        %v3614 = vmul.f32 %v3196, %v3606
        %v3615 = vmul.f32 %v3195, %v3607
        %v3616 = vmul.f32 %v3194, %v3608
        %v3617 = vmul.f32 %v3197, %v3609
        %v3618 = vpack.c.bf16 %v3615, %v3614
        %v3619 = vpack.c.bf16 %v3617, %v3616
        %3620 = vst [vmem:[#allocation2 + $0x1a0] sm:$0xff] %v3618
        %3621 = vst [vmem:[#allocation2 + $0x1a8] sm:$0xff] %v3619
        %3622 = vst [vmem:[#allocation2 + $0x1b0] sm:$0xff] %v1194
        %3623 = vst [vmem:[#allocation2 + $0x1b8] sm:$0xff] %v1194
        %v3624 = vld [vmem:[#allocation2] sm:$0xff]
        %v3625 = vld [vmem:[#allocation2 + $0x8] sm:$0xff]
        %v3626 = vld [vmem:[#allocation2 + $0x10] sm:$0xff]
        %v3627 = vld [vmem:[#allocation2 + $0x18] sm:$0xff]
        %v3628 = vld [vmem:[#allocation2 + $0x20] sm:$0xff]
        %v3629 = vld [vmem:[#allocation2 + $0x28] sm:$0xff]
        %v3630 = vld [vmem:[#allocation2 + $0x30] sm:$0xff]
        %v3631 = vld [vmem:[#allocation2 + $0x38] sm:$0xff]
        %v3632 = vld [vmem:[#allocation2 + $0x40] sm:$0xff]
        %v3633 = vld [vmem:[#allocation2 + $0x48] sm:$0xff]
        %v3634 = vld [vmem:[#allocation2 + $0x50] sm:$0xff]
        %v3635 = vld [vmem:[#allocation2 + $0x58] sm:$0xff]
        %v3636 = vld [vmem:[#allocation2 + $0x60] sm:$0xff]
        %v3637 = vld [vmem:[#allocation2 + $0x68] sm:$0xff]
        %v3638 = vld [vmem:[#allocation2 + $0x70] sm:$0xff]
        %v3639 = vld [vmem:[#allocation2 + $0x78] sm:$0xff]
        %v3640 = vld [vmem:[#allocation2 + $0x80] sm:$0xff]
        %v3641 = vld [vmem:[#allocation2 + $0x88] sm:$0xff]
        %v3642 = vld [vmem:[#allocation2 + $0x90] sm:$0xff]
        %v3643 = vld [vmem:[#allocation2 + $0x98] sm:$0xff]
        %v3644 = vld [vmem:[#allocation2 + $0xa0] sm:$0xff]
        %v3645 = vld [vmem:[#allocation2 + $0xa8] sm:$0xff]
        %v3646 = vld [vmem:[#allocation2 + $0xb0] sm:$0xff]
        %v3647 = vld [vmem:[#allocation2 + $0xb8] sm:$0xff]
        %v3648 = vld [vmem:[#allocation2 + $0xc0] sm:$0xff]
        %v3649 = vld [vmem:[#allocation2 + $0xc8] sm:$0xff]
        %v3650 = vld [vmem:[#allocation2 + $0xd0] sm:$0xff]
        %v3651 = vld [vmem:[#allocation2 + $0xd8] sm:$0xff]
        %v3652 = vld [vmem:[#allocation2 + $0xe0] sm:$0xff]
        %v3653 = vld [vmem:[#allocation2 + $0xe8] sm:$0xff]
        %v3654 = vld [vmem:[#allocation2 + $0xf0] sm:$0xff]
        %v3655 = vld [vmem:[#allocation2 + $0xf8] sm:$0xff]
        %v3656 = vld [vmem:[#allocation2 + $0x100] sm:$0xff]
        %v3657 = vld [vmem:[#allocation2 + $0x108] sm:$0xff]
        %v3658 = vld [vmem:[#allocation2 + $0x110] sm:$0xff]
        %v3659 = vld [vmem:[#allocation2 + $0x118] sm:$0xff]
        %v3660 = vld [vmem:[#allocation2 + $0x120] sm:$0xff]
        %v3661 = vld [vmem:[#allocation2 + $0x128] sm:$0xff]
        %v3662 = vld [vmem:[#allocation2 + $0x130] sm:$0xff]
        %v3663 = vld [vmem:[#allocation2 + $0x138] sm:$0xff]
        %v3664 = vld [vmem:[#allocation2 + $0x140] sm:$0xff]
        %v3665 = vld [vmem:[#allocation2 + $0x148] sm:$0xff]
        %v3666 = vld [vmem:[#allocation2 + $0x150] sm:$0xff]
        %v3667 = vld [vmem:[#allocation2 + $0x158] sm:$0xff]
        %v3668 = vld [vmem:[#allocation2 + $0x160] sm:$0xff]
        %v3669 = vld [vmem:[#allocation2 + $0x168] sm:$0xff]
        %v3670 = vld [vmem:[#allocation2 + $0x170] sm:$0xff]
        %v3671 = vld [vmem:[#allocation2 + $0x178] sm:$0xff]
        %v3672 = vld [vmem:[#allocation2 + $0x180] sm:$0xff]
        %v3673 = vld [vmem:[#allocation2 + $0x188] sm:$0xff]
        %v3674 = vld [vmem:[#allocation2 + $0x190] sm:$0xff]
        %v3675 = vld [vmem:[#allocation2 + $0x198] sm:$0xff]
        %v3676 = vld [vmem:[#allocation2 + $0x1a0] sm:$0xff]
        %v3677 = vld [vmem:[#allocation2 + $0x1a8] sm:$0xff]
        %v3678 = vld [vmem:[#allocation2 + $0x1b0] sm:$0xff]
        %v3679 = vld [vmem:[#allocation2 + $0x1b8] sm:$0xff]
        %3681 = vset.pattern.permute.xlu0 0
        %3682 = vperm.xlu0 %3681, %v2945
        %v3683 = vpop.permute.xlu0 %3682
        %v3686 = vunpack.c.l.b16 %v2943
        %v3687 = vunpack.c.h.b16 %v2943
        %v3688 = vpack.c.b16 %v3686, %v3686
        %v3689 = vpack.c.b16 %v3687, %v3687
        %v3747 = vunpack.c.l.b16 %v3624
        %v3748 = vunpack.c.h.b16 %v3624
        %v3749 = vunpack.c.l.b16 %v3625
        %v3750 = vunpack.c.h.b16 %v3625
        %v3751 = vunpack.c.l.b16 %v3626
        %v3752 = vunpack.c.h.b16 %v3626
        %v3753 = vunpack.c.l.b16 %v3627
        %v3754 = vunpack.c.h.b16 %v3627
        %v3755 = vunpack.c.l.b16 %v3628
        %v3756 = vunpack.c.h.b16 %v3628
        %v3757 = vunpack.c.l.b16 %v3629
        %v3758 = vunpack.c.h.b16 %v3629
        %v3759 = vunpack.c.l.b16 %v3630
        %v3760 = vunpack.c.h.b16 %v3630
        %v3761 = vunpack.c.l.b16 %v3631
        %v3762 = vunpack.c.h.b16 %v3631
        %v3763 = vunpack.c.l.b16 %v3632
        %v3764 = vunpack.c.h.b16 %v3632
        %v3765 = vunpack.c.l.b16 %v3633
        %v3766 = vunpack.c.h.b16 %v3633
        %v3767 = vunpack.c.l.b16 %v3634
        %v3768 = vunpack.c.h.b16 %v3634
        %v3769 = vunpack.c.l.b16 %v3635
        %v3770 = vunpack.c.h.b16 %v3635
        %v3771 = vunpack.c.l.b16 %v3636
        %v3772 = vunpack.c.h.b16 %v3636
        %v3773 = vunpack.c.l.b16 %v3637
        %v3774 = vunpack.c.h.b16 %v3637
        %v3775 = vunpack.c.l.b16 %v3638
        %v3776 = vunpack.c.h.b16 %v3638
        %v3777 = vunpack.c.l.b16 %v3639
        %v3778 = vunpack.c.h.b16 %v3639
        %v3779 = vunpack.c.l.b16 %v3640
        %v3780 = vunpack.c.h.b16 %v3640
        %v3781 = vunpack.c.l.b16 %v3641
        %v3782 = vunpack.c.h.b16 %v3641
        %v3783 = vunpack.c.l.b16 %v3642
        %v3784 = vunpack.c.h.b16 %v3642
        %v3785 = vunpack.c.l.b16 %v3643
        %v3786 = vunpack.c.h.b16 %v3643
        %v3787 = vunpack.c.l.b16 %v3644
        %v3788 = vunpack.c.h.b16 %v3644
        %v3789 = vunpack.c.l.b16 %v3645
        %v3790 = vunpack.c.h.b16 %v3645
        %v3791 = vunpack.c.l.b16 %v3646
        %v3792 = vunpack.c.h.b16 %v3646
        %v3793 = vunpack.c.l.b16 %v3647
        %v3794 = vunpack.c.h.b16 %v3647
        %v3795 = vunpack.c.l.b16 %v3648
        %v3796 = vunpack.c.h.b16 %v3648
        %v3797 = vunpack.c.l.b16 %v3649
        %v3798 = vunpack.c.h.b16 %v3649
        %v3799 = vunpack.c.l.b16 %v3650
        %v3800 = vunpack.c.h.b16 %v3650
        %v3801 = vunpack.c.l.b16 %v3651
        %v3802 = vunpack.c.h.b16 %v3651
        %v3803 = vunpack.c.l.b16 %v3652
        %v3804 = vunpack.c.h.b16 %v3652
        %v3805 = vunpack.c.l.b16 %v3653
        %v3806 = vunpack.c.h.b16 %v3653
        %v3807 = vunpack.c.l.b16 %v3654
        %v3808 = vunpack.c.h.b16 %v3654
        %v3809 = vunpack.c.l.b16 %v3655
        %v3810 = vunpack.c.h.b16 %v3655
        %v3811 = vunpack.c.l.b16 %v3656
        %v3812 = vunpack.c.h.b16 %v3656
        %v3813 = vunpack.c.l.b16 %v3657
        %v3814 = vunpack.c.h.b16 %v3657
        %v3815 = vunpack.c.l.b16 %v3658
        %v3816 = vunpack.c.h.b16 %v3658
        %v3817 = vunpack.c.l.b16 %v3659
        %v3818 = vunpack.c.h.b16 %v3659
        %v3819 = vunpack.c.l.b16 %v3660
        %v3820 = vunpack.c.h.b16 %v3660
        %v3821 = vunpack.c.l.b16 %v3661
        %v3822 = vunpack.c.h.b16 %v3661
        %v3823 = vunpack.c.l.b16 %v3662
        %v3824 = vunpack.c.h.b16 %v3662
        %v3825 = vunpack.c.l.b16 %v3663
        %v3826 = vunpack.c.h.b16 %v3663
        %v3827 = vunpack.c.l.b16 %v3664
        %v3828 = vunpack.c.h.b16 %v3664
        %v3829 = vunpack.c.l.b16 %v3665
        %v3830 = vunpack.c.h.b16 %v3665
        %v3831 = vunpack.c.l.b16 %v3666
        %v3832 = vunpack.c.h.b16 %v3666
        %v3833 = vunpack.c.l.b16 %v3667
        %v3834 = vunpack.c.h.b16 %v3667
        %v3835 = vunpack.c.l.b16 %v3668
        %v3836 = vunpack.c.h.b16 %v3668
        %v3837 = vunpack.c.l.b16 %v3669
        %v3838 = vunpack.c.h.b16 %v3669
        %v3839 = vunpack.c.l.b16 %v3670
        %v3840 = vunpack.c.h.b16 %v3670
        %v3841 = vunpack.c.l.b16 %v3671
        %v3842 = vunpack.c.h.b16 %v3671
        %v3843 = vunpack.c.l.b16 %v3672
        %v3844 = vunpack.c.h.b16 %v3672
        %v3845 = vunpack.c.l.b16 %v3673
        %v3846 = vunpack.c.h.b16 %v3673
        %v3847 = vunpack.c.l.b16 %v3674
        %v3848 = vunpack.c.h.b16 %v3674
        %v3849 = vunpack.c.l.b16 %v3675
        %v3850 = vunpack.c.h.b16 %v3675
        %v3851 = vunpack.c.l.b16 %v3676
        %v3852 = vunpack.c.h.b16 %v3676
        %v3853 = vunpack.c.l.b16 %v3677
        %v3854 = vunpack.c.h.b16 %v3677
        %v3855 = vunpack.c.l.b16 %v3678
        %v3856 = vunpack.c.h.b16 %v3678
        %v3857 = vunpack.c.l.b16 %v3679
        %v3858 = vunpack.c.h.b16 %v3679
        %v3859 = vpack.c.b16 %v3751, %v3747
        %v3860 = vpack.c.b16 %v3752, %v3748
        %v3861 = vpack.c.b16 %v3753, %v3749
        %v3862 = vpack.c.b16 %v3754, %v3750
        %v3863 = vpack.c.b16 %v3759, %v3755
        %v3864 = vpack.c.b16 %v3760, %v3756
        %v3865 = vpack.c.b16 %v3761, %v3757
        %v3866 = vpack.c.b16 %v3762, %v3758
        %v3867 = vpack.c.b16 %v3767, %v3763
        %v3868 = vpack.c.b16 %v3768, %v3764
        %v3869 = vpack.c.b16 %v3769, %v3765
        %v3870 = vpack.c.b16 %v3770, %v3766
        %v3871 = vpack.c.b16 %v3775, %v3771
        %v3872 = vpack.c.b16 %v3776, %v3772
        %v3873 = vpack.c.b16 %v3777, %v3773
        %v3874 = vpack.c.b16 %v3778, %v3774
        %v3875 = vpack.c.b16 %v3783, %v3779
        %v3876 = vpack.c.b16 %v3784, %v3780
        %v3877 = vpack.c.b16 %v3785, %v3781
        %v3878 = vpack.c.b16 %v3786, %v3782
        %v3879 = vpack.c.b16 %v3791, %v3787
        %v3880 = vpack.c.b16 %v3792, %v3788
        %v3881 = vpack.c.b16 %v3793, %v3789
        %v3882 = vpack.c.b16 %v3794, %v3790
        %v3883 = vpack.c.b16 %v3799, %v3795
        %v3884 = vpack.c.b16 %v3800, %v3796
        %v3885 = vpack.c.b16 %v3801, %v3797
        %v3886 = vpack.c.b16 %v3802, %v3798
        %v3887 = vpack.c.b16 %v3807, %v3803
        %v3888 = vpack.c.b16 %v3808, %v3804
        %v3889 = vpack.c.b16 %v3809, %v3805
        %v3890 = vpack.c.b16 %v3810, %v3806
        %v3891 = vpack.c.b16 %v3815, %v3811
        %v3892 = vpack.c.b16 %v3816, %v3812
        %v3893 = vpack.c.b16 %v3817, %v3813
        %v3894 = vpack.c.b16 %v3818, %v3814
        %v3895 = vpack.c.b16 %v3823, %v3819
        %v3896 = vpack.c.b16 %v3824, %v3820
        %v3897 = vpack.c.b16 %v3825, %v3821
        %v3898 = vpack.c.b16 %v3826, %v3822
        %v3899 = vpack.c.b16 %v3831, %v3827
        %v3900 = vpack.c.b16 %v3832, %v3828
        %v3901 = vpack.c.b16 %v3833, %v3829
        %v3902 = vpack.c.b16 %v3834, %v3830
        %v3903 = vpack.c.b16 %v3839, %v3835
        %v3904 = vpack.c.b16 %v3840, %v3836
        %v3905 = vpack.c.b16 %v3841, %v3837
        %v3906 = vpack.c.b16 %v3842, %v3838
        %v3907 = vpack.c.b16 %v3847, %v3843
        %v3908 = vpack.c.b16 %v3848, %v3844
        %v3909 = vpack.c.b16 %v3849, %v3845
        %v3910 = vpack.c.b16 %v3850, %v3846
        %v3911 = vpack.c.b16 %v3855, %v3851
        %v3912 = vpack.c.b16 %v3856, %v3852
        %v3913 = vpack.c.b16 %v3857, %v3853
        %v3914 = vpack.c.b16 %v3858, %v3854
        %v3972 = vsel %vm1546, %v3689, 0
        %3974 = vmatpush.bf16.msra.mxu0 %v3887
        %3975 = vmatpush.bf16.msra.mxu0 %v3883
        %3976 = vmatpush.bf16.msra.mxu0 %v3879
        %3977 = vmatpush.bf16.msra.mxu0 %v3875
        %3978 = vmatpush.bf16.msra.mxu0 %v3871
        %3979 = vmatpush.bf16.msra.mxu0 %v3867
        %3980 = vmatpush.bf16.msra.mxu0 %v3863
        %3981 = vmatpush.bf16.msra.mxu0 %v3859
        %3982 = vmatmul.bf16.gmra.mxu0 %v3688
        %v3983 = vpop.f32.mrf.mxu0
        %v3984 = vadd.f32 %v3683, %v3983
        %v3985 = vpop.f32.mrf.mxu0
        %3986 = vdwg.mxu0
        %3987 = vmatpush.bf16.msra.mxu0 0
        %3988 = vmatpush.bf16.msra.mxu0 0
        %3989 = vmatpush.bf16.msra.mxu0 %v3911
        %3990 = vmatpush.bf16.msra.mxu0 %v3907
        %3991 = vmatpush.bf16.msra.mxu0 %v3903
        %3992 = vmatpush.bf16.msra.mxu0 %v3899
        %3993 = vmatpush.bf16.msra.mxu0 %v3895
        %3994 = vmatpush.bf16.msra.mxu0 %v3891
        %3995 = vmatmul.bf16.gmra.mxu0 %v3972
        %v3996 = vpop.f32.mrf.mxu0
        %v3997 = vadd.f32 %v3984, %v3996
        %v3998 = vpop.f32.mrf.mxu0
        %3999 = vdwg.mxu0
        %4000 = vmatpush.bf16.msra.mxu0 %v3888
        %4001 = vmatpush.bf16.msra.mxu0 %v3884
        %4002 = vmatpush.bf16.msra.mxu0 %v3880
        %4003 = vmatpush.bf16.msra.mxu0 %v3876
        %4004 = vmatpush.bf16.msra.mxu0 %v3872
        %4005 = vmatpush.bf16.msra.mxu0 %v3868
        %4006 = vmatpush.bf16.msra.mxu0 %v3864
        %4007 = vmatpush.bf16.msra.mxu0 %v3860
        %4008 = vmatmul.bf16.gmra.mxu0 %v3688
        %v4009 = vpop.f32.mrf.mxu0
        %v4010 = vadd.f32 %v3683, %v4009
        %v4011 = vpop.f32.mrf.mxu0
        %4012 = vdwg.mxu0
        %4013 = vmatpush.bf16.msra.mxu0 0
        %4014 = vmatpush.bf16.msra.mxu0 0
        %4015 = vmatpush.bf16.msra.mxu0 %v3912
        %4016 = vmatpush.bf16.msra.mxu0 %v3908
        %4017 = vmatpush.bf16.msra.mxu0 %v3904
        %4018 = vmatpush.bf16.msra.mxu0 %v3900
        %4019 = vmatpush.bf16.msra.mxu0 %v3896
        %4020 = vmatpush.bf16.msra.mxu0 %v3892
        %4021 = vmatmul.bf16.gmra.mxu0 %v3972
        %v4022 = vpop.f32.mrf.mxu0
        %v4023 = vadd.f32 %v4010, %v4022
        %v4024 = vpop.f32.mrf.mxu0
        %4025 = vdwg.mxu0
        %4026 = vmatpush.bf16.msra.mxu0 %v3889
        %4027 = vmatpush.bf16.msra.mxu0 %v3885
        %4028 = vmatpush.bf16.msra.mxu0 %v3881
        %4029 = vmatpush.bf16.msra.mxu0 %v3877
        %4030 = vmatpush.bf16.msra.mxu0 %v3873
        %4031 = vmatpush.bf16.msra.mxu0 %v3869
        %4032 = vmatpush.bf16.msra.mxu0 %v3865
        %4033 = vmatpush.bf16.msra.mxu0 %v3861
        %4034 = vmatmul.bf16.gmra.mxu0 %v3688
        %v4035 = vpop.f32.mrf.mxu0
        %v4036 = vadd.f32 %v3683, %v4035
        %v4037 = vpop.f32.mrf.mxu0
        %4038 = vdwg.mxu0
        %4039 = vmatpush.bf16.msra.mxu0 0
        %4040 = vmatpush.bf16.msra.mxu0 0
        %4041 = vmatpush.bf16.msra.mxu0 %v3913
        %4042 = vmatpush.bf16.msra.mxu0 %v3909
        %4043 = vmatpush.bf16.msra.mxu0 %v3905
        %4044 = vmatpush.bf16.msra.mxu0 %v3901
        %4045 = vmatpush.bf16.msra.mxu0 %v3897
        %4046 = vmatpush.bf16.msra.mxu0 %v3893
        %4047 = vmatmul.bf16.gmra.mxu0 %v3972
        %v4048 = vpop.f32.mrf.mxu0
        %v4049 = vadd.f32 %v4036, %v4048
        %v4050 = vpop.f32.mrf.mxu0
        %4051 = vdwg.mxu0
        %4052 = vmatpush.bf16.msra.mxu0 %v3890
        %4053 = vmatpush.bf16.msra.mxu0 %v3886
        %4054 = vmatpush.bf16.msra.mxu0 %v3882
        %4055 = vmatpush.bf16.msra.mxu0 %v3878
        %4056 = vmatpush.bf16.msra.mxu0 %v3874
        %4057 = vmatpush.bf16.msra.mxu0 %v3870
        %4058 = vmatpush.bf16.msra.mxu0 %v3866
        %4059 = vmatpush.bf16.msra.mxu0 %v3862
        %4060 = vmatmul.bf16.gmra.mxu0 %v3688
        %v4061 = vpop.f32.mrf.mxu0
        %v4062 = vadd.f32 %v3683, %v4061
        %v4063 = vpop.f32.mrf.mxu0
        %4064 = vdwg.mxu0
        %4065 = vmatpush.bf16.msra.mxu0 0
        %4066 = vmatpush.bf16.msra.mxu0 0
        %4067 = vmatpush.bf16.msra.mxu0 %v3914
        %4068 = vmatpush.bf16.msra.mxu0 %v3910
        %4069 = vmatpush.bf16.msra.mxu0 %v3906
        %4070 = vmatpush.bf16.msra.mxu0 %v3902
        %4071 = vmatpush.bf16.msra.mxu0 %v3898
        %4072 = vmatpush.bf16.msra.mxu0 %v3894
        %4073 = vmatmul.bf16.gmra.mxu0 %v3972
        %v4074 = vpop.f32.mrf.mxu0
        %v4075 = vadd.f32 %v4062, %v4074
        %v4076 = vpop.f32.mrf.mxu0
        %4077 = vdwg.mxu0
        %s4078 = scalar_lea.vmem %s6, 8
        %v4079 = vld [vmem:[%s4078] sm:$0xff]
        %s4080 = scalar_lea.vmem %s7, 8
        %v4081 = vld [vmem:[%s4080] sm:$0xff]
        %v4082 = vadd.f32 %v3997, %v4023
        %v4083 = vadd.f32 %v4082, %v4049
        %v4084 = vadd.f32 %v4083, %v4075
        %4085 = vadd.xlane.f32.xlu0 %v4084
        %v4086 = vpop.xlane.xlu0 %4085
        %v4087 = vrot.slane %v4086, 4
        %v4088 = vadd.f32 %v4086, %v4087
        %v4089 = vrot.slane %v4088, 2
        %v4090 = vadd.f32 %v4088, %v4089
        %v4091 = vrot.slane %v4090, 1
        %v4092 = vadd.f32 %v4090, %v4091
        %s4093 = vtos %v4092
        %v4094 = vmul.f32 %v3997, %v3997
        %v4095 = vmul.f32 %v4023, %v4023
        %v4096 = vmul.f32 %v4049, %v4049
        %v4097 = vmul.f32 %v4075, %v4075
        %v4098 = vadd.f32 %v4094, %v4095
        %v4099 = vadd.f32 %v4098, %v4096
        %v4100 = vadd.f32 %v4099, %v4097
        %4101 = vadd.xlane.f32.xlu0 %v4100
        %v4102 = vpop.xlane.xlu0 %4101
        %v4103 = vrot.slane %v4102, 4
        %v4104 = vadd.f32 %v4102, %v4103
        %v4105 = vrot.slane %v4104, 2
        %v4106 = vadd.f32 %v4104, %v4105
        %v4107 = vrot.slane %v4106, 1
        %v4108 = vadd.f32 %v4106, %v4107
        %s4109 = vtos %v4108
        %s4110 = smul.f32 %s4093, 0.00024414063
        %s4111 = smul.f32 %s4109, 0.00024414063
        %s4112 = smul.f32 %s4110, %s4110
        %s4113 = ssub.f32 %s4111, %s4112
        %s4114 = sadd.f32 %s4113, 1e-05
        %v4115 = vstv %s4114
        %v4116 = vrsqrt.pop %v4115
        %v4117 = vmul.f32 %v4116, %v4115
        %v4118 = vmul.f32 %v4117, %v4116
        %v4119 = vmul.f32 0.5, %v4118
        %v4120 = vsub.f32 1.5, %v4119
        %v4121 = vmul.f32 %v4116, %v4120
        %vm4122 = vweird.f32 %v4115
        %vm4123 = vweird.f32 %v4116
        %vm4124 = vmor %vm4122, %vm4123
        %v4125 = vsel %vm4124, %v4116, %v4121
        %s4126 = vtos %v4125
        %v4127 = vstv %s4126
        %v4128 = vmul.f32 %v4079, %v4127
        %v4129 = vstv %s4110
        %v4130 = vmul.f32 %v4129, %v4128
        %v4131 = vsub.f32 %v4081, %v4130
        %4133 = vset.pattern.permute.xlu0 0
        %4134 = vperm.xlu0 %4133, %v4128
        %v4135 = vpop.permute.xlu0 %4134
        %v4137 = vmul.f32 %v3997, %v4135
        %v4138 = vmul.f32 %v4023, %v4135
        %v4139 = vmul.f32 %v4049, %v4135
        %v4140 = vmul.f32 %v4075, %v4135
        %4142 = vset.pattern.permute.xlu0 0
        %4143 = vperm.xlu0 %4142, %v4131
        %v4144 = vpop.permute.xlu0 %4143
        %v4146 = vadd.f32 %v4137, %v4144
        %v4147 = vadd.f32 %v4138, %v4144
        %v4148 = vadd.f32 %v4139, %v4144
        %v4149 = vadd.f32 %v4140, %v4144
        %v4150 = vmax.f32 %v4146, 0.0
        %v4151 = vmax.f32 %v4147, 0.0
        %v4152 = vmax.f32 %v4148, 0.0
        %v4153 = vmax.f32 %v4149, 0.0
        %s4154 = scalar_lea.vmem %s8, 8
        %v4155 = vld [vmem:[%s4154] sm:$0xff]
        %s4156 = scalar_lea.vmem %s9, 8
        %v4157 = vld [vmem:[%s4156] sm:$0xff]
        %4158 = vrot.lane.b32.xlu0 %v4150, 73
        %v4159 = vpop.permute.xlu0 %4158
        %4160 = vrot.lane.b32.xlu0 %v4151, 73
        %v4161 = vpop.permute.xlu0 %4160
        %4162 = vrot.lane.b32.xlu0 %v4152, 73
        %v4163 = vpop.permute.xlu0 %4162
        %4164 = vrot.lane.b32.xlu0 %v4153, 73
        %v4165 = vpop.permute.xlu0 %4164
        %v4166 = vsel %vm486, %v4163, %v4165
        %v4167 = vsel %vm486, %v4161, %v4163
        %v4168 = vsel %vm486, %v4159, %v4161
        %v4169 = vsel %vm486, %v4165, %v4159
        %v4170 = vld [vmem:[#allocation6] sm:$0xf]
        %v4172 = vperm.slane %v4170, 0
        %v4173 = vperm.slane %v4170, 1
        %v4174 = vperm.slane %v4170, 2
        %v4175 = vperm.slane %v4170, 3
        %v4180 = vmul.f32 %v4169, %v4172
        %v4181 = vmul.f32 %v4168, %v4173
        %v4182 = vmul.f32 %v4167, %v4174
        %v4183 = vmul.f32 %v4166, %v4175
        %4184 = vrot.lane.b32.xlu0 %v4150, 72
        %v4185 = vpop.permute.xlu0 %4184
        %4186 = vrot.lane.b32.xlu0 %v4151, 72
        %v4187 = vpop.permute.xlu0 %4186
        %4188 = vrot.lane.b32.xlu0 %v4152, 72
        %v4189 = vpop.permute.xlu0 %4188
        %4190 = vrot.lane.b32.xlu0 %v4153, 72
        %v4191 = vpop.permute.xlu0 %4190
        %v4192 = vsel %vm513, %v4189, %v4191
        %v4193 = vsel %vm513, %v4187, %v4189
        %v4194 = vsel %vm513, %v4185, %v4187
        %v4195 = vsel %vm513, %v4191, %v4185
        %v4196 = vld [vmem:[%s518] sm:$0xf]
        %v4198 = vperm.slane %v4196, 0
        %v4199 = vperm.slane %v4196, 1
        %v4200 = vperm.slane %v4196, 2
        %v4201 = vperm.slane %v4196, 3
        %v4206 = vmul.f32 %v4195, %v4198
        %v4207 = vmul.f32 %v4194, %v4199
        %v4208 = vmul.f32 %v4193, %v4200
        %v4209 = vmul.f32 %v4192, %v4201
        %v4210 = vpack.c.bf16 %v4181, %v4180
        %v4211 = vpack.c.bf16 %v4183, %v4182
        %v4212 = vpack.c.bf16 %v4207, %v4206
        %v4213 = vpack.c.bf16 %v4209, %v4208
        %4214 = vst [vmem:[#allocation2] sm:$0xff] %v4210
        %4215 = vst [vmem:[#allocation2 + $0x8] sm:$0xff] %v4211
        %4216 = vst [vmem:[#allocation2 + $0x10] sm:$0xff] %v4212
        %4217 = vst [vmem:[#allocation2 + $0x18] sm:$0xff] %v4213
        %4218 = vrot.lane.b32.xlu0 %v4150, 71
        %v4219 = vpop.permute.xlu0 %4218
        %4220 = vrot.lane.b32.xlu0 %v4151, 71
        %v4221 = vpop.permute.xlu0 %4220
        %4222 = vrot.lane.b32.xlu0 %v4152, 71
        %v4223 = vpop.permute.xlu0 %4222
        %4224 = vrot.lane.b32.xlu0 %v4153, 71
        %v4225 = vpop.permute.xlu0 %4224
        %v4226 = vsel %vm549, %v4223, %v4225
        %v4227 = vsel %vm549, %v4221, %v4223
        %v4228 = vsel %vm549, %v4219, %v4221
        %v4229 = vsel %vm549, %v4225, %v4219
        %v4230 = vld [vmem:[%s554] sm:$0xf]
        %v4232 = vperm.slane %v4230, 0
        %v4233 = vperm.slane %v4230, 1
        %v4234 = vperm.slane %v4230, 2
        %v4235 = vperm.slane %v4230, 3
        %v4240 = vmul.f32 %v4229, %v4232
        %v4241 = vmul.f32 %v4228, %v4233
        %v4242 = vmul.f32 %v4227, %v4234
        %v4243 = vmul.f32 %v4226, %v4235
        %4244 = vrot.lane.b32.xlu0 %v4150, 65
        %v4245 = vpop.permute.xlu0 %4244
        %4246 = vrot.lane.b32.xlu0 %v4151, 65
        %v4247 = vpop.permute.xlu0 %4246
        %4248 = vrot.lane.b32.xlu0 %v4152, 65
        %v4249 = vpop.permute.xlu0 %4248
        %4250 = vrot.lane.b32.xlu0 %v4153, 65
        %v4251 = vpop.permute.xlu0 %4250
        %v4252 = vsel %vm577, %v4249, %v4251
        %v4253 = vsel %vm577, %v4247, %v4249
        %v4254 = vsel %vm577, %v4245, %v4247
        %v4255 = vsel %vm577, %v4251, %v4245
        %v4256 = vld [vmem:[%s582] sm:$0xf]
        %v4258 = vperm.slane %v4256, 0
        %v4259 = vperm.slane %v4256, 1
        %v4260 = vperm.slane %v4256, 2
        %v4261 = vperm.slane %v4256, 3
        %v4266 = vmul.f32 %v4255, %v4258
        %v4267 = vmul.f32 %v4254, %v4259
        %v4268 = vmul.f32 %v4253, %v4260
        %v4269 = vmul.f32 %v4252, %v4261
        %v4270 = vpack.c.bf16 %v4241, %v4240
        %v4271 = vpack.c.bf16 %v4243, %v4242
        %v4272 = vpack.c.bf16 %v4267, %v4266
        %v4273 = vpack.c.bf16 %v4269, %v4268
        %4274 = vst [vmem:[#allocation2 + $0x20] sm:$0xff] %v4270
        %4275 = vst [vmem:[#allocation2 + $0x28] sm:$0xff] %v4271
        %4276 = vst [vmem:[#allocation2 + $0x30] sm:$0xff] %v4272
        %4277 = vst [vmem:[#allocation2 + $0x38] sm:$0xff] %v4273
        %4278 = vrot.lane.b32.xlu0 %v4150, 64
        %v4279 = vpop.permute.xlu0 %4278
        %4280 = vrot.lane.b32.xlu0 %v4151, 64
        %v4281 = vpop.permute.xlu0 %4280
        %4282 = vrot.lane.b32.xlu0 %v4152, 64
        %v4283 = vpop.permute.xlu0 %4282
        %4284 = vrot.lane.b32.xlu0 %v4153, 64
        %v4285 = vpop.permute.xlu0 %4284
        %v4286 = vsel %vm613, %v4283, %v4285
        %v4287 = vsel %vm613, %v4281, %v4283
        %v4288 = vsel %vm613, %v4279, %v4281
        %v4289 = vsel %vm613, %v4285, %v4279
        %v4290 = vld [vmem:[%s618] sm:$0xf]
        %v4292 = vperm.slane %v4290, 0
        %v4293 = vperm.slane %v4290, 1
        %v4294 = vperm.slane %v4290, 2
        %v4295 = vperm.slane %v4290, 3
        %v4300 = vmul.f32 %v4289, %v4292
        %v4301 = vmul.f32 %v4288, %v4293
        %v4302 = vmul.f32 %v4287, %v4294
        %v4303 = vmul.f32 %v4286, %v4295
        %4304 = vrot.lane.b32.xlu0 %v4150, 63
        %v4305 = vpop.permute.xlu0 %4304
        %4306 = vrot.lane.b32.xlu0 %v4151, 63
        %v4307 = vpop.permute.xlu0 %4306
        %4308 = vrot.lane.b32.xlu0 %v4152, 63
        %v4309 = vpop.permute.xlu0 %4308
        %4310 = vrot.lane.b32.xlu0 %v4153, 63
        %v4311 = vpop.permute.xlu0 %4310
        %v4312 = vsel %vm641, %v4309, %v4311
        %v4313 = vsel %vm641, %v4307, %v4309
        %v4314 = vsel %vm641, %v4305, %v4307
        %v4315 = vsel %vm641, %v4311, %v4305
        %v4316 = vld [vmem:[%s646] sm:$0xf]
        %v4318 = vperm.slane %v4316, 0
        %v4319 = vperm.slane %v4316, 1
        %v4320 = vperm.slane %v4316, 2
        %v4321 = vperm.slane %v4316, 3
        %v4326 = vmul.f32 %v4315, %v4318
        %v4327 = vmul.f32 %v4314, %v4319
        %v4328 = vmul.f32 %v4313, %v4320
        %v4329 = vmul.f32 %v4312, %v4321
        %v4330 = vpack.c.bf16 %v4301, %v4300
        %v4331 = vpack.c.bf16 %v4303, %v4302
        %v4332 = vpack.c.bf16 %v4327, %v4326
        %v4333 = vpack.c.bf16 %v4329, %v4328
        %4334 = vst [vmem:[#allocation2 + $0x40] sm:$0xff] %v4330
        %4335 = vst [vmem:[#allocation2 + $0x48] sm:$0xff] %v4331
        %4336 = vst [vmem:[#allocation2 + $0x50] sm:$0xff] %v4332
        %4337 = vst [vmem:[#allocation2 + $0x58] sm:$0xff] %v4333
        %4338 = vrot.lane.b32.xlu0 %v4150, 57
        %v4339 = vpop.permute.xlu0 %4338
        %4340 = vrot.lane.b32.xlu0 %v4151, 57
        %v4341 = vpop.permute.xlu0 %4340
        %4342 = vrot.lane.b32.xlu0 %v4152, 57
        %v4343 = vpop.permute.xlu0 %4342
        %4344 = vrot.lane.b32.xlu0 %v4153, 57
        %v4345 = vpop.permute.xlu0 %4344
        %v4346 = vsel %vm677, %v4343, %v4345
        %v4347 = vsel %vm677, %v4341, %v4343
        %v4348 = vsel %vm677, %v4339, %v4341
        %v4349 = vsel %vm677, %v4345, %v4339
        %v4350 = vld [vmem:[%s682] sm:$0xf]
        %v4352 = vperm.slane %v4350, 0
        %v4353 = vperm.slane %v4350, 1
        %v4354 = vperm.slane %v4350, 2
        %v4355 = vperm.slane %v4350, 3
        %v4360 = vmul.f32 %v4349, %v4352
        %v4361 = vmul.f32 %v4348, %v4353
        %v4362 = vmul.f32 %v4347, %v4354
        %v4363 = vmul.f32 %v4346, %v4355
        %4364 = vrot.lane.b32.xlu0 %v4150, 56
        %v4365 = vpop.permute.xlu0 %4364
        %4366 = vrot.lane.b32.xlu0 %v4151, 56
        %v4367 = vpop.permute.xlu0 %4366
        %4368 = vrot.lane.b32.xlu0 %v4152, 56
        %v4369 = vpop.permute.xlu0 %4368
        %4370 = vrot.lane.b32.xlu0 %v4153, 56
        %v4371 = vpop.permute.xlu0 %4370
        %v4372 = vsel %vm705, %v4369, %v4371
        %v4373 = vsel %vm705, %v4367, %v4369
        %v4374 = vsel %vm705, %v4365, %v4367
        %v4375 = vsel %vm705, %v4371, %v4365
        %v4376 = vld [vmem:[%s710] sm:$0xf]
        %v4378 = vperm.slane %v4376, 0
        %v4379 = vperm.slane %v4376, 1
        %v4380 = vperm.slane %v4376, 2
        %v4381 = vperm.slane %v4376, 3
        %v4386 = vmul.f32 %v4375, %v4378
        %v4387 = vmul.f32 %v4374, %v4379
        %v4388 = vmul.f32 %v4373, %v4380
        %v4389 = vmul.f32 %v4372, %v4381
        %v4390 = vpack.c.bf16 %v4361, %v4360
        %v4391 = vpack.c.bf16 %v4363, %v4362
        %v4392 = vpack.c.bf16 %v4387, %v4386
        %v4393 = vpack.c.bf16 %v4389, %v4388
        %4394 = vst [vmem:[#allocation2 + $0x60] sm:$0xff] %v4390
        %4395 = vst [vmem:[#allocation2 + $0x68] sm:$0xff] %v4391
        %4396 = vst [vmem:[#allocation2 + $0x70] sm:$0xff] %v4392
        %4397 = vst [vmem:[#allocation2 + $0x78] sm:$0xff] %v4393
        %4398 = vrot.lane.b32.xlu0 %v4150, 55
        %v4399 = vpop.permute.xlu0 %4398
        %4400 = vrot.lane.b32.xlu0 %v4151, 55
        %v4401 = vpop.permute.xlu0 %4400
        %4402 = vrot.lane.b32.xlu0 %v4152, 55
        %v4403 = vpop.permute.xlu0 %4402
        %4404 = vrot.lane.b32.xlu0 %v4153, 55
        %v4405 = vpop.permute.xlu0 %4404
        %v4406 = vsel %vm741, %v4403, %v4405
        %v4407 = vsel %vm741, %v4401, %v4403
        %v4408 = vsel %vm741, %v4399, %v4401
        %v4409 = vsel %vm741, %v4405, %v4399
        %v4410 = vld [vmem:[%s746] sm:$0xf]
        %v4412 = vperm.slane %v4410, 0
        %v4413 = vperm.slane %v4410, 1
        %v4414 = vperm.slane %v4410, 2
        %v4415 = vperm.slane %v4410, 3
        %v4420 = vmul.f32 %v4409, %v4412
        %v4421 = vmul.f32 %v4408, %v4413
        %v4422 = vmul.f32 %v4407, %v4414
        %v4423 = vmul.f32 %v4406, %v4415
        %4424 = vrot.lane.b32.xlu0 %v4150, 9
        %v4425 = vpop.permute.xlu0 %4424
        %4426 = vrot.lane.b32.xlu0 %v4151, 9
        %v4427 = vpop.permute.xlu0 %4426
        %4428 = vrot.lane.b32.xlu0 %v4152, 9
        %v4429 = vpop.permute.xlu0 %4428
        %4430 = vrot.lane.b32.xlu0 %v4153, 9
        %v4431 = vpop.permute.xlu0 %4430
        %v4432 = vsel %vm769, %v4429, %v4431
        %v4433 = vsel %vm769, %v4427, %v4429
        %v4434 = vsel %vm769, %v4425, %v4427
        %v4435 = vsel %vm769, %v4431, %v4425
        %v4436 = vld [vmem:[%s774] sm:$0xf]
        %v4438 = vperm.slane %v4436, 0
        %v4439 = vperm.slane %v4436, 1
        %v4440 = vperm.slane %v4436, 2
        %v4441 = vperm.slane %v4436, 3
        %v4446 = vmul.f32 %v4435, %v4438
        %v4447 = vmul.f32 %v4434, %v4439
        %v4448 = vmul.f32 %v4433, %v4440
        %v4449 = vmul.f32 %v4432, %v4441
        %v4450 = vpack.c.bf16 %v4421, %v4420
        %v4451 = vpack.c.bf16 %v4423, %v4422
        %v4452 = vpack.c.bf16 %v4447, %v4446
        %v4453 = vpack.c.bf16 %v4449, %v4448
        %4454 = vst [vmem:[#allocation2 + $0x80] sm:$0xff] %v4450
        %4455 = vst [vmem:[#allocation2 + $0x88] sm:$0xff] %v4451
        %4456 = vst [vmem:[#allocation2 + $0x90] sm:$0xff] %v4452
        %4457 = vst [vmem:[#allocation2 + $0x98] sm:$0xff] %v4453
        %4458 = vrot.lane.b32.xlu0 %v4150, 8
        %v4459 = vpop.permute.xlu0 %4458
        %4460 = vrot.lane.b32.xlu0 %v4151, 8
        %v4461 = vpop.permute.xlu0 %4460
        %4462 = vrot.lane.b32.xlu0 %v4152, 8
        %v4463 = vpop.permute.xlu0 %4462
        %4464 = vrot.lane.b32.xlu0 %v4153, 8
        %v4465 = vpop.permute.xlu0 %4464
        %v4466 = vsel %vm805, %v4463, %v4465
        %v4467 = vsel %vm805, %v4461, %v4463
        %v4468 = vsel %vm805, %v4459, %v4461
        %v4469 = vsel %vm805, %v4465, %v4459
        %v4470 = vld [vmem:[%s810] sm:$0xf]
        %v4472 = vperm.slane %v4470, 0
        %v4473 = vperm.slane %v4470, 1
        %v4474 = vperm.slane %v4470, 2
        %v4475 = vperm.slane %v4470, 3
        %v4480 = vmul.f32 %v4469, %v4472
        %v4481 = vmul.f32 %v4468, %v4473
        %v4482 = vmul.f32 %v4467, %v4474
        %v4483 = vmul.f32 %v4466, %v4475
        %4484 = vrot.lane.b32.xlu0 %v4150, 7
        %v4485 = vpop.permute.xlu0 %4484
        %4486 = vrot.lane.b32.xlu0 %v4151, 7
        %v4487 = vpop.permute.xlu0 %4486
        %4488 = vrot.lane.b32.xlu0 %v4152, 7
        %v4489 = vpop.permute.xlu0 %4488
        %4490 = vrot.lane.b32.xlu0 %v4153, 7
        %v4491 = vpop.permute.xlu0 %4490
        %v4492 = vsel %vm833, %v4489, %v4491
        %v4493 = vsel %vm833, %v4487, %v4489
        %v4494 = vsel %vm833, %v4485, %v4487
        %v4495 = vsel %vm833, %v4491, %v4485
        %v4496 = vld [vmem:[%s838] sm:$0xf]
        %v4498 = vperm.slane %v4496, 0
        %v4499 = vperm.slane %v4496, 1
        %v4500 = vperm.slane %v4496, 2
        %v4501 = vperm.slane %v4496, 3
        %v4506 = vmul.f32 %v4495, %v4498
        %v4507 = vmul.f32 %v4494, %v4499
        %v4508 = vmul.f32 %v4493, %v4500
        %v4509 = vmul.f32 %v4492, %v4501
        %v4510 = vpack.c.bf16 %v4481, %v4480
        %v4511 = vpack.c.bf16 %v4483, %v4482
        %v4512 = vpack.c.bf16 %v4507, %v4506
        %v4513 = vpack.c.bf16 %v4509, %v4508
        %4514 = vst [vmem:[#allocation2 + $0xa0] sm:$0xff] %v4510
        %4515 = vst [vmem:[#allocation2 + $0xa8] sm:$0xff] %v4511
        %4516 = vst [vmem:[#allocation2 + $0xb0] sm:$0xff] %v4512
        %4517 = vst [vmem:[#allocation2 + $0xb8] sm:$0xff] %v4513
        %4518 = vrot.lane.b32.xlu0 %v4150, 1
        %v4519 = vpop.permute.xlu0 %4518
        %4520 = vrot.lane.b32.xlu0 %v4151, 1
        %v4521 = vpop.permute.xlu0 %4520
        %4522 = vrot.lane.b32.xlu0 %v4152, 1
        %v4523 = vpop.permute.xlu0 %4522
        %4524 = vrot.lane.b32.xlu0 %v4153, 1
        %v4525 = vpop.permute.xlu0 %4524
        %v4526 = vsel %vm869, %v4523, %v4525
        %v4527 = vsel %vm869, %v4521, %v4523
        %v4528 = vsel %vm869, %v4519, %v4521
        %v4529 = vsel %vm869, %v4525, %v4519
        %v4530 = vld [vmem:[%s874] sm:$0xf]
        %v4532 = vperm.slane %v4530, 0
        %v4533 = vperm.slane %v4530, 1
        %v4534 = vperm.slane %v4530, 2
        %v4535 = vperm.slane %v4530, 3
        %v4540 = vmul.f32 %v4529, %v4532
        %v4541 = vmul.f32 %v4528, %v4533
        %v4542 = vmul.f32 %v4527, %v4534
        %v4543 = vmul.f32 %v4526, %v4535
        %v4544 = vpack.c.bf16 %v4541, %v4540
        %v4545 = vpack.c.bf16 %v4543, %v4542
        %v4546 = vpack.c.bf16 %v4151, %v4150
        %v4547 = vpack.c.bf16 %v4153, %v4152
        %4548 = vst [vmem:[#allocation2 + $0xc0] sm:$0xff] %v4544
        %4549 = vst [vmem:[#allocation2 + $0xc8] sm:$0xff] %v4545
        %4550 = vst [vmem:[#allocation2 + $0xd0] sm:$0xff] %v4546
        %4551 = vst [vmem:[#allocation2 + $0xd8] sm:$0xff] %v4547
        %4552 = vrot.lane.b32.xlu0 %v4150, 127
        %v4553 = vpop.permute.xlu0 %4552
        %4554 = vrot.lane.b32.xlu0 %v4151, 127
        %v4555 = vpop.permute.xlu0 %4554
        %4556 = vrot.lane.b32.xlu0 %v4152, 127
        %v4557 = vpop.permute.xlu0 %4556
        %4558 = vrot.lane.b32.xlu0 %v4153, 127
        %v4559 = vpop.permute.xlu0 %4558
        %v4560 = vsel %vm905, %v4557, %v4559
        %v4561 = vsel %vm905, %v4555, %v4557
        %v4562 = vsel %vm905, %v4553, %v4555
        %v4563 = vsel %vm905, %v4559, %v4553
        %v4564 = vld [vmem:[%s910] sm:$0xf]
        %v4566 = vperm.slane %v4564, 0
        %v4567 = vperm.slane %v4564, 1
        %v4568 = vperm.slane %v4564, 2
        %v4569 = vperm.slane %v4564, 3
        %v4574 = vmul.f32 %v4562, %v4566
        %v4575 = vmul.f32 %v4561, %v4567
        %v4576 = vmul.f32 %v4560, %v4568
        %v4577 = vmul.f32 %v4563, %v4569
        %4578 = vrot.lane.b32.xlu0 %v4150, 121
        %v4579 = vpop.permute.xlu0 %4578
        %4580 = vrot.lane.b32.xlu0 %v4151, 121
        %v4581 = vpop.permute.xlu0 %4580
        %4582 = vrot.lane.b32.xlu0 %v4152, 121
        %v4583 = vpop.permute.xlu0 %4582
        %4584 = vrot.lane.b32.xlu0 %v4153, 121
        %v4585 = vpop.permute.xlu0 %4584
        %v4586 = vsel %vm933, %v4583, %v4585
        %v4587 = vsel %vm933, %v4581, %v4583
        %v4588 = vsel %vm933, %v4579, %v4581
        %v4589 = vsel %vm933, %v4585, %v4579
        %v4590 = vld [vmem:[%s938] sm:$0xf]
        %v4592 = vperm.slane %v4590, 0
        %v4593 = vperm.slane %v4590, 1
        %v4594 = vperm.slane %v4590, 2
        %v4595 = vperm.slane %v4590, 3
        %v4600 = vmul.f32 %v4588, %v4592
        %v4601 = vmul.f32 %v4587, %v4593
        %v4602 = vmul.f32 %v4586, %v4594
        %v4603 = vmul.f32 %v4589, %v4595
        %v4604 = vpack.c.bf16 %v4575, %v4574
        %v4605 = vpack.c.bf16 %v4577, %v4576
        %v4606 = vpack.c.bf16 %v4601, %v4600
        %v4607 = vpack.c.bf16 %v4603, %v4602
        %4608 = vst [vmem:[#allocation2 + $0xe0] sm:$0xff] %v4604
        %4609 = vst [vmem:[#allocation2 + $0xe8] sm:$0xff] %v4605
        %4610 = vst [vmem:[#allocation2 + $0xf0] sm:$0xff] %v4606
        %4611 = vst [vmem:[#allocation2 + $0xf8] sm:$0xff] %v4607
        %4612 = vrot.lane.b32.xlu0 %v4150, 120
        %v4613 = vpop.permute.xlu0 %4612
        %4614 = vrot.lane.b32.xlu0 %v4151, 120
        %v4615 = vpop.permute.xlu0 %4614
        %4616 = vrot.lane.b32.xlu0 %v4152, 120
        %v4617 = vpop.permute.xlu0 %4616
        %4618 = vrot.lane.b32.xlu0 %v4153, 120
        %v4619 = vpop.permute.xlu0 %4618
        %v4620 = vsel %vm969, %v4617, %v4619
        %v4621 = vsel %vm969, %v4615, %v4617
        %v4622 = vsel %vm969, %v4613, %v4615
        %v4623 = vsel %vm969, %v4619, %v4613
        %v4624 = vld [vmem:[%s974] sm:$0xf]
        %v4626 = vperm.slane %v4624, 0
        %v4627 = vperm.slane %v4624, 1
        %v4628 = vperm.slane %v4624, 2
        %v4629 = vperm.slane %v4624, 3
        %v4634 = vmul.f32 %v4622, %v4626
        %v4635 = vmul.f32 %v4621, %v4627
        %v4636 = vmul.f32 %v4620, %v4628
        %v4637 = vmul.f32 %v4623, %v4629
        %4638 = vrot.lane.b32.xlu0 %v4150, 119
        %v4639 = vpop.permute.xlu0 %4638
        %4640 = vrot.lane.b32.xlu0 %v4151, 119
        %v4641 = vpop.permute.xlu0 %4640
        %4642 = vrot.lane.b32.xlu0 %v4152, 119
        %v4643 = vpop.permute.xlu0 %4642
        %4644 = vrot.lane.b32.xlu0 %v4153, 119
        %v4645 = vpop.permute.xlu0 %4644
        %v4646 = vsel %vm997, %v4643, %v4645
        %v4647 = vsel %vm997, %v4641, %v4643
        %v4648 = vsel %vm997, %v4639, %v4641
        %v4649 = vsel %vm997, %v4645, %v4639
        %v4650 = vld [vmem:[%s1002] sm:$0xf]
        %v4652 = vperm.slane %v4650, 0
        %v4653 = vperm.slane %v4650, 1
        %v4654 = vperm.slane %v4650, 2
        %v4655 = vperm.slane %v4650, 3
        %v4660 = vmul.f32 %v4648, %v4652
        %v4661 = vmul.f32 %v4647, %v4653
        %v4662 = vmul.f32 %v4646, %v4654
        %v4663 = vmul.f32 %v4649, %v4655
        %v4664 = vpack.c.bf16 %v4635, %v4634
        %v4665 = vpack.c.bf16 %v4637, %v4636
        %v4666 = vpack.c.bf16 %v4661, %v4660
        %v4667 = vpack.c.bf16 %v4663, %v4662
        %4668 = vst [vmem:[#allocation2 + $0x100] sm:$0xff] %v4664
        %4669 = vst [vmem:[#allocation2 + $0x108] sm:$0xff] %v4665
        %4670 = vst [vmem:[#allocation2 + $0x110] sm:$0xff] %v4666
        %4671 = vst [vmem:[#allocation2 + $0x118] sm:$0xff] %v4667
        %v4672 = vld [vmem:[%s1025] sm:$0xf]
        %v4674 = vperm.slane %v4672, 0
        %v4675 = vperm.slane %v4672, 1
        %v4676 = vperm.slane %v4672, 2
        %v4677 = vperm.slane %v4672, 3
        %v4682 = vmul.f32 %v4168, %v4674
        %v4683 = vmul.f32 %v4167, %v4675
        %v4684 = vmul.f32 %v4166, %v4676
        %v4685 = vmul.f32 %v4169, %v4677
        %v4686 = vld [vmem:[%s1040] sm:$0xf]
        %v4688 = vperm.slane %v4686, 0
        %v4689 = vperm.slane %v4686, 1
        %v4690 = vperm.slane %v4686, 2
        %v4691 = vperm.slane %v4686, 3
        %v4696 = vmul.f32 %v4194, %v4688
        %v4697 = vmul.f32 %v4193, %v4689
        %v4698 = vmul.f32 %v4192, %v4690
        %v4699 = vmul.f32 %v4195, %v4691
        %v4700 = vpack.c.bf16 %v4683, %v4682
        %v4701 = vpack.c.bf16 %v4685, %v4684
        %v4702 = vpack.c.bf16 %v4697, %v4696
        %v4703 = vpack.c.bf16 %v4699, %v4698
        %4704 = vst [vmem:[#allocation2 + $0x120] sm:$0xff] %v4700
        %4705 = vst [vmem:[#allocation2 + $0x128] sm:$0xff] %v4701
        %4706 = vst [vmem:[#allocation2 + $0x130] sm:$0xff] %v4702
        %4707 = vst [vmem:[#allocation2 + $0x138] sm:$0xff] %v4703
        %v4708 = vld [vmem:[%s1063] sm:$0xf]
        %v4710 = vperm.slane %v4708, 0
        %v4711 = vperm.slane %v4708, 1
        %v4712 = vperm.slane %v4708, 2
        %v4713 = vperm.slane %v4708, 3
        %v4718 = vmul.f32 %v4228, %v4710
        %v4719 = vmul.f32 %v4227, %v4711
        %v4720 = vmul.f32 %v4226, %v4712
        %v4721 = vmul.f32 %v4229, %v4713
        %v4722 = vld [vmem:[%s1078] sm:$0xf]
        %v4724 = vperm.slane %v4722, 0
        %v4725 = vperm.slane %v4722, 1
        %v4726 = vperm.slane %v4722, 2
        %v4727 = vperm.slane %v4722, 3
        %v4732 = vmul.f32 %v4254, %v4724
        %v4733 = vmul.f32 %v4253, %v4725
        %v4734 = vmul.f32 %v4252, %v4726
        %v4735 = vmul.f32 %v4255, %v4727
        %v4736 = vpack.c.bf16 %v4719, %v4718
        %v4737 = vpack.c.bf16 %v4721, %v4720
        %v4738 = vpack.c.bf16 %v4733, %v4732
        %v4739 = vpack.c.bf16 %v4735, %v4734
        %4740 = vst [vmem:[#allocation2 + $0x140] sm:$0xff] %v4736
        %4741 = vst [vmem:[#allocation2 + $0x148] sm:$0xff] %v4737
        %4742 = vst [vmem:[#allocation2 + $0x150] sm:$0xff] %v4738
        %4743 = vst [vmem:[#allocation2 + $0x158] sm:$0xff] %v4739
        %v4744 = vld [vmem:[%s1101] sm:$0xf]
        %v4746 = vperm.slane %v4744, 0
        %v4747 = vperm.slane %v4744, 1
        %v4748 = vperm.slane %v4744, 2
        %v4749 = vperm.slane %v4744, 3
        %v4754 = vmul.f32 %v4288, %v4746
        %v4755 = vmul.f32 %v4287, %v4747
        %v4756 = vmul.f32 %v4286, %v4748
        %v4757 = vmul.f32 %v4289, %v4749
        %v4758 = vld [vmem:[%s1116] sm:$0xf]
        %v4760 = vperm.slane %v4758, 0
        %v4761 = vperm.slane %v4758, 1
        %v4762 = vperm.slane %v4758, 2
        %v4763 = vperm.slane %v4758, 3
        %v4768 = vmul.f32 %v4314, %v4760
        %v4769 = vmul.f32 %v4313, %v4761
        %v4770 = vmul.f32 %v4312, %v4762
        %v4771 = vmul.f32 %v4315, %v4763
        %v4772 = vpack.c.bf16 %v4755, %v4754
        %v4773 = vpack.c.bf16 %v4757, %v4756
        %v4774 = vpack.c.bf16 %v4769, %v4768
        %v4775 = vpack.c.bf16 %v4771, %v4770
        %4776 = vst [vmem:[#allocation2 + $0x160] sm:$0xff] %v4772
        %4777 = vst [vmem:[#allocation2 + $0x168] sm:$0xff] %v4773
        %4778 = vst [vmem:[#allocation2 + $0x170] sm:$0xff] %v4774
        %4779 = vst [vmem:[#allocation2 + $0x178] sm:$0xff] %v4775
        %v4780 = vld [vmem:[%s1139] sm:$0xf]
        %v4782 = vperm.slane %v4780, 0
        %v4783 = vperm.slane %v4780, 1
        %v4784 = vperm.slane %v4780, 2
        %v4785 = vperm.slane %v4780, 3
        %v4790 = vmul.f32 %v4348, %v4782
        %v4791 = vmul.f32 %v4347, %v4783
        %v4792 = vmul.f32 %v4346, %v4784
        %v4793 = vmul.f32 %v4349, %v4785
        %v4794 = vld [vmem:[%s1154] sm:$0xf]
        %v4796 = vperm.slane %v4794, 0
        %v4797 = vperm.slane %v4794, 1
        %v4798 = vperm.slane %v4794, 2
        %v4799 = vperm.slane %v4794, 3
        %v4804 = vmul.f32 %v4374, %v4796
        %v4805 = vmul.f32 %v4373, %v4797
        %v4806 = vmul.f32 %v4372, %v4798
        %v4807 = vmul.f32 %v4375, %v4799
        %v4808 = vpack.c.bf16 %v4791, %v4790
        %v4809 = vpack.c.bf16 %v4793, %v4792
        %v4810 = vpack.c.bf16 %v4805, %v4804
        %v4811 = vpack.c.bf16 %v4807, %v4806
        %4812 = vst [vmem:[#allocation2 + $0x180] sm:$0xff] %v4808
        %4813 = vst [vmem:[#allocation2 + $0x188] sm:$0xff] %v4809
        %4814 = vst [vmem:[#allocation2 + $0x190] sm:$0xff] %v4810
        %4815 = vst [vmem:[#allocation2 + $0x198] sm:$0xff] %v4811
        %v4816 = vld [vmem:[%s1177] sm:$0xf]
        %v4818 = vperm.slane %v4816, 0
        %v4819 = vperm.slane %v4816, 1
        %v4820 = vperm.slane %v4816, 2
        %v4821 = vperm.slane %v4816, 3
        %v4826 = vmul.f32 %v4408, %v4818
        %v4827 = vmul.f32 %v4407, %v4819
        %v4828 = vmul.f32 %v4406, %v4820
        %v4829 = vmul.f32 %v4409, %v4821
        %v4830 = vpack.c.bf16 %v4827, %v4826
        %v4831 = vpack.c.bf16 %v4829, %v4828
        %4832 = vst [vmem:[#allocation2 + $0x1a0] sm:$0xff] %v4830
        %4833 = vst [vmem:[#allocation2 + $0x1a8] sm:$0xff] %v4831
        %4834 = vst [vmem:[#allocation2 + $0x1b0] sm:$0xff] %v1194
        %4835 = vst [vmem:[#allocation2 + $0x1b8] sm:$0xff] %v1194
        %v4836 = vld [vmem:[#allocation2] sm:$0xff]
        %v4837 = vld [vmem:[#allocation2 + $0x8] sm:$0xff]
        %v4838 = vld [vmem:[#allocation2 + $0x10] sm:$0xff]
        %v4839 = vld [vmem:[#allocation2 + $0x18] sm:$0xff]
        %v4840 = vld [vmem:[#allocation2 + $0x20] sm:$0xff]
        %v4841 = vld [vmem:[#allocation2 + $0x28] sm:$0xff]
        %v4842 = vld [vmem:[#allocation2 + $0x30] sm:$0xff]
        %v4843 = vld [vmem:[#allocation2 + $0x38] sm:$0xff]
        %v4844 = vld [vmem:[#allocation2 + $0x40] sm:$0xff]
        %v4845 = vld [vmem:[#allocation2 + $0x48] sm:$0xff]
        %v4846 = vld [vmem:[#allocation2 + $0x50] sm:$0xff]
        %v4847 = vld [vmem:[#allocation2 + $0x58] sm:$0xff]
        %v4848 = vld [vmem:[#allocation2 + $0x60] sm:$0xff]
        %v4849 = vld [vmem:[#allocation2 + $0x68] sm:$0xff]
        %v4850 = vld [vmem:[#allocation2 + $0x70] sm:$0xff]
        %v4851 = vld [vmem:[#allocation2 + $0x78] sm:$0xff]
        %v4852 = vld [vmem:[#allocation2 + $0x80] sm:$0xff]
        %v4853 = vld [vmem:[#allocation2 + $0x88] sm:$0xff]
        %v4854 = vld [vmem:[#allocation2 + $0x90] sm:$0xff]
        %v4855 = vld [vmem:[#allocation2 + $0x98] sm:$0xff]
        %v4856 = vld [vmem:[#allocation2 + $0xa0] sm:$0xff]
        %v4857 = vld [vmem:[#allocation2 + $0xa8] sm:$0xff]
        %v4858 = vld [vmem:[#allocation2 + $0xb0] sm:$0xff]
        %v4859 = vld [vmem:[#allocation2 + $0xb8] sm:$0xff]
        %v4860 = vld [vmem:[#allocation2 + $0xc0] sm:$0xff]
        %v4861 = vld [vmem:[#allocation2 + $0xc8] sm:$0xff]
        %v4862 = vld [vmem:[#allocation2 + $0xd0] sm:$0xff]
        %v4863 = vld [vmem:[#allocation2 + $0xd8] sm:$0xff]
        %v4864 = vld [vmem:[#allocation2 + $0xe0] sm:$0xff]
        %v4865 = vld [vmem:[#allocation2 + $0xe8] sm:$0xff]
        %v4866 = vld [vmem:[#allocation2 + $0xf0] sm:$0xff]
        %v4867 = vld [vmem:[#allocation2 + $0xf8] sm:$0xff]
        %v4868 = vld [vmem:[#allocation2 + $0x100] sm:$0xff]
        %v4869 = vld [vmem:[#allocation2 + $0x108] sm:$0xff]
        %v4870 = vld [vmem:[#allocation2 + $0x110] sm:$0xff]
        %v4871 = vld [vmem:[#allocation2 + $0x118] sm:$0xff]
        %v4872 = vld [vmem:[#allocation2 + $0x120] sm:$0xff]
        %v4873 = vld [vmem:[#allocation2 + $0x128] sm:$0xff]
        %v4874 = vld [vmem:[#allocation2 + $0x130] sm:$0xff]
        %v4875 = vld [vmem:[#allocation2 + $0x138] sm:$0xff]
        %v4876 = vld [vmem:[#allocation2 + $0x140] sm:$0xff]
        %v4877 = vld [vmem:[#allocation2 + $0x148] sm:$0xff]
        %v4878 = vld [vmem:[#allocation2 + $0x150] sm:$0xff]
        %v4879 = vld [vmem:[#allocation2 + $0x158] sm:$0xff]
        %v4880 = vld [vmem:[#allocation2 + $0x160] sm:$0xff]
        %v4881 = vld [vmem:[#allocation2 + $0x168] sm:$0xff]
        %v4882 = vld [vmem:[#allocation2 + $0x170] sm:$0xff]
        %v4883 = vld [vmem:[#allocation2 + $0x178] sm:$0xff]
        %v4884 = vld [vmem:[#allocation2 + $0x180] sm:$0xff]
        %v4885 = vld [vmem:[#allocation2 + $0x188] sm:$0xff]
        %v4886 = vld [vmem:[#allocation2 + $0x190] sm:$0xff]
        %v4887 = vld [vmem:[#allocation2 + $0x198] sm:$0xff]
        %v4888 = vld [vmem:[#allocation2 + $0x1a0] sm:$0xff]
        %v4889 = vld [vmem:[#allocation2 + $0x1a8] sm:$0xff]
        %v4890 = vld [vmem:[#allocation2 + $0x1b0] sm:$0xff]
        %v4891 = vld [vmem:[#allocation2 + $0x1b8] sm:$0xff]
        %4893 = vset.pattern.permute.xlu0 0
        %4894 = vperm.xlu0 %4893, %v4157
        %v4895 = vpop.permute.xlu0 %4894
        %v4898 = vunpack.c.l.b16 %v4155
        %v4899 = vunpack.c.h.b16 %v4155
        %v4900 = vpack.c.b16 %v4898, %v4898
        %v4901 = vpack.c.b16 %v4899, %v4899
        %v4959 = vunpack.c.l.b16 %v4836
        %v4960 = vunpack.c.h.b16 %v4836
        %v4961 = vunpack.c.l.b16 %v4837
        %v4962 = vunpack.c.h.b16 %v4837
        %v4963 = vunpack.c.l.b16 %v4838
        %v4964 = vunpack.c.h.b16 %v4838
        %v4965 = vunpack.c.l.b16 %v4839
        %v4966 = vunpack.c.h.b16 %v4839
        %v4967 = vunpack.c.l.b16 %v4840
        %v4968 = vunpack.c.h.b16 %v4840
        %v4969 = vunpack.c.l.b16 %v4841
        %v4970 = vunpack.c.h.b16 %v4841
        %v4971 = vunpack.c.l.b16 %v4842
        %v4972 = vunpack.c.h.b16 %v4842
        %v4973 = vunpack.c.l.b16 %v4843
        %v4974 = vunpack.c.h.b16 %v4843
        %v4975 = vunpack.c.l.b16 %v4844
        %v4976 = vunpack.c.h.b16 %v4844
        %v4977 = vunpack.c.l.b16 %v4845
        %v4978 = vunpack.c.h.b16 %v4845
        %v4979 = vunpack.c.l.b16 %v4846
        %v4980 = vunpack.c.h.b16 %v4846
        %v4981 = vunpack.c.l.b16 %v4847
        %v4982 = vunpack.c.h.b16 %v4847
        %v4983 = vunpack.c.l.b16 %v4848
        %v4984 = vunpack.c.h.b16 %v4848
        %v4985 = vunpack.c.l.b16 %v4849
        %v4986 = vunpack.c.h.b16 %v4849
        %v4987 = vunpack.c.l.b16 %v4850
        %v4988 = vunpack.c.h.b16 %v4850
        %v4989 = vunpack.c.l.b16 %v4851
        %v4990 = vunpack.c.h.b16 %v4851
        %v4991 = vunpack.c.l.b16 %v4852
        %v4992 = vunpack.c.h.b16 %v4852
        %v4993 = vunpack.c.l.b16 %v4853
        %v4994 = vunpack.c.h.b16 %v4853
        %v4995 = vunpack.c.l.b16 %v4854
        %v4996 = vunpack.c.h.b16 %v4854
        %v4997 = vunpack.c.l.b16 %v4855
        %v4998 = vunpack.c.h.b16 %v4855
        %v4999 = vunpack.c.l.b16 %v4856
        %v5000 = vunpack.c.h.b16 %v4856
        %v5001 = vunpack.c.l.b16 %v4857
        %v5002 = vunpack.c.h.b16 %v4857
        %v5003 = vunpack.c.l.b16 %v4858
        %v5004 = vunpack.c.h.b16 %v4858
        %v5005 = vunpack.c.l.b16 %v4859
        %v5006 = vunpack.c.h.b16 %v4859
        %v5007 = vunpack.c.l.b16 %v4860
        %v5008 = vunpack.c.h.b16 %v4860
        %v5009 = vunpack.c.l.b16 %v4861
        %v5010 = vunpack.c.h.b16 %v4861
        %v5011 = vunpack.c.l.b16 %v4862
        %v5012 = vunpack.c.h.b16 %v4862
        %v5013 = vunpack.c.l.b16 %v4863
        %v5014 = vunpack.c.h.b16 %v4863
        %v5015 = vunpack.c.l.b16 %v4864
        %v5016 = vunpack.c.h.b16 %v4864
        %v5017 = vunpack.c.l.b16 %v4865
        %v5018 = vunpack.c.h.b16 %v4865
        %v5019 = vunpack.c.l.b16 %v4866
        %v5020 = vunpack.c.h.b16 %v4866
        %v5021 = vunpack.c.l.b16 %v4867
        %v5022 = vunpack.c.h.b16 %v4867
        %v5023 = vunpack.c.l.b16 %v4868
        %v5024 = vunpack.c.h.b16 %v4868
        %v5025 = vunpack.c.l.b16 %v4869
        %v5026 = vunpack.c.h.b16 %v4869
        %v5027 = vunpack.c.l.b16 %v4870
        %v5028 = vunpack.c.h.b16 %v4870
        %v5029 = vunpack.c.l.b16 %v4871
        %v5030 = vunpack.c.h.b16 %v4871
        %v5031 = vunpack.c.l.b16 %v4872
        %v5032 = vunpack.c.h.b16 %v4872
        %v5033 = vunpack.c.l.b16 %v4873
        %v5034 = vunpack.c.h.b16 %v4873
        %v5035 = vunpack.c.l.b16 %v4874
        %v5036 = vunpack.c.h.b16 %v4874
        %v5037 = vunpack.c.l.b16 %v4875
        %v5038 = vunpack.c.h.b16 %v4875
        %v5039 = vunpack.c.l.b16 %v4876
        %v5040 = vunpack.c.h.b16 %v4876
        %v5041 = vunpack.c.l.b16 %v4877
        %v5042 = vunpack.c.h.b16 %v4877
        %v5043 = vunpack.c.l.b16 %v4878
        %v5044 = vunpack.c.h.b16 %v4878
        %v5045 = vunpack.c.l.b16 %v4879
        %v5046 = vunpack.c.h.b16 %v4879
        %v5047 = vunpack.c.l.b16 %v4880
        %v5048 = vunpack.c.h.b16 %v4880
        %v5049 = vunpack.c.l.b16 %v4881
        %v5050 = vunpack.c.h.b16 %v4881
        %v5051 = vunpack.c.l.b16 %v4882
        %v5052 = vunpack.c.h.b16 %v4882
        %v5053 = vunpack.c.l.b16 %v4883
        %v5054 = vunpack.c.h.b16 %v4883
        %v5055 = vunpack.c.l.b16 %v4884
        %v5056 = vunpack.c.h.b16 %v4884
        %v5057 = vunpack.c.l.b16 %v4885
        %v5058 = vunpack.c.h.b16 %v4885
        %v5059 = vunpack.c.l.b16 %v4886
        %v5060 = vunpack.c.h.b16 %v4886
        %v5061 = vunpack.c.l.b16 %v4887
        %v5062 = vunpack.c.h.b16 %v4887
        %v5063 = vunpack.c.l.b16 %v4888
        %v5064 = vunpack.c.h.b16 %v4888
        %v5065 = vunpack.c.l.b16 %v4889
        %v5066 = vunpack.c.h.b16 %v4889
        %v5067 = vunpack.c.l.b16 %v4890
        %v5068 = vunpack.c.h.b16 %v4890
        %v5069 = vunpack.c.l.b16 %v4891
        %v5070 = vunpack.c.h.b16 %v4891
        %v5071 = vpack.c.b16 %v4963, %v4959
        %v5072 = vpack.c.b16 %v4964, %v4960
        %v5073 = vpack.c.b16 %v4965, %v4961
        %v5074 = vpack.c.b16 %v4966, %v4962
        %v5075 = vpack.c.b16 %v4971, %v4967
        %v5076 = vpack.c.b16 %v4972, %v4968
        %v5077 = vpack.c.b16 %v4973, %v4969
        %v5078 = vpack.c.b16 %v4974, %v4970
        %v5079 = vpack.c.b16 %v4979, %v4975
        %v5080 = vpack.c.b16 %v4980, %v4976
        %v5081 = vpack.c.b16 %v4981, %v4977
        %v5082 = vpack.c.b16 %v4982, %v4978
        %v5083 = vpack.c.b16 %v4987, %v4983
        %v5084 = vpack.c.b16 %v4988, %v4984
        %v5085 = vpack.c.b16 %v4989, %v4985
        %v5086 = vpack.c.b16 %v4990, %v4986
        %v5087 = vpack.c.b16 %v4995, %v4991
        %v5088 = vpack.c.b16 %v4996, %v4992
        %v5089 = vpack.c.b16 %v4997, %v4993
        %v5090 = vpack.c.b16 %v4998, %v4994
        %v5091 = vpack.c.b16 %v5003, %v4999
        %v5092 = vpack.c.b16 %v5004, %v5000
        %v5093 = vpack.c.b16 %v5005, %v5001
        %v5094 = vpack.c.b16 %v5006, %v5002
        %v5095 = vpack.c.b16 %v5011, %v5007
        %v5096 = vpack.c.b16 %v5012, %v5008
        %v5097 = vpack.c.b16 %v5013, %v5009
        %v5098 = vpack.c.b16 %v5014, %v5010
        %v5099 = vpack.c.b16 %v5019, %v5015
        %v5100 = vpack.c.b16 %v5020, %v5016
        %v5101 = vpack.c.b16 %v5021, %v5017
        %v5102 = vpack.c.b16 %v5022, %v5018
        %v5103 = vpack.c.b16 %v5027, %v5023
        %v5104 = vpack.c.b16 %v5028, %v5024
        %v5105 = vpack.c.b16 %v5029, %v5025
        %v5106 = vpack.c.b16 %v5030, %v5026
        %v5107 = vpack.c.b16 %v5035, %v5031
        %v5108 = vpack.c.b16 %v5036, %v5032
        %v5109 = vpack.c.b16 %v5037, %v5033
        %v5110 = vpack.c.b16 %v5038, %v5034
        %v5111 = vpack.c.b16 %v5043, %v5039
        %v5112 = vpack.c.b16 %v5044, %v5040
        %v5113 = vpack.c.b16 %v5045, %v5041
        %v5114 = vpack.c.b16 %v5046, %v5042
        %v5115 = vpack.c.b16 %v5051, %v5047
        %v5116 = vpack.c.b16 %v5052, %v5048
        %v5117 = vpack.c.b16 %v5053, %v5049
        %v5118 = vpack.c.b16 %v5054, %v5050
        %v5119 = vpack.c.b16 %v5059, %v5055
        %v5120 = vpack.c.b16 %v5060, %v5056
        %v5121 = vpack.c.b16 %v5061, %v5057
        %v5122 = vpack.c.b16 %v5062, %v5058
        %v5123 = vpack.c.b16 %v5067, %v5063
        %v5124 = vpack.c.b16 %v5068, %v5064
        %v5125 = vpack.c.b16 %v5069, %v5065
        %v5126 = vpack.c.b16 %v5070, %v5066
        %v5184 = vsel %vm1546, %v4901, 0
        %5186 = vmatpush.bf16.msra.mxu0 %v5099
        %5187 = vmatpush.bf16.msra.mxu0 %v5095
        %5188 = vmatpush.bf16.msra.mxu0 %v5091
        %5189 = vmatpush.bf16.msra.mxu0 %v5087
        %5190 = vmatpush.bf16.msra.mxu0 %v5083
        %5191 = vmatpush.bf16.msra.mxu0 %v5079
        %5192 = vmatpush.bf16.msra.mxu0 %v5075
        %5193 = vmatpush.bf16.msra.mxu0 %v5071
        %5194 = vmatmul.bf16.gmra.mxu0 %v4900
        %v5195 = vpop.f32.mrf.mxu0
        %v5196 = vadd.f32 %v4895, %v5195
        %v5197 = vpop.f32.mrf.mxu0
        %5198 = vdwg.mxu0
        %5199 = vmatpush.bf16.msra.mxu0 0
        %5200 = vmatpush.bf16.msra.mxu0 0
        %5201 = vmatpush.bf16.msra.mxu0 %v5123
        %5202 = vmatpush.bf16.msra.mxu0 %v5119
        %5203 = vmatpush.bf16.msra.mxu0 %v5115
        %5204 = vmatpush.bf16.msra.mxu0 %v5111
        %5205 = vmatpush.bf16.msra.mxu0 %v5107
        %5206 = vmatpush.bf16.msra.mxu0 %v5103
        %5207 = vmatmul.bf16.gmra.mxu0 %v5184
        %v5208 = vpop.f32.mrf.mxu0
        %v5209 = vadd.f32 %v5196, %v5208
        %v5210 = vpop.f32.mrf.mxu0
        %5211 = vdwg.mxu0
        %5212 = vmatpush.bf16.msra.mxu0 %v5100
        %5213 = vmatpush.bf16.msra.mxu0 %v5096
        %5214 = vmatpush.bf16.msra.mxu0 %v5092
        %5215 = vmatpush.bf16.msra.mxu0 %v5088
        %5216 = vmatpush.bf16.msra.mxu0 %v5084
        %5217 = vmatpush.bf16.msra.mxu0 %v5080
        %5218 = vmatpush.bf16.msra.mxu0 %v5076
        %5219 = vmatpush.bf16.msra.mxu0 %v5072
        %5220 = vmatmul.bf16.gmra.mxu0 %v4900
        %v5221 = vpop.f32.mrf.mxu0
        %v5222 = vadd.f32 %v4895, %v5221
        %v5223 = vpop.f32.mrf.mxu0
        %5224 = vdwg.mxu0
        %5225 = vmatpush.bf16.msra.mxu0 0
        %5226 = vmatpush.bf16.msra.mxu0 0
        %5227 = vmatpush.bf16.msra.mxu0 %v5124
        %5228 = vmatpush.bf16.msra.mxu0 %v5120
        %5229 = vmatpush.bf16.msra.mxu0 %v5116
        %5230 = vmatpush.bf16.msra.mxu0 %v5112
        %5231 = vmatpush.bf16.msra.mxu0 %v5108
        %5232 = vmatpush.bf16.msra.mxu0 %v5104
        %5233 = vmatmul.bf16.gmra.mxu0 %v5184
        %v5234 = vpop.f32.mrf.mxu0
        %v5235 = vadd.f32 %v5222, %v5234
        %v5236 = vpop.f32.mrf.mxu0
        %5237 = vdwg.mxu0
        %5238 = vmatpush.bf16.msra.mxu0 %v5101
        %5239 = vmatpush.bf16.msra.mxu0 %v5097
        %5240 = vmatpush.bf16.msra.mxu0 %v5093
        %5241 = vmatpush.bf16.msra.mxu0 %v5089
        %5242 = vmatpush.bf16.msra.mxu0 %v5085
        %5243 = vmatpush.bf16.msra.mxu0 %v5081
        %5244 = vmatpush.bf16.msra.mxu0 %v5077
        %5245 = vmatpush.bf16.msra.mxu0 %v5073
        %5246 = vmatmul.bf16.gmra.mxu0 %v4900
        %v5247 = vpop.f32.mrf.mxu0
        %v5248 = vadd.f32 %v4895, %v5247
        %v5249 = vpop.f32.mrf.mxu0
        %5250 = vdwg.mxu0
        %5251 = vmatpush.bf16.msra.mxu0 0
        %5252 = vmatpush.bf16.msra.mxu0 0
        %5253 = vmatpush.bf16.msra.mxu0 %v5125
        %5254 = vmatpush.bf16.msra.mxu0 %v5121
        %5255 = vmatpush.bf16.msra.mxu0 %v5117
        %5256 = vmatpush.bf16.msra.mxu0 %v5113
        %5257 = vmatpush.bf16.msra.mxu0 %v5109
        %5258 = vmatpush.bf16.msra.mxu0 %v5105
        %5259 = vmatmul.bf16.gmra.mxu0 %v5184
        %v5260 = vpop.f32.mrf.mxu0
        %v5261 = vadd.f32 %v5248, %v5260
        %v5262 = vpop.f32.mrf.mxu0
        %5263 = vdwg.mxu0
        %5264 = vmatpush.bf16.msra.mxu0 %v5102
        %5265 = vmatpush.bf16.msra.mxu0 %v5098
        %5266 = vmatpush.bf16.msra.mxu0 %v5094
        %5267 = vmatpush.bf16.msra.mxu0 %v5090
        %5268 = vmatpush.bf16.msra.mxu0 %v5086
        %5269 = vmatpush.bf16.msra.mxu0 %v5082
        %5270 = vmatpush.bf16.msra.mxu0 %v5078
        %5271 = vmatpush.bf16.msra.mxu0 %v5074
        %5272 = vmatmul.bf16.gmra.mxu0 %v4900
        %v5273 = vpop.f32.mrf.mxu0
        %v5274 = vadd.f32 %v4895, %v5273
        %v5275 = vpop.f32.mrf.mxu0
        %5276 = vdwg.mxu0
        %5277 = vmatpush.bf16.msra.mxu0 0
        %5278 = vmatpush.bf16.msra.mxu0 0
        %5279 = vmatpush.bf16.msra.mxu0 %v5126
        %5280 = vmatpush.bf16.msra.mxu0 %v5122
        %5281 = vmatpush.bf16.msra.mxu0 %v5118
        %5282 = vmatpush.bf16.msra.mxu0 %v5114
        %5283 = vmatpush.bf16.msra.mxu0 %v5110
        %5284 = vmatpush.bf16.msra.mxu0 %v5106
        %5285 = vmatmul.bf16.gmra.mxu0 %v5184
        %v5286 = vpop.f32.mrf.mxu0
        %v5287 = vadd.f32 %v5274, %v5286
        %v5288 = vpop.f32.mrf.mxu0
        %5289 = vdwg.mxu0
        %v5290 = vadd.f32 %v2862, %v5209
        %v5291 = vadd.f32 %v2863, %v5235
        %v5292 = vadd.f32 %v2864, %v5261
        %v5293 = vadd.f32 %v2865, %v5287
        %5294 = vst [vmem:[%s394] sm:$0xff] %v5290
        %5295 = vst [vmem:[%s394 + $0x8] sm:$0xff] %v5291
        %5296 = vst [vmem:[%s394 + $0x10] sm:$0xff] %v5292
        %5297 = vst [vmem:[%s394 + $0x18] sm:$0xff] %v5293
        %s5298 = sand.u32 %s251, 1
        %s5299 = scalar_lea.sflag [#allocation5], %s5298
        %s5300 = sand.u32 %s251, 1
        %s5301 = smul.addr %s5300, 32
        %s5302 = scalar_lea.vmem [#allocation8], %s5301
        // Predicated region
        $region69: #{tpu_custom_call.1} parent=59 // pred_check
          %p5303 = pneg %p261
        $region70: #{tpu_custom_call.1} parent=59 // pred_check_branch
          %5305 = sbr.rel (%p5303) target = $region72
        $region71: #{tpu_custom_call.1} parent=59 // pred_region
          %5307 = vsyncadd %s5299, 0
          %s5308 = smul.addr %s28, 4
          %s5309 = smul.addr %s5308, 8
          %s5310 = scalar_lea.hbm %s10, %s5309
          %s5312 = sshll.u32 %s5302, 4
          %s5313 = int_to_ptr.vmem [resolvable:$true] %s5312
          %s5314 = sshll.u32 %s5310, 4
          %s5315 = int_to_ptr.hbm [resolvable:$true] %s5314
          %5317 = dma.vmem_to_hbm [thread:$0]  %s5313, 512, %s5315, %s5299
        $region72: #{tpu_custom_call.1} parent=59 // pred_fallthru
          _
      $region60: #{tpu_custom_call.1} parent=5 // pred_fallthru
        _
      %p5318 = scmp.le.s32.totalorder 2, %s23
      // Predicated region
      $region73: #{tpu_custom_call.1} parent=5 // pred_check
        %p5319 = pneg %p5318
      $region74: #{tpu_custom_call.1} parent=5 // pred_check_branch
        %5321 = sbr.rel (%p5319) target = $region76
      $region75: #{tpu_custom_call.1} parent=5 // pred_region
        %s5322 = ssub.s32 %s23, 2
        // Predicated region
        $region77: #{tpu_custom_call.1} parent=75 // pred_check
          %p5323 = pneg %p267
        $region78: #{tpu_custom_call.1} parent=75 // pred_check_branch
          %5325 = sbr.rel (%p5323) target = $region80
        $region79: #{tpu_custom_call.1} parent=75 // pred_region
          %s5326 = sand.u32 %s252, 1
          %s5327 = scalar_lea.sflag [#allocation5], %s5326
          %s5328 = sand.u32 %s252, 1
          %s5329 = smul.addr %s5328, 32
          %s5330 = scalar_lea.vmem [#allocation8], %s5329
          %5332 = dma.done %s5327, 512
        $region80: #{tpu_custom_call.1} parent=75 // pred_fallthru
          _
      $region76: #{tpu_custom_call.1} parent=5 // pred_fallthru
        _
    $region6: #{tpu_custom_call.1} parent=1 // loop_footer
      %s27 = sadd.s32 1, %s23
    $region7: #{tpu_custom_call.1} parent=1 // loop_footer_branch
      %22 = sbr.rel target = $region3
    $region8: #{tpu_custom_call.1} parent=1 // loop_exit
      _
    %5333 = vsyncpa [#allocation4], 1
    %s5334 = scalar_lea.sflag [#allocation4], 1
    %5335 = vsyncpa %s5334, 1
    %5336 = vsyncpa [#allocation7], 1
    %5337 = vsyncpa [#allocation5], 1
    %s5338 = scalar_lea.sflag [#allocation5], 1
    %5339 = vsyncpa %s5338, 1

</llo_original>
